<compile_context>
chip_gen: v5e
topology: v5e:2x2
jax: 0.10.0
libtpu: 0.0.40
codegen_flags: <defaults>
</compile_context>

<pallas_src>
import functools
import math

import jax
import jax.numpy as jnp
from jax import lax
from jax.experimental import pallas as pl
from jax.experimental.pallas import tpu as pltpu


# --------------------------- in-kernel helpers -------------------------------

def _ln(y, g, b, eps):
    """PyTorch-style LayerNorm over the last dim (biased variance)."""
    mu = jnp.mean(y, axis=-1, keepdims=True)
    var = jnp.mean((y - mu) ** 2, axis=-1, keepdims=True)
    return (y - mu) * lax.rsqrt(var + eps) * g + b


def _mha(q2, k2, v2, wo, bo, B, S, D, H):
    """Multi-head attention on already-projected (and pre-scaled) Q/K/V.

    q2/k2/v2: (B*S, D).  The 1/sqrt(Hd) scale is already folded into the Q
    projection weights.  Heads are sliced statically (unrolled at trace time),
    then concatenated once for a single output-projection matmul.
    """
    Hd = D // H
    q3 = q2.reshape(B, S, D)
    k3 = k2.reshape(B, S, D)
    v3 = v2.reshape(B, S, D)
    heads = []
    for h in range(H):                          # H=4, unrolled at trace time
        sl = slice(h * Hd, (h + 1) * Hd)
        s = jnp.einsum('bqd,bkd->bqk', q3[:, :, sl], k3[:, :, sl],
                       preferred_element_type=jnp.float32)
        s = s - jnp.max(s, axis=-1, keepdims=True)
        p = jnp.exp(s)
        p = p * pl.reciprocal(jnp.sum(p, axis=-1, keepdims=True), approx=True)
        heads.append(jnp.einsum('bqk,bkd->bqd', p, v3[:, :, sl],
                                preferred_element_type=jnp.float32))
    o = jnp.concatenate(heads, axis=-1).reshape(B * S, D)
    return jnp.dot(o, wo, preferred_element_type=jnp.float32) + bo


def _encoder_layer(x2, p, B, S, D, H, eps):
    """Post-norm TransformerEncoderLayer (eval: dropout = identity)."""
    (wqkv, bqkv, wo, bo, ln1g, ln1b, w1, b1, w2, b2, ln2g, ln2b) = p
    qkv = jnp.dot(x2, wqkv[...], preferred_element_type=jnp.float32) + bqkv[...]
    a = _mha(qkv[:, :D], qkv[:, D:2 * D], qkv[:, 2 * D:],
             wo[...], bo[...], B, S, D, H)
    x1 = _ln(x2 + a, ln1g[...], ln1b[...], eps)
    h = jnp.dot(x1, w1[...], preferred_element_type=jnp.float32) + b1[...]
    h = jnp.maximum(h, 0.0)                     # relu = nn.Transformer default
    f = jnp.dot(h, w2[...], preferred_element_type=jnp.float32) + b2[...]
    return _ln(x1 + f, ln2g[...], ln2b[...], eps)


def _decoder_layer(x2, m2, p, B, S, D, H, eps):
    """Post-norm TransformerDecoderLayer (no masks, eval)."""
    (s_wqkv, s_bqkv, s_wo, s_bo, ln1g, ln1b,
     c_wq, c_bq, c_wkv, c_bkv, c_wo, c_bo, ln2g, ln2b,
     w1, b1, w2, b2, ln3g, ln3b) = p
    # self-attention + add&norm
    qkv = jnp.dot(x2, s_wqkv[...], preferred_element_type=jnp.float32) + s_bqkv[...]
    a = _mha(qkv[:, :D], qkv[:, D:2 * D], qkv[:, 2 * D:],
             s_wo[...], s_bo[...], B, S, D, H)
    x1 = _ln(x2 + a, ln1g[...], ln1b[...], eps)
    # cross-attention (Q from tgt stream, fused KV from encoder memory) + add&norm
    q = jnp.dot(x1, c_wq[...], preferred_element_type=jnp.float32) + c_bq[...]
    kv = jnp.dot(m2, c_wkv[...], preferred_element_type=jnp.float32) + c_bkv[...]
    c = _mha(q, kv[:, :D], kv[:, D:], c_wo[...], c_bo[...], B, S, D, H)
    xc = _ln(x1 + c, ln2g[...], ln2b[...], eps)
    # feed-forward + add&norm
    h = jnp.dot(xc, w1[...], preferred_element_type=jnp.float32) + b1[...]
    h = jnp.maximum(h, 0.0)
    f = jnp.dot(h, w2[...], preferred_element_type=jnp.float32) + b2[...]
    return _ln(xc + f, ln3g[...], ln3b[...], eps)


# --------------------------- the single fused kernel --------------------------

def _fused_forward_kernel(*refs, num_heads, eps, B, S, n_enc, n_dec):
    o_ref = refs[-1]
    it = iter(refs[:-1])
    tok_ref = next(it)                                  # (B*S, 1) int32
    emb_ref = next(it)                                  # (V, D)
    enc_ps = [tuple(next(it) for _ in range(12)) for _ in range(n_enc)]
    enc_g, enc_b = next(it), next(it)
    dec_ps = [tuple(next(it) for _ in range(20)) for _ in range(n_dec)]
    dec_g, dec_b = next(it), next(it)
    fc_w, fc_b = next(it), next(it)

    V, D = emb_ref.shape
    H = num_heads

    # --- embedding lookup fused as a one-hot MXU matmul (table is VMEM-resident) ---
    tok = tok_ref[...]                                              # (B*S, 1)
    ids = lax.broadcasted_iota(jnp.int32, (B * S, V), 1)
    onehot = (tok == ids).astype(jnp.float32)                       # (B*S, V)
    x2 = jnp.dot(onehot, emb_ref[...],
                 preferred_element_type=jnp.float32)                # (B*S, D)

    # --- encoder stack + final norm -> memory ---
    mem = x2
    for p in enc_ps:
        mem = _encoder_layer(mem, p, B, S, D, H, eps)
    mem = _ln(mem, enc_g[...], enc_b[...], eps)

    # --- decoder stack (tgt = src embedding) + final norm ---
    y = x2
    for p in dec_ps:
        y = _decoder_layer(y, mem, p, B, S, D, H, eps)
    y = _ln(y, dec_g[...], dec_b[...], eps)                         # (B*S, D)

    # --- mean over sequence + classifier head ---
    m = jnp.mean(y.reshape(B, S, D), axis=1)                        # (B, D)
    o_ref[...] = jnp.dot(m, fc_w[...],
                         preferred_element_type=jnp.float32) + fc_b[...]


# ------------------------------ pallas wrapper ---------------------------------

_ENC_KEYS = ('wqkv', 'bqkv', 'wo', 'bo', 'ln1_g', 'ln1_b',
             'w1', 'b1', 'w2', 'b2', 'ln2_g', 'ln2_b')
_DEC_KEYS = ('s_wqkv', 's_bqkv', 's_wo', 's_bo', 'ln1_g', 'ln1_b',
             'c_wq', 'c_bq', 'c_wkv', 'c_bkv', 'c_wo', 'c_bo', 'ln2_g', 'ln2_b',
             'w1', 'b1', 'w2', 'b2', 'ln3_g', 'ln3_b')


def _full(shape):
    nd = len(shape)
    return pl.BlockSpec(shape, lambda i, _nd=nd: (0,) * _nd)


def course_recommendation_forward(params, tokens, num_heads, eps=1e-5):
    """Whole forward pass in a single fused pallas_call."""
    B, S = tokens.shape
    C = params['fc_w'].shape[1]

    args = [tokens.reshape(B * S, 1).astype(jnp.int32), params['embedding']]
    for p in params['encoder_layers']:
        args += [p[k] for k in _ENC_KEYS]
    args += [params['enc_norm_g'], params['enc_norm_b']]
    for p in params['decoder_layers']:
        args += [p[k] for k in _DEC_KEYS]
    args += [params['dec_norm_g'], params['dec_norm_b'],
             params['fc_w'], params['fc_b']]

    kernel = functools.partial(
        _fused_forward_kernel, num_heads=num_heads, eps=eps, B=B, S=S,
        n_enc=len(params['encoder_layers']),
        n_dec=len(params['decoder_layers']))

    return pl.pallas_call(
        kernel,
        out_shape=jax.ShapeDtypeStruct((B, C), jnp.float32),
        grid=(1,),
        in_specs=[_full(a.shape) for a in args],
        out_specs=_full((B, C)),
        compiler_params=pltpu.CompilerParams(
            dimension_semantics=("arbitrary",),
            vmem_limit_bytes=32 * 1024 * 1024),
    )(*args)


# ----------------------------- parameter handling ------------------------------

def init_params(key, vocab_size, d_model, num_layers, num_classes, dim_ff):
    """Parameters in PyTorch layout (Dout, Din weights)."""
    keys = iter(jax.random.split(key, 256))

    def w(shape, scale=0.02):
        return scale * jax.random.normal(next(keys), shape, jnp.float32)

    zeros = lambda s: jnp.zeros(s, jnp.float32)
    ones = lambda s: jnp.ones(s, jnp.float32)

    def attn_p():
        return dict(in_proj_w=w((3 * d_model, d_model)),
                    in_proj_b=zeros((3 * d_model,)),
                    out_w=w((d_model, d_model)),
                    out_b=zeros((d_model,)))

    def enc_p():
        return dict(attn=attn_p(),
                    ln1_w=ones((d_model,)), ln1_b=zeros((d_model,)),
                    lin1_w=w((dim_ff, d_model)), lin1_b=zeros((dim_ff,)),
                    lin2_w=w((d_model, dim_ff)), lin2_b=zeros((d_model,)),
                    ln2_w=ones((d_model,)), ln2_b=zeros((d_model,)))

    def dec_p():
        return dict(self_attn=attn_p(), cross_attn=attn_p(),
                    ln1_w=ones((d_model,)), ln1_b=zeros((d_model,)),
                    ln2_w=ones((d_model,)), ln2_b=zeros((d_model,)),
                    lin1_w=w((dim_ff, d_model)), lin1_b=zeros((dim_ff,)),
                    lin2_w=w((d_model, dim_ff)), lin2_b=zeros((d_model,)),
                    ln3_w=ones((d_model,)), ln3_b=zeros((d_model,)))

    return dict(
        embedding=w((vocab_size, d_model), scale=1.0),
        encoder_layers=[enc_p() for _ in range(num_layers)],
        decoder_layers=[dec_p() for _ in range(num_layers)],
        enc_norm_w=ones((d_model,)), enc_norm_b=zeros((d_model,)),
        dec_norm_w=ones((d_model,)), dec_norm_b=zeros((d_model,)),
        fc_w=w((num_classes, d_model)), fc_b=zeros((num_classes,)),
    )


def pack_params(tp, num_heads):
    """One-time pre-transpose / fuse of torch-layout params into kernel layout.

    Matmul weights become (Din, Dout), QKV is fused into one (D, 3D) operand,
    cross-attn in_proj is split into (D, D) Q and (D, 2D) KV, the attention
    scale 1/sqrt(head_dim) is folded into the Q weights/biases, and all biases
    / LN params become (1, X) rows — so no per-call transposes or in-kernel
    scaling remain.
    """
    mm = lambda w: jnp.asarray(w, jnp.float32).T
    row = lambda b: jnp.asarray(b, jnp.float32).reshape(1, -1)
    D = tp['embedding'].shape[1]
    scale = 1.0 / math.sqrt(D // num_heads)

    def attn_self(a):
        wqkv = mm(a['in_proj_w'])                     # (D, 3D), cols [Q|K|V]
        bqkv = row(a['in_proj_b'])
        wqkv = wqkv.at[:, :D].multiply(scale)         # fold softmax scale into Q
        bqkv = bqkv.at[:, :D].multiply(scale)
        return dict(wqkv=wqkv, bqkv=bqkv, wo=mm(a['out_w']), bo=row(a['out_b']))

    def attn_cross(a):
        return dict(wq=mm(a['in_proj_w'][:D]) * scale,
                    bq=row(a['in_proj_b'][:D]) * scale,
                    wkv=mm(a['in_proj_w'][D:]), bkv=row(a['in_proj_b'][D:]),
                    wo=mm(a['out_w']), bo=row(a['out_b']))

    enc_layers = []
    for p in tp['encoder_layers']:
        a = attn_self(p['attn'])
        enc_layers.append(dict(
            wqkv=a['wqkv'], bqkv=a['bqkv'], wo=a['wo'], bo=a['bo'],
            ln1_g=row(p['ln1_w']), ln1_b=row(p['ln1_b']),
            w1=mm(p['lin1_w']), b1=row(p['lin1_b']),
            w2=mm(p['lin2_w']), b2=row(p['lin2_b']),
            ln2_g=row(p['ln2_w']), ln2_b=row(p['ln2_b'])))

    dec_layers = []
    for p in tp['decoder_layers']:
        sa = attn_self(p['self_attn'])
        ca = attn_cross(p['cross_attn'])
        dec_layers.append(dict(
            s_wqkv=sa['wqkv'], s_bqkv=sa['bqkv'], s_wo=sa['wo'], s_bo=sa['bo'],
            ln1_g=row(p['ln1_w']), ln1_b=row(p['ln1_b']),
            c_wq=ca['wq'], c_bq=ca['bq'], c_wkv=ca['wkv'], c_bkv=ca['bkv'],
            c_wo=ca['wo'], c_bo=ca['bo'],
            ln2_g=row(p['ln2_w']), ln2_b=row(p['ln2_b']),
            w1=mm(p['lin1_w']), b1=row(p['lin1_b']),
            w2=mm(p['lin2_w']), b2=row(p['lin2_b']),
            ln3_g=row(p['ln3_w']), ln3_b=row(p['ln3_b'])))

    return dict(
        embedding=jnp.asarray(tp['embedding'], jnp.float32),
        encoder_layers=enc_layers,
        decoder_layers=dec_layers,
        enc_norm_g=row(tp['enc_norm_w']), enc_norm_b=row(tp['enc_norm_b']),
        dec_norm_g=row(tp['dec_norm_w']), dec_norm_b=row(tp['dec_norm_b']),
        fc_w=mm(tp['fc_w']), fc_b=row(tp['fc_b']))


# ----------------------------------- main --------------------------------------

if __name__ == "__main__":
    # Small config consistent with the module's forward.  Notes:
    #  * The reference's embedding_dim=50 with num_heads=4 would not even
    #    construct in PyTorch (50 % 4 != 0), so we use d_model=32 here.
    #  * dim_feedforward kept small (64) for a small runnable example.
    # TODO(synk): nn.Transformer.forward requires (src, tgt); the reference
    # calls transformer(x) with one argument (would raise in PyTorch).  We
    # follow the obvious intent and use tgt = src (no masks, eval dropout).
    VOCAB, D_MODEL, N_HEADS, N_LAYERS, N_CLASSES, D_FF = 1000, 32, 4, 2, 2, 64
    B, S = 2, 8

    key = jax.random.PRNGKey(0)
    pkey, xkey = jax.random.split(key)
    params = pack_params(
        init_params(pkey, VOCAB, D_MODEL, N_LAYERS, N_CLASSES, D_FF), N_HEADS)
    tokens = jax.random.randint(xkey, (B, S), 0, VOCAB, dtype=jnp.int32)

    fwd = jax.jit(functools.partial(course_recommendation_forward,
                                    num_heads=N_HEADS))
    logits = fwd(params, tokens)
    jax.block_until_ready(logits)
    assert logits.shape == (B, N_CLASSES) and logits.dtype == jnp.float32
    assert bool(jnp.all(jnp.isfinite(logits)))
    print("KERNEL_OK")
</pallas_src>

<mosaic_0001>
module attributes {stable_mosaic.version = 11 : i64} {
  func.func @_fused_forward_kernel(%arg0: i32, %arg1: memref<16x1xi32, #tpu.memory_space<vmem>>, %arg2: memref<1000x32xf32, #tpu.memory_space<vmem>>, %arg3: memref<32x96xf32, #tpu.memory_space<vmem>>, %arg4: memref<1x96xf32, #tpu.memory_space<vmem>>, %arg5: memref<32x32xf32, #tpu.memory_space<vmem>>, %arg6: memref<1x32xf32, #tpu.memory_space<vmem>>, %arg7: memref<1x32xf32, #tpu.memory_space<vmem>>, %arg8: memref<1x32xf32, #tpu.memory_space<vmem>>, %arg9: memref<32x64xf32, #tpu.memory_space<vmem>>, %arg10: memref<1x64xf32, #tpu.memory_space<vmem>>, %arg11: memref<64x32xf32, #tpu.memory_space<vmem>>, %arg12: memref<1x32xf32, #tpu.memory_space<vmem>>, %arg13: memref<1x32xf32, #tpu.memory_space<vmem>>, %arg14: memref<1x32xf32, #tpu.memory_space<vmem>>, %arg15: memref<32x96xf32, #tpu.memory_space<vmem>>, %arg16: memref<1x96xf32, #tpu.memory_space<vmem>>, %arg17: memref<32x32xf32, #tpu.memory_space<vmem>>, %arg18: memref<1x32xf32, #tpu.memory_space<vmem>>, %arg19: memref<1x32xf32, #tpu.memory_space<vmem>>, %arg20: memref<1x32xf32, #tpu.memory_space<vmem>>, %arg21: memref<32x64xf32, #tpu.memory_space<vmem>>, %arg22: memref<1x64xf32, #tpu.memory_space<vmem>>, %arg23: memref<64x32xf32, #tpu.memory_space<vmem>>, %arg24: memref<1x32xf32, #tpu.memory_space<vmem>>, %arg25: memref<1x32xf32, #tpu.memory_space<vmem>>, %arg26: memref<1x32xf32, #tpu.memory_space<vmem>>, %arg27: memref<1x32xf32, #tpu.memory_space<vmem>>, %arg28: memref<1x32xf32, #tpu.memory_space<vmem>>, %arg29: memref<32x96xf32, #tpu.memory_space<vmem>>, %arg30: memref<1x96xf32, #tpu.memory_space<vmem>>, %arg31: memref<32x32xf32, #tpu.memory_space<vmem>>, %arg32: memref<1x32xf32, #tpu.memory_space<vmem>>, %arg33: memref<1x32xf32, #tpu.memory_space<vmem>>, %arg34: memref<1x32xf32, #tpu.memory_space<vmem>>, %arg35: memref<32x32xf32, #tpu.memory_space<vmem>>, %arg36: memref<1x32xf32, #tpu.memory_space<vmem>>, %arg37: memref<32x64xf32, #tpu.memory_space<vmem>>, %arg38: memref<1x64xf32, #tpu.memory_space<vmem>>, %arg39: memref<32x32xf32, #tpu.memory_space<vmem>>, %arg40: memref<1x32xf32, #tpu.memory_space<vmem>>, %arg41: memref<1x32xf32, #tpu.memory_space<vmem>>, %arg42: memref<1x32xf32, #tpu.memory_space<vmem>>, %arg43: memref<32x64xf32, #tpu.memory_space<vmem>>, %arg44: memref<1x64xf32, #tpu.memory_space<vmem>>, %arg45: memref<64x32xf32, #tpu.memory_space<vmem>>, %arg46: memref<1x32xf32, #tpu.memory_space<vmem>>, %arg47: memref<1x32xf32, #tpu.memory_space<vmem>>, %arg48: memref<1x32xf32, #tpu.memory_space<vmem>>, %arg49: memref<32x96xf32, #tpu.memory_space<vmem>>, %arg50: memref<1x96xf32, #tpu.memory_space<vmem>>, %arg51: memref<32x32xf32, #tpu.memory_space<vmem>>, %arg52: memref<1x32xf32, #tpu.memory_space<vmem>>, %arg53: memref<1x32xf32, #tpu.memory_space<vmem>>, %arg54: memref<1x32xf32, #tpu.memory_space<vmem>>, %arg55: memref<32x32xf32, #tpu.memory_space<vmem>>, %arg56: memref<1x32xf32, #tpu.memory_space<vmem>>, %arg57: memref<32x64xf32, #tpu.memory_space<vmem>>, %arg58: memref<1x64xf32, #tpu.memory_space<vmem>>, %arg59: memref<32x32xf32, #tpu.memory_space<vmem>>, %arg60: memref<1x32xf32, #tpu.memory_space<vmem>>, %arg61: memref<1x32xf32, #tpu.memory_space<vmem>>, %arg62: memref<1x32xf32, #tpu.memory_space<vmem>>, %arg63: memref<32x64xf32, #tpu.memory_space<vmem>>, %arg64: memref<1x64xf32, #tpu.memory_space<vmem>>, %arg65: memref<64x32xf32, #tpu.memory_space<vmem>>, %arg66: memref<1x32xf32, #tpu.memory_space<vmem>>, %arg67: memref<1x32xf32, #tpu.memory_space<vmem>>, %arg68: memref<1x32xf32, #tpu.memory_space<vmem>>, %arg69: memref<1x32xf32, #tpu.memory_space<vmem>>, %arg70: memref<1x32xf32, #tpu.memory_space<vmem>>, %arg71: memref<32x2xf32, #tpu.memory_space<vmem>>, %arg72: memref<1x2xf32, #tpu.memory_space<vmem>>, %arg73: memref<2x2xf32, #tpu.memory_space<vmem>>) attributes {dimension_semantics = [#tpu.dimension_semantics<arbitrary>], iteration_bounds = array<i64: 1>, scalar_prefetch = 0 : i64, scratch_operands = 0 : i64, tpu.core_type = #tpu.core_type<tc>, window_params = [{pipeline_mode = #tpu.pipeline_mode<synchronous>, transform_indices = @transform_0, window_bounds = array<i64: 16, 1>}, {pipeline_mode = #tpu.pipeline_mode<synchronous>, transform_indices = @transform_1, window_bounds = array<i64: 1000, 32>}, {pipeline_mode = #tpu.pipeline_mode<synchronous>, transform_indices = @transform_2, window_bounds = array<i64: 32, 96>}, {pipeline_mode = #tpu.pipeline_mode<synchronous>, transform_indices = @transform_3, window_bounds = array<i64: 1, 96>}, {pipeline_mode = #tpu.pipeline_mode<synchronous>, transform_indices = @transform_4, window_bounds = array<i64: 32, 32>}, {pipeline_mode = #tpu.pipeline_mode<synchronous>, transform_indices = @transform_5, window_bounds = array<i64: 1, 32>}, {pipeline_mode = #tpu.pipeline_mode<synchronous>, transform_indices = @transform_6, window_bounds = array<i64: 1, 32>}, {pipeline_mode = #tpu.pipeline_mode<synchronous>, transform_indices = @transform_7, window_bounds = array<i64: 1, 32>}, {pipeline_mode = #tpu.pipeline_mode<synchronous>, transform_indices = @transform_8, window_bounds = array<i64: 32, 64>}, {pipeline_mode = #tpu.pipeline_mode<synchronous>, transform_indices = @transform_9, window_bounds = array<i64: 1, 64>}, {pipeline_mode = #tpu.pipeline_mode<synchronous>, transform_indices = @transform_10, window_bounds = array<i64: 64, 32>}, {pipeline_mode = #tpu.pipeline_mode<synchronous>, transform_indices = @transform_11, window_bounds = array<i64: 1, 32>}, {pipeline_mode = #tpu.pipeline_mode<synchronous>, transform_indices = @transform_12, window_bounds = array<i64: 1, 32>}, {pipeline_mode = #tpu.pipeline_mode<synchronous>, transform_indices = @transform_13, window_bounds = array<i64: 1, 32>}, {pipeline_mode = #tpu.pipeline_mode<synchronous>, transform_indices = @transform_14, window_bounds = array<i64: 32, 96>}, {pipeline_mode = #tpu.pipeline_mode<synchronous>, transform_indices = @transform_15, window_bounds = array<i64: 1, 96>}, {pipeline_mode = #tpu.pipeline_mode<synchronous>, transform_indices = @transform_16, window_bounds = array<i64: 32, 32>}, {pipeline_mode = #tpu.pipeline_mode<synchronous>, transform_indices = @transform_17, window_bounds = array<i64: 1, 32>}, {pipeline_mode = #tpu.pipeline_mode<synchronous>, transform_indices = @transform_18, window_bounds = array<i64: 1, 32>}, {pipeline_mode = #tpu.pipeline_mode<synchronous>, transform_indices = @transform_19, window_bounds = array<i64: 1, 32>}, {pipeline_mode = #tpu.pipeline_mode<synchronous>, transform_indices = @transform_20, window_bounds = array<i64: 32, 64>}, {pipeline_mode = #tpu.pipeline_mode<synchronous>, transform_indices = @transform_21, window_bounds = array<i64: 1, 64>}, {pipeline_mode = #tpu.pipeline_mode<synchronous>, transform_indices = @transform_22, window_bounds = array<i64: 64, 32>}, {pipeline_mode = #tpu.pipeline_mode<synchronous>, transform_indices = @transform_23, window_bounds = array<i64: 1, 32>}, {pipeline_mode = #tpu.pipeline_mode<synchronous>, transform_indices = @transform_24, window_bounds = array<i64: 1, 32>}, {pipeline_mode = #tpu.pipeline_mode<synchronous>, transform_indices = @transform_25, window_bounds = array<i64: 1, 32>}, {pipeline_mode = #tpu.pipeline_mode<synchronous>, transform_indices = @transform_26, window_bounds = array<i64: 1, 32>}, {pipeline_mode = #tpu.pipeline_mode<synchronous>, transform_indices = @transform_27, window_bounds = array<i64: 1, 32>}, {pipeline_mode = #tpu.pipeline_mode<synchronous>, transform_indices = @transform_28, window_bounds = array<i64: 32, 96>}, {pipeline_mode = #tpu.pipeline_mode<synchronous>, transform_indices = @transform_29, window_bounds = array<i64: 1, 96>}, {pipeline_mode = #tpu.pipeline_mode<synchronous>, transform_indices = @transform_30, window_bounds = array<i64: 32, 32>}, {pipeline_mode = #tpu.pipeline_mode<synchronous>, transform_indices = @transform_31, window_bounds = array<i64: 1, 32>}, {pipeline_mode = #tpu.pipeline_mode<synchronous>, transform_indices = @transform_32, window_bounds = array<i64: 1, 32>}, {pipeline_mode = #tpu.pipeline_mode<synchronous>, transform_indices = @transform_33, window_bounds = array<i64: 1, 32>}, {pipeline_mode = #tpu.pipeline_mode<synchronous>, transform_indices = @transform_34, window_bounds = array<i64: 32, 32>}, {pipeline_mode = #tpu.pipeline_mode<synchronous>, transform_indices = @transform_35, window_bounds = array<i64: 1, 32>}, {pipeline_mode = #tpu.pipeline_mode<synchronous>, transform_indices = @transform_36, window_bounds = array<i64: 32, 64>}, {pipeline_mode = #tpu.pipeline_mode<synchronous>, transform_indices = @transform_37, window_bounds = array<i64: 1, 64>}, {pipeline_mode = #tpu.pipeline_mode<synchronous>, transform_indices = @transform_38, window_bounds = array<i64: 32, 32>}, {pipeline_mode = #tpu.pipeline_mode<synchronous>, transform_indices = @transform_39, window_bounds = array<i64: 1, 32>}, {pipeline_mode = #tpu.pipeline_mode<synchronous>, transform_indices = @transform_40, window_bounds = array<i64: 1, 32>}, {pipeline_mode = #tpu.pipeline_mode<synchronous>, transform_indices = @transform_41, window_bounds = array<i64: 1, 32>}, {pipeline_mode = #tpu.pipeline_mode<synchronous>, transform_indices = @transform_42, window_bounds = array<i64: 32, 64>}, {pipeline_mode = #tpu.pipeline_mode<synchronous>, transform_indices = @transform_43, window_bounds = array<i64: 1, 64>}, {pipeline_mode = #tpu.pipeline_mode<synchronous>, transform_indices = @transform_44, window_bounds = array<i64: 64, 32>}, {pipeline_mode = #tpu.pipeline_mode<synchronous>, transform_indices = @transform_45, window_bounds = array<i64: 1, 32>}, {pipeline_mode = #tpu.pipeline_mode<synchronous>, transform_indices = @transform_46, window_bounds = array<i64: 1, 32>}, {pipeline_mode = #tpu.pipeline_mode<synchronous>, transform_indices = @transform_47, window_bounds = array<i64: 1, 32>}, {pipeline_mode = #tpu.pipeline_mode<synchronous>, transform_indices = @transform_48, window_bounds = array<i64: 32, 96>}, {pipeline_mode = #tpu.pipeline_mode<synchronous>, transform_indices = @transform_49, window_bounds = array<i64: 1, 96>}, {pipeline_mode = #tpu.pipeline_mode<synchronous>, transform_indices = @transform_50, window_bounds = array<i64: 32, 32>}, {pipeline_mode = #tpu.pipeline_mode<synchronous>, transform_indices = @transform_51, window_bounds = array<i64: 1, 32>}, {pipeline_mode = #tpu.pipeline_mode<synchronous>, transform_indices = @transform_52, window_bounds = array<i64: 1, 32>}, {pipeline_mode = #tpu.pipeline_mode<synchronous>, transform_indices = @transform_53, window_bounds = array<i64: 1, 32>}, {pipeline_mode = #tpu.pipeline_mode<synchronous>, transform_indices = @transform_54, window_bounds = array<i64: 32, 32>}, {pipeline_mode = #tpu.pipeline_mode<synchronous>, transform_indices = @transform_55, window_bounds = array<i64: 1, 32>}, {pipeline_mode = #tpu.pipeline_mode<synchronous>, transform_indices = @transform_56, window_bounds = array<i64: 32, 64>}, {pipeline_mode = #tpu.pipeline_mode<synchronous>, transform_indices = @transform_57, window_bounds = array<i64: 1, 64>}, {pipeline_mode = #tpu.pipeline_mode<synchronous>, transform_indices = @transform_58, window_bounds = array<i64: 32, 32>}, {pipeline_mode = #tpu.pipeline_mode<synchronous>, transform_indices = @transform_59, window_bounds = array<i64: 1, 32>}, {pipeline_mode = #tpu.pipeline_mode<synchronous>, transform_indices = @transform_60, window_bounds = array<i64: 1, 32>}, {pipeline_mode = #tpu.pipeline_mode<synchronous>, transform_indices = @transform_61, window_bounds = array<i64: 1, 32>}, {pipeline_mode = #tpu.pipeline_mode<synchronous>, transform_indices = @transform_62, window_bounds = array<i64: 32, 64>}, {pipeline_mode = #tpu.pipeline_mode<synchronous>, transform_indices = @transform_63, window_bounds = array<i64: 1, 64>}, {pipeline_mode = #tpu.pipeline_mode<synchronous>, transform_indices = @transform_64, window_bounds = array<i64: 64, 32>}, {pipeline_mode = #tpu.pipeline_mode<synchronous>, transform_indices = @transform_65, window_bounds = array<i64: 1, 32>}, {pipeline_mode = #tpu.pipeline_mode<synchronous>, transform_indices = @transform_66, window_bounds = array<i64: 1, 32>}, {pipeline_mode = #tpu.pipeline_mode<synchronous>, transform_indices = @transform_67, window_bounds = array<i64: 1, 32>}, {pipeline_mode = #tpu.pipeline_mode<synchronous>, transform_indices = @transform_68, window_bounds = array<i64: 1, 32>}, {pipeline_mode = #tpu.pipeline_mode<synchronous>, transform_indices = @transform_69, window_bounds = array<i64: 1, 32>}, {pipeline_mode = #tpu.pipeline_mode<synchronous>, transform_indices = @transform_70, window_bounds = array<i64: 32, 2>}, {pipeline_mode = #tpu.pipeline_mode<synchronous>, transform_indices = @transform_71, window_bounds = array<i64: 1, 2>}, {pipeline_mode = #tpu.pipeline_mode<synchronous>, transform_indices = @transform_72, window_bounds = array<i64: 2, 2>}]} {
    %c0 = arith.constant 0 : index
    %c0_0 = arith.constant 0 : index
    %0 = vector.load %arg1[%c0, %c0_0] : memref<16x1xi32, #tpu.memory_space<vmem>>, vector<16x1xi32>
    %1 = tpu.iota {dimensions = array<i32: 1>} : vector<16x1000xi32>
    %2 = vector.broadcast %0 : vector<16x1xi32> to vector<16x1000xi32>
    %3 = arith.cmpi eq, %2, %1 : vector<16x1000xi32>
    %4 = arith.extui %3 : vector<16x1000xi1> to vector<16x1000xi32>
    %5 = arith.sitofp %4 : vector<16x1000xi32> to vector<16x1000xf32>
    %c0_1 = arith.constant 0 : index
    %c0_2 = arith.constant 0 : index
    %6 = vector.load %arg2[%c0_1, %c0_2] : memref<1000x32xf32, #tpu.memory_space<vmem>>, vector<1000x32xf32>
    %cst = arith.constant dense<0.000000e+00> : vector<16x32xf32>
    %7 = tpu.matmul %5, %6, %cst {dimension_numbers = #tpu.dot_dimension_numbers<[1], [0], [0], [1], [0, 0, 1, 1], [], []>} : vector<16x1000xf32>, vector<1000x32xf32>, vector<16x32xf32> -> vector<16x32xf32>
    %c0_3 = arith.constant 0 : index
    %c0_4 = arith.constant 0 : index
    %8 = vector.load %arg3[%c0_3, %c0_4] : memref<32x96xf32, #tpu.memory_space<vmem>>, vector<32x96xf32>
    %cst_5 = arith.constant dense<0.000000e+00> : vector<16x96xf32>
    %9 = tpu.matmul %7, %8, %cst_5 {dimension_numbers = #tpu.dot_dimension_numbers<[1], [0], [0], [1], [0, 0, 1, 1], [], []>} : vector<16x32xf32>, vector<32x96xf32>, vector<16x96xf32> -> vector<16x96xf32>
    %c0_6 = arith.constant 0 : index
    %c0_7 = arith.constant 0 : index
    %10 = vector.load %arg4[%c0_6, %c0_7] : memref<1x96xf32, #tpu.memory_space<vmem>>, vector<1x96xf32>
    %11 = vector.broadcast %10 : vector<1x96xf32> to vector<16x96xf32>
    %12 = arith.addf %9, %11 : vector<16x96xf32>
    %13 = vector.extract_strided_slice %12 {offsets = [0, 0], sizes = [16, 32], strides = [1, 1]} : vector<16x96xf32> to vector<16x32xf32>
    %14 = vector.extract_strided_slice %12 {offsets = [0, 32], sizes = [16, 32], strides = [1, 1]} : vector<16x96xf32> to vector<16x32xf32>
    %15 = vector.extract_strided_slice %12 {offsets = [0, 64], sizes = [16, 32], strides = [1, 1]} : vector<16x96xf32> to vector<16x32xf32>
    %c0_8 = arith.constant 0 : index
    %c0_9 = arith.constant 0 : index
    %16 = vector.load %arg5[%c0_8, %c0_9] : memref<32x32xf32, #tpu.memory_space<vmem>>, vector<32x32xf32>
    %c0_10 = arith.constant 0 : index
    %c0_11 = arith.constant 0 : index
    %17 = vector.load %arg6[%c0_10, %c0_11] : memref<1x32xf32, #tpu.memory_space<vmem>>, vector<1x32xf32>
    %18 = vector.shape_cast %13 : vector<16x32xf32> to vector<2x8x32xf32>
    %19 = vector.shape_cast %14 : vector<16x32xf32> to vector<2x8x32xf32>
    %20 = vector.shape_cast %15 : vector<16x32xf32> to vector<2x8x32xf32>
    %21 = vector.extract_strided_slice %18 {offsets = [0, 0, 0], sizes = [2, 8, 8], strides = [1, 1, 1]} : vector<2x8x32xf32> to vector<2x8x8xf32>
    %22 = vector.extract_strided_slice %19 {offsets = [0, 0, 0], sizes = [2, 8, 8], strides = [1, 1, 1]} : vector<2x8x32xf32> to vector<2x8x8xf32>
    "tpu.trace_start"() <{level = 10 : i32, message = "bqd,bkd->bqk"}> : () -> ()
    %cst_12 = arith.constant dense<0.000000e+00> : vector<2x8x8xf32>
    %23 = tpu.matmul %21, %22, %cst_12 {dimension_numbers = #tpu.dot_dimension_numbers<[2], [2], [1], [1], [0, 0, 0, 1, 1, 1], [0], [0]>} : vector<2x8x8xf32>, vector<2x8x8xf32>, vector<2x8x8xf32> -> vector<2x8x8xf32>
    "tpu.trace_stop"() : () -> ()
    %cst_13 = arith.constant dense<0xFF800000> : vector<2x8xf32>
    %24 = vector.multi_reduction <maximumf>, %23, %cst_13 [2] : vector<2x8x8xf32> to vector<2x8xf32>
    %25 = vector.shape_cast %24 : vector<2x8xf32> to vector<2x8x1xf32>
    %26 = vector.broadcast %25 : vector<2x8x1xf32> to vector<2x8x8xf32>
    %27 = arith.subf %23, %26 : vector<2x8x8xf32>
    %28 = math.exp %27 : vector<2x8x8xf32>
    %cst_14 = arith.constant dense<0.000000e+00> : vector<2x8xf32>
    %29 = vector.multi_reduction <add>, %28, %cst_14 [2] : vector<2x8x8xf32> to vector<2x8xf32>
    %30 = vector.shape_cast %29 : vector<2x8xf32> to vector<2x8x1xf32>
    %31 = tpu.reciprocal %30 {approx = true} : vector<2x8x1xf32> -> vector<2x8x1xf32>
    %32 = vector.broadcast %31 : vector<2x8x1xf32> to vector<2x8x8xf32>
    %33 = arith.mulf %28, %32 : vector<2x8x8xf32>
    %34 = vector.extract_strided_slice %20 {offsets = [0, 0, 0], sizes = [2, 8, 8], strides = [1, 1, 1]} : vector<2x8x32xf32> to vector<2x8x8xf32>
    "tpu.trace_start"() <{level = 10 : i32, message = "bqk,bkd->bqd"}> : () -> ()
    %cst_15 = arith.constant dense<0.000000e+00> : vector<2x8x8xf32>
    %35 = tpu.matmul %33, %34, %cst_15 {dimension_numbers = #tpu.dot_dimension_numbers<[2], [1], [1], [2], [0, 0, 0, 1, 1, 2], [0], [0]>} : vector<2x8x8xf32>, vector<2x8x8xf32>, vector<2x8x8xf32> -> vector<2x8x8xf32>
    "tpu.trace_stop"() : () -> ()
    %36 = vector.extract_strided_slice %18 {offsets = [0, 0, 8], sizes = [2, 8, 8], strides = [1, 1, 1]} : vector<2x8x32xf32> to vector<2x8x8xf32>
    %37 = vector.extract_strided_slice %19 {offsets = [0, 0, 8], sizes = [2, 8, 8], strides = [1, 1, 1]} : vector<2x8x32xf32> to vector<2x8x8xf32>
    "tpu.trace_start"() <{level = 10 : i32, message = "bqd,bkd->bqk"}> : () -> ()
    %cst_16 = arith.constant dense<0.000000e+00> : vector<2x8x8xf32>
    %38 = tpu.matmul %36, %37, %cst_16 {dimension_numbers = #tpu.dot_dimension_numbers<[2], [2], [1], [1], [0, 0, 0, 1, 1, 1], [0], [0]>} : vector<2x8x8xf32>, vector<2x8x8xf32>, vector<2x8x8xf32> -> vector<2x8x8xf32>
    "tpu.trace_stop"() : () -> ()
    %cst_17 = arith.constant dense<0xFF800000> : vector<2x8xf32>
    %39 = vector.multi_reduction <maximumf>, %38, %cst_17 [2] : vector<2x8x8xf32> to vector<2x8xf32>
    %40 = vector.shape_cast %39 : vector<2x8xf32> to vector<2x8x1xf32>
    %41 = vector.broadcast %40 : vector<2x8x1xf32> to vector<2x8x8xf32>
    %42 = arith.subf %38, %41 : vector<2x8x8xf32>
    %43 = math.exp %42 : vector<2x8x8xf32>
    %cst_18 = arith.constant dense<0.000000e+00> : vector<2x8xf32>
    %44 = vector.multi_reduction <add>, %43, %cst_18 [2] : vector<2x8x8xf32> to vector<2x8xf32>
    %45 = vector.shape_cast %44 : vector<2x8xf32> to vector<2x8x1xf32>
    %46 = tpu.reciprocal %45 {approx = true} : vector<2x8x1xf32> -> vector<2x8x1xf32>
    %47 = vector.broadcast %46 : vector<2x8x1xf32> to vector<2x8x8xf32>
    %48 = arith.mulf %43, %47 : vector<2x8x8xf32>
    %49 = vector.extract_strided_slice %20 {offsets = [0, 0, 8], sizes = [2, 8, 8], strides = [1, 1, 1]} : vector<2x8x32xf32> to vector<2x8x8xf32>
    "tpu.trace_start"() <{level = 10 : i32, message = "bqk,bkd->bqd"}> : () -> ()
    %cst_19 = arith.constant dense<0.000000e+00> : vector<2x8x8xf32>
    %50 = tpu.matmul %48, %49, %cst_19 {dimension_numbers = #tpu.dot_dimension_numbers<[2], [1], [1], [2], [0, 0, 0, 1, 1, 2], [0], [0]>} : vector<2x8x8xf32>, vector<2x8x8xf32>, vector<2x8x8xf32> -> vector<2x8x8xf32>
    "tpu.trace_stop"() : () -> ()
    %51 = vector.extract_strided_slice %18 {offsets = [0, 0, 16], sizes = [2, 8, 8], strides = [1, 1, 1]} : vector<2x8x32xf32> to vector<2x8x8xf32>
    %52 = vector.extract_strided_slice %19 {offsets = [0, 0, 16], sizes = [2, 8, 8], strides = [1, 1, 1]} : vector<2x8x32xf32> to vector<2x8x8xf32>
    "tpu.trace_start"() <{level = 10 : i32, message = "bqd,bkd->bqk"}> : () -> ()
    %cst_20 = arith.constant dense<0.000000e+00> : vector<2x8x8xf32>
    %53 = tpu.matmul %51, %52, %cst_20 {dimension_numbers = #tpu.dot_dimension_numbers<[2], [2], [1], [1], [0, 0, 0, 1, 1, 1], [0], [0]>} : vector<2x8x8xf32>, vector<2x8x8xf32>, vector<2x8x8xf32> -> vector<2x8x8xf32>
    "tpu.trace_stop"() : () -> ()
    %cst_21 = arith.constant dense<0xFF800000> : vector<2x8xf32>
    %54 = vector.multi_reduction <maximumf>, %53, %cst_21 [2] : vector<2x8x8xf32> to vector<2x8xf32>
    %55 = vector.shape_cast %54 : vector<2x8xf32> to vector<2x8x1xf32>
    %56 = vector.broadcast %55 : vector<2x8x1xf32> to vector<2x8x8xf32>
    %57 = arith.subf %53, %56 : vector<2x8x8xf32>
    %58 = math.exp %57 : vector<2x8x8xf32>
    %cst_22 = arith.constant dense<0.000000e+00> : vector<2x8xf32>
    %59 = vector.multi_reduction <add>, %58, %cst_22 [2] : vector<2x8x8xf32> to vector<2x8xf32>
    %60 = vector.shape_cast %59 : vector<2x8xf32> to vector<2x8x1xf32>
    %61 = tpu.reciprocal %60 {approx = true} : vector<2x8x1xf32> -> vector<2x8x1xf32>
    %62 = vector.broadcast %61 : vector<2x8x1xf32> to vector<2x8x8xf32>
    %63 = arith.mulf %58, %62 : vector<2x8x8xf32>
    %64 = vector.extract_strided_slice %20 {offsets = [0, 0, 16], sizes = [2, 8, 8], strides = [1, 1, 1]} : vector<2x8x32xf32> to vector<2x8x8xf32>
    "tpu.trace_start"() <{level = 10 : i32, message = "bqk,bkd->bqd"}> : () -> ()
    %cst_23 = arith.constant dense<0.000000e+00> : vector<2x8x8xf32>
    %65 = tpu.matmul %63, %64, %cst_23 {dimension_numbers = #tpu.dot_dimension_numbers<[2], [1], [1], [2], [0, 0, 0, 1, 1, 2], [0], [0]>} : vector<2x8x8xf32>, vector<2x8x8xf32>, vector<2x8x8xf32> -> vector<2x8x8xf32>
    "tpu.trace_stop"() : () -> ()
    %66 = vector.extract_strided_slice %18 {offsets = [0, 0, 24], sizes = [2, 8, 8], strides = [1, 1, 1]} : vector<2x8x32xf32> to vector<2x8x8xf32>
    %67 = vector.extract_strided_slice %19 {offsets = [0, 0, 24], sizes = [2, 8, 8], strides = [1, 1, 1]} : vector<2x8x32xf32> to vector<2x8x8xf32>
    "tpu.trace_start"() <{level = 10 : i32, message = "bqd,bkd->bqk"}> : () -> ()
    %cst_24 = arith.constant dense<0.000000e+00> : vector<2x8x8xf32>
    %68 = tpu.matmul %66, %67, %cst_24 {dimension_numbers = #tpu.dot_dimension_numbers<[2], [2], [1], [1], [0, 0, 0, 1, 1, 1], [0], [0]>} : vector<2x8x8xf32>, vector<2x8x8xf32>, vector<2x8x8xf32> -> vector<2x8x8xf32>
    "tpu.trace_stop"() : () -> ()
    %cst_25 = arith.constant dense<0xFF800000> : vector<2x8xf32>
    %69 = vector.multi_reduction <maximumf>, %68, %cst_25 [2] : vector<2x8x8xf32> to vector<2x8xf32>
    %70 = vector.shape_cast %69 : vector<2x8xf32> to vector<2x8x1xf32>
    %71 = vector.broadcast %70 : vector<2x8x1xf32> to vector<2x8x8xf32>
    %72 = arith.subf %68, %71 : vector<2x8x8xf32>
    %73 = math.exp %72 : vector<2x8x8xf32>
    %cst_26 = arith.constant dense<0.000000e+00> : vector<2x8xf32>
    %74 = vector.multi_reduction <add>, %73, %cst_26 [2] : vector<2x8x8xf32> to vector<2x8xf32>
    %75 = vector.shape_cast %74 : vector<2x8xf32> to vector<2x8x1xf32>
    %76 = tpu.reciprocal %75 {approx = true} : vector<2x8x1xf32> -> vector<2x8x1xf32>
    %77 = vector.broadcast %76 : vector<2x8x1xf32> to vector<2x8x8xf32>
    %78 = arith.mulf %73, %77 : vector<2x8x8xf32>
    %79 = vector.extract_strided_slice %20 {offsets = [0, 0, 24], sizes = [2, 8, 8], strides = [1, 1, 1]} : vector<2x8x32xf32> to vector<2x8x8xf32>
    "tpu.trace_start"() <{level = 10 : i32, message = "bqk,bkd->bqd"}> : () -> ()
    %cst_27 = arith.constant dense<0.000000e+00> : vector<2x8x8xf32>
    %80 = tpu.matmul %78, %79, %cst_27 {dimension_numbers = #tpu.dot_dimension_numbers<[2], [1], [1], [2], [0, 0, 0, 1, 1, 2], [0], [0]>} : vector<2x8x8xf32>, vector<2x8x8xf32>, vector<2x8x8xf32> -> vector<2x8x8xf32>
    "tpu.trace_stop"() : () -> ()
    %81 = tpu.concatenate %35, %50, %65, %80 in 2 : vector<2x8x8xf32>, vector<2x8x8xf32>, vector<2x8x8xf32>, vector<2x8x8xf32> -> vector<2x8x32xf32>
    %82 = vector.shape_cast %81 : vector<2x8x32xf32> to vector<16x32xf32>
    %cst_28 = arith.constant dense<0.000000e+00> : vector<16x32xf32>
    %83 = tpu.matmul %82, %16, %cst_28 {dimension_numbers = #tpu.dot_dimension_numbers<[1], [0], [0], [1], [0, 0, 1, 1], [], []>} : vector<16x32xf32>, vector<32x32xf32>, vector<16x32xf32> -> vector<16x32xf32>
    %84 = vector.broadcast %17 : vector<1x32xf32> to vector<16x32xf32>
    %85 = arith.addf %83, %84 : vector<16x32xf32>
    %86 = arith.addf %7, %85 : vector<16x32xf32>
    %c0_29 = arith.constant 0 : index
    %c0_30 = arith.constant 0 : index
    %87 = vector.load %arg7[%c0_29, %c0_30] : memref<1x32xf32, #tpu.memory_space<vmem>>, vector<1x32xf32>
    %c0_31 = arith.constant 0 : index
    %c0_32 = arith.constant 0 : index
    %88 = vector.load %arg8[%c0_31, %c0_32] : memref<1x32xf32, #tpu.memory_space<vmem>>, vector<1x32xf32>
    %cst_33 = arith.constant dense<0.000000e+00> : vector<16xf32>
    %89 = vector.multi_reduction <add>, %86, %cst_33 [1] : vector<16x32xf32> to vector<16xf32>
    %90 = vector.shape_cast %89 : vector<16xf32> to vector<16x1xf32>
    %cst_34 = arith.constant 3.200000e+01 : f32
    %91 = vector.broadcast %cst_34 : f32 to vector<16x1xf32>
    %92 = arith.divf %90, %91 : vector<16x1xf32>
    %93 = vector.broadcast %92 : vector<16x1xf32> to vector<16x32xf32>
    %94 = arith.subf %86, %93 : vector<16x32xf32>
    %95 = arith.mulf %94, %94 : vector<16x32xf32>
    %cst_35 = arith.constant dense<0.000000e+00> : vector<16xf32>
    %96 = vector.multi_reduction <add>, %95, %cst_35 [1] : vector<16x32xf32> to vector<16xf32>
    %97 = vector.shape_cast %96 : vector<16xf32> to vector<16x1xf32>
    %cst_36 = arith.constant 3.200000e+01 : f32
    %98 = vector.broadcast %cst_36 : f32 to vector<16x1xf32>
    %99 = arith.divf %97, %98 : vector<16x1xf32>
    %100 = vector.broadcast %92 : vector<16x1xf32> to vector<16x32xf32>
    %101 = arith.subf %86, %100 : vector<16x32xf32>
    %cst_37 = arith.constant 9.99999974E-6 : f32
    %102 = vector.broadcast %cst_37 : f32 to vector<16x1xf32>
    %103 = arith.addf %99, %102 : vector<16x1xf32>
    %104 = math.rsqrt %103 : vector<16x1xf32>
    %105 = vector.broadcast %104 : vector<16x1xf32> to vector<16x32xf32>
    %106 = arith.mulf %101, %105 : vector<16x32xf32>
    %107 = vector.broadcast %87 : vector<1x32xf32> to vector<16x32xf32>
    %108 = arith.mulf %106, %107 : vector<16x32xf32>
    %109 = vector.broadcast %88 : vector<1x32xf32> to vector<16x32xf32>
    %110 = arith.addf %108, %109 : vector<16x32xf32>
    %c0_38 = arith.constant 0 : index
    %c0_39 = arith.constant 0 : index
    %111 = vector.load %arg9[%c0_38, %c0_39] : memref<32x64xf32, #tpu.memory_space<vmem>>, vector<32x64xf32>
    %cst_40 = arith.constant dense<0.000000e+00> : vector<16x64xf32>
    %112 = tpu.matmul %110, %111, %cst_40 {dimension_numbers = #tpu.dot_dimension_numbers<[1], [0], [0], [1], [0, 0, 1, 1], [], []>} : vector<16x32xf32>, vector<32x64xf32>, vector<16x64xf32> -> vector<16x64xf32>
    %c0_41 = arith.constant 0 : index
    %c0_42 = arith.constant 0 : index
    %113 = vector.load %arg10[%c0_41, %c0_42] : memref<1x64xf32, #tpu.memory_space<vmem>>, vector<1x64xf32>
    %114 = vector.broadcast %113 : vector<1x64xf32> to vector<16x64xf32>
    %115 = arith.addf %112, %114 : vector<16x64xf32>
    %cst_43 = arith.constant 0.000000e+00 : f32
    %116 = vector.broadcast %cst_43 : f32 to vector<16x64xf32>
    %117 = arith.maximumf %115, %116 : vector<16x64xf32>
    %c0_44 = arith.constant 0 : index
    %c0_45 = arith.constant 0 : index
    %118 = vector.load %arg11[%c0_44, %c0_45] : memref<64x32xf32, #tpu.memory_space<vmem>>, vector<64x32xf32>
    %cst_46 = arith.constant dense<0.000000e+00> : vector<16x32xf32>
    %119 = tpu.matmul %117, %118, %cst_46 {dimension_numbers = #tpu.dot_dimension_numbers<[1], [0], [0], [1], [0, 0, 1, 1], [], []>} : vector<16x64xf32>, vector<64x32xf32>, vector<16x32xf32> -> vector<16x32xf32>
    %c0_47 = arith.constant 0 : index
    %c0_48 = arith.constant 0 : index
    %120 = vector.load %arg12[%c0_47, %c0_48] : memref<1x32xf32, #tpu.memory_space<vmem>>, vector<1x32xf32>
    %121 = vector.broadcast %120 : vector<1x32xf32> to vector<16x32xf32>
    %122 = arith.addf %119, %121 : vector<16x32xf32>
    %123 = arith.addf %110, %122 : vector<16x32xf32>
    %c0_49 = arith.constant 0 : index
    %c0_50 = arith.constant 0 : index
    %124 = vector.load %arg13[%c0_49, %c0_50] : memref<1x32xf32, #tpu.memory_space<vmem>>, vector<1x32xf32>
    %c0_51 = arith.constant 0 : index
    %c0_52 = arith.constant 0 : index
    %125 = vector.load %arg14[%c0_51, %c0_52] : memref<1x32xf32, #tpu.memory_space<vmem>>, vector<1x32xf32>
    %cst_53 = arith.constant dense<0.000000e+00> : vector<16xf32>
    %126 = vector.multi_reduction <add>, %123, %cst_53 [1] : vector<16x32xf32> to vector<16xf32>
    %127 = vector.shape_cast %126 : vector<16xf32> to vector<16x1xf32>
    %cst_54 = arith.constant 3.200000e+01 : f32
    %128 = vector.broadcast %cst_54 : f32 to vector<16x1xf32>
    %129 = arith.divf %127, %128 : vector<16x1xf32>
    %130 = vector.broadcast %129 : vector<16x1xf32> to vector<16x32xf32>
    %131 = arith.subf %123, %130 : vector<16x32xf32>
    %132 = arith.mulf %131, %131 : vector<16x32xf32>
    %cst_55 = arith.constant dense<0.000000e+00> : vector<16xf32>
    %133 = vector.multi_reduction <add>, %132, %cst_55 [1] : vector<16x32xf32> to vector<16xf32>
    %134 = vector.shape_cast %133 : vector<16xf32> to vector<16x1xf32>
    %cst_56 = arith.constant 3.200000e+01 : f32
    %135 = vector.broadcast %cst_56 : f32 to vector<16x1xf32>
    %136 = arith.divf %134, %135 : vector<16x1xf32>
    %137 = vector.broadcast %129 : vector<16x1xf32> to vector<16x32xf32>
    %138 = arith.subf %123, %137 : vector<16x32xf32>
    %cst_57 = arith.constant 9.99999974E-6 : f32
    %139 = vector.broadcast %cst_57 : f32 to vector<16x1xf32>
    %140 = arith.addf %136, %139 : vector<16x1xf32>
    %141 = math.rsqrt %140 : vector<16x1xf32>
    %142 = vector.broadcast %141 : vector<16x1xf32> to vector<16x32xf32>
    %143 = arith.mulf %138, %142 : vector<16x32xf32>
    %144 = vector.broadcast %124 : vector<1x32xf32> to vector<16x32xf32>
    %145 = arith.mulf %143, %144 : vector<16x32xf32>
    %146 = vector.broadcast %125 : vector<1x32xf32> to vector<16x32xf32>
    %147 = arith.addf %145, %146 : vector<16x32xf32>
    %c0_58 = arith.constant 0 : index
    %c0_59 = arith.constant 0 : index
    %148 = vector.load %arg15[%c0_58, %c0_59] : memref<32x96xf32, #tpu.memory_space<vmem>>, vector<32x96xf32>
    %cst_60 = arith.constant dense<0.000000e+00> : vector<16x96xf32>
    %149 = tpu.matmul %147, %148, %cst_60 {dimension_numbers = #tpu.dot_dimension_numbers<[1], [0], [0], [1], [0, 0, 1, 1], [], []>} : vector<16x32xf32>, vector<32x96xf32>, vector<16x96xf32> -> vector<16x96xf32>
    %c0_61 = arith.constant 0 : index
    %c0_62 = arith.constant 0 : index
    %150 = vector.load %arg16[%c0_61, %c0_62] : memref<1x96xf32, #tpu.memory_space<vmem>>, vector<1x96xf32>
    %151 = vector.broadcast %150 : vector<1x96xf32> to vector<16x96xf32>
    %152 = arith.addf %149, %151 : vector<16x96xf32>
    %153 = vector.extract_strided_slice %152 {offsets = [0, 0], sizes = [16, 32], strides = [1, 1]} : vector<16x96xf32> to vector<16x32xf32>
    %154 = vector.extract_strided_slice %152 {offsets = [0, 32], sizes = [16, 32], strides = [1, 1]} : vector<16x96xf32> to vector<16x32xf32>
    %155 = vector.extract_strided_slice %152 {offsets = [0, 64], sizes = [16, 32], strides = [1, 1]} : vector<16x96xf32> to vector<16x32xf32>
    %c0_63 = arith.constant 0 : index
    %c0_64 = arith.constant 0 : index
    %156 = vector.load %arg17[%c0_63, %c0_64] : memref<32x32xf32, #tpu.memory_space<vmem>>, vector<32x32xf32>
    %c0_65 = arith.constant 0 : index
    %c0_66 = arith.constant 0 : index
    %157 = vector.load %arg18[%c0_65, %c0_66] : memref<1x32xf32, #tpu.memory_space<vmem>>, vector<1x32xf32>
    %158 = vector.shape_cast %153 : vector<16x32xf32> to vector<2x8x32xf32>
    %159 = vector.shape_cast %154 : vector<16x32xf32> to vector<2x8x32xf32>
    %160 = vector.shape_cast %155 : vector<16x32xf32> to vector<2x8x32xf32>
    %161 = vector.extract_strided_slice %158 {offsets = [0, 0, 0], sizes = [2, 8, 8], strides = [1, 1, 1]} : vector<2x8x32xf32> to vector<2x8x8xf32>
    %162 = vector.extract_strided_slice %159 {offsets = [0, 0, 0], sizes = [2, 8, 8], strides = [1, 1, 1]} : vector<2x8x32xf32> to vector<2x8x8xf32>
    "tpu.trace_start"() <{level = 10 : i32, message = "bqd,bkd->bqk"}> : () -> ()
    %cst_67 = arith.constant dense<0.000000e+00> : vector<2x8x8xf32>
    %163 = tpu.matmul %161, %162, %cst_67 {dimension_numbers = #tpu.dot_dimension_numbers<[2], [2], [1], [1], [0, 0, 0, 1, 1, 1], [0], [0]>} : vector<2x8x8xf32>, vector<2x8x8xf32>, vector<2x8x8xf32> -> vector<2x8x8xf32>
    "tpu.trace_stop"() : () -> ()
    %cst_68 = arith.constant dense<0xFF800000> : vector<2x8xf32>
    %164 = vector.multi_reduction <maximumf>, %163, %cst_68 [2] : vector<2x8x8xf32> to vector<2x8xf32>
    %165 = vector.shape_cast %164 : vector<2x8xf32> to vector<2x8x1xf32>
    %166 = vector.broadcast %165 : vector<2x8x1xf32> to vector<2x8x8xf32>
    %167 = arith.subf %163, %166 : vector<2x8x8xf32>
    %168 = math.exp %167 : vector<2x8x8xf32>
    %cst_69 = arith.constant dense<0.000000e+00> : vector<2x8xf32>
    %169 = vector.multi_reduction <add>, %168, %cst_69 [2] : vector<2x8x8xf32> to vector<2x8xf32>
    %170 = vector.shape_cast %169 : vector<2x8xf32> to vector<2x8x1xf32>
    %171 = tpu.reciprocal %170 {approx = true} : vector<2x8x1xf32> -> vector<2x8x1xf32>
    %172 = vector.broadcast %171 : vector<2x8x1xf32> to vector<2x8x8xf32>
    %173 = arith.mulf %168, %172 : vector<2x8x8xf32>
    %174 = vector.extract_strided_slice %160 {offsets = [0, 0, 0], sizes = [2, 8, 8], strides = [1, 1, 1]} : vector<2x8x32xf32> to vector<2x8x8xf32>
    "tpu.trace_start"() <{level = 10 : i32, message = "bqk,bkd->bqd"}> : () -> ()
    %cst_70 = arith.constant dense<0.000000e+00> : vector<2x8x8xf32>
    %175 = tpu.matmul %173, %174, %cst_70 {dimension_numbers = #tpu.dot_dimension_numbers<[2], [1], [1], [2], [0, 0, 0, 1, 1, 2], [0], [0]>} : vector<2x8x8xf32>, vector<2x8x8xf32>, vector<2x8x8xf32> -> vector<2x8x8xf32>
    "tpu.trace_stop"() : () -> ()
    %176 = vector.extract_strided_slice %158 {offsets = [0, 0, 8], sizes = [2, 8, 8], strides = [1, 1, 1]} : vector<2x8x32xf32> to vector<2x8x8xf32>
    %177 = vector.extract_strided_slice %159 {offsets = [0, 0, 8], sizes = [2, 8, 8], strides = [1, 1, 1]} : vector<2x8x32xf32> to vector<2x8x8xf32>
    "tpu.trace_start"() <{level = 10 : i32, message = "bqd,bkd->bqk"}> : () -> ()
    %cst_71 = arith.constant dense<0.000000e+00> : vector<2x8x8xf32>
    %178 = tpu.matmul %176, %177, %cst_71 {dimension_numbers = #tpu.dot_dimension_numbers<[2], [2], [1], [1], [0, 0, 0, 1, 1, 1], [0], [0]>} : vector<2x8x8xf32>, vector<2x8x8xf32>, vector<2x8x8xf32> -> vector<2x8x8xf32>
    "tpu.trace_stop"() : () -> ()
    %cst_72 = arith.constant dense<0xFF800000> : vector<2x8xf32>
    %179 = vector.multi_reduction <maximumf>, %178, %cst_72 [2] : vector<2x8x8xf32> to vector<2x8xf32>
    %180 = vector.shape_cast %179 : vector<2x8xf32> to vector<2x8x1xf32>
    %181 = vector.broadcast %180 : vector<2x8x1xf32> to vector<2x8x8xf32>
    %182 = arith.subf %178, %181 : vector<2x8x8xf32>
    %183 = math.exp %182 : vector<2x8x8xf32>
    %cst_73 = arith.constant dense<0.000000e+00> : vector<2x8xf32>
    %184 = vector.multi_reduction <add>, %183, %cst_73 [2] : vector<2x8x8xf32> to vector<2x8xf32>
    %185 = vector.shape_cast %184 : vector<2x8xf32> to vector<2x8x1xf32>
    %186 = tpu.reciprocal %185 {approx = true} : vector<2x8x1xf32> -> vector<2x8x1xf32>
    %187 = vector.broadcast %186 : vector<2x8x1xf32> to vector<2x8x8xf32>
    %188 = arith.mulf %183, %187 : vector<2x8x8xf32>
    %189 = vector.extract_strided_slice %160 {offsets = [0, 0, 8], sizes = [2, 8, 8], strides = [1, 1, 1]} : vector<2x8x32xf32> to vector<2x8x8xf32>
    "tpu.trace_start"() <{level = 10 : i32, message = "bqk,bkd->bqd"}> : () -> ()
    %cst_74 = arith.constant dense<0.000000e+00> : vector<2x8x8xf32>
    %190 = tpu.matmul %188, %189, %cst_74 {dimension_numbers = #tpu.dot_dimension_numbers<[2], [1], [1], [2], [0, 0, 0, 1, 1, 2], [0], [0]>} : vector<2x8x8xf32>, vector<2x8x8xf32>, vector<2x8x8xf32> -> vector<2x8x8xf32>
    "tpu.trace_stop"() : () -> ()
    %191 = vector.extract_strided_slice %158 {offsets = [0, 0, 16], sizes = [2, 8, 8], strides = [1, 1, 1]} : vector<2x8x32xf32> to vector<2x8x8xf32>
    %192 = vector.extract_strided_slice %159 {offsets = [0, 0, 16], sizes = [2, 8, 8], strides = [1, 1, 1]} : vector<2x8x32xf32> to vector<2x8x8xf32>
    "tpu.trace_start"() <{level = 10 : i32, message = "bqd,bkd->bqk"}> : () -> ()
    %cst_75 = arith.constant dense<0.000000e+00> : vector<2x8x8xf32>
    %193 = tpu.matmul %191, %192, %cst_75 {dimension_numbers = #tpu.dot_dimension_numbers<[2], [2], [1], [1], [0, 0, 0, 1, 1, 1], [0], [0]>} : vector<2x8x8xf32>, vector<2x8x8xf32>, vector<2x8x8xf32> -> vector<2x8x8xf32>
    "tpu.trace_stop"() : () -> ()
    %cst_76 = arith.constant dense<0xFF800000> : vector<2x8xf32>
    %194 = vector.multi_reduction <maximumf>, %193, %cst_76 [2] : vector<2x8x8xf32> to vector<2x8xf32>
    %195 = vector.shape_cast %194 : vector<2x8xf32> to vector<2x8x1xf32>
    %196 = vector.broadcast %195 : vector<2x8x1xf32> to vector<2x8x8xf32>
    %197 = arith.subf %193, %196 : vector<2x8x8xf32>
    %198 = math.exp %197 : vector<2x8x8xf32>
    %cst_77 = arith.constant dense<0.000000e+00> : vector<2x8xf32>
    %199 = vector.multi_reduction <add>, %198, %cst_77 [2] : vector<2x8x8xf32> to vector<2x8xf32>
    %200 = vector.shape_cast %199 : vector<2x8xf32> to vector<2x8x1xf32>
    %201 = tpu.reciprocal %200 {approx = true} : vector<2x8x1xf32> -> vector<2x8x1xf32>
    %202 = vector.broadcast %201 : vector<2x8x1xf32> to vector<2x8x8xf32>
    %203 = arith.mulf %198, %202 : vector<2x8x8xf32>
    %204 = vector.extract_strided_slice %160 {offsets = [0, 0, 16], sizes = [2, 8, 8], strides = [1, 1, 1]} : vector<2x8x32xf32> to vector<2x8x8xf32>
    "tpu.trace_start"() <{level = 10 : i32, message = "bqk,bkd->bqd"}> : () -> ()
    %cst_78 = arith.constant dense<0.000000e+00> : vector<2x8x8xf32>
    %205 = tpu.matmul %203, %204, %cst_78 {dimension_numbers = #tpu.dot_dimension_numbers<[2], [1], [1], [2], [0, 0, 0, 1, 1, 2], [0], [0]>} : vector<2x8x8xf32>, vector<2x8x8xf32>, vector<2x8x8xf32> -> vector<2x8x8xf32>
    "tpu.trace_stop"() : () -> ()
    %206 = vector.extract_strided_slice %158 {offsets = [0, 0, 24], sizes = [2, 8, 8], strides = [1, 1, 1]} : vector<2x8x32xf32> to vector<2x8x8xf32>
    %207 = vector.extract_strided_slice %159 {offsets = [0, 0, 24], sizes = [2, 8, 8], strides = [1, 1, 1]} : vector<2x8x32xf32> to vector<2x8x8xf32>
    "tpu.trace_start"() <{level = 10 : i32, message = "bqd,bkd->bqk"}> : () -> ()
    %cst_79 = arith.constant dense<0.000000e+00> : vector<2x8x8xf32>
    %208 = tpu.matmul %206, %207, %cst_79 {dimension_numbers = #tpu.dot_dimension_numbers<[2], [2], [1], [1], [0, 0, 0, 1, 1, 1], [0], [0]>} : vector<2x8x8xf32>, vector<2x8x8xf32>, vector<2x8x8xf32> -> vector<2x8x8xf32>
    "tpu.trace_stop"() : () -> ()
    %cst_80 = arith.constant dense<0xFF800000> : vector<2x8xf32>
    %209 = vector.multi_reduction <maximumf>, %208, %cst_80 [2] : vector<2x8x8xf32> to vector<2x8xf32>
    %210 = vector.shape_cast %209 : vector<2x8xf32> to vector<2x8x1xf32>
    %211 = vector.broadcast %210 : vector<2x8x1xf32> to vector<2x8x8xf32>
    %212 = arith.subf %208, %211 : vector<2x8x8xf32>
    %213 = math.exp %212 : vector<2x8x8xf32>
    %cst_81 = arith.constant dense<0.000000e+00> : vector<2x8xf32>
    %214 = vector.multi_reduction <add>, %213, %cst_81 [2] : vector<2x8x8xf32> to vector<2x8xf32>
    %215 = vector.shape_cast %214 : vector<2x8xf32> to vector<2x8x1xf32>
    %216 = tpu.reciprocal %215 {approx = true} : vector<2x8x1xf32> -> vector<2x8x1xf32>
    %217 = vector.broadcast %216 : vector<2x8x1xf32> to vector<2x8x8xf32>
    %218 = arith.mulf %213, %217 : vector<2x8x8xf32>
    %219 = vector.extract_strided_slice %160 {offsets = [0, 0, 24], sizes = [2, 8, 8], strides = [1, 1, 1]} : vector<2x8x32xf32> to vector<2x8x8xf32>
    "tpu.trace_start"() <{level = 10 : i32, message = "bqk,bkd->bqd"}> : () -> ()
    %cst_82 = arith.constant dense<0.000000e+00> : vector<2x8x8xf32>
    %220 = tpu.matmul %218, %219, %cst_82 {dimension_numbers = #tpu.dot_dimension_numbers<[2], [1], [1], [2], [0, 0, 0, 1, 1, 2], [0], [0]>} : vector<2x8x8xf32>, vector<2x8x8xf32>, vector<2x8x8xf32> -> vector<2x8x8xf32>
    "tpu.trace_stop"() : () -> ()
    %221 = tpu.concatenate %175, %190, %205, %220 in 2 : vector<2x8x8xf32>, vector<2x8x8xf32>, vector<2x8x8xf32>, vector<2x8x8xf32> -> vector<2x8x32xf32>
    %222 = vector.shape_cast %221 : vector<2x8x32xf32> to vector<16x32xf32>
    %cst_83 = arith.constant dense<0.000000e+00> : vector<16x32xf32>
    %223 = tpu.matmul %222, %156, %cst_83 {dimension_numbers = #tpu.dot_dimension_numbers<[1], [0], [0], [1], [0, 0, 1, 1], [], []>} : vector<16x32xf32>, vector<32x32xf32>, vector<16x32xf32> -> vector<16x32xf32>
    %224 = vector.broadcast %157 : vector<1x32xf32> to vector<16x32xf32>
    %225 = arith.addf %223, %224 : vector<16x32xf32>
    %226 = arith.addf %147, %225 : vector<16x32xf32>
    %c0_84 = arith.constant 0 : index
    %c0_85 = arith.constant 0 : index
    %227 = vector.load %arg19[%c0_84, %c0_85] : memref<1x32xf32, #tpu.memory_space<vmem>>, vector<1x32xf32>
    %c0_86 = arith.constant 0 : index
    %c0_87 = arith.constant 0 : index
    %228 = vector.load %arg20[%c0_86, %c0_87] : memref<1x32xf32, #tpu.memory_space<vmem>>, vector<1x32xf32>
    %cst_88 = arith.constant dense<0.000000e+00> : vector<16xf32>
    %229 = vector.multi_reduction <add>, %226, %cst_88 [1] : vector<16x32xf32> to vector<16xf32>
    %230 = vector.shape_cast %229 : vector<16xf32> to vector<16x1xf32>
    %cst_89 = arith.constant 3.200000e+01 : f32
    %231 = vector.broadcast %cst_89 : f32 to vector<16x1xf32>
    %232 = arith.divf %230, %231 : vector<16x1xf32>
    %233 = vector.broadcast %232 : vector<16x1xf32> to vector<16x32xf32>
    %234 = arith.subf %226, %233 : vector<16x32xf32>
    %235 = arith.mulf %234, %234 : vector<16x32xf32>
    %cst_90 = arith.constant dense<0.000000e+00> : vector<16xf32>
    %236 = vector.multi_reduction <add>, %235, %cst_90 [1] : vector<16x32xf32> to vector<16xf32>
    %237 = vector.shape_cast %236 : vector<16xf32> to vector<16x1xf32>
    %cst_91 = arith.constant 3.200000e+01 : f32
    %238 = vector.broadcast %cst_91 : f32 to vector<16x1xf32>
    %239 = arith.divf %237, %238 : vector<16x1xf32>
    %240 = vector.broadcast %232 : vector<16x1xf32> to vector<16x32xf32>
    %241 = arith.subf %226, %240 : vector<16x32xf32>
    %cst_92 = arith.constant 9.99999974E-6 : f32
    %242 = vector.broadcast %cst_92 : f32 to vector<16x1xf32>
    %243 = arith.addf %239, %242 : vector<16x1xf32>
    %244 = math.rsqrt %243 : vector<16x1xf32>
    %245 = vector.broadcast %244 : vector<16x1xf32> to vector<16x32xf32>
    %246 = arith.mulf %241, %245 : vector<16x32xf32>
    %247 = vector.broadcast %227 : vector<1x32xf32> to vector<16x32xf32>
    %248 = arith.mulf %246, %247 : vector<16x32xf32>
    %249 = vector.broadcast %228 : vector<1x32xf32> to vector<16x32xf32>
    %250 = arith.addf %248, %249 : vector<16x32xf32>
    %c0_93 = arith.constant 0 : index
    %c0_94 = arith.constant 0 : index
    %251 = vector.load %arg21[%c0_93, %c0_94] : memref<32x64xf32, #tpu.memory_space<vmem>>, vector<32x64xf32>
    %cst_95 = arith.constant dense<0.000000e+00> : vector<16x64xf32>
    %252 = tpu.matmul %250, %251, %cst_95 {dimension_numbers = #tpu.dot_dimension_numbers<[1], [0], [0], [1], [0, 0, 1, 1], [], []>} : vector<16x32xf32>, vector<32x64xf32>, vector<16x64xf32> -> vector<16x64xf32>
    %c0_96 = arith.constant 0 : index
    %c0_97 = arith.constant 0 : index
    %253 = vector.load %arg22[%c0_96, %c0_97] : memref<1x64xf32, #tpu.memory_space<vmem>>, vector<1x64xf32>
    %254 = vector.broadcast %253 : vector<1x64xf32> to vector<16x64xf32>
    %255 = arith.addf %252, %254 : vector<16x64xf32>
    %cst_98 = arith.constant 0.000000e+00 : f32
    %256 = vector.broadcast %cst_98 : f32 to vector<16x64xf32>
    %257 = arith.maximumf %255, %256 : vector<16x64xf32>
    %c0_99 = arith.constant 0 : index
    %c0_100 = arith.constant 0 : index
    %258 = vector.load %arg23[%c0_99, %c0_100] : memref<64x32xf32, #tpu.memory_space<vmem>>, vector<64x32xf32>
    %cst_101 = arith.constant dense<0.000000e+00> : vector<16x32xf32>
    %259 = tpu.matmul %257, %258, %cst_101 {dimension_numbers = #tpu.dot_dimension_numbers<[1], [0], [0], [1], [0, 0, 1, 1], [], []>} : vector<16x64xf32>, vector<64x32xf32>, vector<16x32xf32> -> vector<16x32xf32>
    %c0_102 = arith.constant 0 : index
    %c0_103 = arith.constant 0 : index
    %260 = vector.load %arg24[%c0_102, %c0_103] : memref<1x32xf32, #tpu.memory_space<vmem>>, vector<1x32xf32>
    %261 = vector.broadcast %260 : vector<1x32xf32> to vector<16x32xf32>
    %262 = arith.addf %259, %261 : vector<16x32xf32>
    %263 = arith.addf %250, %262 : vector<16x32xf32>
    %c0_104 = arith.constant 0 : index
    %c0_105 = arith.constant 0 : index
    %264 = vector.load %arg25[%c0_104, %c0_105] : memref<1x32xf32, #tpu.memory_space<vmem>>, vector<1x32xf32>
    %c0_106 = arith.constant 0 : index
    %c0_107 = arith.constant 0 : index
    %265 = vector.load %arg26[%c0_106, %c0_107] : memref<1x32xf32, #tpu.memory_space<vmem>>, vector<1x32xf32>
    %cst_108 = arith.constant dense<0.000000e+00> : vector<16xf32>
    %266 = vector.multi_reduction <add>, %263, %cst_108 [1] : vector<16x32xf32> to vector<16xf32>
    %267 = vector.shape_cast %266 : vector<16xf32> to vector<16x1xf32>
    %cst_109 = arith.constant 3.200000e+01 : f32
    %268 = vector.broadcast %cst_109 : f32 to vector<16x1xf32>
    %269 = arith.divf %267, %268 : vector<16x1xf32>
    %270 = vector.broadcast %269 : vector<16x1xf32> to vector<16x32xf32>
    %271 = arith.subf %263, %270 : vector<16x32xf32>
    %272 = arith.mulf %271, %271 : vector<16x32xf32>
    %cst_110 = arith.constant dense<0.000000e+00> : vector<16xf32>
    %273 = vector.multi_reduction <add>, %272, %cst_110 [1] : vector<16x32xf32> to vector<16xf32>
    %274 = vector.shape_cast %273 : vector<16xf32> to vector<16x1xf32>
    %cst_111 = arith.constant 3.200000e+01 : f32
    %275 = vector.broadcast %cst_111 : f32 to vector<16x1xf32>
    %276 = arith.divf %274, %275 : vector<16x1xf32>
    %277 = vector.broadcast %269 : vector<16x1xf32> to vector<16x32xf32>
    %278 = arith.subf %263, %277 : vector<16x32xf32>
    %cst_112 = arith.constant 9.99999974E-6 : f32
    %279 = vector.broadcast %cst_112 : f32 to vector<16x1xf32>
    %280 = arith.addf %276, %279 : vector<16x1xf32>
    %281 = math.rsqrt %280 : vector<16x1xf32>
    %282 = vector.broadcast %281 : vector<16x1xf32> to vector<16x32xf32>
    %283 = arith.mulf %278, %282 : vector<16x32xf32>
    %284 = vector.broadcast %264 : vector<1x32xf32> to vector<16x32xf32>
    %285 = arith.mulf %283, %284 : vector<16x32xf32>
    %286 = vector.broadcast %265 : vector<1x32xf32> to vector<16x32xf32>
    %287 = arith.addf %285, %286 : vector<16x32xf32>
    %c0_113 = arith.constant 0 : index
    %c0_114 = arith.constant 0 : index
    %288 = vector.load %arg27[%c0_113, %c0_114] : memref<1x32xf32, #tpu.memory_space<vmem>>, vector<1x32xf32>
    %c0_115 = arith.constant 0 : index
    %c0_116 = arith.constant 0 : index
    %289 = vector.load %arg28[%c0_115, %c0_116] : memref<1x32xf32, #tpu.memory_space<vmem>>, vector<1x32xf32>
    %cst_117 = arith.constant dense<0.000000e+00> : vector<16xf32>
    %290 = vector.multi_reduction <add>, %287, %cst_117 [1] : vector<16x32xf32> to vector<16xf32>
    %291 = vector.shape_cast %290 : vector<16xf32> to vector<16x1xf32>
    %cst_118 = arith.constant 3.200000e+01 : f32
    %292 = vector.broadcast %cst_118 : f32 to vector<16x1xf32>
    %293 = arith.divf %291, %292 : vector<16x1xf32>
    %294 = vector.broadcast %293 : vector<16x1xf32> to vector<16x32xf32>
    %295 = arith.subf %287, %294 : vector<16x32xf32>
    %296 = arith.mulf %295, %295 : vector<16x32xf32>
    %cst_119 = arith.constant dense<0.000000e+00> : vector<16xf32>
    %297 = vector.multi_reduction <add>, %296, %cst_119 [1] : vector<16x32xf32> to vector<16xf32>
    %298 = vector.shape_cast %297 : vector<16xf32> to vector<16x1xf32>
    %cst_120 = arith.constant 3.200000e+01 : f32
    %299 = vector.broadcast %cst_120 : f32 to vector<16x1xf32>
    %300 = arith.divf %298, %299 : vector<16x1xf32>
    %301 = vector.broadcast %293 : vector<16x1xf32> to vector<16x32xf32>
    %302 = arith.subf %287, %301 : vector<16x32xf32>
    %cst_121 = arith.constant 9.99999974E-6 : f32
    %303 = vector.broadcast %cst_121 : f32 to vector<16x1xf32>
    %304 = arith.addf %300, %303 : vector<16x1xf32>
    %305 = math.rsqrt %304 : vector<16x1xf32>
    %306 = vector.broadcast %305 : vector<16x1xf32> to vector<16x32xf32>
    %307 = arith.mulf %302, %306 : vector<16x32xf32>
    %308 = vector.broadcast %288 : vector<1x32xf32> to vector<16x32xf32>
    %309 = arith.mulf %307, %308 : vector<16x32xf32>
    %310 = vector.broadcast %289 : vector<1x32xf32> to vector<16x32xf32>
    %311 = arith.addf %309, %310 : vector<16x32xf32>
    %c0_122 = arith.constant 0 : index
    %c0_123 = arith.constant 0 : index
    %312 = vector.load %arg29[%c0_122, %c0_123] : memref<32x96xf32, #tpu.memory_space<vmem>>, vector<32x96xf32>
    %cst_124 = arith.constant dense<0.000000e+00> : vector<16x96xf32>
    %313 = tpu.matmul %7, %312, %cst_124 {dimension_numbers = #tpu.dot_dimension_numbers<[1], [0], [0], [1], [0, 0, 1, 1], [], []>} : vector<16x32xf32>, vector<32x96xf32>, vector<16x96xf32> -> vector<16x96xf32>
    %c0_125 = arith.constant 0 : index
    %c0_126 = arith.constant 0 : index
    %314 = vector.load %arg30[%c0_125, %c0_126] : memref<1x96xf32, #tpu.memory_space<vmem>>, vector<1x96xf32>
    %315 = vector.broadcast %314 : vector<1x96xf32> to vector<16x96xf32>
    %316 = arith.addf %313, %315 : vector<16x96xf32>
    %317 = vector.extract_strided_slice %316 {offsets = [0, 0], sizes = [16, 32], strides = [1, 1]} : vector<16x96xf32> to vector<16x32xf32>
    %318 = vector.extract_strided_slice %316 {offsets = [0, 32], sizes = [16, 32], strides = [1, 1]} : vector<16x96xf32> to vector<16x32xf32>
    %319 = vector.extract_strided_slice %316 {offsets = [0, 64], sizes = [16, 32], strides = [1, 1]} : vector<16x96xf32> to vector<16x32xf32>
    %c0_127 = arith.constant 0 : index
    %c0_128 = arith.constant 0 : index
    %320 = vector.load %arg31[%c0_127, %c0_128] : memref<32x32xf32, #tpu.memory_space<vmem>>, vector<32x32xf32>
    %c0_129 = arith.constant 0 : index
    %c0_130 = arith.constant 0 : index
    %321 = vector.load %arg32[%c0_129, %c0_130] : memref<1x32xf32, #tpu.memory_space<vmem>>, vector<1x32xf32>
    %322 = vector.shape_cast %317 : vector<16x32xf32> to vector<2x8x32xf32>
    %323 = vector.shape_cast %318 : vector<16x32xf32> to vector<2x8x32xf32>
    %324 = vector.shape_cast %319 : vector<16x32xf32> to vector<2x8x32xf32>
    %325 = vector.extract_strided_slice %322 {offsets = [0, 0, 0], sizes = [2, 8, 8], strides = [1, 1, 1]} : vector<2x8x32xf32> to vector<2x8x8xf32>
    %326 = vector.extract_strided_slice %323 {offsets = [0, 0, 0], sizes = [2, 8, 8], strides = [1, 1, 1]} : vector<2x8x32xf32> to vector<2x8x8xf32>
    "tpu.trace_start"() <{level = 10 : i32, message = "bqd,bkd->bqk"}> : () -> ()
    %cst_131 = arith.constant dense<0.000000e+00> : vector<2x8x8xf32>
    %327 = tpu.matmul %325, %326, %cst_131 {dimension_numbers = #tpu.dot_dimension_numbers<[2], [2], [1], [1], [0, 0, 0, 1, 1, 1], [0], [0]>} : vector<2x8x8xf32>, vector<2x8x8xf32>, vector<2x8x8xf32> -> vector<2x8x8xf32>
    "tpu.trace_stop"() : () -> ()
    %cst_132 = arith.constant dense<0xFF800000> : vector<2x8xf32>
    %328 = vector.multi_reduction <maximumf>, %327, %cst_132 [2] : vector<2x8x8xf32> to vector<2x8xf32>
    %329 = vector.shape_cast %328 : vector<2x8xf32> to vector<2x8x1xf32>
    %330 = vector.broadcast %329 : vector<2x8x1xf32> to vector<2x8x8xf32>
    %331 = arith.subf %327, %330 : vector<2x8x8xf32>
    %332 = math.exp %331 : vector<2x8x8xf32>
    %cst_133 = arith.constant dense<0.000000e+00> : vector<2x8xf32>
    %333 = vector.multi_reduction <add>, %332, %cst_133 [2] : vector<2x8x8xf32> to vector<2x8xf32>
    %334 = vector.shape_cast %333 : vector<2x8xf32> to vector<2x8x1xf32>
    %335 = tpu.reciprocal %334 {approx = true} : vector<2x8x1xf32> -> vector<2x8x1xf32>
    %336 = vector.broadcast %335 : vector<2x8x1xf32> to vector<2x8x8xf32>
    %337 = arith.mulf %332, %336 : vector<2x8x8xf32>
    %338 = vector.extract_strided_slice %324 {offsets = [0, 0, 0], sizes = [2, 8, 8], strides = [1, 1, 1]} : vector<2x8x32xf32> to vector<2x8x8xf32>
    "tpu.trace_start"() <{level = 10 : i32, message = "bqk,bkd->bqd"}> : () -> ()
    %cst_134 = arith.constant dense<0.000000e+00> : vector<2x8x8xf32>
    %339 = tpu.matmul %337, %338, %cst_134 {dimension_numbers = #tpu.dot_dimension_numbers<[2], [1], [1], [2], [0, 0, 0, 1, 1, 2], [0], [0]>} : vector<2x8x8xf32>, vector<2x8x8xf32>, vector<2x8x8xf32> -> vector<2x8x8xf32>
    "tpu.trace_stop"() : () -> ()
    %340 = vector.extract_strided_slice %322 {offsets = [0, 0, 8], sizes = [2, 8, 8], strides = [1, 1, 1]} : vector<2x8x32xf32> to vector<2x8x8xf32>
    %341 = vector.extract_strided_slice %323 {offsets = [0, 0, 8], sizes = [2, 8, 8], strides = [1, 1, 1]} : vector<2x8x32xf32> to vector<2x8x8xf32>
    "tpu.trace_start"() <{level = 10 : i32, message = "bqd,bkd->bqk"}> : () -> ()
    %cst_135 = arith.constant dense<0.000000e+00> : vector<2x8x8xf32>
    %342 = tpu.matmul %340, %341, %cst_135 {dimension_numbers = #tpu.dot_dimension_numbers<[2], [2], [1], [1], [0, 0, 0, 1, 1, 1], [0], [0]>} : vector<2x8x8xf32>, vector<2x8x8xf32>, vector<2x8x8xf32> -> vector<2x8x8xf32>
    "tpu.trace_stop"() : () -> ()
    %cst_136 = arith.constant dense<0xFF800000> : vector<2x8xf32>
    %343 = vector.multi_reduction <maximumf>, %342, %cst_136 [2] : vector<2x8x8xf32> to vector<2x8xf32>
    %344 = vector.shape_cast %343 : vector<2x8xf32> to vector<2x8x1xf32>
    %345 = vector.broadcast %344 : vector<2x8x1xf32> to vector<2x8x8xf32>
    %346 = arith.subf %342, %345 : vector<2x8x8xf32>
    %347 = math.exp %346 : vector<2x8x8xf32>
    %cst_137 = arith.constant dense<0.000000e+00> : vector<2x8xf32>
    %348 = vector.multi_reduction <add>, %347, %cst_137 [2] : vector<2x8x8xf32> to vector<2x8xf32>
    %349 = vector.shape_cast %348 : vector<2x8xf32> to vector<2x8x1xf32>
    %350 = tpu.reciprocal %349 {approx = true} : vector<2x8x1xf32> -> vector<2x8x1xf32>
    %351 = vector.broadcast %350 : vector<2x8x1xf32> to vector<2x8x8xf32>
    %352 = arith.mulf %347, %351 : vector<2x8x8xf32>
    %353 = vector.extract_strided_slice %324 {offsets = [0, 0, 8], sizes = [2, 8, 8], strides = [1, 1, 1]} : vector<2x8x32xf32> to vector<2x8x8xf32>
    "tpu.trace_start"() <{level = 10 : i32, message = "bqk,bkd->bqd"}> : () -> ()
    %cst_138 = arith.constant dense<0.000000e+00> : vector<2x8x8xf32>
    %354 = tpu.matmul %352, %353, %cst_138 {dimension_numbers = #tpu.dot_dimension_numbers<[2], [1], [1], [2], [0, 0, 0, 1, 1, 2], [0], [0]>} : vector<2x8x8xf32>, vector<2x8x8xf32>, vector<2x8x8xf32> -> vector<2x8x8xf32>
    "tpu.trace_stop"() : () -> ()
    %355 = vector.extract_strided_slice %322 {offsets = [0, 0, 16], sizes = [2, 8, 8], strides = [1, 1, 1]} : vector<2x8x32xf32> to vector<2x8x8xf32>
    %356 = vector.extract_strided_slice %323 {offsets = [0, 0, 16], sizes = [2, 8, 8], strides = [1, 1, 1]} : vector<2x8x32xf32> to vector<2x8x8xf32>
    "tpu.trace_start"() <{level = 10 : i32, message = "bqd,bkd->bqk"}> : () -> ()
    %cst_139 = arith.constant dense<0.000000e+00> : vector<2x8x8xf32>
    %357 = tpu.matmul %355, %356, %cst_139 {dimension_numbers = #tpu.dot_dimension_numbers<[2], [2], [1], [1], [0, 0, 0, 1, 1, 1], [0], [0]>} : vector<2x8x8xf32>, vector<2x8x8xf32>, vector<2x8x8xf32> -> vector<2x8x8xf32>
    "tpu.trace_stop"() : () -> ()
    %cst_140 = arith.constant dense<0xFF800000> : vector<2x8xf32>
    %358 = vector.multi_reduction <maximumf>, %357, %cst_140 [2] : vector<2x8x8xf32> to vector<2x8xf32>
    %359 = vector.shape_cast %358 : vector<2x8xf32> to vector<2x8x1xf32>
    %360 = vector.broadcast %359 : vector<2x8x1xf32> to vector<2x8x8xf32>
    %361 = arith.subf %357, %360 : vector<2x8x8xf32>
    %362 = math.exp %361 : vector<2x8x8xf32>
    %cst_141 = arith.constant dense<0.000000e+00> : vector<2x8xf32>
    %363 = vector.multi_reduction <add>, %362, %cst_141 [2] : vector<2x8x8xf32> to vector<2x8xf32>
    %364 = vector.shape_cast %363 : vector<2x8xf32> to vector<2x8x1xf32>
    %365 = tpu.reciprocal %364 {approx = true} : vector<2x8x1xf32> -> vector<2x8x1xf32>
    %366 = vector.broadcast %365 : vector<2x8x1xf32> to vector<2x8x8xf32>
    %367 = arith.mulf %362, %366 : vector<2x8x8xf32>
    %368 = vector.extract_strided_slice %324 {offsets = [0, 0, 16], sizes = [2, 8, 8], strides = [1, 1, 1]} : vector<2x8x32xf32> to vector<2x8x8xf32>
    "tpu.trace_start"() <{level = 10 : i32, message = "bqk,bkd->bqd"}> : () -> ()
    %cst_142 = arith.constant dense<0.000000e+00> : vector<2x8x8xf32>
    %369 = tpu.matmul %367, %368, %cst_142 {dimension_numbers = #tpu.dot_dimension_numbers<[2], [1], [1], [2], [0, 0, 0, 1, 1, 2], [0], [0]>} : vector<2x8x8xf32>, vector<2x8x8xf32>, vector<2x8x8xf32> -> vector<2x8x8xf32>
    "tpu.trace_stop"() : () -> ()
    %370 = vector.extract_strided_slice %322 {offsets = [0, 0, 24], sizes = [2, 8, 8], strides = [1, 1, 1]} : vector<2x8x32xf32> to vector<2x8x8xf32>
    %371 = vector.extract_strided_slice %323 {offsets = [0, 0, 24], sizes = [2, 8, 8], strides = [1, 1, 1]} : vector<2x8x32xf32> to vector<2x8x8xf32>
    "tpu.trace_start"() <{level = 10 : i32, message = "bqd,bkd->bqk"}> : () -> ()
    %cst_143 = arith.constant dense<0.000000e+00> : vector<2x8x8xf32>
    %372 = tpu.matmul %370, %371, %cst_143 {dimension_numbers = #tpu.dot_dimension_numbers<[2], [2], [1], [1], [0, 0, 0, 1, 1, 1], [0], [0]>} : vector<2x8x8xf32>, vector<2x8x8xf32>, vector<2x8x8xf32> -> vector<2x8x8xf32>
    "tpu.trace_stop"() : () -> ()
    %cst_144 = arith.constant dense<0xFF800000> : vector<2x8xf32>
    %373 = vector.multi_reduction <maximumf>, %372, %cst_144 [2] : vector<2x8x8xf32> to vector<2x8xf32>
    %374 = vector.shape_cast %373 : vector<2x8xf32> to vector<2x8x1xf32>
    %375 = vector.broadcast %374 : vector<2x8x1xf32> to vector<2x8x8xf32>
    %376 = arith.subf %372, %375 : vector<2x8x8xf32>
    %377 = math.exp %376 : vector<2x8x8xf32>
    %cst_145 = arith.constant dense<0.000000e+00> : vector<2x8xf32>
    %378 = vector.multi_reduction <add>, %377, %cst_145 [2] : vector<2x8x8xf32> to vector<2x8xf32>
    %379 = vector.shape_cast %378 : vector<2x8xf32> to vector<2x8x1xf32>
    %380 = tpu.reciprocal %379 {approx = true} : vector<2x8x1xf32> -> vector<2x8x1xf32>
    %381 = vector.broadcast %380 : vector<2x8x1xf32> to vector<2x8x8xf32>
    %382 = arith.mulf %377, %381 : vector<2x8x8xf32>
    %383 = vector.extract_strided_slice %324 {offsets = [0, 0, 24], sizes = [2, 8, 8], strides = [1, 1, 1]} : vector<2x8x32xf32> to vector<2x8x8xf32>
    "tpu.trace_start"() <{level = 10 : i32, message = "bqk,bkd->bqd"}> : () -> ()
    %cst_146 = arith.constant dense<0.000000e+00> : vector<2x8x8xf32>
    %384 = tpu.matmul %382, %383, %cst_146 {dimension_numbers = #tpu.dot_dimension_numbers<[2], [1], [1], [2], [0, 0, 0, 1, 1, 2], [0], [0]>} : vector<2x8x8xf32>, vector<2x8x8xf32>, vector<2x8x8xf32> -> vector<2x8x8xf32>
    "tpu.trace_stop"() : () -> ()
    %385 = tpu.concatenate %339, %354, %369, %384 in 2 : vector<2x8x8xf32>, vector<2x8x8xf32>, vector<2x8x8xf32>, vector<2x8x8xf32> -> vector<2x8x32xf32>
    %386 = vector.shape_cast %385 : vector<2x8x32xf32> to vector<16x32xf32>
    %cst_147 = arith.constant dense<0.000000e+00> : vector<16x32xf32>
    %387 = tpu.matmul %386, %320, %cst_147 {dimension_numbers = #tpu.dot_dimension_numbers<[1], [0], [0], [1], [0, 0, 1, 1], [], []>} : vector<16x32xf32>, vector<32x32xf32>, vector<16x32xf32> -> vector<16x32xf32>
    %388 = vector.broadcast %321 : vector<1x32xf32> to vector<16x32xf32>
    %389 = arith.addf %387, %388 : vector<16x32xf32>
    %390 = arith.addf %7, %389 : vector<16x32xf32>
    %c0_148 = arith.constant 0 : index
    %c0_149 = arith.constant 0 : index
    %391 = vector.load %arg33[%c0_148, %c0_149] : memref<1x32xf32, #tpu.memory_space<vmem>>, vector<1x32xf32>
    %c0_150 = arith.constant 0 : index
    %c0_151 = arith.constant 0 : index
    %392 = vector.load %arg34[%c0_150, %c0_151] : memref<1x32xf32, #tpu.memory_space<vmem>>, vector<1x32xf32>
    %cst_152 = arith.constant dense<0.000000e+00> : vector<16xf32>
    %393 = vector.multi_reduction <add>, %390, %cst_152 [1] : vector<16x32xf32> to vector<16xf32>
    %394 = vector.shape_cast %393 : vector<16xf32> to vector<16x1xf32>
    %cst_153 = arith.constant 3.200000e+01 : f32
    %395 = vector.broadcast %cst_153 : f32 to vector<16x1xf32>
    %396 = arith.divf %394, %395 : vector<16x1xf32>
    %397 = vector.broadcast %396 : vector<16x1xf32> to vector<16x32xf32>
    %398 = arith.subf %390, %397 : vector<16x32xf32>
    %399 = arith.mulf %398, %398 : vector<16x32xf32>
    %cst_154 = arith.constant dense<0.000000e+00> : vector<16xf32>
    %400 = vector.multi_reduction <add>, %399, %cst_154 [1] : vector<16x32xf32> to vector<16xf32>
    %401 = vector.shape_cast %400 : vector<16xf32> to vector<16x1xf32>
    %cst_155 = arith.constant 3.200000e+01 : f32
    %402 = vector.broadcast %cst_155 : f32 to vector<16x1xf32>
    %403 = arith.divf %401, %402 : vector<16x1xf32>
    %404 = vector.broadcast %396 : vector<16x1xf32> to vector<16x32xf32>
    %405 = arith.subf %390, %404 : vector<16x32xf32>
    %cst_156 = arith.constant 9.99999974E-6 : f32
    %406 = vector.broadcast %cst_156 : f32 to vector<16x1xf32>
    %407 = arith.addf %403, %406 : vector<16x1xf32>
    %408 = math.rsqrt %407 : vector<16x1xf32>
    %409 = vector.broadcast %408 : vector<16x1xf32> to vector<16x32xf32>
    %410 = arith.mulf %405, %409 : vector<16x32xf32>
    %411 = vector.broadcast %391 : vector<1x32xf32> to vector<16x32xf32>
    %412 = arith.mulf %410, %411 : vector<16x32xf32>
    %413 = vector.broadcast %392 : vector<1x32xf32> to vector<16x32xf32>
    %414 = arith.addf %412, %413 : vector<16x32xf32>
    %c0_157 = arith.constant 0 : index
    %c0_158 = arith.constant 0 : index
    %415 = vector.load %arg35[%c0_157, %c0_158] : memref<32x32xf32, #tpu.memory_space<vmem>>, vector<32x32xf32>
    %cst_159 = arith.constant dense<0.000000e+00> : vector<16x32xf32>
    %416 = tpu.matmul %414, %415, %cst_159 {dimension_numbers = #tpu.dot_dimension_numbers<[1], [0], [0], [1], [0, 0, 1, 1], [], []>} : vector<16x32xf32>, vector<32x32xf32>, vector<16x32xf32> -> vector<16x32xf32>
    %c0_160 = arith.constant 0 : index
    %c0_161 = arith.constant 0 : index
    %417 = vector.load %arg36[%c0_160, %c0_161] : memref<1x32xf32, #tpu.memory_space<vmem>>, vector<1x32xf32>
    %418 = vector.broadcast %417 : vector<1x32xf32> to vector<16x32xf32>
    %419 = arith.addf %416, %418 : vector<16x32xf32>
    %c0_162 = arith.constant 0 : index
    %c0_163 = arith.constant 0 : index
    %420 = vector.load %arg37[%c0_162, %c0_163] : memref<32x64xf32, #tpu.memory_space<vmem>>, vector<32x64xf32>
    %cst_164 = arith.constant dense<0.000000e+00> : vector<16x64xf32>
    %421 = tpu.matmul %311, %420, %cst_164 {dimension_numbers = #tpu.dot_dimension_numbers<[1], [0], [0], [1], [0, 0, 1, 1], [], []>} : vector<16x32xf32>, vector<32x64xf32>, vector<16x64xf32> -> vector<16x64xf32>
    %c0_165 = arith.constant 0 : index
    %c0_166 = arith.constant 0 : index
    %422 = vector.load %arg38[%c0_165, %c0_166] : memref<1x64xf32, #tpu.memory_space<vmem>>, vector<1x64xf32>
    %423 = vector.broadcast %422 : vector<1x64xf32> to vector<16x64xf32>
    %424 = arith.addf %421, %423 : vector<16x64xf32>
    %425 = vector.extract_strided_slice %424 {offsets = [0, 0], sizes = [16, 32], strides = [1, 1]} : vector<16x64xf32> to vector<16x32xf32>
    %426 = vector.extract_strided_slice %424 {offsets = [0, 32], sizes = [16, 32], strides = [1, 1]} : vector<16x64xf32> to vector<16x32xf32>
    %c0_167 = arith.constant 0 : index
    %c0_168 = arith.constant 0 : index
    %427 = vector.load %arg39[%c0_167, %c0_168] : memref<32x32xf32, #tpu.memory_space<vmem>>, vector<32x32xf32>
    %c0_169 = arith.constant 0 : index
    %c0_170 = arith.constant 0 : index
    %428 = vector.load %arg40[%c0_169, %c0_170] : memref<1x32xf32, #tpu.memory_space<vmem>>, vector<1x32xf32>
    %429 = vector.shape_cast %419 : vector<16x32xf32> to vector<2x8x32xf32>
    %430 = vector.shape_cast %425 : vector<16x32xf32> to vector<2x8x32xf32>
    %431 = vector.shape_cast %426 : vector<16x32xf32> to vector<2x8x32xf32>
    %432 = vector.extract_strided_slice %429 {offsets = [0, 0, 0], sizes = [2, 8, 8], strides = [1, 1, 1]} : vector<2x8x32xf32> to vector<2x8x8xf32>
    %433 = vector.extract_strided_slice %430 {offsets = [0, 0, 0], sizes = [2, 8, 8], strides = [1, 1, 1]} : vector<2x8x32xf32> to vector<2x8x8xf32>
    "tpu.trace_start"() <{level = 10 : i32, message = "bqd,bkd->bqk"}> : () -> ()
    %cst_171 = arith.constant dense<0.000000e+00> : vector<2x8x8xf32>
    %434 = tpu.matmul %432, %433, %cst_171 {dimension_numbers = #tpu.dot_dimension_numbers<[2], [2], [1], [1], [0, 0, 0, 1, 1, 1], [0], [0]>} : vector<2x8x8xf32>, vector<2x8x8xf32>, vector<2x8x8xf32> -> vector<2x8x8xf32>
    "tpu.trace_stop"() : () -> ()
    %cst_172 = arith.constant dense<0xFF800000> : vector<2x8xf32>
    %435 = vector.multi_reduction <maximumf>, %434, %cst_172 [2] : vector<2x8x8xf32> to vector<2x8xf32>
    %436 = vector.shape_cast %435 : vector<2x8xf32> to vector<2x8x1xf32>
    %437 = vector.broadcast %436 : vector<2x8x1xf32> to vector<2x8x8xf32>
    %438 = arith.subf %434, %437 : vector<2x8x8xf32>
    %439 = math.exp %438 : vector<2x8x8xf32>
    %cst_173 = arith.constant dense<0.000000e+00> : vector<2x8xf32>
    %440 = vector.multi_reduction <add>, %439, %cst_173 [2] : vector<2x8x8xf32> to vector<2x8xf32>
    %441 = vector.shape_cast %440 : vector<2x8xf32> to vector<2x8x1xf32>
    %442 = tpu.reciprocal %441 {approx = true} : vector<2x8x1xf32> -> vector<2x8x1xf32>
    %443 = vector.broadcast %442 : vector<2x8x1xf32> to vector<2x8x8xf32>
    %444 = arith.mulf %439, %443 : vector<2x8x8xf32>
    %445 = vector.extract_strided_slice %431 {offsets = [0, 0, 0], sizes = [2, 8, 8], strides = [1, 1, 1]} : vector<2x8x32xf32> to vector<2x8x8xf32>
    "tpu.trace_start"() <{level = 10 : i32, message = "bqk,bkd->bqd"}> : () -> ()
    %cst_174 = arith.constant dense<0.000000e+00> : vector<2x8x8xf32>
    %446 = tpu.matmul %444, %445, %cst_174 {dimension_numbers = #tpu.dot_dimension_numbers<[2], [1], [1], [2], [0, 0, 0, 1, 1, 2], [0], [0]>} : vector<2x8x8xf32>, vector<2x8x8xf32>, vector<2x8x8xf32> -> vector<2x8x8xf32>
    "tpu.trace_stop"() : () -> ()
    %447 = vector.extract_strided_slice %429 {offsets = [0, 0, 8], sizes = [2, 8, 8], strides = [1, 1, 1]} : vector<2x8x32xf32> to vector<2x8x8xf32>
    %448 = vector.extract_strided_slice %430 {offsets = [0, 0, 8], sizes = [2, 8, 8], strides = [1, 1, 1]} : vector<2x8x32xf32> to vector<2x8x8xf32>
    "tpu.trace_start"() <{level = 10 : i32, message = "bqd,bkd->bqk"}> : () -> ()
    %cst_175 = arith.constant dense<0.000000e+00> : vector<2x8x8xf32>
    %449 = tpu.matmul %447, %448, %cst_175 {dimension_numbers = #tpu.dot_dimension_numbers<[2], [2], [1], [1], [0, 0, 0, 1, 1, 1], [0], [0]>} : vector<2x8x8xf32>, vector<2x8x8xf32>, vector<2x8x8xf32> -> vector<2x8x8xf32>
    "tpu.trace_stop"() : () -> ()
    %cst_176 = arith.constant dense<0xFF800000> : vector<2x8xf32>
    %450 = vector.multi_reduction <maximumf>, %449, %cst_176 [2] : vector<2x8x8xf32> to vector<2x8xf32>
    %451 = vector.shape_cast %450 : vector<2x8xf32> to vector<2x8x1xf32>
    %452 = vector.broadcast %451 : vector<2x8x1xf32> to vector<2x8x8xf32>
    %453 = arith.subf %449, %452 : vector<2x8x8xf32>
    %454 = math.exp %453 : vector<2x8x8xf32>
    %cst_177 = arith.constant dense<0.000000e+00> : vector<2x8xf32>
    %455 = vector.multi_reduction <add>, %454, %cst_177 [2] : vector<2x8x8xf32> to vector<2x8xf32>
    %456 = vector.shape_cast %455 : vector<2x8xf32> to vector<2x8x1xf32>
    %457 = tpu.reciprocal %456 {approx = true} : vector<2x8x1xf32> -> vector<2x8x1xf32>
    %458 = vector.broadcast %457 : vector<2x8x1xf32> to vector<2x8x8xf32>
    %459 = arith.mulf %454, %458 : vector<2x8x8xf32>
    %460 = vector.extract_strided_slice %431 {offsets = [0, 0, 8], sizes = [2, 8, 8], strides = [1, 1, 1]} : vector<2x8x32xf32> to vector<2x8x8xf32>
    "tpu.trace_start"() <{level = 10 : i32, message = "bqk,bkd->bqd"}> : () -> ()
    %cst_178 = arith.constant dense<0.000000e+00> : vector<2x8x8xf32>
    %461 = tpu.matmul %459, %460, %cst_178 {dimension_numbers = #tpu.dot_dimension_numbers<[2], [1], [1], [2], [0, 0, 0, 1, 1, 2], [0], [0]>} : vector<2x8x8xf32>, vector<2x8x8xf32>, vector<2x8x8xf32> -> vector<2x8x8xf32>
    "tpu.trace_stop"() : () -> ()
    %462 = vector.extract_strided_slice %429 {offsets = [0, 0, 16], sizes = [2, 8, 8], strides = [1, 1, 1]} : vector<2x8x32xf32> to vector<2x8x8xf32>
    %463 = vector.extract_strided_slice %430 {offsets = [0, 0, 16], sizes = [2, 8, 8], strides = [1, 1, 1]} : vector<2x8x32xf32> to vector<2x8x8xf32>
    "tpu.trace_start"() <{level = 10 : i32, message = "bqd,bkd->bqk"}> : () -> ()
    %cst_179 = arith.constant dense<0.000000e+00> : vector<2x8x8xf32>
    %464 = tpu.matmul %462, %463, %cst_179 {dimension_numbers = #tpu.dot_dimension_numbers<[2], [2], [1], [1], [0, 0, 0, 1, 1, 1], [0], [0]>} : vector<2x8x8xf32>, vector<2x8x8xf32>, vector<2x8x8xf32> -> vector<2x8x8xf32>
    "tpu.trace_stop"() : () -> ()
    %cst_180 = arith.constant dense<0xFF800000> : vector<2x8xf32>
    %465 = vector.multi_reduction <maximumf>, %464, %cst_180 [2] : vector<2x8x8xf32> to vector<2x8xf32>
    %466 = vector.shape_cast %465 : vector<2x8xf32> to vector<2x8x1xf32>
    %467 = vector.broadcast %466 : vector<2x8x1xf32> to vector<2x8x8xf32>
    %468 = arith.subf %464, %467 : vector<2x8x8xf32>
    %469 = math.exp %468 : vector<2x8x8xf32>
    %cst_181 = arith.constant dense<0.000000e+00> : vector<2x8xf32>
    %470 = vector.multi_reduction <add>, %469, %cst_181 [2] : vector<2x8x8xf32> to vector<2x8xf32>
    %471 = vector.shape_cast %470 : vector<2x8xf32> to vector<2x8x1xf32>
    %472 = tpu.reciprocal %471 {approx = true} : vector<2x8x1xf32> -> vector<2x8x1xf32>
    %473 = vector.broadcast %472 : vector<2x8x1xf32> to vector<2x8x8xf32>
    %474 = arith.mulf %469, %473 : vector<2x8x8xf32>
    %475 = vector.extract_strided_slice %431 {offsets = [0, 0, 16], sizes = [2, 8, 8], strides = [1, 1, 1]} : vector<2x8x32xf32> to vector<2x8x8xf32>
    "tpu.trace_start"() <{level = 10 : i32, message = "bqk,bkd->bqd"}> : () -> ()
    %cst_182 = arith.constant dense<0.000000e+00> : vector<2x8x8xf32>
    %476 = tpu.matmul %474, %475, %cst_182 {dimension_numbers = #tpu.dot_dimension_numbers<[2], [1], [1], [2], [0, 0, 0, 1, 1, 2], [0], [0]>} : vector<2x8x8xf32>, vector<2x8x8xf32>, vector<2x8x8xf32> -> vector<2x8x8xf32>
    "tpu.trace_stop"() : () -> ()
    %477 = vector.extract_strided_slice %429 {offsets = [0, 0, 24], sizes = [2, 8, 8], strides = [1, 1, 1]} : vector<2x8x32xf32> to vector<2x8x8xf32>
    %478 = vector.extract_strided_slice %430 {offsets = [0, 0, 24], sizes = [2, 8, 8], strides = [1, 1, 1]} : vector<2x8x32xf32> to vector<2x8x8xf32>
    "tpu.trace_start"() <{level = 10 : i32, message = "bqd,bkd->bqk"}> : () -> ()
    %cst_183 = arith.constant dense<0.000000e+00> : vector<2x8x8xf32>
    %479 = tpu.matmul %477, %478, %cst_183 {dimension_numbers = #tpu.dot_dimension_numbers<[2], [2], [1], [1], [0, 0, 0, 1, 1, 1], [0], [0]>} : vector<2x8x8xf32>, vector<2x8x8xf32>, vector<2x8x8xf32> -> vector<2x8x8xf32>
    "tpu.trace_stop"() : () -> ()
    %cst_184 = arith.constant dense<0xFF800000> : vector<2x8xf32>
    %480 = vector.multi_reduction <maximumf>, %479, %cst_184 [2] : vector<2x8x8xf32> to vector<2x8xf32>
    %481 = vector.shape_cast %480 : vector<2x8xf32> to vector<2x8x1xf32>
    %482 = vector.broadcast %481 : vector<2x8x1xf32> to vector<2x8x8xf32>
    %483 = arith.subf %479, %482 : vector<2x8x8xf32>
    %484 = math.exp %483 : vector<2x8x8xf32>
    %cst_185 = arith.constant dense<0.000000e+00> : vector<2x8xf32>
    %485 = vector.multi_reduction <add>, %484, %cst_185 [2] : vector<2x8x8xf32> to vector<2x8xf32>
    %486 = vector.shape_cast %485 : vector<2x8xf32> to vector<2x8x1xf32>
    %487 = tpu.reciprocal %486 {approx = true} : vector<2x8x1xf32> -> vector<2x8x1xf32>
    %488 = vector.broadcast %487 : vector<2x8x1xf32> to vector<2x8x8xf32>
    %489 = arith.mulf %484, %488 : vector<2x8x8xf32>
    %490 = vector.extract_strided_slice %431 {offsets = [0, 0, 24], sizes = [2, 8, 8], strides = [1, 1, 1]} : vector<2x8x32xf32> to vector<2x8x8xf32>
    "tpu.trace_start"() <{level = 10 : i32, message = "bqk,bkd->bqd"}> : () -> ()
    %cst_186 = arith.constant dense<0.000000e+00> : vector<2x8x8xf32>
    %491 = tpu.matmul %489, %490, %cst_186 {dimension_numbers = #tpu.dot_dimension_numbers<[2], [1], [1], [2], [0, 0, 0, 1, 1, 2], [0], [0]>} : vector<2x8x8xf32>, vector<2x8x8xf32>, vector<2x8x8xf32> -> vector<2x8x8xf32>
    "tpu.trace_stop"() : () -> ()
    %492 = tpu.concatenate %446, %461, %476, %491 in 2 : vector<2x8x8xf32>, vector<2x8x8xf32>, vector<2x8x8xf32>, vector<2x8x8xf32> -> vector<2x8x32xf32>
    %493 = vector.shape_cast %492 : vector<2x8x32xf32> to vector<16x32xf32>
    %cst_187 = arith.constant dense<0.000000e+00> : vector<16x32xf32>
    %494 = tpu.matmul %493, %427, %cst_187 {dimension_numbers = #tpu.dot_dimension_numbers<[1], [0], [0], [1], [0, 0, 1, 1], [], []>} : vector<16x32xf32>, vector<32x32xf32>, vector<16x32xf32> -> vector<16x32xf32>
    %495 = vector.broadcast %428 : vector<1x32xf32> to vector<16x32xf32>
    %496 = arith.addf %494, %495 : vector<16x32xf32>
    %497 = arith.addf %414, %496 : vector<16x32xf32>
    %c0_188 = arith.constant 0 : index
    %c0_189 = arith.constant 0 : index
    %498 = vector.load %arg41[%c0_188, %c0_189] : memref<1x32xf32, #tpu.memory_space<vmem>>, vector<1x32xf32>
    %c0_190 = arith.constant 0 : index
    %c0_191 = arith.constant 0 : index
    %499 = vector.load %arg42[%c0_190, %c0_191] : memref<1x32xf32, #tpu.memory_space<vmem>>, vector<1x32xf32>
    %cst_192 = arith.constant dense<0.000000e+00> : vector<16xf32>
    %500 = vector.multi_reduction <add>, %497, %cst_192 [1] : vector<16x32xf32> to vector<16xf32>
    %501 = vector.shape_cast %500 : vector<16xf32> to vector<16x1xf32>
    %cst_193 = arith.constant 3.200000e+01 : f32
    %502 = vector.broadcast %cst_193 : f32 to vector<16x1xf32>
    %503 = arith.divf %501, %502 : vector<16x1xf32>
    %504 = vector.broadcast %503 : vector<16x1xf32> to vector<16x32xf32>
    %505 = arith.subf %497, %504 : vector<16x32xf32>
    %506 = arith.mulf %505, %505 : vector<16x32xf32>
    %cst_194 = arith.constant dense<0.000000e+00> : vector<16xf32>
    %507 = vector.multi_reduction <add>, %506, %cst_194 [1] : vector<16x32xf32> to vector<16xf32>
    %508 = vector.shape_cast %507 : vector<16xf32> to vector<16x1xf32>
    %cst_195 = arith.constant 3.200000e+01 : f32
    %509 = vector.broadcast %cst_195 : f32 to vector<16x1xf32>
    %510 = arith.divf %508, %509 : vector<16x1xf32>
    %511 = vector.broadcast %503 : vector<16x1xf32> to vector<16x32xf32>
    %512 = arith.subf %497, %511 : vector<16x32xf32>
    %cst_196 = arith.constant 9.99999974E-6 : f32
    %513 = vector.broadcast %cst_196 : f32 to vector<16x1xf32>
    %514 = arith.addf %510, %513 : vector<16x1xf32>
    %515 = math.rsqrt %514 : vector<16x1xf32>
    %516 = vector.broadcast %515 : vector<16x1xf32> to vector<16x32xf32>
    %517 = arith.mulf %512, %516 : vector<16x32xf32>
    %518 = vector.broadcast %498 : vector<1x32xf32> to vector<16x32xf32>
    %519 = arith.mulf %517, %518 : vector<16x32xf32>
    %520 = vector.broadcast %499 : vector<1x32xf32> to vector<16x32xf32>
    %521 = arith.addf %519, %520 : vector<16x32xf32>
    %c0_197 = arith.constant 0 : index
    %c0_198 = arith.constant 0 : index
    %522 = vector.load %arg43[%c0_197, %c0_198] : memref<32x64xf32, #tpu.memory_space<vmem>>, vector<32x64xf32>
    %cst_199 = arith.constant dense<0.000000e+00> : vector<16x64xf32>
    %523 = tpu.matmul %521, %522, %cst_199 {dimension_numbers = #tpu.dot_dimension_numbers<[1], [0], [0], [1], [0, 0, 1, 1], [], []>} : vector<16x32xf32>, vector<32x64xf32>, vector<16x64xf32> -> vector<16x64xf32>
    %c0_200 = arith.constant 0 : index
    %c0_201 = arith.constant 0 : index
    %524 = vector.load %arg44[%c0_200, %c0_201] : memref<1x64xf32, #tpu.memory_space<vmem>>, vector<1x64xf32>
    %525 = vector.broadcast %524 : vector<1x64xf32> to vector<16x64xf32>
    %526 = arith.addf %523, %525 : vector<16x64xf32>
    %cst_202 = arith.constant 0.000000e+00 : f32
    %527 = vector.broadcast %cst_202 : f32 to vector<16x64xf32>
    %528 = arith.maximumf %526, %527 : vector<16x64xf32>
    %c0_203 = arith.constant 0 : index
    %c0_204 = arith.constant 0 : index
    %529 = vector.load %arg45[%c0_203, %c0_204] : memref<64x32xf32, #tpu.memory_space<vmem>>, vector<64x32xf32>
    %cst_205 = arith.constant dense<0.000000e+00> : vector<16x32xf32>
    %530 = tpu.matmul %528, %529, %cst_205 {dimension_numbers = #tpu.dot_dimension_numbers<[1], [0], [0], [1], [0, 0, 1, 1], [], []>} : vector<16x64xf32>, vector<64x32xf32>, vector<16x32xf32> -> vector<16x32xf32>
    %c0_206 = arith.constant 0 : index
    %c0_207 = arith.constant 0 : index
    %531 = vector.load %arg46[%c0_206, %c0_207] : memref<1x32xf32, #tpu.memory_space<vmem>>, vector<1x32xf32>
    %532 = vector.broadcast %531 : vector<1x32xf32> to vector<16x32xf32>
    %533 = arith.addf %530, %532 : vector<16x32xf32>
    %534 = arith.addf %521, %533 : vector<16x32xf32>
    %c0_208 = arith.constant 0 : index
    %c0_209 = arith.constant 0 : index
    %535 = vector.load %arg47[%c0_208, %c0_209] : memref<1x32xf32, #tpu.memory_space<vmem>>, vector<1x32xf32>
    %c0_210 = arith.constant 0 : index
    %c0_211 = arith.constant 0 : index
    %536 = vector.load %arg48[%c0_210, %c0_211] : memref<1x32xf32, #tpu.memory_space<vmem>>, vector<1x32xf32>
    %cst_212 = arith.constant dense<0.000000e+00> : vector<16xf32>
    %537 = vector.multi_reduction <add>, %534, %cst_212 [1] : vector<16x32xf32> to vector<16xf32>
    %538 = vector.shape_cast %537 : vector<16xf32> to vector<16x1xf32>
    %cst_213 = arith.constant 3.200000e+01 : f32
    %539 = vector.broadcast %cst_213 : f32 to vector<16x1xf32>
    %540 = arith.divf %538, %539 : vector<16x1xf32>
    %541 = vector.broadcast %540 : vector<16x1xf32> to vector<16x32xf32>
    %542 = arith.subf %534, %541 : vector<16x32xf32>
    %543 = arith.mulf %542, %542 : vector<16x32xf32>
    %cst_214 = arith.constant dense<0.000000e+00> : vector<16xf32>
    %544 = vector.multi_reduction <add>, %543, %cst_214 [1] : vector<16x32xf32> to vector<16xf32>
    %545 = vector.shape_cast %544 : vector<16xf32> to vector<16x1xf32>
    %cst_215 = arith.constant 3.200000e+01 : f32
    %546 = vector.broadcast %cst_215 : f32 to vector<16x1xf32>
    %547 = arith.divf %545, %546 : vector<16x1xf32>
    %548 = vector.broadcast %540 : vector<16x1xf32> to vector<16x32xf32>
    %549 = arith.subf %534, %548 : vector<16x32xf32>
    %cst_216 = arith.constant 9.99999974E-6 : f32
    %550 = vector.broadcast %cst_216 : f32 to vector<16x1xf32>
    %551 = arith.addf %547, %550 : vector<16x1xf32>
    %552 = math.rsqrt %551 : vector<16x1xf32>
    %553 = vector.broadcast %552 : vector<16x1xf32> to vector<16x32xf32>
    %554 = arith.mulf %549, %553 : vector<16x32xf32>
    %555 = vector.broadcast %535 : vector<1x32xf32> to vector<16x32xf32>
    %556 = arith.mulf %554, %555 : vector<16x32xf32>
    %557 = vector.broadcast %536 : vector<1x32xf32> to vector<16x32xf32>
    %558 = arith.addf %556, %557 : vector<16x32xf32>
    %c0_217 = arith.constant 0 : index
    %c0_218 = arith.constant 0 : index
    %559 = vector.load %arg49[%c0_217, %c0_218] : memref<32x96xf32, #tpu.memory_space<vmem>>, vector<32x96xf32>
    %cst_219 = arith.constant dense<0.000000e+00> : vector<16x96xf32>
    %560 = tpu.matmul %558, %559, %cst_219 {dimension_numbers = #tpu.dot_dimension_numbers<[1], [0], [0], [1], [0, 0, 1, 1], [], []>} : vector<16x32xf32>, vector<32x96xf32>, vector<16x96xf32> -> vector<16x96xf32>
    %c0_220 = arith.constant 0 : index
    %c0_221 = arith.constant 0 : index
    %561 = vector.load %arg50[%c0_220, %c0_221] : memref<1x96xf32, #tpu.memory_space<vmem>>, vector<1x96xf32>
    %562 = vector.broadcast %561 : vector<1x96xf32> to vector<16x96xf32>
    %563 = arith.addf %560, %562 : vector<16x96xf32>
    %564 = vector.extract_strided_slice %563 {offsets = [0, 0], sizes = [16, 32], strides = [1, 1]} : vector<16x96xf32> to vector<16x32xf32>
    %565 = vector.extract_strided_slice %563 {offsets = [0, 32], sizes = [16, 32], strides = [1, 1]} : vector<16x96xf32> to vector<16x32xf32>
    %566 = vector.extract_strided_slice %563 {offsets = [0, 64], sizes = [16, 32], strides = [1, 1]} : vector<16x96xf32> to vector<16x32xf32>
    %c0_222 = arith.constant 0 : index
    %c0_223 = arith.constant 0 : index
    %567 = vector.load %arg51[%c0_222, %c0_223] : memref<32x32xf32, #tpu.memory_space<vmem>>, vector<32x32xf32>
    %c0_224 = arith.constant 0 : index
    %c0_225 = arith.constant 0 : index
    %568 = vector.load %arg52[%c0_224, %c0_225] : memref<1x32xf32, #tpu.memory_space<vmem>>, vector<1x32xf32>
    %569 = vector.shape_cast %564 : vector<16x32xf32> to vector<2x8x32xf32>
    %570 = vector.shape_cast %565 : vector<16x32xf32> to vector<2x8x32xf32>
    %571 = vector.shape_cast %566 : vector<16x32xf32> to vector<2x8x32xf32>
    %572 = vector.extract_strided_slice %569 {offsets = [0, 0, 0], sizes = [2, 8, 8], strides = [1, 1, 1]} : vector<2x8x32xf32> to vector<2x8x8xf32>
    %573 = vector.extract_strided_slice %570 {offsets = [0, 0, 0], sizes = [2, 8, 8], strides = [1, 1, 1]} : vector<2x8x32xf32> to vector<2x8x8xf32>
    "tpu.trace_start"() <{level = 10 : i32, message = "bqd,bkd->bqk"}> : () -> ()
    %cst_226 = arith.constant dense<0.000000e+00> : vector<2x8x8xf32>
    %574 = tpu.matmul %572, %573, %cst_226 {dimension_numbers = #tpu.dot_dimension_numbers<[2], [2], [1], [1], [0, 0, 0, 1, 1, 1], [0], [0]>} : vector<2x8x8xf32>, vector<2x8x8xf32>, vector<2x8x8xf32> -> vector<2x8x8xf32>
    "tpu.trace_stop"() : () -> ()
    %cst_227 = arith.constant dense<0xFF800000> : vector<2x8xf32>
    %575 = vector.multi_reduction <maximumf>, %574, %cst_227 [2] : vector<2x8x8xf32> to vector<2x8xf32>
    %576 = vector.shape_cast %575 : vector<2x8xf32> to vector<2x8x1xf32>
    %577 = vector.broadcast %576 : vector<2x8x1xf32> to vector<2x8x8xf32>
    %578 = arith.subf %574, %577 : vector<2x8x8xf32>
    %579 = math.exp %578 : vector<2x8x8xf32>
    %cst_228 = arith.constant dense<0.000000e+00> : vector<2x8xf32>
    %580 = vector.multi_reduction <add>, %579, %cst_228 [2] : vector<2x8x8xf32> to vector<2x8xf32>
    %581 = vector.shape_cast %580 : vector<2x8xf32> to vector<2x8x1xf32>
    %582 = tpu.reciprocal %581 {approx = true} : vector<2x8x1xf32> -> vector<2x8x1xf32>
    %583 = vector.broadcast %582 : vector<2x8x1xf32> to vector<2x8x8xf32>
    %584 = arith.mulf %579, %583 : vector<2x8x8xf32>
    %585 = vector.extract_strided_slice %571 {offsets = [0, 0, 0], sizes = [2, 8, 8], strides = [1, 1, 1]} : vector<2x8x32xf32> to vector<2x8x8xf32>
    "tpu.trace_start"() <{level = 10 : i32, message = "bqk,bkd->bqd"}> : () -> ()
    %cst_229 = arith.constant dense<0.000000e+00> : vector<2x8x8xf32>
    %586 = tpu.matmul %584, %585, %cst_229 {dimension_numbers = #tpu.dot_dimension_numbers<[2], [1], [1], [2], [0, 0, 0, 1, 1, 2], [0], [0]>} : vector<2x8x8xf32>, vector<2x8x8xf32>, vector<2x8x8xf32> -> vector<2x8x8xf32>
    "tpu.trace_stop"() : () -> ()
    %587 = vector.extract_strided_slice %569 {offsets = [0, 0, 8], sizes = [2, 8, 8], strides = [1, 1, 1]} : vector<2x8x32xf32> to vector<2x8x8xf32>
    %588 = vector.extract_strided_slice %570 {offsets = [0, 0, 8], sizes = [2, 8, 8], strides = [1, 1, 1]} : vector<2x8x32xf32> to vector<2x8x8xf32>
    "tpu.trace_start"() <{level = 10 : i32, message = "bqd,bkd->bqk"}> : () -> ()
    %cst_230 = arith.constant dense<0.000000e+00> : vector<2x8x8xf32>
    %589 = tpu.matmul %587, %588, %cst_230 {dimension_numbers = #tpu.dot_dimension_numbers<[2], [2], [1], [1], [0, 0, 0, 1, 1, 1], [0], [0]>} : vector<2x8x8xf32>, vector<2x8x8xf32>, vector<2x8x8xf32> -> vector<2x8x8xf32>
    "tpu.trace_stop"() : () -> ()
    %cst_231 = arith.constant dense<0xFF800000> : vector<2x8xf32>
    %590 = vector.multi_reduction <maximumf>, %589, %cst_231 [2] : vector<2x8x8xf32> to vector<2x8xf32>
    %591 = vector.shape_cast %590 : vector<2x8xf32> to vector<2x8x1xf32>
    %592 = vector.broadcast %591 : vector<2x8x1xf32> to vector<2x8x8xf32>
    %593 = arith.subf %589, %592 : vector<2x8x8xf32>
    %594 = math.exp %593 : vector<2x8x8xf32>
    %cst_232 = arith.constant dense<0.000000e+00> : vector<2x8xf32>
    %595 = vector.multi_reduction <add>, %594, %cst_232 [2] : vector<2x8x8xf32> to vector<2x8xf32>
    %596 = vector.shape_cast %595 : vector<2x8xf32> to vector<2x8x1xf32>
    %597 = tpu.reciprocal %596 {approx = true} : vector<2x8x1xf32> -> vector<2x8x1xf32>
    %598 = vector.broadcast %597 : vector<2x8x1xf32> to vector<2x8x8xf32>
    %599 = arith.mulf %594, %598 : vector<2x8x8xf32>
    %600 = vector.extract_strided_slice %571 {offsets = [0, 0, 8], sizes = [2, 8, 8], strides = [1, 1, 1]} : vector<2x8x32xf32> to vector<2x8x8xf32>
    "tpu.trace_start"() <{level = 10 : i32, message = "bqk,bkd->bqd"}> : () -> ()
    %cst_233 = arith.constant dense<0.000000e+00> : vector<2x8x8xf32>
    %601 = tpu.matmul %599, %600, %cst_233 {dimension_numbers = #tpu.dot_dimension_numbers<[2], [1], [1], [2], [0, 0, 0, 1, 1, 2], [0], [0]>} : vector<2x8x8xf32>, vector<2x8x8xf32>, vector<2x8x8xf32> -> vector<2x8x8xf32>
    "tpu.trace_stop"() : () -> ()
    %602 = vector.extract_strided_slice %569 {offsets = [0, 0, 16], sizes = [2, 8, 8], strides = [1, 1, 1]} : vector<2x8x32xf32> to vector<2x8x8xf32>
    %603 = vector.extract_strided_slice %570 {offsets = [0, 0, 16], sizes = [2, 8, 8], strides = [1, 1, 1]} : vector<2x8x32xf32> to vector<2x8x8xf32>
    "tpu.trace_start"() <{level = 10 : i32, message = "bqd,bkd->bqk"}> : () -> ()
    %cst_234 = arith.constant dense<0.000000e+00> : vector<2x8x8xf32>
    %604 = tpu.matmul %602, %603, %cst_234 {dimension_numbers = #tpu.dot_dimension_numbers<[2], [2], [1], [1], [0, 0, 0, 1, 1, 1], [0], [0]>} : vector<2x8x8xf32>, vector<2x8x8xf32>, vector<2x8x8xf32> -> vector<2x8x8xf32>
    "tpu.trace_stop"() : () -> ()
    %cst_235 = arith.constant dense<0xFF800000> : vector<2x8xf32>
    %605 = vector.multi_reduction <maximumf>, %604, %cst_235 [2] : vector<2x8x8xf32> to vector<2x8xf32>
    %606 = vector.shape_cast %605 : vector<2x8xf32> to vector<2x8x1xf32>
    %607 = vector.broadcast %606 : vector<2x8x1xf32> to vector<2x8x8xf32>
    %608 = arith.subf %604, %607 : vector<2x8x8xf32>
    %609 = math.exp %608 : vector<2x8x8xf32>
    %cst_236 = arith.constant dense<0.000000e+00> : vector<2x8xf32>
    %610 = vector.multi_reduction <add>, %609, %cst_236 [2] : vector<2x8x8xf32> to vector<2x8xf32>
    %611 = vector.shape_cast %610 : vector<2x8xf32> to vector<2x8x1xf32>
    %612 = tpu.reciprocal %611 {approx = true} : vector<2x8x1xf32> -> vector<2x8x1xf32>
    %613 = vector.broadcast %612 : vector<2x8x1xf32> to vector<2x8x8xf32>
    %614 = arith.mulf %609, %613 : vector<2x8x8xf32>
    %615 = vector.extract_strided_slice %571 {offsets = [0, 0, 16], sizes = [2, 8, 8], strides = [1, 1, 1]} : vector<2x8x32xf32> to vector<2x8x8xf32>
    "tpu.trace_start"() <{level = 10 : i32, message = "bqk,bkd->bqd"}> : () -> ()
    %cst_237 = arith.constant dense<0.000000e+00> : vector<2x8x8xf32>
    %616 = tpu.matmul %614, %615, %cst_237 {dimension_numbers = #tpu.dot_dimension_numbers<[2], [1], [1], [2], [0, 0, 0, 1, 1, 2], [0], [0]>} : vector<2x8x8xf32>, vector<2x8x8xf32>, vector<2x8x8xf32> -> vector<2x8x8xf32>
    "tpu.trace_stop"() : () -> ()
    %617 = vector.extract_strided_slice %569 {offsets = [0, 0, 24], sizes = [2, 8, 8], strides = [1, 1, 1]} : vector<2x8x32xf32> to vector<2x8x8xf32>
    %618 = vector.extract_strided_slice %570 {offsets = [0, 0, 24], sizes = [2, 8, 8], strides = [1, 1, 1]} : vector<2x8x32xf32> to vector<2x8x8xf32>
    "tpu.trace_start"() <{level = 10 : i32, message = "bqd,bkd->bqk"}> : () -> ()
    %cst_238 = arith.constant dense<0.000000e+00> : vector<2x8x8xf32>
    %619 = tpu.matmul %617, %618, %cst_238 {dimension_numbers = #tpu.dot_dimension_numbers<[2], [2], [1], [1], [0, 0, 0, 1, 1, 1], [0], [0]>} : vector<2x8x8xf32>, vector<2x8x8xf32>, vector<2x8x8xf32> -> vector<2x8x8xf32>
    "tpu.trace_stop"() : () -> ()
    %cst_239 = arith.constant dense<0xFF800000> : vector<2x8xf32>
    %620 = vector.multi_reduction <maximumf>, %619, %cst_239 [2] : vector<2x8x8xf32> to vector<2x8xf32>
    %621 = vector.shape_cast %620 : vector<2x8xf32> to vector<2x8x1xf32>
    %622 = vector.broadcast %621 : vector<2x8x1xf32> to vector<2x8x8xf32>
    %623 = arith.subf %619, %622 : vector<2x8x8xf32>
    %624 = math.exp %623 : vector<2x8x8xf32>
    %cst_240 = arith.constant dense<0.000000e+00> : vector<2x8xf32>
    %625 = vector.multi_reduction <add>, %624, %cst_240 [2] : vector<2x8x8xf32> to vector<2x8xf32>
    %626 = vector.shape_cast %625 : vector<2x8xf32> to vector<2x8x1xf32>
    %627 = tpu.reciprocal %626 {approx = true} : vector<2x8x1xf32> -> vector<2x8x1xf32>
    %628 = vector.broadcast %627 : vector<2x8x1xf32> to vector<2x8x8xf32>
    %629 = arith.mulf %624, %628 : vector<2x8x8xf32>
    %630 = vector.extract_strided_slice %571 {offsets = [0, 0, 24], sizes = [2, 8, 8], strides = [1, 1, 1]} : vector<2x8x32xf32> to vector<2x8x8xf32>
    "tpu.trace_start"() <{level = 10 : i32, message = "bqk,bkd->bqd"}> : () -> ()
    %cst_241 = arith.constant dense<0.000000e+00> : vector<2x8x8xf32>
    %631 = tpu.matmul %629, %630, %cst_241 {dimension_numbers = #tpu.dot_dimension_numbers<[2], [1], [1], [2], [0, 0, 0, 1, 1, 2], [0], [0]>} : vector<2x8x8xf32>, vector<2x8x8xf32>, vector<2x8x8xf32> -> vector<2x8x8xf32>
    "tpu.trace_stop"() : () -> ()
    %632 = tpu.concatenate %586, %601, %616, %631 in 2 : vector<2x8x8xf32>, vector<2x8x8xf32>, vector<2x8x8xf32>, vector<2x8x8xf32> -> vector<2x8x32xf32>
    %633 = vector.shape_cast %632 : vector<2x8x32xf32> to vector<16x32xf32>
    %cst_242 = arith.constant dense<0.000000e+00> : vector<16x32xf32>
    %634 = tpu.matmul %633, %567, %cst_242 {dimension_numbers = #tpu.dot_dimension_numbers<[1], [0], [0], [1], [0, 0, 1, 1], [], []>} : vector<16x32xf32>, vector<32x32xf32>, vector<16x32xf32> -> vector<16x32xf32>
    %635 = vector.broadcast %568 : vector<1x32xf32> to vector<16x32xf32>
    %636 = arith.addf %634, %635 : vector<16x32xf32>
    %637 = arith.addf %558, %636 : vector<16x32xf32>
    %c0_243 = arith.constant 0 : index
    %c0_244 = arith.constant 0 : index
    %638 = vector.load %arg53[%c0_243, %c0_244] : memref<1x32xf32, #tpu.memory_space<vmem>>, vector<1x32xf32>
    %c0_245 = arith.constant 0 : index
    %c0_246 = arith.constant 0 : index
    %639 = vector.load %arg54[%c0_245, %c0_246] : memref<1x32xf32, #tpu.memory_space<vmem>>, vector<1x32xf32>
    %cst_247 = arith.constant dense<0.000000e+00> : vector<16xf32>
    %640 = vector.multi_reduction <add>, %637, %cst_247 [1] : vector<16x32xf32> to vector<16xf32>
    %641 = vector.shape_cast %640 : vector<16xf32> to vector<16x1xf32>
    %cst_248 = arith.constant 3.200000e+01 : f32
    %642 = vector.broadcast %cst_248 : f32 to vector<16x1xf32>
    %643 = arith.divf %641, %642 : vector<16x1xf32>
    %644 = vector.broadcast %643 : vector<16x1xf32> to vector<16x32xf32>
    %645 = arith.subf %637, %644 : vector<16x32xf32>
    %646 = arith.mulf %645, %645 : vector<16x32xf32>
    %cst_249 = arith.constant dense<0.000000e+00> : vector<16xf32>
    %647 = vector.multi_reduction <add>, %646, %cst_249 [1] : vector<16x32xf32> to vector<16xf32>
    %648 = vector.shape_cast %647 : vector<16xf32> to vector<16x1xf32>
    %cst_250 = arith.constant 3.200000e+01 : f32
    %649 = vector.broadcast %cst_250 : f32 to vector<16x1xf32>
    %650 = arith.divf %648, %649 : vector<16x1xf32>
    %651 = vector.broadcast %643 : vector<16x1xf32> to vector<16x32xf32>
    %652 = arith.subf %637, %651 : vector<16x32xf32>
    %cst_251 = arith.constant 9.99999974E-6 : f32
    %653 = vector.broadcast %cst_251 : f32 to vector<16x1xf32>
    %654 = arith.addf %650, %653 : vector<16x1xf32>
    %655 = math.rsqrt %654 : vector<16x1xf32>
    %656 = vector.broadcast %655 : vector<16x1xf32> to vector<16x32xf32>
    %657 = arith.mulf %652, %656 : vector<16x32xf32>
    %658 = vector.broadcast %638 : vector<1x32xf32> to vector<16x32xf32>
    %659 = arith.mulf %657, %658 : vector<16x32xf32>
    %660 = vector.broadcast %639 : vector<1x32xf32> to vector<16x32xf32>
    %661 = arith.addf %659, %660 : vector<16x32xf32>
    %c0_252 = arith.constant 0 : index
    %c0_253 = arith.constant 0 : index
    %662 = vector.load %arg55[%c0_252, %c0_253] : memref<32x32xf32, #tpu.memory_space<vmem>>, vector<32x32xf32>
    %cst_254 = arith.constant dense<0.000000e+00> : vector<16x32xf32>
    %663 = tpu.matmul %661, %662, %cst_254 {dimension_numbers = #tpu.dot_dimension_numbers<[1], [0], [0], [1], [0, 0, 1, 1], [], []>} : vector<16x32xf32>, vector<32x32xf32>, vector<16x32xf32> -> vector<16x32xf32>
    %c0_255 = arith.constant 0 : index
    %c0_256 = arith.constant 0 : index
    %664 = vector.load %arg56[%c0_255, %c0_256] : memref<1x32xf32, #tpu.memory_space<vmem>>, vector<1x32xf32>
    %665 = vector.broadcast %664 : vector<1x32xf32> to vector<16x32xf32>
    %666 = arith.addf %663, %665 : vector<16x32xf32>
    %c0_257 = arith.constant 0 : index
    %c0_258 = arith.constant 0 : index
    %667 = vector.load %arg57[%c0_257, %c0_258] : memref<32x64xf32, #tpu.memory_space<vmem>>, vector<32x64xf32>
    %cst_259 = arith.constant dense<0.000000e+00> : vector<16x64xf32>
    %668 = tpu.matmul %311, %667, %cst_259 {dimension_numbers = #tpu.dot_dimension_numbers<[1], [0], [0], [1], [0, 0, 1, 1], [], []>} : vector<16x32xf32>, vector<32x64xf32>, vector<16x64xf32> -> vector<16x64xf32>
    %c0_260 = arith.constant 0 : index
    %c0_261 = arith.constant 0 : index
    %669 = vector.load %arg58[%c0_260, %c0_261] : memref<1x64xf32, #tpu.memory_space<vmem>>, vector<1x64xf32>
    %670 = vector.broadcast %669 : vector<1x64xf32> to vector<16x64xf32>
    %671 = arith.addf %668, %670 : vector<16x64xf32>
    %672 = vector.extract_strided_slice %671 {offsets = [0, 0], sizes = [16, 32], strides = [1, 1]} : vector<16x64xf32> to vector<16x32xf32>
    %673 = vector.extract_strided_slice %671 {offsets = [0, 32], sizes = [16, 32], strides = [1, 1]} : vector<16x64xf32> to vector<16x32xf32>
    %c0_262 = arith.constant 0 : index
    %c0_263 = arith.constant 0 : index
    %674 = vector.load %arg59[%c0_262, %c0_263] : memref<32x32xf32, #tpu.memory_space<vmem>>, vector<32x32xf32>
    %c0_264 = arith.constant 0 : index
    %c0_265 = arith.constant 0 : index
    %675 = vector.load %arg60[%c0_264, %c0_265] : memref<1x32xf32, #tpu.memory_space<vmem>>, vector<1x32xf32>
    %676 = vector.shape_cast %666 : vector<16x32xf32> to vector<2x8x32xf32>
    %677 = vector.shape_cast %672 : vector<16x32xf32> to vector<2x8x32xf32>
    %678 = vector.shape_cast %673 : vector<16x32xf32> to vector<2x8x32xf32>
    %679 = vector.extract_strided_slice %676 {offsets = [0, 0, 0], sizes = [2, 8, 8], strides = [1, 1, 1]} : vector<2x8x32xf32> to vector<2x8x8xf32>
    %680 = vector.extract_strided_slice %677 {offsets = [0, 0, 0], sizes = [2, 8, 8], strides = [1, 1, 1]} : vector<2x8x32xf32> to vector<2x8x8xf32>
    "tpu.trace_start"() <{level = 10 : i32, message = "bqd,bkd->bqk"}> : () -> ()
    %cst_266 = arith.constant dense<0.000000e+00> : vector<2x8x8xf32>
    %681 = tpu.matmul %679, %680, %cst_266 {dimension_numbers = #tpu.dot_dimension_numbers<[2], [2], [1], [1], [0, 0, 0, 1, 1, 1], [0], [0]>} : vector<2x8x8xf32>, vector<2x8x8xf32>, vector<2x8x8xf32> -> vector<2x8x8xf32>
    "tpu.trace_stop"() : () -> ()
    %cst_267 = arith.constant dense<0xFF800000> : vector<2x8xf32>
    %682 = vector.multi_reduction <maximumf>, %681, %cst_267 [2] : vector<2x8x8xf32> to vector<2x8xf32>
    %683 = vector.shape_cast %682 : vector<2x8xf32> to vector<2x8x1xf32>
    %684 = vector.broadcast %683 : vector<2x8x1xf32> to vector<2x8x8xf32>
    %685 = arith.subf %681, %684 : vector<2x8x8xf32>
    %686 = math.exp %685 : vector<2x8x8xf32>
    %cst_268 = arith.constant dense<0.000000e+00> : vector<2x8xf32>
    %687 = vector.multi_reduction <add>, %686, %cst_268 [2] : vector<2x8x8xf32> to vector<2x8xf32>
    %688 = vector.shape_cast %687 : vector<2x8xf32> to vector<2x8x1xf32>
    %689 = tpu.reciprocal %688 {approx = true} : vector<2x8x1xf32> -> vector<2x8x1xf32>
    %690 = vector.broadcast %689 : vector<2x8x1xf32> to vector<2x8x8xf32>
    %691 = arith.mulf %686, %690 : vector<2x8x8xf32>
    %692 = vector.extract_strided_slice %678 {offsets = [0, 0, 0], sizes = [2, 8, 8], strides = [1, 1, 1]} : vector<2x8x32xf32> to vector<2x8x8xf32>
    "tpu.trace_start"() <{level = 10 : i32, message = "bqk,bkd->bqd"}> : () -> ()
    %cst_269 = arith.constant dense<0.000000e+00> : vector<2x8x8xf32>
    %693 = tpu.matmul %691, %692, %cst_269 {dimension_numbers = #tpu.dot_dimension_numbers<[2], [1], [1], [2], [0, 0, 0, 1, 1, 2], [0], [0]>} : vector<2x8x8xf32>, vector<2x8x8xf32>, vector<2x8x8xf32> -> vector<2x8x8xf32>
    "tpu.trace_stop"() : () -> ()
    %694 = vector.extract_strided_slice %676 {offsets = [0, 0, 8], sizes = [2, 8, 8], strides = [1, 1, 1]} : vector<2x8x32xf32> to vector<2x8x8xf32>
    %695 = vector.extract_strided_slice %677 {offsets = [0, 0, 8], sizes = [2, 8, 8], strides = [1, 1, 1]} : vector<2x8x32xf32> to vector<2x8x8xf32>
    "tpu.trace_start"() <{level = 10 : i32, message = "bqd,bkd->bqk"}> : () -> ()
    %cst_270 = arith.constant dense<0.000000e+00> : vector<2x8x8xf32>
    %696 = tpu.matmul %694, %695, %cst_270 {dimension_numbers = #tpu.dot_dimension_numbers<[2], [2], [1], [1], [0, 0, 0, 1, 1, 1], [0], [0]>} : vector<2x8x8xf32>, vector<2x8x8xf32>, vector<2x8x8xf32> -> vector<2x8x8xf32>
    "tpu.trace_stop"() : () -> ()
    %cst_271 = arith.constant dense<0xFF800000> : vector<2x8xf32>
    %697 = vector.multi_reduction <maximumf>, %696, %cst_271 [2] : vector<2x8x8xf32> to vector<2x8xf32>
    %698 = vector.shape_cast %697 : vector<2x8xf32> to vector<2x8x1xf32>
    %699 = vector.broadcast %698 : vector<2x8x1xf32> to vector<2x8x8xf32>
    %700 = arith.subf %696, %699 : vector<2x8x8xf32>
    %701 = math.exp %700 : vector<2x8x8xf32>
    %cst_272 = arith.constant dense<0.000000e+00> : vector<2x8xf32>
    %702 = vector.multi_reduction <add>, %701, %cst_272 [2] : vector<2x8x8xf32> to vector<2x8xf32>
    %703 = vector.shape_cast %702 : vector<2x8xf32> to vector<2x8x1xf32>
    %704 = tpu.reciprocal %703 {approx = true} : vector<2x8x1xf32> -> vector<2x8x1xf32>
    %705 = vector.broadcast %704 : vector<2x8x1xf32> to vector<2x8x8xf32>
    %706 = arith.mulf %701, %705 : vector<2x8x8xf32>
    %707 = vector.extract_strided_slice %678 {offsets = [0, 0, 8], sizes = [2, 8, 8], strides = [1, 1, 1]} : vector<2x8x32xf32> to vector<2x8x8xf32>
    "tpu.trace_start"() <{level = 10 : i32, message = "bqk,bkd->bqd"}> : () -> ()
    %cst_273 = arith.constant dense<0.000000e+00> : vector<2x8x8xf32>
    %708 = tpu.matmul %706, %707, %cst_273 {dimension_numbers = #tpu.dot_dimension_numbers<[2], [1], [1], [2], [0, 0, 0, 1, 1, 2], [0], [0]>} : vector<2x8x8xf32>, vector<2x8x8xf32>, vector<2x8x8xf32> -> vector<2x8x8xf32>
    "tpu.trace_stop"() : () -> ()
    %709 = vector.extract_strided_slice %676 {offsets = [0, 0, 16], sizes = [2, 8, 8], strides = [1, 1, 1]} : vector<2x8x32xf32> to vector<2x8x8xf32>
    %710 = vector.extract_strided_slice %677 {offsets = [0, 0, 16], sizes = [2, 8, 8], strides = [1, 1, 1]} : vector<2x8x32xf32> to vector<2x8x8xf32>
    "tpu.trace_start"() <{level = 10 : i32, message = "bqd,bkd->bqk"}> : () -> ()
    %cst_274 = arith.constant dense<0.000000e+00> : vector<2x8x8xf32>
    %711 = tpu.matmul %709, %710, %cst_274 {dimension_numbers = #tpu.dot_dimension_numbers<[2], [2], [1], [1], [0, 0, 0, 1, 1, 1], [0], [0]>} : vector<2x8x8xf32>, vector<2x8x8xf32>, vector<2x8x8xf32> -> vector<2x8x8xf32>
    "tpu.trace_stop"() : () -> ()
    %cst_275 = arith.constant dense<0xFF800000> : vector<2x8xf32>
    %712 = vector.multi_reduction <maximumf>, %711, %cst_275 [2] : vector<2x8x8xf32> to vector<2x8xf32>
    %713 = vector.shape_cast %712 : vector<2x8xf32> to vector<2x8x1xf32>
    %714 = vector.broadcast %713 : vector<2x8x1xf32> to vector<2x8x8xf32>
    %715 = arith.subf %711, %714 : vector<2x8x8xf32>
    %716 = math.exp %715 : vector<2x8x8xf32>
    %cst_276 = arith.constant dense<0.000000e+00> : vector<2x8xf32>
    %717 = vector.multi_reduction <add>, %716, %cst_276 [2] : vector<2x8x8xf32> to vector<2x8xf32>
    %718 = vector.shape_cast %717 : vector<2x8xf32> to vector<2x8x1xf32>
    %719 = tpu.reciprocal %718 {approx = true} : vector<2x8x1xf32> -> vector<2x8x1xf32>
    %720 = vector.broadcast %719 : vector<2x8x1xf32> to vector<2x8x8xf32>
    %721 = arith.mulf %716, %720 : vector<2x8x8xf32>
    %722 = vector.extract_strided_slice %678 {offsets = [0, 0, 16], sizes = [2, 8, 8], strides = [1, 1, 1]} : vector<2x8x32xf32> to vector<2x8x8xf32>
    "tpu.trace_start"() <{level = 10 : i32, message = "bqk,bkd->bqd"}> : () -> ()
    %cst_277 = arith.constant dense<0.000000e+00> : vector<2x8x8xf32>
    %723 = tpu.matmul %721, %722, %cst_277 {dimension_numbers = #tpu.dot_dimension_numbers<[2], [1], [1], [2], [0, 0, 0, 1, 1, 2], [0], [0]>} : vector<2x8x8xf32>, vector<2x8x8xf32>, vector<2x8x8xf32> -> vector<2x8x8xf32>
    "tpu.trace_stop"() : () -> ()
    %724 = vector.extract_strided_slice %676 {offsets = [0, 0, 24], sizes = [2, 8, 8], strides = [1, 1, 1]} : vector<2x8x32xf32> to vector<2x8x8xf32>
    %725 = vector.extract_strided_slice %677 {offsets = [0, 0, 24], sizes = [2, 8, 8], strides = [1, 1, 1]} : vector<2x8x32xf32> to vector<2x8x8xf32>
    "tpu.trace_start"() <{level = 10 : i32, message = "bqd,bkd->bqk"}> : () -> ()
    %cst_278 = arith.constant dense<0.000000e+00> : vector<2x8x8xf32>
    %726 = tpu.matmul %724, %725, %cst_278 {dimension_numbers = #tpu.dot_dimension_numbers<[2], [2], [1], [1], [0, 0, 0, 1, 1, 1], [0], [0]>} : vector<2x8x8xf32>, vector<2x8x8xf32>, vector<2x8x8xf32> -> vector<2x8x8xf32>
    "tpu.trace_stop"() : () -> ()
    %cst_279 = arith.constant dense<0xFF800000> : vector<2x8xf32>
    %727 = vector.multi_reduction <maximumf>, %726, %cst_279 [2] : vector<2x8x8xf32> to vector<2x8xf32>
    %728 = vector.shape_cast %727 : vector<2x8xf32> to vector<2x8x1xf32>
    %729 = vector.broadcast %728 : vector<2x8x1xf32> to vector<2x8x8xf32>
    %730 = arith.subf %726, %729 : vector<2x8x8xf32>
    %731 = math.exp %730 : vector<2x8x8xf32>
    %cst_280 = arith.constant dense<0.000000e+00> : vector<2x8xf32>
    %732 = vector.multi_reduction <add>, %731, %cst_280 [2] : vector<2x8x8xf32> to vector<2x8xf32>
    %733 = vector.shape_cast %732 : vector<2x8xf32> to vector<2x8x1xf32>
    %734 = tpu.reciprocal %733 {approx = true} : vector<2x8x1xf32> -> vector<2x8x1xf32>
    %735 = vector.broadcast %734 : vector<2x8x1xf32> to vector<2x8x8xf32>
    %736 = arith.mulf %731, %735 : vector<2x8x8xf32>
    %737 = vector.extract_strided_slice %678 {offsets = [0, 0, 24], sizes = [2, 8, 8], strides = [1, 1, 1]} : vector<2x8x32xf32> to vector<2x8x8xf32>
    "tpu.trace_start"() <{level = 10 : i32, message = "bqk,bkd->bqd"}> : () -> ()
    %cst_281 = arith.constant dense<0.000000e+00> : vector<2x8x8xf32>
    %738 = tpu.matmul %736, %737, %cst_281 {dimension_numbers = #tpu.dot_dimension_numbers<[2], [1], [1], [2], [0, 0, 0, 1, 1, 2], [0], [0]>} : vector<2x8x8xf32>, vector<2x8x8xf32>, vector<2x8x8xf32> -> vector<2x8x8xf32>
    "tpu.trace_stop"() : () -> ()
    %739 = tpu.concatenate %693, %708, %723, %738 in 2 : vector<2x8x8xf32>, vector<2x8x8xf32>, vector<2x8x8xf32>, vector<2x8x8xf32> -> vector<2x8x32xf32>
    %740 = vector.shape_cast %739 : vector<2x8x32xf32> to vector<16x32xf32>
    %cst_282 = arith.constant dense<0.000000e+00> : vector<16x32xf32>
    %741 = tpu.matmul %740, %674, %cst_282 {dimension_numbers = #tpu.dot_dimension_numbers<[1], [0], [0], [1], [0, 0, 1, 1], [], []>} : vector<16x32xf32>, vector<32x32xf32>, vector<16x32xf32> -> vector<16x32xf32>
    %742 = vector.broadcast %675 : vector<1x32xf32> to vector<16x32xf32>
    %743 = arith.addf %741, %742 : vector<16x32xf32>
    %744 = arith.addf %661, %743 : vector<16x32xf32>
    %c0_283 = arith.constant 0 : index
    %c0_284 = arith.constant 0 : index
    %745 = vector.load %arg61[%c0_283, %c0_284] : memref<1x32xf32, #tpu.memory_space<vmem>>, vector<1x32xf32>
    %c0_285 = arith.constant 0 : index
    %c0_286 = arith.constant 0 : index
    %746 = vector.load %arg62[%c0_285, %c0_286] : memref<1x32xf32, #tpu.memory_space<vmem>>, vector<1x32xf32>
    %cst_287 = arith.constant dense<0.000000e+00> : vector<16xf32>
    %747 = vector.multi_reduction <add>, %744, %cst_287 [1] : vector<16x32xf32> to vector<16xf32>
    %748 = vector.shape_cast %747 : vector<16xf32> to vector<16x1xf32>
    %cst_288 = arith.constant 3.200000e+01 : f32
    %749 = vector.broadcast %cst_288 : f32 to vector<16x1xf32>
    %750 = arith.divf %748, %749 : vector<16x1xf32>
    %751 = vector.broadcast %750 : vector<16x1xf32> to vector<16x32xf32>
    %752 = arith.subf %744, %751 : vector<16x32xf32>
    %753 = arith.mulf %752, %752 : vector<16x32xf32>
    %cst_289 = arith.constant dense<0.000000e+00> : vector<16xf32>
    %754 = vector.multi_reduction <add>, %753, %cst_289 [1] : vector<16x32xf32> to vector<16xf32>
    %755 = vector.shape_cast %754 : vector<16xf32> to vector<16x1xf32>
    %cst_290 = arith.constant 3.200000e+01 : f32
    %756 = vector.broadcast %cst_290 : f32 to vector<16x1xf32>
    %757 = arith.divf %755, %756 : vector<16x1xf32>
    %758 = vector.broadcast %750 : vector<16x1xf32> to vector<16x32xf32>
    %759 = arith.subf %744, %758 : vector<16x32xf32>
    %cst_291 = arith.constant 9.99999974E-6 : f32
    %760 = vector.broadcast %cst_291 : f32 to vector<16x1xf32>
    %761 = arith.addf %757, %760 : vector<16x1xf32>
    %762 = math.rsqrt %761 : vector<16x1xf32>
    %763 = vector.broadcast %762 : vector<16x1xf32> to vector<16x32xf32>
    %764 = arith.mulf %759, %763 : vector<16x32xf32>
    %765 = vector.broadcast %745 : vector<1x32xf32> to vector<16x32xf32>
    %766 = arith.mulf %764, %765 : vector<16x32xf32>
    %767 = vector.broadcast %746 : vector<1x32xf32> to vector<16x32xf32>
    %768 = arith.addf %766, %767 : vector<16x32xf32>
    %c0_292 = arith.constant 0 : index
    %c0_293 = arith.constant 0 : index
    %769 = vector.load %arg63[%c0_292, %c0_293] : memref<32x64xf32, #tpu.memory_space<vmem>>, vector<32x64xf32>
    %cst_294 = arith.constant dense<0.000000e+00> : vector<16x64xf32>
    %770 = tpu.matmul %768, %769, %cst_294 {dimension_numbers = #tpu.dot_dimension_numbers<[1], [0], [0], [1], [0, 0, 1, 1], [], []>} : vector<16x32xf32>, vector<32x64xf32>, vector<16x64xf32> -> vector<16x64xf32>
    %c0_295 = arith.constant 0 : index
    %c0_296 = arith.constant 0 : index
    %771 = vector.load %arg64[%c0_295, %c0_296] : memref<1x64xf32, #tpu.memory_space<vmem>>, vector<1x64xf32>
    %772 = vector.broadcast %771 : vector<1x64xf32> to vector<16x64xf32>
    %773 = arith.addf %770, %772 : vector<16x64xf32>
    %cst_297 = arith.constant 0.000000e+00 : f32
    %774 = vector.broadcast %cst_297 : f32 to vector<16x64xf32>
    %775 = arith.maximumf %773, %774 : vector<16x64xf32>
    %c0_298 = arith.constant 0 : index
    %c0_299 = arith.constant 0 : index
    %776 = vector.load %arg65[%c0_298, %c0_299] : memref<64x32xf32, #tpu.memory_space<vmem>>, vector<64x32xf32>
    %cst_300 = arith.constant dense<0.000000e+00> : vector<16x32xf32>
    %777 = tpu.matmul %775, %776, %cst_300 {dimension_numbers = #tpu.dot_dimension_numbers<[1], [0], [0], [1], [0, 0, 1, 1], [], []>} : vector<16x64xf32>, vector<64x32xf32>, vector<16x32xf32> -> vector<16x32xf32>
    %c0_301 = arith.constant 0 : index
    %c0_302 = arith.constant 0 : index
    %778 = vector.load %arg66[%c0_301, %c0_302] : memref<1x32xf32, #tpu.memory_space<vmem>>, vector<1x32xf32>
    %779 = vector.broadcast %778 : vector<1x32xf32> to vector<16x32xf32>
    %780 = arith.addf %777, %779 : vector<16x32xf32>
    %781 = arith.addf %768, %780 : vector<16x32xf32>
    %c0_303 = arith.constant 0 : index
    %c0_304 = arith.constant 0 : index
    %782 = vector.load %arg67[%c0_303, %c0_304] : memref<1x32xf32, #tpu.memory_space<vmem>>, vector<1x32xf32>
    %c0_305 = arith.constant 0 : index
    %c0_306 = arith.constant 0 : index
    %783 = vector.load %arg68[%c0_305, %c0_306] : memref<1x32xf32, #tpu.memory_space<vmem>>, vector<1x32xf32>
    %cst_307 = arith.constant dense<0.000000e+00> : vector<16xf32>
    %784 = vector.multi_reduction <add>, %781, %cst_307 [1] : vector<16x32xf32> to vector<16xf32>
    %785 = vector.shape_cast %784 : vector<16xf32> to vector<16x1xf32>
    %cst_308 = arith.constant 3.200000e+01 : f32
    %786 = vector.broadcast %cst_308 : f32 to vector<16x1xf32>
    %787 = arith.divf %785, %786 : vector<16x1xf32>
    %788 = vector.broadcast %787 : vector<16x1xf32> to vector<16x32xf32>
    %789 = arith.subf %781, %788 : vector<16x32xf32>
    %790 = arith.mulf %789, %789 : vector<16x32xf32>
    %cst_309 = arith.constant dense<0.000000e+00> : vector<16xf32>
    %791 = vector.multi_reduction <add>, %790, %cst_309 [1] : vector<16x32xf32> to vector<16xf32>
    %792 = vector.shape_cast %791 : vector<16xf32> to vector<16x1xf32>
    %cst_310 = arith.constant 3.200000e+01 : f32
    %793 = vector.broadcast %cst_310 : f32 to vector<16x1xf32>
    %794 = arith.divf %792, %793 : vector<16x1xf32>
    %795 = vector.broadcast %787 : vector<16x1xf32> to vector<16x32xf32>
    %796 = arith.subf %781, %795 : vector<16x32xf32>
    %cst_311 = arith.constant 9.99999974E-6 : f32
    %797 = vector.broadcast %cst_311 : f32 to vector<16x1xf32>
    %798 = arith.addf %794, %797 : vector<16x1xf32>
    %799 = math.rsqrt %798 : vector<16x1xf32>
    %800 = vector.broadcast %799 : vector<16x1xf32> to vector<16x32xf32>
    %801 = arith.mulf %796, %800 : vector<16x32xf32>
    %802 = vector.broadcast %782 : vector<1x32xf32> to vector<16x32xf32>
    %803 = arith.mulf %801, %802 : vector<16x32xf32>
    %804 = vector.broadcast %783 : vector<1x32xf32> to vector<16x32xf32>
    %805 = arith.addf %803, %804 : vector<16x32xf32>
    %c0_312 = arith.constant 0 : index
    %c0_313 = arith.constant 0 : index
    %806 = vector.load %arg69[%c0_312, %c0_313] : memref<1x32xf32, #tpu.memory_space<vmem>>, vector<1x32xf32>
    %c0_314 = arith.constant 0 : index
    %c0_315 = arith.constant 0 : index
    %807 = vector.load %arg70[%c0_314, %c0_315] : memref<1x32xf32, #tpu.memory_space<vmem>>, vector<1x32xf32>
    %cst_316 = arith.constant dense<0.000000e+00> : vector<16xf32>
    %808 = vector.multi_reduction <add>, %805, %cst_316 [1] : vector<16x32xf32> to vector<16xf32>
    %809 = vector.shape_cast %808 : vector<16xf32> to vector<16x1xf32>
    %cst_317 = arith.constant 3.200000e+01 : f32
    %810 = vector.broadcast %cst_317 : f32 to vector<16x1xf32>
    %811 = arith.divf %809, %810 : vector<16x1xf32>
    %812 = vector.broadcast %811 : vector<16x1xf32> to vector<16x32xf32>
    %813 = arith.subf %805, %812 : vector<16x32xf32>
    %814 = arith.mulf %813, %813 : vector<16x32xf32>
    %cst_318 = arith.constant dense<0.000000e+00> : vector<16xf32>
    %815 = vector.multi_reduction <add>, %814, %cst_318 [1] : vector<16x32xf32> to vector<16xf32>
    %816 = vector.shape_cast %815 : vector<16xf32> to vector<16x1xf32>
    %cst_319 = arith.constant 3.200000e+01 : f32
    %817 = vector.broadcast %cst_319 : f32 to vector<16x1xf32>
    %818 = arith.divf %816, %817 : vector<16x1xf32>
    %819 = vector.broadcast %811 : vector<16x1xf32> to vector<16x32xf32>
    %820 = arith.subf %805, %819 : vector<16x32xf32>
    %cst_320 = arith.constant 9.99999974E-6 : f32
    %821 = vector.broadcast %cst_320 : f32 to vector<16x1xf32>
    %822 = arith.addf %818, %821 : vector<16x1xf32>
    %823 = math.rsqrt %822 : vector<16x1xf32>
    %824 = vector.broadcast %823 : vector<16x1xf32> to vector<16x32xf32>
    %825 = arith.mulf %820, %824 : vector<16x32xf32>
    %826 = vector.broadcast %806 : vector<1x32xf32> to vector<16x32xf32>
    %827 = arith.mulf %825, %826 : vector<16x32xf32>
    %828 = vector.broadcast %807 : vector<1x32xf32> to vector<16x32xf32>
    %829 = arith.addf %827, %828 : vector<16x32xf32>
    %830 = vector.shape_cast %829 : vector<16x32xf32> to vector<2x8x32xf32>
    %cst_321 = arith.constant dense<0.000000e+00> : vector<2x32xf32>
    %831 = vector.multi_reduction <add>, %830, %cst_321 [1] : vector<2x8x32xf32> to vector<2x32xf32>
    %cst_322 = arith.constant 8.000000e+00 : f32
    %832 = vector.broadcast %cst_322 : f32 to vector<2x32xf32>
    %833 = arith.divf %831, %832 : vector<2x32xf32>
    %c0_323 = arith.constant 0 : index
    %c0_324 = arith.constant 0 : index
    %834 = vector.load %arg71[%c0_323, %c0_324] : memref<32x2xf32, #tpu.memory_space<vmem>>, vector<32x2xf32>
    %cst_325 = arith.constant dense<0.000000e+00> : vector<2x2xf32>
    %835 = tpu.matmul %833, %834, %cst_325 {dimension_numbers = #tpu.dot_dimension_numbers<[1], [0], [0], [1], [0, 0, 1, 1], [], []>} : vector<2x32xf32>, vector<32x2xf32>, vector<2x2xf32> -> vector<2x2xf32>
    %c0_326 = arith.constant 0 : index
    %c0_327 = arith.constant 0 : index
    %836 = vector.load %arg72[%c0_326, %c0_327] : memref<1x2xf32, #tpu.memory_space<vmem>>, vector<1x2xf32>
    %837 = vector.broadcast %836 : vector<1x2xf32> to vector<2x2xf32>
    %838 = arith.addf %835, %837 : vector<2x2xf32>
    %c0_328 = arith.constant 0 : index
    %c0_329 = arith.constant 0 : index
    %839 = vector.load %arg73[%c0_328, %c0_329] : memref<2x2xf32, #tpu.memory_space<vmem>>, vector<2x2xf32>
    tpu.vector_store %arg73[%c0_328, %c0_329], %838 {strides = array<i32>} : memref<2x2xf32, #tpu.memory_space<vmem>>, vector<2x2xf32>,
    return
  }
  func.func @transform_0(%arg0: i32) -> (i32, i32) {
    %c0_i32 = arith.constant 0 : i32
    %c0_i32_0 = arith.constant 0 : i32
    %c0_i32_1 = arith.constant 0 : i32
    return %c0_i32, %c0_i32_0 : i32, i32
  }
  func.func @transform_1(%arg0: i32) -> (i32, i32) {
    %c0_i32 = arith.constant 0 : i32
    %c0_i32_0 = arith.constant 0 : i32
    %c0_i32_1 = arith.constant 0 : i32
    return %c0_i32, %c0_i32_0 : i32, i32
  }
  func.func @transform_2(%arg0: i32) -> (i32, i32) {
    %c0_i32 = arith.constant 0 : i32
    %c0_i32_0 = arith.constant 0 : i32
    %c0_i32_1 = arith.constant 0 : i32
    return %c0_i32, %c0_i32_0 : i32, i32
  }
  func.func @transform_3(%arg0: i32) -> (i32, i32) {
    %c0_i32 = arith.constant 0 : i32
    %c0_i32_0 = arith.constant 0 : i32
    %c0_i32_1 = arith.constant 0 : i32
    return %c0_i32, %c0_i32_0 : i32, i32
  }
  func.func @transform_4(%arg0: i32) -> (i32, i32) {
    %c0_i32 = arith.constant 0 : i32
    %c0_i32_0 = arith.constant 0 : i32
    %c0_i32_1 = arith.constant 0 : i32
    return %c0_i32, %c0_i32_0 : i32, i32
  }
  func.func @transform_5(%arg0: i32) -> (i32, i32) {
    %c0_i32 = arith.constant 0 : i32
    %c0_i32_0 = arith.constant 0 : i32
    %c0_i32_1 = arith.constant 0 : i32
    return %c0_i32, %c0_i32_0 : i32, i32
  }
  func.func @transform_6(%arg0: i32) -> (i32, i32) {
    %c0_i32 = arith.constant 0 : i32
    %c0_i32_0 = arith.constant 0 : i32
    %c0_i32_1 = arith.constant 0 : i32
    return %c0_i32, %c0_i32_0 : i32, i32
  }
  func.func @transform_7(%arg0: i32) -> (i32, i32) {
    %c0_i32 = arith.constant 0 : i32
    %c0_i32_0 = arith.constant 0 : i32
    %c0_i32_1 = arith.constant 0 : i32
    return %c0_i32, %c0_i32_0 : i32, i32
  }
  func.func @transform_8(%arg0: i32) -> (i32, i32) {
    %c0_i32 = arith.constant 0 : i32
    %c0_i32_0 = arith.constant 0 : i32
    %c0_i32_1 = arith.constant 0 : i32
    return %c0_i32, %c0_i32_0 : i32, i32
  }
  func.func @transform_9(%arg0: i32) -> (i32, i32) {
    %c0_i32 = arith.constant 0 : i32
    %c0_i32_0 = arith.constant 0 : i32
    %c0_i32_1 = arith.constant 0 : i32
    return %c0_i32, %c0_i32_0 : i32, i32
  }
  func.func @transform_10(%arg0: i32) -> (i32, i32) {
    %c0_i32 = arith.constant 0 : i32
    %c0_i32_0 = arith.constant 0 : i32
    %c0_i32_1 = arith.constant 0 : i32
    return %c0_i32, %c0_i32_0 : i32, i32
  }
  func.func @transform_11(%arg0: i32) -> (i32, i32) {
    %c0_i32 = arith.constant 0 : i32
    %c0_i32_0 = arith.constant 0 : i32
    %c0_i32_1 = arith.constant 0 : i32
    return %c0_i32, %c0_i32_0 : i32, i32
  }
  func.func @transform_12(%arg0: i32) -> (i32, i32) {
    %c0_i32 = arith.constant 0 : i32
    %c0_i32_0 = arith.constant 0 : i32
    %c0_i32_1 = arith.constant 0 : i32
    return %c0_i32, %c0_i32_0 : i32, i32
  }
  func.func @transform_13(%arg0: i32) -> (i32, i32) {
    %c0_i32 = arith.constant 0 : i32
    %c0_i32_0 = arith.constant 0 : i32
    %c0_i32_1 = arith.constant 0 : i32
    return %c0_i32, %c0_i32_0 : i32, i32
  }
  func.func @transform_14(%arg0: i32) -> (i32, i32) {
    %c0_i32 = arith.constant 0 : i32
    %c0_i32_0 = arith.constant 0 : i32
    %c0_i32_1 = arith.constant 0 : i32
    return %c0_i32, %c0_i32_0 : i32, i32
  }
  func.func @transform_15(%arg0: i32) -> (i32, i32) {
    %c0_i32 = arith.constant 0 : i32
    %c0_i32_0 = arith.constant 0 : i32
    %c0_i32_1 = arith.constant 0 : i32
    return %c0_i32, %c0_i32_0 : i32, i32
  }
  func.func @transform_16(%arg0: i32) -> (i32, i32) {
    %c0_i32 = arith.constant 0 : i32
    %c0_i32_0 = arith.constant 0 : i32
    %c0_i32_1 = arith.constant 0 : i32
    return %c0_i32, %c0_i32_0 : i32, i32
  }
  func.func @transform_17(%arg0: i32) -> (i32, i32) {
    %c0_i32 = arith.constant 0 : i32
    %c0_i32_0 = arith.constant 0 : i32
    %c0_i32_1 = arith.constant 0 : i32
    return %c0_i32, %c0_i32_0 : i32, i32
  }
  func.func @transform_18(%arg0: i32) -> (i32, i32) {
    %c0_i32 = arith.constant 0 : i32
    %c0_i32_0 = arith.constant 0 : i32
    %c0_i32_1 = arith.constant 0 : i32
    return %c0_i32, %c0_i32_0 : i32, i32
  }
  func.func @transform_19(%arg0: i32) -> (i32, i32) {
    %c0_i32 = arith.constant 0 : i32
    %c0_i32_0 = arith.constant 0 : i32
    %c0_i32_1 = arith.constant 0 : i32
    return %c0_i32, %c0_i32_0 : i32, i32
  }
  func.func @transform_20(%arg0: i32) -> (i32, i32) {
    %c0_i32 = arith.constant 0 : i32
    %c0_i32_0 = arith.constant 0 : i32
    %c0_i32_1 = arith.constant 0 : i32
    return %c0_i32, %c0_i32_0 : i32, i32
  }
  func.func @transform_21(%arg0: i32) -> (i32, i32) {
    %c0_i32 = arith.constant 0 : i32
    %c0_i32_0 = arith.constant 0 : i32
    %c0_i32_1 = arith.constant 0 : i32
    return %c0_i32, %c0_i32_0 : i32, i32
  }
  func.func @transform_22(%arg0: i32) -> (i32, i32) {
    %c0_i32 = arith.constant 0 : i32
    %c0_i32_0 = arith.constant 0 : i32
    %c0_i32_1 = arith.constant 0 : i32
    return %c0_i32, %c0_i32_0 : i32, i32
  }
  func.func @transform_23(%arg0: i32) -> (i32, i32) {
    %c0_i32 = arith.constant 0 : i32
    %c0_i32_0 = arith.constant 0 : i32
    %c0_i32_1 = arith.constant 0 : i32
    return %c0_i32, %c0_i32_0 : i32, i32
  }
  func.func @transform_24(%arg0: i32) -> (i32, i32) {
    %c0_i32 = arith.constant 0 : i32
    %c0_i32_0 = arith.constant 0 : i32
    %c0_i32_1 = arith.constant 0 : i32
    return %c0_i32, %c0_i32_0 : i32, i32
  }
  func.func @transform_25(%arg0: i32) -> (i32, i32) {
    %c0_i32 = arith.constant 0 : i32
    %c0_i32_0 = arith.constant 0 : i32
    %c0_i32_1 = arith.constant 0 : i32
    return %c0_i32, %c0_i32_0 : i32, i32
  }
  func.func @transform_26(%arg0: i32) -> (i32, i32) {
    %c0_i32 = arith.constant 0 : i32
    %c0_i32_0 = arith.constant 0 : i32
    %c0_i32_1 = arith.constant 0 : i32
    return %c0_i32, %c0_i32_0 : i32, i32
  }
  func.func @transform_27(%arg0: i32) -> (i32, i32) {
    %c0_i32 = arith.constant 0 : i32
    %c0_i32_0 = arith.constant 0 : i32
    %c0_i32_1 = arith.constant 0 : i32
    return %c0_i32, %c0_i32_0 : i32, i32
  }
  func.func @transform_28(%arg0: i32) -> (i32, i32) {
    %c0_i32 = arith.constant 0 : i32
    %c0_i32_0 = arith.constant 0 : i32
    %c0_i32_1 = arith.constant 0 : i32
    return %c0_i32, %c0_i32_0 : i32, i32
  }
  func.func @transform_29(%arg0: i32) -> (i32, i32) {
    %c0_i32 = arith.constant 0 : i32
    %c0_i32_0 = arith.constant 0 : i32
    %c0_i32_1 = arith.constant 0 : i32
    return %c0_i32, %c0_i32_0 : i32, i32
  }
  func.func @transform_30(%arg0: i32) -> (i32, i32) {
    %c0_i32 = arith.constant 0 : i32
    %c0_i32_0 = arith.constant 0 : i32
    %c0_i32_1 = arith.constant 0 : i32
    return %c0_i32, %c0_i32_0 : i32, i32
  }
  func.func @transform_31(%arg0: i32) -> (i32, i32) {
    %c0_i32 = arith.constant 0 : i32
    %c0_i32_0 = arith.constant 0 : i32
    %c0_i32_1 = arith.constant 0 : i32
    return %c0_i32, %c0_i32_0 : i32, i32
  }
  func.func @transform_32(%arg0: i32) -> (i32, i32) {
    %c0_i32 = arith.constant 0 : i32
    %c0_i32_0 = arith.constant 0 : i32
    %c0_i32_1 = arith.constant 0 : i32
    return %c0_i32, %c0_i32_0 : i32, i32
  }
  func.func @transform_33(%arg0: i32) -> (i32, i32) {
    %c0_i32 = arith.constant 0 : i32
    %c0_i32_0 = arith.constant 0 : i32
    %c0_i32_1 = arith.constant 0 : i32
    return %c0_i32, %c0_i32_0 : i32, i32
  }
  func.func @transform_34(%arg0: i32) -> (i32, i32) {
    %c0_i32 = arith.constant 0 : i32
    %c0_i32_0 = arith.constant 0 : i32
    %c0_i32_1 = arith.constant 0 : i32
    return %c0_i32, %c0_i32_0 : i32, i32
  }
  func.func @transform_35(%arg0: i32) -> (i32, i32) {
    %c0_i32 = arith.constant 0 : i32
    %c0_i32_0 = arith.constant 0 : i32
    %c0_i32_1 = arith.constant 0 : i32
    return %c0_i32, %c0_i32_0 : i32, i32
  }
  func.func @transform_36(%arg0: i32) -> (i32, i32) {
    %c0_i32 = arith.constant 0 : i32
    %c0_i32_0 = arith.constant 0 : i32
    %c0_i32_1 = arith.constant 0 : i32
    return %c0_i32, %c0_i32_0 : i32, i32
  }
  func.func @transform_37(%arg0: i32) -> (i32, i32) {
    %c0_i32 = arith.constant 0 : i32
    %c0_i32_0 = arith.constant 0 : i32
    %c0_i32_1 = arith.constant 0 : i32
    return %c0_i32, %c0_i32_0 : i32, i32
  }
  func.func @transform_38(%arg0: i32) -> (i32, i32) {
    %c0_i32 = arith.constant 0 : i32
    %c0_i32_0 = arith.constant 0 : i32
    %c0_i32_1 = arith.constant 0 : i32
    return %c0_i32, %c0_i32_0 : i32, i32
  }
  func.func @transform_39(%arg0: i32) -> (i32, i32) {
    %c0_i32 = arith.constant 0 : i32
    %c0_i32_0 = arith.constant 0 : i32
    %c0_i32_1 = arith.constant 0 : i32
    return %c0_i32, %c0_i32_0 : i32, i32
  }
  func.func @transform_40(%arg0: i32) -> (i32, i32) {
    %c0_i32 = arith.constant 0 : i32
    %c0_i32_0 = arith.constant 0 : i32
    %c0_i32_1 = arith.constant 0 : i32
    return %c0_i32, %c0_i32_0 : i32, i32
  }
  func.func @transform_41(%arg0: i32) -> (i32, i32) {
    %c0_i32 = arith.constant 0 : i32
    %c0_i32_0 = arith.constant 0 : i32
    %c0_i32_1 = arith.constant 0 : i32
    return %c0_i32, %c0_i32_0 : i32, i32
  }
  func.func @transform_42(%arg0: i32) -> (i32, i32) {
    %c0_i32 = arith.constant 0 : i32
    %c0_i32_0 = arith.constant 0 : i32
    %c0_i32_1 = arith.constant 0 : i32
    return %c0_i32, %c0_i32_0 : i32, i32
  }
  func.func @transform_43(%arg0: i32) -> (i32, i32) {
    %c0_i32 = arith.constant 0 : i32
    %c0_i32_0 = arith.constant 0 : i32
    %c0_i32_1 = arith.constant 0 : i32
    return %c0_i32, %c0_i32_0 : i32, i32
  }
  func.func @transform_44(%arg0: i32) -> (i32, i32) {
    %c0_i32 = arith.constant 0 : i32
    %c0_i32_0 = arith.constant 0 : i32
    %c0_i32_1 = arith.constant 0 : i32
    return %c0_i32, %c0_i32_0 : i32, i32
  }
  func.func @transform_45(%arg0: i32) -> (i32, i32) {
    %c0_i32 = arith.constant 0 : i32
    %c0_i32_0 = arith.constant 0 : i32
    %c0_i32_1 = arith.constant 0 : i32
    return %c0_i32, %c0_i32_0 : i32, i32
  }
  func.func @transform_46(%arg0: i32) -> (i32, i32) {
    %c0_i32 = arith.constant 0 : i32
    %c0_i32_0 = arith.constant 0 : i32
    %c0_i32_1 = arith.constant 0 : i32
    return %c0_i32, %c0_i32_0 : i32, i32
  }
  func.func @transform_47(%arg0: i32) -> (i32, i32) {
    %c0_i32 = arith.constant 0 : i32
    %c0_i32_0 = arith.constant 0 : i32
    %c0_i32_1 = arith.constant 0 : i32
    return %c0_i32, %c0_i32_0 : i32, i32
  }
  func.func @transform_48(%arg0: i32) -> (i32, i32) {
    %c0_i32 = arith.constant 0 : i32
    %c0_i32_0 = arith.constant 0 : i32
    %c0_i32_1 = arith.constant 0 : i32
    return %c0_i32, %c0_i32_0 : i32, i32
  }
  func.func @transform_49(%arg0: i32) -> (i32, i32) {
    %c0_i32 = arith.constant 0 : i32
    %c0_i32_0 = arith.constant 0 : i32
    %c0_i32_1 = arith.constant 0 : i32
    return %c0_i32, %c0_i32_0 : i32, i32
  }
  func.func @transform_50(%arg0: i32) -> (i32, i32) {
    %c0_i32 = arith.constant 0 : i32
    %c0_i32_0 = arith.constant 0 : i32
    %c0_i32_1 = arith.constant 0 : i32
    return %c0_i32, %c0_i32_0 : i32, i32
  }
  func.func @transform_51(%arg0: i32) -> (i32, i32) {
    %c0_i32 = arith.constant 0 : i32
    %c0_i32_0 = arith.constant 0 : i32
    %c0_i32_1 = arith.constant 0 : i32
    return %c0_i32, %c0_i32_0 : i32, i32
  }
  func.func @transform_52(%arg0: i32) -> (i32, i32) {
    %c0_i32 = arith.constant 0 : i32
    %c0_i32_0 = arith.constant 0 : i32
    %c0_i32_1 = arith.constant 0 : i32
    return %c0_i32, %c0_i32_0 : i32, i32
  }
  func.func @transform_53(%arg0: i32) -> (i32, i32) {
    %c0_i32 = arith.constant 0 : i32
    %c0_i32_0 = arith.constant 0 : i32
    %c0_i32_1 = arith.constant 0 : i32
    return %c0_i32, %c0_i32_0 : i32, i32
  }
  func.func @transform_54(%arg0: i32) -> (i32, i32) {
    %c0_i32 = arith.constant 0 : i32
    %c0_i32_0 = arith.constant 0 : i32
    %c0_i32_1 = arith.constant 0 : i32
    return %c0_i32, %c0_i32_0 : i32, i32
  }
  func.func @transform_55(%arg0: i32) -> (i32, i32) {
    %c0_i32 = arith.constant 0 : i32
    %c0_i32_0 = arith.constant 0 : i32
    %c0_i32_1 = arith.constant 0 : i32
    return %c0_i32, %c0_i32_0 : i32, i32
  }
  func.func @transform_56(%arg0: i32) -> (i32, i32) {
    %c0_i32 = arith.constant 0 : i32
    %c0_i32_0 = arith.constant 0 : i32
    %c0_i32_1 = arith.constant 0 : i32
    return %c0_i32, %c0_i32_0 : i32, i32
  }
  func.func @transform_57(%arg0: i32) -> (i32, i32) {
    %c0_i32 = arith.constant 0 : i32
    %c0_i32_0 = arith.constant 0 : i32
    %c0_i32_1 = arith.constant 0 : i32
    return %c0_i32, %c0_i32_0 : i32, i32
  }
  func.func @transform_58(%arg0: i32) -> (i32, i32) {
    %c0_i32 = arith.constant 0 : i32
    %c0_i32_0 = arith.constant 0 : i32
    %c0_i32_1 = arith.constant 0 : i32
    return %c0_i32, %c0_i32_0 : i32, i32
  }
  func.func @transform_59(%arg0: i32) -> (i32, i32) {
    %c0_i32 = arith.constant 0 : i32
    %c0_i32_0 = arith.constant 0 : i32
    %c0_i32_1 = arith.constant 0 : i32
    return %c0_i32, %c0_i32_0 : i32, i32
  }
  func.func @transform_60(%arg0: i32) -> (i32, i32) {
    %c0_i32 = arith.constant 0 : i32
    %c0_i32_0 = arith.constant 0 : i32
    %c0_i32_1 = arith.constant 0 : i32
    return %c0_i32, %c0_i32_0 : i32, i32
  }
  func.func @transform_61(%arg0: i32) -> (i32, i32) {
    %c0_i32 = arith.constant 0 : i32
    %c0_i32_0 = arith.constant 0 : i32
    %c0_i32_1 = arith.constant 0 : i32
    return %c0_i32, %c0_i32_0 : i32, i32
  }
  func.func @transform_62(%arg0: i32) -> (i32, i32) {
    %c0_i32 = arith.constant 0 : i32
    %c0_i32_0 = arith.constant 0 : i32
    %c0_i32_1 = arith.constant 0 : i32
    return %c0_i32, %c0_i32_0 : i32, i32
  }
  func.func @transform_63(%arg0: i32) -> (i32, i32) {
    %c0_i32 = arith.constant 0 : i32
    %c0_i32_0 = arith.constant 0 : i32
    %c0_i32_1 = arith.constant 0 : i32
    return %c0_i32, %c0_i32_0 : i32, i32
  }
  func.func @transform_64(%arg0: i32) -> (i32, i32) {
    %c0_i32 = arith.constant 0 : i32
    %c0_i32_0 = arith.constant 0 : i32
    %c0_i32_1 = arith.constant 0 : i32
    return %c0_i32, %c0_i32_0 : i32, i32
  }
  func.func @transform_65(%arg0: i32) -> (i32, i32) {
    %c0_i32 = arith.constant 0 : i32
    %c0_i32_0 = arith.constant 0 : i32
    %c0_i32_1 = arith.constant 0 : i32
    return %c0_i32, %c0_i32_0 : i32, i32
  }
  func.func @transform_66(%arg0: i32) -> (i32, i32) {
    %c0_i32 = arith.constant 0 : i32
    %c0_i32_0 = arith.constant 0 : i32
    %c0_i32_1 = arith.constant 0 : i32
    return %c0_i32, %c0_i32_0 : i32, i32
  }
  func.func @transform_67(%arg0: i32) -> (i32, i32) {
    %c0_i32 = arith.constant 0 : i32
    %c0_i32_0 = arith.constant 0 : i32
    %c0_i32_1 = arith.constant 0 : i32
    return %c0_i32, %c0_i32_0 : i32, i32
  }
  func.func @transform_68(%arg0: i32) -> (i32, i32) {
    %c0_i32 = arith.constant 0 : i32
    %c0_i32_0 = arith.constant 0 : i32
    %c0_i32_1 = arith.constant 0 : i32
    return %c0_i32, %c0_i32_0 : i32, i32
  }
  func.func @transform_69(%arg0: i32) -> (i32, i32) {
    %c0_i32 = arith.constant 0 : i32
    %c0_i32_0 = arith.constant 0 : i32
    %c0_i32_1 = arith.constant 0 : i32
    return %c0_i32, %c0_i32_0 : i32, i32
  }
  func.func @transform_70(%arg0: i32) -> (i32, i32) {
    %c0_i32 = arith.constant 0 : i32
    %c0_i32_0 = arith.constant 0 : i32
    %c0_i32_1 = arith.constant 0 : i32
    return %c0_i32, %c0_i32_0 : i32, i32
  }
  func.func @transform_71(%arg0: i32) -> (i32, i32) {
    %c0_i32 = arith.constant 0 : i32
    %c0_i32_0 = arith.constant 0 : i32
    %c0_i32_1 = arith.constant 0 : i32
    return %c0_i32, %c0_i32_0 : i32, i32
  }
  func.func @transform_72(%arg0: i32) -> (i32, i32) {
    %c0_i32 = arith.constant 0 : i32
    %c0_i32_0 = arith.constant 0 : i32
    %c0_i32_1 = arith.constant 0 : i32
    return %c0_i32, %c0_i32_0 : i32, i32
  }
}

</mosaic_0001>

<llo_original>
// kernel: course_recommendation_forward.1
$region0: #{course_recommendation_forward.1}
  #allocation0 [shape = 'u32[]', space=smem, size = 0x4, offset = 0x4, fixed_abs, tag = 'smem constant byte address 0x4 - core index']
  #allocation1 [shape = 'u32[72,128]{1,0:T(1,128)}', space=vmem, size = 0x9000, scoped, tag = 'internal scratch']
  %s0 = inlined_call_operand.smem [shape: u32[73], index: -1, kind: input, shape index: {}]
  %s1 = sld [smem:[%s0]]
  %s2 = scalar_lea.smem %s0, 1
  %s3 = sld [smem:[%s2]]
  %s4 = scalar_lea.smem %s0, 2
  %s5 = sld [smem:[%s4]]
  %s6 = scalar_lea.smem %s0, 3
  %s7 = sld [smem:[%s6]]
  %s8 = scalar_lea.smem %s0, 4
  %s9 = sld [smem:[%s8]]
  %s10 = scalar_lea.smem %s0, 5
  %s11 = sld [smem:[%s10]]
  %s12 = scalar_lea.smem %s0, 6
  %s13 = sld [smem:[%s12]]
  %s14 = scalar_lea.smem %s0, 7
  %s15 = sld [smem:[%s14]]
  %s16 = scalar_lea.smem %s0, 8
  %s17 = sld [smem:[%s16]]
  %s18 = scalar_lea.smem %s0, 9
  %s19 = sld [smem:[%s18]]
  %s20 = scalar_lea.smem %s0, 10
  %s21 = sld [smem:[%s20]]
  %s22 = scalar_lea.smem %s0, 11
  %s23 = sld [smem:[%s22]]
  %s24 = scalar_lea.smem %s0, 12
  %s25 = sld [smem:[%s24]]
  %s26 = scalar_lea.smem %s0, 13
  %s27 = sld [smem:[%s26]]
  %s28 = scalar_lea.smem %s0, 14
  %s29 = sld [smem:[%s28]]
  %s30 = scalar_lea.smem %s0, 15
  %s31 = sld [smem:[%s30]]
  %s32 = scalar_lea.smem %s0, 16
  %s33 = sld [smem:[%s32]]
  %s34 = scalar_lea.smem %s0, 17
  %s35 = sld [smem:[%s34]]
  %s36 = scalar_lea.smem %s0, 18
  %s37 = sld [smem:[%s36]]
  %s38 = scalar_lea.smem %s0, 19
  %s39 = sld [smem:[%s38]]
  %s40 = scalar_lea.smem %s0, 20
  %s41 = sld [smem:[%s40]]
  %s42 = scalar_lea.smem %s0, 21
  %s43 = sld [smem:[%s42]]
  %s44 = scalar_lea.smem %s0, 22
  %s45 = sld [smem:[%s44]]
  %s46 = scalar_lea.smem %s0, 23
  %s47 = sld [smem:[%s46]]
  %s48 = scalar_lea.smem %s0, 24
  %s49 = sld [smem:[%s48]]
  %s50 = scalar_lea.smem %s0, 25
  %s51 = sld [smem:[%s50]]
  %s52 = scalar_lea.smem %s0, 26
  %s53 = sld [smem:[%s52]]
  %s54 = scalar_lea.smem %s0, 27
  %s55 = sld [smem:[%s54]]
  %s56 = scalar_lea.smem %s0, 28
  %s57 = sld [smem:[%s56]]
  %s58 = scalar_lea.smem %s0, 29
  %s59 = sld [smem:[%s58]]
  %s60 = scalar_lea.smem %s0, 30
  %s61 = sld [smem:[%s60]]
  %s62 = scalar_lea.smem %s0, 31
  %s63 = sld [smem:[%s62]]
  %s64 = scalar_lea.smem %s0, 32
  %s65 = sld [smem:[%s64]]
  %s66 = scalar_lea.smem %s0, 33
  %s67 = sld [smem:[%s66]]
  %s68 = scalar_lea.smem %s0, 34
  %s69 = sld [smem:[%s68]]
  %s70 = scalar_lea.smem %s0, 35
  %s71 = sld [smem:[%s70]]
  %s72 = scalar_lea.smem %s0, 36
  %s73 = sld [smem:[%s72]]
  %s74 = scalar_lea.smem %s0, 37
  %s75 = sld [smem:[%s74]]
  %s76 = scalar_lea.smem %s0, 38
  %s77 = sld [smem:[%s76]]
  %s78 = scalar_lea.smem %s0, 39
  %s79 = sld [smem:[%s78]]
  %s80 = scalar_lea.smem %s0, 40
  %s81 = sld [smem:[%s80]]
  %s82 = scalar_lea.smem %s0, 41
  %s83 = sld [smem:[%s82]]
  %s84 = scalar_lea.smem %s0, 42
  %s85 = sld [smem:[%s84]]
  %s86 = scalar_lea.smem %s0, 43
  %s87 = sld [smem:[%s86]]
  %s88 = scalar_lea.smem %s0, 44
  %s89 = sld [smem:[%s88]]
  %s90 = scalar_lea.smem %s0, 45
  %s91 = sld [smem:[%s90]]
  %s92 = scalar_lea.smem %s0, 46
  %s93 = sld [smem:[%s92]]
  %s94 = scalar_lea.smem %s0, 47
  %s95 = sld [smem:[%s94]]
  %s96 = scalar_lea.smem %s0, 48
  %s97 = sld [smem:[%s96]]
  %s98 = scalar_lea.smem %s0, 49
  %s99 = sld [smem:[%s98]]
  %s100 = scalar_lea.smem %s0, 50
  %s101 = sld [smem:[%s100]]
  %s102 = scalar_lea.smem %s0, 51
  %s103 = sld [smem:[%s102]]
  %s104 = scalar_lea.smem %s0, 52
  %s105 = sld [smem:[%s104]]
  %s106 = scalar_lea.smem %s0, 53
  %s107 = sld [smem:[%s106]]
  %s108 = scalar_lea.smem %s0, 54
  %s109 = sld [smem:[%s108]]
  %s110 = scalar_lea.smem %s0, 55
  %s111 = sld [smem:[%s110]]
  %s112 = scalar_lea.smem %s0, 56
  %s113 = sld [smem:[%s112]]
  %s114 = scalar_lea.smem %s0, 57
  %s115 = sld [smem:[%s114]]
  %s116 = scalar_lea.smem %s0, 58
  %s117 = sld [smem:[%s116]]
  %s118 = scalar_lea.smem %s0, 59
  %s119 = sld [smem:[%s118]]
  %s120 = scalar_lea.smem %s0, 60
  %s121 = sld [smem:[%s120]]
  %s122 = scalar_lea.smem %s0, 61
  %s123 = sld [smem:[%s122]]
  %s124 = scalar_lea.smem %s0, 62
  %s125 = sld [smem:[%s124]]
  %s126 = scalar_lea.smem %s0, 63
  %s127 = sld [smem:[%s126]]
  %s128 = scalar_lea.smem %s0, 64
  %s129 = sld [smem:[%s128]]
  %s130 = scalar_lea.smem %s0, 65
  %s131 = sld [smem:[%s130]]
  %s132 = scalar_lea.smem %s0, 66
  %s133 = sld [smem:[%s132]]
  %s134 = scalar_lea.smem %s0, 67
  %s135 = sld [smem:[%s134]]
  %s136 = scalar_lea.smem %s0, 68
  %s137 = sld [smem:[%s136]]
  %s138 = scalar_lea.smem %s0, 69
  %s139 = sld [smem:[%s138]]
  %s140 = scalar_lea.smem %s0, 70
  %s141 = sld [smem:[%s140]]
  %s142 = scalar_lea.smem %s0, 71
  %s143 = sld [smem:[%s142]]
  %s144 = scalar_lea.smem %s0, 72
  %s145 = sld [smem:[%s144]]
  %s146 = sld [smem:[#allocation0]]
  $region406: #{course_recommendation_forward.1} parent=0
    _
  %s148 = ssub.s32 1, %s146
  %s149 = scalar_select 0, %s148, %s146
  $region1: #{course_recommendation_forward.1} parent=0
    #allocation2 [shape = 'u8[512]{0}', space=vmem, size = 0x400, scoped, tag = 'input window, operand 32, single buffered']
    #allocation3 [shape = 's32[1]{0}', space=sflag, size = 0x4, scoped, tag = 'scoped memory for course_recommendation_forward.1']
    #allocation4 [shape = 's32[1]{0}', space=sflag, size = 0x4, scoped, tag = 'scoped memory for course_recommendation_forward.1']
    #allocation5 [shape = 'u8[512]{0}', space=vmem, size = 0x400, scoped, tag = 'input window, operand 33, single buffered']
    #allocation6 [shape = 's32[1]{0}', space=sflag, size = 0x4, scoped, tag = 'scoped memory for course_recommendation_forward.1']
    #allocation7 [shape = 'u8[512]{0}', space=vmem, size = 0x400, scoped, tag = 'input window, operand 35, single buffered']
    #allocation8 [shape = 'u8[512]{0}', space=vmem, size = 0x400, scoped, tag = 'input window, operand 37, single buffered']
    #allocation9 [shape = 's32[1]{0}', space=sflag, size = 0x4, scoped, tag = 'scoped memory for course_recommendation_forward.1']
    #allocation10 [shape = 'u8[512]{0}', space=vmem, size = 0x400, scoped, tag = 'input window, operand 39, single buffered']
    #allocation11 [shape = 'u8[512]{0}', space=vmem, size = 0x400, scoped, tag = 'input window, operand 40, single buffered']
    #allocation12 [shape = 's32[1]{0}', space=sflag, size = 0x4, scoped, tag = 'scoped memory for course_recommendation_forward.1']
    #allocation13 [shape = 'u8[512]{0}', space=vmem, size = 0x400, scoped, tag = 'input window, operand 41, single buffered']
    #allocation14 [shape = 'u8[512]{0}', space=vmem, size = 0x400, scoped, tag = 'input window, operand 43, single buffered']
    #allocation15 [shape = 's32[1]{0}', space=sflag, size = 0x4, scoped, tag = 'scoped memory for course_recommendation_forward.1']
    #allocation16 [shape = 'u8[512]{0}', space=vmem, size = 0x400, scoped, tag = 'input window, operand 45, single buffered']
    #allocation17 [shape = 'u8[512]{0}', space=vmem, size = 0x400, scoped, tag = 'input window, operand 46, single buffered']
    #allocation18 [shape = 's32[1]{0}', space=sflag, size = 0x4, scoped, tag = 'scoped memory for course_recommendation_forward.1']
    #allocation19 [shape = 'u8[512]{0}', space=vmem, size = 0x400, scoped, tag = 'input window, operand 47, single buffered']
    #allocation20 [shape = 'u8[512]{0}', space=vmem, size = 0x400, scoped, tag = 'input window, operand 49, single buffered']
    #allocation21 [shape = 's32[1]{0}', space=sflag, size = 0x4, scoped, tag = 'scoped memory for course_recommendation_forward.1']
    #allocation22 [shape = 'u8[512]{0}', space=vmem, size = 0x400, scoped, tag = 'input window, operand 51, single buffered']
    #allocation23 [shape = 'u8[512]{0}', space=vmem, size = 0x400, scoped, tag = 'input window, operand 52, single buffered']
    #allocation24 [shape = 's32[1]{0}', space=sflag, size = 0x4, scoped, tag = 'scoped memory for course_recommendation_forward.1']
    #allocation25 [shape = 'u8[512]{0}', space=vmem, size = 0x400, scoped, tag = 'input window, operand 53, single buffered']
    #allocation26 [shape = 'u8[512]{0}', space=vmem, size = 0x400, scoped, tag = 'input window, operand 55, single buffered']
    #allocation27 [shape = 's32[1]{0}', space=sflag, size = 0x4, scoped, tag = 'scoped memory for course_recommendation_forward.1']
    #allocation28 [shape = 'u8[512]{0}', space=vmem, size = 0x400, scoped, tag = 'input window, operand 57, single buffered']
    #allocation29 [shape = 'u8[512]{0}', space=vmem, size = 0x400, scoped, tag = 'input window, operand 59, single buffered']
    #allocation30 [shape = 's32[1]{0}', space=sflag, size = 0x4, scoped, tag = 'scoped memory for course_recommendation_forward.1']
    #allocation31 [shape = 'u8[512]{0}', space=vmem, size = 0x400, scoped, tag = 'input window, operand 60, single buffered']
    #allocation32 [shape = 'u8[512]{0}', space=vmem, size = 0x400, scoped, tag = 'input window, operand 61, single buffered']
    #allocation33 [shape = 's32[1]{0}', space=sflag, size = 0x4, scoped, tag = 'scoped memory for course_recommendation_forward.1']
    #allocation34 [shape = 'u8[512]{0}', space=vmem, size = 0x400, scoped, tag = 'input window, operand 63, single buffered']
    #allocation35 [shape = 'u8[512]{0}', space=vmem, size = 0x400, scoped, tag = 'input window, operand 65, single buffered']
    #allocation36 [shape = 's32[1]{0}', space=sflag, size = 0x4, scoped, tag = 'scoped memory for course_recommendation_forward.1']
    #allocation37 [shape = 'u8[512]{0}', space=vmem, size = 0x400, scoped, tag = 'input window, operand 66, single buffered']
    #allocation38 [shape = 'u8[512]{0}', space=vmem, size = 0x400, scoped, tag = 'input window, operand 67, single buffered']
    #allocation39 [shape = 's32[1]{0}', space=sflag, size = 0x4, scoped, tag = 'scoped memory for course_recommendation_forward.1']
    #allocation40 [shape = 'u8[512]{0}', space=vmem, size = 0x400, scoped, tag = 'input window, operand 68, single buffered']
    #allocation41 [shape = 'u8[512]{0}', space=vmem, size = 0x400, scoped, tag = 'input window, operand 69, single buffered']
    #allocation42 [shape = 's32[1]{0}', space=sflag, size = 0x4, scoped, tag = 'scoped memory for course_recommendation_forward.1']
    #allocation43 [shape = 'u8[512]{0}', space=vmem, size = 0x400, scoped, tag = 'input window, operand 71, single buffered']
    #allocation44 [shape = 'u8[1024]{0}', space=vmem, size = 0x400, scoped, tag = 'output window, operand 0, single buffered']
    %150 = vsyncpa [#allocation3], 0
    %151 = vsyncpa [#allocation6], 0
    %152 = vsyncpa [#allocation9], 0
    %153 = vsyncpa [#allocation12], 0
    %154 = vsyncpa [#allocation15], 0
    %155 = vsyncpa [#allocation18], 0
    %156 = vsyncpa [#allocation21], 0
    %157 = vsyncpa [#allocation24], 0
    %158 = vsyncpa [#allocation27], 0
    %159 = vsyncpa [#allocation30], 0
    %160 = vsyncpa [#allocation33], 0
    %161 = vsyncpa [#allocation36], 0
    %162 = vsyncpa [#allocation39], 0
    %163 = vsyncpa [#allocation42], 0
    %164 = vsyncpa [#allocation4], 0
    // Predicated region
    $region2: #{course_recommendation_forward.1} parent=1 // pred_check
      _
    $region3: #{course_recommendation_forward.1} parent=1 // pred_check_branch
      %166 = sbr.rel (0) target = $region5
    $region4: #{course_recommendation_forward.1} parent=1 // pred_region
      _
    $region5: #{course_recommendation_forward.1} parent=1 // pred_fallthru
      _
    // Predicated region
    $region6: #{course_recommendation_forward.1} parent=1 // pred_check
      _
    $region7: #{course_recommendation_forward.1} parent=1 // pred_check_branch
      %168 = sbr.rel (0) target = $region9
    $region8: #{course_recommendation_forward.1} parent=1 // pred_region
      _
    $region9: #{course_recommendation_forward.1} parent=1 // pred_fallthru
      _
    // Predicated region
    $region10: #{course_recommendation_forward.1} parent=1 // pred_check
      _
    $region11: #{course_recommendation_forward.1} parent=1 // pred_check_branch
      %170 = sbr.rel (0) target = $region13
    $region12: #{course_recommendation_forward.1} parent=1 // pred_region
      _
    $region13: #{course_recommendation_forward.1} parent=1 // pred_fallthru
      _
    // Predicated region
    $region14: #{course_recommendation_forward.1} parent=1 // pred_check
      _
    $region15: #{course_recommendation_forward.1} parent=1 // pred_check_branch
      %172 = sbr.rel (0) target = $region17
    $region16: #{course_recommendation_forward.1} parent=1 // pred_region
      _
    $region17: #{course_recommendation_forward.1} parent=1 // pred_fallthru
      _
    // Predicated region
    $region18: #{course_recommendation_forward.1} parent=1 // pred_check
      _
    $region19: #{course_recommendation_forward.1} parent=1 // pred_check_branch
      %174 = sbr.rel (0) target = $region21
    $region20: #{course_recommendation_forward.1} parent=1 // pred_region
      _
    $region21: #{course_recommendation_forward.1} parent=1 // pred_fallthru
      _
    // Predicated region
    $region22: #{course_recommendation_forward.1} parent=1 // pred_check
      _
    $region23: #{course_recommendation_forward.1} parent=1 // pred_check_branch
      %176 = sbr.rel (0) target = $region25
    $region24: #{course_recommendation_forward.1} parent=1 // pred_region
      _
    $region25: #{course_recommendation_forward.1} parent=1 // pred_fallthru
      _
    // Predicated region
    $region26: #{course_recommendation_forward.1} parent=1 // pred_check
      _
    $region27: #{course_recommendation_forward.1} parent=1 // pred_check_branch
      %178 = sbr.rel (0) target = $region29
    $region28: #{course_recommendation_forward.1} parent=1 // pred_region
      _
    $region29: #{course_recommendation_forward.1} parent=1 // pred_fallthru
      _
    // Predicated region
    $region30: #{course_recommendation_forward.1} parent=1 // pred_check
      _
    $region31: #{course_recommendation_forward.1} parent=1 // pred_check_branch
      %180 = sbr.rel (0) target = $region33
    $region32: #{course_recommendation_forward.1} parent=1 // pred_region
      _
    $region33: #{course_recommendation_forward.1} parent=1 // pred_fallthru
      _
    // Predicated region
    $region34: #{course_recommendation_forward.1} parent=1 // pred_check
      _
    $region35: #{course_recommendation_forward.1} parent=1 // pred_check_branch
      %182 = sbr.rel (0) target = $region37
    $region36: #{course_recommendation_forward.1} parent=1 // pred_region
      _
    $region37: #{course_recommendation_forward.1} parent=1 // pred_fallthru
      _
    // Predicated region
    $region38: #{course_recommendation_forward.1} parent=1 // pred_check
      _
    $region39: #{course_recommendation_forward.1} parent=1 // pred_check_branch
      %184 = sbr.rel (0) target = $region41
    $region40: #{course_recommendation_forward.1} parent=1 // pred_region
      _
    $region41: #{course_recommendation_forward.1} parent=1 // pred_fallthru
      _
    // Predicated region
    $region42: #{course_recommendation_forward.1} parent=1 // pred_check
      _
    $region43: #{course_recommendation_forward.1} parent=1 // pred_check_branch
      %186 = sbr.rel (0) target = $region45
    $region44: #{course_recommendation_forward.1} parent=1 // pred_region
      _
    $region45: #{course_recommendation_forward.1} parent=1 // pred_fallthru
      _
    // Predicated region
    $region46: #{course_recommendation_forward.1} parent=1 // pred_check
      _
    $region47: #{course_recommendation_forward.1} parent=1 // pred_check_branch
      %188 = sbr.rel (0) target = $region49
    $region48: #{course_recommendation_forward.1} parent=1 // pred_region
      _
    $region49: #{course_recommendation_forward.1} parent=1 // pred_fallthru
      _
    // Predicated region
    $region50: #{course_recommendation_forward.1} parent=1 // pred_check
      _
    $region51: #{course_recommendation_forward.1} parent=1 // pred_check_branch
      %190 = sbr.rel (0) target = $region53
    $region52: #{course_recommendation_forward.1} parent=1 // pred_region
      _
    $region53: #{course_recommendation_forward.1} parent=1 // pred_fallthru
      _
    // Predicated region
    $region54: #{course_recommendation_forward.1} parent=1 // pred_check
      _
    $region55: #{course_recommendation_forward.1} parent=1 // pred_check_branch
      %192 = sbr.rel (0) target = $region57
    $region56: #{course_recommendation_forward.1} parent=1 // pred_region
      _
    $region57: #{course_recommendation_forward.1} parent=1 // pred_fallthru
      _
    // Predicated region
    $region58: #{course_recommendation_forward.1} parent=1 // pred_check
      _
    $region59: #{course_recommendation_forward.1} parent=1 // pred_check_branch
      %194 = sbr.rel (0) target = $region61
    $region60: #{course_recommendation_forward.1} parent=1 // pred_region
      _
    $region61: #{course_recommendation_forward.1} parent=1 // pred_fallthru
      _
    // Predicated region
    $region62: #{course_recommendation_forward.1} parent=1 // pred_check
      _
    $region63: #{course_recommendation_forward.1} parent=1 // pred_check_branch
      %196 = sbr.rel (0) target = $region65
    $region64: #{course_recommendation_forward.1} parent=1 // pred_region
      _
    $region65: #{course_recommendation_forward.1} parent=1 // pred_fallthru
      _
    // Predicated region
    $region66: #{course_recommendation_forward.1} parent=1 // pred_check
      _
    $region67: #{course_recommendation_forward.1} parent=1 // pred_check_branch
      %198 = sbr.rel (0) target = $region69
    $region68: #{course_recommendation_forward.1} parent=1 // pred_region
      _
    $region69: #{course_recommendation_forward.1} parent=1 // pred_fallthru
      _
    // Predicated region
    $region70: #{course_recommendation_forward.1} parent=1 // pred_check
      _
    $region71: #{course_recommendation_forward.1} parent=1 // pred_check_branch
      %200 = sbr.rel (0) target = $region73
    $region72: #{course_recommendation_forward.1} parent=1 // pred_region
      _
    $region73: #{course_recommendation_forward.1} parent=1 // pred_fallthru
      _
    // Predicated region
    $region74: #{course_recommendation_forward.1} parent=1 // pred_check
      _
    $region75: #{course_recommendation_forward.1} parent=1 // pred_check_branch
      %202 = sbr.rel (0) target = $region77
    $region76: #{course_recommendation_forward.1} parent=1 // pred_region
      _
    $region77: #{course_recommendation_forward.1} parent=1 // pred_fallthru
      _
    // Predicated region
    $region78: #{course_recommendation_forward.1} parent=1 // pred_check
      _
    $region79: #{course_recommendation_forward.1} parent=1 // pred_check_branch
      %204 = sbr.rel (0) target = $region81
    $region80: #{course_recommendation_forward.1} parent=1 // pred_region
      _
    $region81: #{course_recommendation_forward.1} parent=1 // pred_fallthru
      _
    // Predicated region
    $region82: #{course_recommendation_forward.1} parent=1 // pred_check
      _
    $region83: #{course_recommendation_forward.1} parent=1 // pred_check_branch
      %206 = sbr.rel (0) target = $region85
    $region84: #{course_recommendation_forward.1} parent=1 // pred_region
      _
    $region85: #{course_recommendation_forward.1} parent=1 // pred_fallthru
      _
    // Predicated region
    $region86: #{course_recommendation_forward.1} parent=1 // pred_check
      _
    $region87: #{course_recommendation_forward.1} parent=1 // pred_check_branch
      %208 = sbr.rel (0) target = $region89
    $region88: #{course_recommendation_forward.1} parent=1 // pred_region
      _
    $region89: #{course_recommendation_forward.1} parent=1 // pred_fallthru
      _
    // Predicated region
    $region90: #{course_recommendation_forward.1} parent=1 // pred_check
      _
    $region91: #{course_recommendation_forward.1} parent=1 // pred_check_branch
      %210 = sbr.rel (0) target = $region93
    $region92: #{course_recommendation_forward.1} parent=1 // pred_region
      _
    $region93: #{course_recommendation_forward.1} parent=1 // pred_fallthru
      _
    // Predicated region
    $region94: #{course_recommendation_forward.1} parent=1 // pred_check
      _
    $region95: #{course_recommendation_forward.1} parent=1 // pred_check_branch
      %212 = sbr.rel (0) target = $region97
    $region96: #{course_recommendation_forward.1} parent=1 // pred_region
      _
    $region97: #{course_recommendation_forward.1} parent=1 // pred_fallthru
      _
    // Predicated region
    $region98: #{course_recommendation_forward.1} parent=1 // pred_check
      _
    $region99: #{course_recommendation_forward.1} parent=1 // pred_check_branch
      %214 = sbr.rel (0) target = $region101
    $region100: #{course_recommendation_forward.1} parent=1 // pred_region
      _
    $region101: #{course_recommendation_forward.1} parent=1 // pred_fallthru
      _
    // Predicated region
    $region102: #{course_recommendation_forward.1} parent=1 // pred_check
      _
    $region103: #{course_recommendation_forward.1} parent=1 // pred_check_branch
      %216 = sbr.rel (0) target = $region105
    $region104: #{course_recommendation_forward.1} parent=1 // pred_region
      _
    $region105: #{course_recommendation_forward.1} parent=1 // pred_fallthru
      _
    // Predicated region
    $region106: #{course_recommendation_forward.1} parent=1 // pred_check
      _
    $region107: #{course_recommendation_forward.1} parent=1 // pred_check_branch
      %218 = sbr.rel (0) target = $region109
    $region108: #{course_recommendation_forward.1} parent=1 // pred_region
      _
    $region109: #{course_recommendation_forward.1} parent=1 // pred_fallthru
      _
    // Predicated region
    $region110: #{course_recommendation_forward.1} parent=1 // pred_check
      _
    $region111: #{course_recommendation_forward.1} parent=1 // pred_check_branch
      %220 = sbr.rel (0) target = $region113
    $region112: #{course_recommendation_forward.1} parent=1 // pred_region
      _
    $region113: #{course_recommendation_forward.1} parent=1 // pred_fallthru
      _
    // Predicated region
    $region114: #{course_recommendation_forward.1} parent=1 // pred_check
      _
    $region115: #{course_recommendation_forward.1} parent=1 // pred_check_branch
      %222 = sbr.rel (0) target = $region117
    $region116: #{course_recommendation_forward.1} parent=1 // pred_region
      _
    $region117: #{course_recommendation_forward.1} parent=1 // pred_fallthru
      _
    // Predicated region
    $region118: #{course_recommendation_forward.1} parent=1 // pred_check
      _
    $region119: #{course_recommendation_forward.1} parent=1 // pred_check_branch
      %224 = sbr.rel (0) target = $region121
    $region120: #{course_recommendation_forward.1} parent=1 // pred_region
      _
    $region121: #{course_recommendation_forward.1} parent=1 // pred_fallthru
      _
    // Predicated region
    $region122: #{course_recommendation_forward.1} parent=1 // pred_check
      _
    $region123: #{course_recommendation_forward.1} parent=1 // pred_check_branch
      %226 = sbr.rel (0) target = $region125
    $region124: #{course_recommendation_forward.1} parent=1 // pred_region
      _
    $region125: #{course_recommendation_forward.1} parent=1 // pred_fallthru
      _
    // Predicated region
    $region126: #{course_recommendation_forward.1} parent=1 // pred_check
      _
    $region127: #{course_recommendation_forward.1} parent=1 // pred_check_branch
      %228 = sbr.rel (0) target = $region129
    $region128: #{course_recommendation_forward.1} parent=1 // pred_region
      _
    $region129: #{course_recommendation_forward.1} parent=1 // pred_fallthru
      _
    // Predicated region
    $region130: #{course_recommendation_forward.1} parent=1 // pred_check
      _
    $region131: #{course_recommendation_forward.1} parent=1 // pred_check_branch
      %230 = sbr.rel (0) target = $region133
    $region132: #{course_recommendation_forward.1} parent=1 // pred_region
      %232 = vsyncadd [#allocation3], 0
      %s234 = sshll.u32 %s65, 4
      %s235 = int_to_ptr.hbm [resolvable:$true] %s234
      %s236 = sshll.u32 [#allocation2], 4
      %s237 = int_to_ptr.vmem [resolvable:$true] %s236
      %239 = dma.hbm_to_vmem [thread:$0]  %s235, 16, %s237, [#allocation3]
    $region133: #{course_recommendation_forward.1} parent=1 // pred_fallthru
      _
    // Predicated region
    $region134: #{course_recommendation_forward.1} parent=1 // pred_check
      _
    $region135: #{course_recommendation_forward.1} parent=1 // pred_check_branch
      %241 = sbr.rel (0) target = $region137
    $region136: #{course_recommendation_forward.1} parent=1 // pred_region
      %243 = vsyncadd [#allocation6], 0
      %s245 = sshll.u32 %s67, 4
      %s246 = int_to_ptr.hbm [resolvable:$true] %s245
      %s247 = sshll.u32 [#allocation5], 4
      %s248 = int_to_ptr.vmem [resolvable:$true] %s247
      %250 = dma.hbm_to_vmem [thread:$0]  %s246, 16, %s248, [#allocation6]
    $region137: #{course_recommendation_forward.1} parent=1 // pred_fallthru
      _
    // Predicated region
    $region138: #{course_recommendation_forward.1} parent=1 // pred_check
      _
    $region139: #{course_recommendation_forward.1} parent=1 // pred_check_branch
      %252 = sbr.rel (0) target = $region141
    $region140: #{course_recommendation_forward.1} parent=1 // pred_region
      _
    $region141: #{course_recommendation_forward.1} parent=1 // pred_fallthru
      _
    // Predicated region
    $region142: #{course_recommendation_forward.1} parent=1 // pred_check
      _
    $region143: #{course_recommendation_forward.1} parent=1 // pred_check_branch
      %254 = sbr.rel (0) target = $region145
    $region144: #{course_recommendation_forward.1} parent=1 // pred_region
      %256 = vsyncadd [#allocation6], 0
      %s258 = sshll.u32 %s71, 4
      %s259 = int_to_ptr.hbm [resolvable:$true] %s258
      %s260 = sshll.u32 [#allocation7], 4
      %s261 = int_to_ptr.vmem [resolvable:$true] %s260
      %263 = dma.hbm_to_vmem [thread:$0]  %s259, 16, %s261, [#allocation6]
    $region145: #{course_recommendation_forward.1} parent=1 // pred_fallthru
      _
    // Predicated region
    $region146: #{course_recommendation_forward.1} parent=1 // pred_check
      _
    $region147: #{course_recommendation_forward.1} parent=1 // pred_check_branch
      %265 = sbr.rel (0) target = $region149
    $region148: #{course_recommendation_forward.1} parent=1 // pred_region
      _
    $region149: #{course_recommendation_forward.1} parent=1 // pred_fallthru
      _
    // Predicated region
    $region150: #{course_recommendation_forward.1} parent=1 // pred_check
      _
    $region151: #{course_recommendation_forward.1} parent=1 // pred_check_branch
      %267 = sbr.rel (0) target = $region153
    $region152: #{course_recommendation_forward.1} parent=1 // pred_region
      %269 = vsyncadd [#allocation9], 0
      %s271 = sshll.u32 %s75, 4
      %s272 = int_to_ptr.hbm [resolvable:$true] %s271
      %s273 = sshll.u32 [#allocation8], 4
      %s274 = int_to_ptr.vmem [resolvable:$true] %s273
      %276 = dma.hbm_to_vmem [thread:$0]  %s272, 16, %s274, [#allocation9]
    $region153: #{course_recommendation_forward.1} parent=1 // pred_fallthru
      _
    // Predicated region
    $region154: #{course_recommendation_forward.1} parent=1 // pred_check
      _
    $region155: #{course_recommendation_forward.1} parent=1 // pred_check_branch
      %278 = sbr.rel (0) target = $region157
    $region156: #{course_recommendation_forward.1} parent=1 // pred_region
      _
    $region157: #{course_recommendation_forward.1} parent=1 // pred_fallthru
      _
    // Predicated region
    $region158: #{course_recommendation_forward.1} parent=1 // pred_check
      _
    $region159: #{course_recommendation_forward.1} parent=1 // pred_check_branch
      %280 = sbr.rel (0) target = $region161
    $region160: #{course_recommendation_forward.1} parent=1 // pred_region
      %282 = vsyncadd [#allocation9], 0
      %s284 = sshll.u32 %s79, 4
      %s285 = int_to_ptr.hbm [resolvable:$true] %s284
      %s286 = sshll.u32 [#allocation10], 4
      %s287 = int_to_ptr.vmem [resolvable:$true] %s286
      %289 = dma.hbm_to_vmem [thread:$0]  %s285, 16, %s287, [#allocation9]
    $region161: #{course_recommendation_forward.1} parent=1 // pred_fallthru
      _
    // Predicated region
    $region162: #{course_recommendation_forward.1} parent=1 // pred_check
      _
    $region163: #{course_recommendation_forward.1} parent=1 // pred_check_branch
      %291 = sbr.rel (0) target = $region165
    $region164: #{course_recommendation_forward.1} parent=1 // pred_region
      %293 = vsyncadd [#allocation12], 0
      %s295 = sshll.u32 %s81, 4
      %s296 = int_to_ptr.hbm [resolvable:$true] %s295
      %s297 = sshll.u32 [#allocation11], 4
      %s298 = int_to_ptr.vmem [resolvable:$true] %s297
      %300 = dma.hbm_to_vmem [thread:$0]  %s296, 16, %s298, [#allocation12]
    $region165: #{course_recommendation_forward.1} parent=1 // pred_fallthru
      _
    // Predicated region
    $region166: #{course_recommendation_forward.1} parent=1 // pred_check
      _
    $region167: #{course_recommendation_forward.1} parent=1 // pred_check_branch
      %302 = sbr.rel (0) target = $region169
    $region168: #{course_recommendation_forward.1} parent=1 // pred_region
      %304 = vsyncadd [#allocation12], 0
      %s306 = sshll.u32 %s83, 4
      %s307 = int_to_ptr.hbm [resolvable:$true] %s306
      %s308 = sshll.u32 [#allocation13], 4
      %s309 = int_to_ptr.vmem [resolvable:$true] %s308
      %311 = dma.hbm_to_vmem [thread:$0]  %s307, 16, %s309, [#allocation12]
    $region169: #{course_recommendation_forward.1} parent=1 // pred_fallthru
      _
    // Predicated region
    $region170: #{course_recommendation_forward.1} parent=1 // pred_check
      _
    $region171: #{course_recommendation_forward.1} parent=1 // pred_check_branch
      %313 = sbr.rel (0) target = $region173
    $region172: #{course_recommendation_forward.1} parent=1 // pred_region
      _
    $region173: #{course_recommendation_forward.1} parent=1 // pred_fallthru
      _
    // Predicated region
    $region174: #{course_recommendation_forward.1} parent=1 // pred_check
      _
    $region175: #{course_recommendation_forward.1} parent=1 // pred_check_branch
      %315 = sbr.rel (0) target = $region177
    $region176: #{course_recommendation_forward.1} parent=1 // pred_region
      %317 = vsyncadd [#allocation15], 0
      %s319 = sshll.u32 %s87, 4
      %s320 = int_to_ptr.hbm [resolvable:$true] %s319
      %s321 = sshll.u32 [#allocation14], 4
      %s322 = int_to_ptr.vmem [resolvable:$true] %s321
      %324 = dma.hbm_to_vmem [thread:$0]  %s320, 16, %s322, [#allocation15]
    $region177: #{course_recommendation_forward.1} parent=1 // pred_fallthru
      _
    // Predicated region
    $region178: #{course_recommendation_forward.1} parent=1 // pred_check
      _
    $region179: #{course_recommendation_forward.1} parent=1 // pred_check_branch
      %326 = sbr.rel (0) target = $region181
    $region180: #{course_recommendation_forward.1} parent=1 // pred_region
      _
    $region181: #{course_recommendation_forward.1} parent=1 // pred_fallthru
      _
    // Predicated region
    $region182: #{course_recommendation_forward.1} parent=1 // pred_check
      _
    $region183: #{course_recommendation_forward.1} parent=1 // pred_check_branch
      %328 = sbr.rel (0) target = $region185
    $region184: #{course_recommendation_forward.1} parent=1 // pred_region
      %330 = vsyncadd [#allocation15], 0
      %s332 = sshll.u32 %s91, 4
      %s333 = int_to_ptr.hbm [resolvable:$true] %s332
      %s334 = sshll.u32 [#allocation16], 4
      %s335 = int_to_ptr.vmem [resolvable:$true] %s334
      %337 = dma.hbm_to_vmem [thread:$0]  %s333, 16, %s335, [#allocation15]
    $region185: #{course_recommendation_forward.1} parent=1 // pred_fallthru
      _
    // Predicated region
    $region186: #{course_recommendation_forward.1} parent=1 // pred_check
      _
    $region187: #{course_recommendation_forward.1} parent=1 // pred_check_branch
      %339 = sbr.rel (0) target = $region189
    $region188: #{course_recommendation_forward.1} parent=1 // pred_region
      %341 = vsyncadd [#allocation18], 0
      %s343 = sshll.u32 %s93, 4
      %s344 = int_to_ptr.hbm [resolvable:$true] %s343
      %s345 = sshll.u32 [#allocation17], 4
      %s346 = int_to_ptr.vmem [resolvable:$true] %s345
      %348 = dma.hbm_to_vmem [thread:$0]  %s344, 16, %s346, [#allocation18]
    $region189: #{course_recommendation_forward.1} parent=1 // pred_fallthru
      _
    // Predicated region
    $region190: #{course_recommendation_forward.1} parent=1 // pred_check
      _
    $region191: #{course_recommendation_forward.1} parent=1 // pred_check_branch
      %350 = sbr.rel (0) target = $region193
    $region192: #{course_recommendation_forward.1} parent=1 // pred_region
      %352 = vsyncadd [#allocation18], 0
      %s354 = sshll.u32 %s95, 4
      %s355 = int_to_ptr.hbm [resolvable:$true] %s354
      %s356 = sshll.u32 [#allocation19], 4
      %s357 = int_to_ptr.vmem [resolvable:$true] %s356
      %359 = dma.hbm_to_vmem [thread:$0]  %s355, 16, %s357, [#allocation18]
    $region193: #{course_recommendation_forward.1} parent=1 // pred_fallthru
      _
    // Predicated region
    $region194: #{course_recommendation_forward.1} parent=1 // pred_check
      _
    $region195: #{course_recommendation_forward.1} parent=1 // pred_check_branch
      %361 = sbr.rel (0) target = $region197
    $region196: #{course_recommendation_forward.1} parent=1 // pred_region
      _
    $region197: #{course_recommendation_forward.1} parent=1 // pred_fallthru
      _
    // Predicated region
    $region198: #{course_recommendation_forward.1} parent=1 // pred_check
      _
    $region199: #{course_recommendation_forward.1} parent=1 // pred_check_branch
      %363 = sbr.rel (0) target = $region201
    $region200: #{course_recommendation_forward.1} parent=1 // pred_region
      %365 = vsyncadd [#allocation21], 0
      %s367 = sshll.u32 %s99, 4
      %s368 = int_to_ptr.hbm [resolvable:$true] %s367
      %s369 = sshll.u32 [#allocation20], 4
      %s370 = int_to_ptr.vmem [resolvable:$true] %s369
      %372 = dma.hbm_to_vmem [thread:$0]  %s368, 16, %s370, [#allocation21]
    $region201: #{course_recommendation_forward.1} parent=1 // pred_fallthru
      _
    // Predicated region
    $region202: #{course_recommendation_forward.1} parent=1 // pred_check
      _
    $region203: #{course_recommendation_forward.1} parent=1 // pred_check_branch
      %374 = sbr.rel (0) target = $region205
    $region204: #{course_recommendation_forward.1} parent=1 // pred_region
      _
    $region205: #{course_recommendation_forward.1} parent=1 // pred_fallthru
      _
    // Predicated region
    $region206: #{course_recommendation_forward.1} parent=1 // pred_check
      _
    $region207: #{course_recommendation_forward.1} parent=1 // pred_check_branch
      %376 = sbr.rel (0) target = $region209
    $region208: #{course_recommendation_forward.1} parent=1 // pred_region
      %378 = vsyncadd [#allocation21], 0
      %s380 = sshll.u32 %s103, 4
      %s381 = int_to_ptr.hbm [resolvable:$true] %s380
      %s382 = sshll.u32 [#allocation22], 4
      %s383 = int_to_ptr.vmem [resolvable:$true] %s382
      %385 = dma.hbm_to_vmem [thread:$0]  %s381, 16, %s383, [#allocation21]
    $region209: #{course_recommendation_forward.1} parent=1 // pred_fallthru
      _
    // Predicated region
    $region210: #{course_recommendation_forward.1} parent=1 // pred_check
      _
    $region211: #{course_recommendation_forward.1} parent=1 // pred_check_branch
      %387 = sbr.rel (0) target = $region213
    $region212: #{course_recommendation_forward.1} parent=1 // pred_region
      %389 = vsyncadd [#allocation24], 0
      %s391 = sshll.u32 %s105, 4
      %s392 = int_to_ptr.hbm [resolvable:$true] %s391
      %s393 = sshll.u32 [#allocation23], 4
      %s394 = int_to_ptr.vmem [resolvable:$true] %s393
      %396 = dma.hbm_to_vmem [thread:$0]  %s392, 16, %s394, [#allocation24]
    $region213: #{course_recommendation_forward.1} parent=1 // pred_fallthru
      _
    // Predicated region
    $region214: #{course_recommendation_forward.1} parent=1 // pred_check
      _
    $region215: #{course_recommendation_forward.1} parent=1 // pred_check_branch
      %398 = sbr.rel (0) target = $region217
    $region216: #{course_recommendation_forward.1} parent=1 // pred_region
      %400 = vsyncadd [#allocation24], 0
      %s402 = sshll.u32 %s107, 4
      %s403 = int_to_ptr.hbm [resolvable:$true] %s402
      %s404 = sshll.u32 [#allocation25], 4
      %s405 = int_to_ptr.vmem [resolvable:$true] %s404
      %407 = dma.hbm_to_vmem [thread:$0]  %s403, 16, %s405, [#allocation24]
    $region217: #{course_recommendation_forward.1} parent=1 // pred_fallthru
      _
    // Predicated region
    $region218: #{course_recommendation_forward.1} parent=1 // pred_check
      _
    $region219: #{course_recommendation_forward.1} parent=1 // pred_check_branch
      %409 = sbr.rel (0) target = $region221
    $region220: #{course_recommendation_forward.1} parent=1 // pred_region
      _
    $region221: #{course_recommendation_forward.1} parent=1 // pred_fallthru
      _
    // Predicated region
    $region222: #{course_recommendation_forward.1} parent=1 // pred_check
      _
    $region223: #{course_recommendation_forward.1} parent=1 // pred_check_branch
      %411 = sbr.rel (0) target = $region225
    $region224: #{course_recommendation_forward.1} parent=1 // pred_region
      %413 = vsyncadd [#allocation27], 0
      %s415 = sshll.u32 %s111, 4
      %s416 = int_to_ptr.hbm [resolvable:$true] %s415
      %s417 = sshll.u32 [#allocation26], 4
      %s418 = int_to_ptr.vmem [resolvable:$true] %s417
      %420 = dma.hbm_to_vmem [thread:$0]  %s416, 16, %s418, [#allocation27]
    $region225: #{course_recommendation_forward.1} parent=1 // pred_fallthru
      _
    // Predicated region
    $region226: #{course_recommendation_forward.1} parent=1 // pred_check
      _
    $region227: #{course_recommendation_forward.1} parent=1 // pred_check_branch
      %422 = sbr.rel (0) target = $region229
    $region228: #{course_recommendation_forward.1} parent=1 // pred_region
      _
    $region229: #{course_recommendation_forward.1} parent=1 // pred_fallthru
      _
    // Predicated region
    $region230: #{course_recommendation_forward.1} parent=1 // pred_check
      _
    $region231: #{course_recommendation_forward.1} parent=1 // pred_check_branch
      %424 = sbr.rel (0) target = $region233
    $region232: #{course_recommendation_forward.1} parent=1 // pred_region
      %426 = vsyncadd [#allocation27], 0
      %s428 = sshll.u32 %s115, 4
      %s429 = int_to_ptr.hbm [resolvable:$true] %s428
      %s430 = sshll.u32 [#allocation28], 4
      %s431 = int_to_ptr.vmem [resolvable:$true] %s430
      %433 = dma.hbm_to_vmem [thread:$0]  %s429, 16, %s431, [#allocation27]
    $region233: #{course_recommendation_forward.1} parent=1 // pred_fallthru
      _
    // Predicated region
    $region234: #{course_recommendation_forward.1} parent=1 // pred_check
      _
    $region235: #{course_recommendation_forward.1} parent=1 // pred_check_branch
      %435 = sbr.rel (0) target = $region237
    $region236: #{course_recommendation_forward.1} parent=1 // pred_region
      _
    $region237: #{course_recommendation_forward.1} parent=1 // pred_fallthru
      _
    // Predicated region
    $region238: #{course_recommendation_forward.1} parent=1 // pred_check
      _
    $region239: #{course_recommendation_forward.1} parent=1 // pred_check_branch
      %437 = sbr.rel (0) target = $region241
    $region240: #{course_recommendation_forward.1} parent=1 // pred_region
      %439 = vsyncadd [#allocation30], 0
      %s441 = sshll.u32 %s119, 4
      %s442 = int_to_ptr.hbm [resolvable:$true] %s441
      %s443 = sshll.u32 [#allocation29], 4
      %s444 = int_to_ptr.vmem [resolvable:$true] %s443
      %446 = dma.hbm_to_vmem [thread:$0]  %s442, 16, %s444, [#allocation30]
    $region241: #{course_recommendation_forward.1} parent=1 // pred_fallthru
      _
    // Predicated region
    $region242: #{course_recommendation_forward.1} parent=1 // pred_check
      _
    $region243: #{course_recommendation_forward.1} parent=1 // pred_check_branch
      %448 = sbr.rel (0) target = $region245
    $region244: #{course_recommendation_forward.1} parent=1 // pred_region
      %450 = vsyncadd [#allocation30], 0
      %s452 = sshll.u32 %s121, 4
      %s453 = int_to_ptr.hbm [resolvable:$true] %s452
      %s454 = sshll.u32 [#allocation31], 4
      %s455 = int_to_ptr.vmem [resolvable:$true] %s454
      %457 = dma.hbm_to_vmem [thread:$0]  %s453, 16, %s455, [#allocation30]
    $region245: #{course_recommendation_forward.1} parent=1 // pred_fallthru
      _
    // Predicated region
    $region246: #{course_recommendation_forward.1} parent=1 // pred_check
      _
    $region247: #{course_recommendation_forward.1} parent=1 // pred_check_branch
      %459 = sbr.rel (0) target = $region249
    $region248: #{course_recommendation_forward.1} parent=1 // pred_region
      %461 = vsyncadd [#allocation33], 0
      %s463 = sshll.u32 %s123, 4
      %s464 = int_to_ptr.hbm [resolvable:$true] %s463
      %s465 = sshll.u32 [#allocation32], 4
      %s466 = int_to_ptr.vmem [resolvable:$true] %s465
      %468 = dma.hbm_to_vmem [thread:$0]  %s464, 16, %s466, [#allocation33]
    $region249: #{course_recommendation_forward.1} parent=1 // pred_fallthru
      _
    // Predicated region
    $region250: #{course_recommendation_forward.1} parent=1 // pred_check
      _
    $region251: #{course_recommendation_forward.1} parent=1 // pred_check_branch
      %470 = sbr.rel (0) target = $region253
    $region252: #{course_recommendation_forward.1} parent=1 // pred_region
      _
    $region253: #{course_recommendation_forward.1} parent=1 // pred_fallthru
      _
    // Predicated region
    $region254: #{course_recommendation_forward.1} parent=1 // pred_check
      _
    $region255: #{course_recommendation_forward.1} parent=1 // pred_check_branch
      %472 = sbr.rel (0) target = $region257
    $region256: #{course_recommendation_forward.1} parent=1 // pred_region
      %474 = vsyncadd [#allocation33], 0
      %s476 = sshll.u32 %s127, 4
      %s477 = int_to_ptr.hbm [resolvable:$true] %s476
      %s478 = sshll.u32 [#allocation34], 4
      %s479 = int_to_ptr.vmem [resolvable:$true] %s478
      %481 = dma.hbm_to_vmem [thread:$0]  %s477, 16, %s479, [#allocation33]
    $region257: #{course_recommendation_forward.1} parent=1 // pred_fallthru
      _
    // Predicated region
    $region258: #{course_recommendation_forward.1} parent=1 // pred_check
      _
    $region259: #{course_recommendation_forward.1} parent=1 // pred_check_branch
      %483 = sbr.rel (0) target = $region261
    $region260: #{course_recommendation_forward.1} parent=1 // pred_region
      _
    $region261: #{course_recommendation_forward.1} parent=1 // pred_fallthru
      _
    // Predicated region
    $region262: #{course_recommendation_forward.1} parent=1 // pred_check
      _
    $region263: #{course_recommendation_forward.1} parent=1 // pred_check_branch
      %485 = sbr.rel (0) target = $region265
    $region264: #{course_recommendation_forward.1} parent=1 // pred_region
      %487 = vsyncadd [#allocation36], 0
      %s489 = sshll.u32 %s131, 4
      %s490 = int_to_ptr.hbm [resolvable:$true] %s489
      %s491 = sshll.u32 [#allocation35], 4
      %s492 = int_to_ptr.vmem [resolvable:$true] %s491
      %494 = dma.hbm_to_vmem [thread:$0]  %s490, 16, %s492, [#allocation36]
    $region265: #{course_recommendation_forward.1} parent=1 // pred_fallthru
      _
    // Predicated region
    $region266: #{course_recommendation_forward.1} parent=1 // pred_check
      _
    $region267: #{course_recommendation_forward.1} parent=1 // pred_check_branch
      %496 = sbr.rel (0) target = $region269
    $region268: #{course_recommendation_forward.1} parent=1 // pred_region
      %498 = vsyncadd [#allocation36], 0
      %s500 = sshll.u32 %s133, 4
      %s501 = int_to_ptr.hbm [resolvable:$true] %s500
      %s502 = sshll.u32 [#allocation37], 4
      %s503 = int_to_ptr.vmem [resolvable:$true] %s502
      %505 = dma.hbm_to_vmem [thread:$0]  %s501, 16, %s503, [#allocation36]
    $region269: #{course_recommendation_forward.1} parent=1 // pred_fallthru
      _
    // Predicated region
    $region270: #{course_recommendation_forward.1} parent=1 // pred_check
      _
    $region271: #{course_recommendation_forward.1} parent=1 // pred_check_branch
      %507 = sbr.rel (0) target = $region273
    $region272: #{course_recommendation_forward.1} parent=1 // pred_region
      %509 = vsyncadd [#allocation39], 0
      %s511 = sshll.u32 %s135, 4
      %s512 = int_to_ptr.hbm [resolvable:$true] %s511
      %s513 = sshll.u32 [#allocation38], 4
      %s514 = int_to_ptr.vmem [resolvable:$true] %s513
      %516 = dma.hbm_to_vmem [thread:$0]  %s512, 16, %s514, [#allocation39]
    $region273: #{course_recommendation_forward.1} parent=1 // pred_fallthru
      _
    // Predicated region
    $region274: #{course_recommendation_forward.1} parent=1 // pred_check
      _
    $region275: #{course_recommendation_forward.1} parent=1 // pred_check_branch
      %518 = sbr.rel (0) target = $region277
    $region276: #{course_recommendation_forward.1} parent=1 // pred_region
      %520 = vsyncadd [#allocation39], 0
      %s522 = sshll.u32 %s137, 4
      %s523 = int_to_ptr.hbm [resolvable:$true] %s522
      %s524 = sshll.u32 [#allocation40], 4
      %s525 = int_to_ptr.vmem [resolvable:$true] %s524
      %527 = dma.hbm_to_vmem [thread:$0]  %s523, 16, %s525, [#allocation39]
    $region277: #{course_recommendation_forward.1} parent=1 // pred_fallthru
      _
    // Predicated region
    $region278: #{course_recommendation_forward.1} parent=1 // pred_check
      _
    $region279: #{course_recommendation_forward.1} parent=1 // pred_check_branch
      %529 = sbr.rel (0) target = $region281
    $region280: #{course_recommendation_forward.1} parent=1 // pred_region
      %531 = vsyncadd [#allocation42], 0
      %s533 = sshll.u32 %s139, 4
      %s534 = int_to_ptr.hbm [resolvable:$true] %s533
      %s535 = sshll.u32 [#allocation41], 4
      %s536 = int_to_ptr.vmem [resolvable:$true] %s535
      %538 = dma.hbm_to_vmem [thread:$0]  %s534, 16, %s536, [#allocation42]
    $region281: #{course_recommendation_forward.1} parent=1 // pred_fallthru
      _
    // Predicated region
    $region282: #{course_recommendation_forward.1} parent=1 // pred_check
      _
    $region283: #{course_recommendation_forward.1} parent=1 // pred_check_branch
      %540 = sbr.rel (0) target = $region285
    $region284: #{course_recommendation_forward.1} parent=1 // pred_region
      _
    $region285: #{course_recommendation_forward.1} parent=1 // pred_fallthru
      _
    // Predicated region
    $region286: #{course_recommendation_forward.1} parent=1 // pred_check
      _
    $region287: #{course_recommendation_forward.1} parent=1 // pred_check_branch
      %542 = sbr.rel (0) target = $region289
    $region288: #{course_recommendation_forward.1} parent=1 // pred_region
      %544 = vsyncadd [#allocation42], 0
      %s546 = sshll.u32 %s143, 4
      %s547 = int_to_ptr.hbm [resolvable:$true] %s546
      %s548 = sshll.u32 [#allocation43], 4
      %s549 = int_to_ptr.vmem [resolvable:$true] %s548
      %551 = dma.hbm_to_vmem [thread:$0]  %s547, 16, %s549, [#allocation42]
    $region289: #{course_recommendation_forward.1} parent=1 // pred_fallthru
      _
    // Predicated region
    $region290: #{course_recommendation_forward.1} parent=1 // pred_check
      _
    $region291: #{course_recommendation_forward.1} parent=1 // pred_check_branch
      %553 = sbr.rel (0) target = $region293
    $region292: #{course_recommendation_forward.1} parent=1 // pred_region
      %555 = dma.done [#allocation3], 16
    $region293: #{course_recommendation_forward.1} parent=1 // pred_fallthru
      _
    // Predicated region
    $region294: #{course_recommendation_forward.1} parent=1 // pred_check
      _
    $region295: #{course_recommendation_forward.1} parent=1 // pred_check_branch
      %557 = sbr.rel (0) target = $region297
    $region296: #{course_recommendation_forward.1} parent=1 // pred_region
      %559 = dma.done [#allocation6], 16
    $region297: #{course_recommendation_forward.1} parent=1 // pred_fallthru
      _
    // Predicated region
    $region298: #{course_recommendation_forward.1} parent=1 // pred_check
      _
    $region299: #{course_recommendation_forward.1} parent=1 // pred_check_branch
      %561 = sbr.rel (0) target = $region301
    $region300: #{course_recommendation_forward.1} parent=1 // pred_region
      %563 = dma.done [#allocation6], 16
    $region301: #{course_recommendation_forward.1} parent=1 // pred_fallthru
      _
    // Predicated region
    $region302: #{course_recommendation_forward.1} parent=1 // pred_check
      _
    $region303: #{course_recommendation_forward.1} parent=1 // pred_check_branch
      %565 = sbr.rel (0) target = $region305
    $region304: #{course_recommendation_forward.1} parent=1 // pred_region
      %567 = dma.done [#allocation9], 16
    $region305: #{course_recommendation_forward.1} parent=1 // pred_fallthru
      _
    // Predicated region
    $region306: #{course_recommendation_forward.1} parent=1 // pred_check
      _
    $region307: #{course_recommendation_forward.1} parent=1 // pred_check_branch
      %569 = sbr.rel (0) target = $region309
    $region308: #{course_recommendation_forward.1} parent=1 // pred_region
      %571 = dma.done [#allocation9], 16
    $region309: #{course_recommendation_forward.1} parent=1 // pred_fallthru
      _
    // Predicated region
    $region310: #{course_recommendation_forward.1} parent=1 // pred_check
      _
    $region311: #{course_recommendation_forward.1} parent=1 // pred_check_branch
      %573 = sbr.rel (0) target = $region313
    $region312: #{course_recommendation_forward.1} parent=1 // pred_region
      %575 = dma.done [#allocation12], 16
    $region313: #{course_recommendation_forward.1} parent=1 // pred_fallthru
      _
    // Predicated region
    $region314: #{course_recommendation_forward.1} parent=1 // pred_check
      _
    $region315: #{course_recommendation_forward.1} parent=1 // pred_check_branch
      %577 = sbr.rel (0) target = $region317
    $region316: #{course_recommendation_forward.1} parent=1 // pred_region
      %579 = dma.done [#allocation12], 16
    $region317: #{course_recommendation_forward.1} parent=1 // pred_fallthru
      _
    // Predicated region
    $region318: #{course_recommendation_forward.1} parent=1 // pred_check
      _
    $region319: #{course_recommendation_forward.1} parent=1 // pred_check_branch
      %581 = sbr.rel (0) target = $region321
    $region320: #{course_recommendation_forward.1} parent=1 // pred_region
      %583 = dma.done [#allocation15], 16
    $region321: #{course_recommendation_forward.1} parent=1 // pred_fallthru
      _
    // Predicated region
    $region322: #{course_recommendation_forward.1} parent=1 // pred_check
      _
    $region323: #{course_recommendation_forward.1} parent=1 // pred_check_branch
      %585 = sbr.rel (0) target = $region325
    $region324: #{course_recommendation_forward.1} parent=1 // pred_region
      %587 = dma.done [#allocation15], 16
    $region325: #{course_recommendation_forward.1} parent=1 // pred_fallthru
      _
    // Predicated region
    $region326: #{course_recommendation_forward.1} parent=1 // pred_check
      _
    $region327: #{course_recommendation_forward.1} parent=1 // pred_check_branch
      %589 = sbr.rel (0) target = $region329
    $region328: #{course_recommendation_forward.1} parent=1 // pred_region
      %591 = dma.done [#allocation18], 16
    $region329: #{course_recommendation_forward.1} parent=1 // pred_fallthru
      _
    // Predicated region
    $region330: #{course_recommendation_forward.1} parent=1 // pred_check
      _
    $region331: #{course_recommendation_forward.1} parent=1 // pred_check_branch
      %593 = sbr.rel (0) target = $region333
    $region332: #{course_recommendation_forward.1} parent=1 // pred_region
      %595 = dma.done [#allocation18], 16
    $region333: #{course_recommendation_forward.1} parent=1 // pred_fallthru
      _
    // Predicated region
    $region334: #{course_recommendation_forward.1} parent=1 // pred_check
      _
    $region335: #{course_recommendation_forward.1} parent=1 // pred_check_branch
      %597 = sbr.rel (0) target = $region337
    $region336: #{course_recommendation_forward.1} parent=1 // pred_region
      %599 = dma.done [#allocation21], 16
    $region337: #{course_recommendation_forward.1} parent=1 // pred_fallthru
      _
    // Predicated region
    $region338: #{course_recommendation_forward.1} parent=1 // pred_check
      _
    $region339: #{course_recommendation_forward.1} parent=1 // pred_check_branch
      %601 = sbr.rel (0) target = $region341
    $region340: #{course_recommendation_forward.1} parent=1 // pred_region
      %603 = dma.done [#allocation21], 16
    $region341: #{course_recommendation_forward.1} parent=1 // pred_fallthru
      _
    // Predicated region
    $region342: #{course_recommendation_forward.1} parent=1 // pred_check
      _
    $region343: #{course_recommendation_forward.1} parent=1 // pred_check_branch
      %605 = sbr.rel (0) target = $region345
    $region344: #{course_recommendation_forward.1} parent=1 // pred_region
      %607 = dma.done [#allocation24], 16
    $region345: #{course_recommendation_forward.1} parent=1 // pred_fallthru
      _
    // Predicated region
    $region346: #{course_recommendation_forward.1} parent=1 // pred_check
      _
    $region347: #{course_recommendation_forward.1} parent=1 // pred_check_branch
      %609 = sbr.rel (0) target = $region349
    $region348: #{course_recommendation_forward.1} parent=1 // pred_region
      %611 = dma.done [#allocation24], 16
    $region349: #{course_recommendation_forward.1} parent=1 // pred_fallthru
      _
    // Predicated region
    $region350: #{course_recommendation_forward.1} parent=1 // pred_check
      _
    $region351: #{course_recommendation_forward.1} parent=1 // pred_check_branch
      %613 = sbr.rel (0) target = $region353
    $region352: #{course_recommendation_forward.1} parent=1 // pred_region
      %615 = dma.done [#allocation27], 16
    $region353: #{course_recommendation_forward.1} parent=1 // pred_fallthru
      _
    // Predicated region
    $region354: #{course_recommendation_forward.1} parent=1 // pred_check
      _
    $region355: #{course_recommendation_forward.1} parent=1 // pred_check_branch
      %617 = sbr.rel (0) target = $region357
    $region356: #{course_recommendation_forward.1} parent=1 // pred_region
      %619 = dma.done [#allocation27], 16
    $region357: #{course_recommendation_forward.1} parent=1 // pred_fallthru
      _
    // Predicated region
    $region358: #{course_recommendation_forward.1} parent=1 // pred_check
      _
    $region359: #{course_recommendation_forward.1} parent=1 // pred_check_branch
      %621 = sbr.rel (0) target = $region361
    $region360: #{course_recommendation_forward.1} parent=1 // pred_region
      %623 = dma.done [#allocation30], 16
    $region361: #{course_recommendation_forward.1} parent=1 // pred_fallthru
      _
    // Predicated region
    $region362: #{course_recommendation_forward.1} parent=1 // pred_check
      _
    $region363: #{course_recommendation_forward.1} parent=1 // pred_check_branch
      %625 = sbr.rel (0) target = $region365
    $region364: #{course_recommendation_forward.1} parent=1 // pred_region
      %627 = dma.done [#allocation30], 16
    $region365: #{course_recommendation_forward.1} parent=1 // pred_fallthru
      _
    // Predicated region
    $region366: #{course_recommendation_forward.1} parent=1 // pred_check
      _
    $region367: #{course_recommendation_forward.1} parent=1 // pred_check_branch
      %629 = sbr.rel (0) target = $region369
    $region368: #{course_recommendation_forward.1} parent=1 // pred_region
      %631 = dma.done [#allocation33], 16
    $region369: #{course_recommendation_forward.1} parent=1 // pred_fallthru
      _
    // Predicated region
    $region370: #{course_recommendation_forward.1} parent=1 // pred_check
      _
    $region371: #{course_recommendation_forward.1} parent=1 // pred_check_branch
      %633 = sbr.rel (0) target = $region373
    $region372: #{course_recommendation_forward.1} parent=1 // pred_region
      %635 = dma.done [#allocation33], 16
    $region373: #{course_recommendation_forward.1} parent=1 // pred_fallthru
      _
    // Predicated region
    $region374: #{course_recommendation_forward.1} parent=1 // pred_check
      _
    $region375: #{course_recommendation_forward.1} parent=1 // pred_check_branch
      %637 = sbr.rel (0) target = $region377
    $region376: #{course_recommendation_forward.1} parent=1 // pred_region
      %639 = dma.done [#allocation36], 16
    $region377: #{course_recommendation_forward.1} parent=1 // pred_fallthru
      _
    // Predicated region
    $region378: #{course_recommendation_forward.1} parent=1 // pred_check
      _
    $region379: #{course_recommendation_forward.1} parent=1 // pred_check_branch
      %641 = sbr.rel (0) target = $region381
    $region380: #{course_recommendation_forward.1} parent=1 // pred_region
      %643 = dma.done [#allocation36], 16
    $region381: #{course_recommendation_forward.1} parent=1 // pred_fallthru
      _
    // Predicated region
    $region382: #{course_recommendation_forward.1} parent=1 // pred_check
      _
    $region383: #{course_recommendation_forward.1} parent=1 // pred_check_branch
      %645 = sbr.rel (0) target = $region385
    $region384: #{course_recommendation_forward.1} parent=1 // pred_region
      %647 = dma.done [#allocation39], 16
    $region385: #{course_recommendation_forward.1} parent=1 // pred_fallthru
      _
    // Predicated region
    $region386: #{course_recommendation_forward.1} parent=1 // pred_check
      _
    $region387: #{course_recommendation_forward.1} parent=1 // pred_check_branch
      %649 = sbr.rel (0) target = $region389
    $region388: #{course_recommendation_forward.1} parent=1 // pred_region
      %651 = dma.done [#allocation39], 16
    $region389: #{course_recommendation_forward.1} parent=1 // pred_fallthru
      _
    // Predicated region
    $region390: #{course_recommendation_forward.1} parent=1 // pred_check
      _
    $region391: #{course_recommendation_forward.1} parent=1 // pred_check_branch
      %653 = sbr.rel (0) target = $region393
    $region392: #{course_recommendation_forward.1} parent=1 // pred_region
      %655 = dma.done [#allocation42], 16
    $region393: #{course_recommendation_forward.1} parent=1 // pred_fallthru
      _
    // Predicated region
    $region394: #{course_recommendation_forward.1} parent=1 // pred_check
      _
    $region395: #{course_recommendation_forward.1} parent=1 // pred_check_branch
      %657 = sbr.rel (0) target = $region397
    $region396: #{course_recommendation_forward.1} parent=1 // pred_region
      %659 = dma.done [#allocation42], 16
    $region397: #{course_recommendation_forward.1} parent=1 // pred_fallthru
      _
    %v660 = vld [vmem:[%s1] sm:$0xff]
    %v661 = vld [vmem:[%s1 + $0x8] sm:$0xff]
    %v662 = vlaneseq
    %v663 = vand.u32 %v662, 127
    %v664 = vadd.s32 %v663, 128
    %v665 = vadd.s32 %v663, 256
    %v666 = vadd.s32 %v663, 384
    %v667 = vadd.s32 %v663, 512
    %v668 = vadd.s32 %v663, 640
    %v669 = vadd.s32 %v663, 768
    %v670 = vadd.s32 %v663, 896
    %671 = vset.pattern.permute.xlu0 0
    %672 = vperm.xlu0 %671, %v660
    %v673 = vpop.permute.xlu0 %672
    %674 = vset.pattern.permute.xlu0 0
    %675 = vperm.xlu0 %674, %v661
    %v676 = vpop.permute.xlu0 %675
    %vm677 = vcmp.eq.s32.totalorder %v673, %v663
    %vm678 = vcmp.eq.s32.totalorder %v673, %v664
    %vm679 = vcmp.eq.s32.totalorder %v673, %v665
    %vm680 = vcmp.eq.s32.totalorder %v673, %v666
    %vm681 = vcmp.eq.s32.totalorder %v673, %v667
    %vm682 = vcmp.eq.s32.totalorder %v673, %v668
    %vm683 = vcmp.eq.s32.totalorder %v673, %v669
    %vm684 = vcmp.eq.s32.totalorder %v673, %v670
    %vm685 = vcmp.eq.s32.totalorder %v676, %v663
    %vm686 = vcmp.eq.s32.totalorder %v676, %v664
    %vm687 = vcmp.eq.s32.totalorder %v676, %v665
    %vm688 = vcmp.eq.s32.totalorder %v676, %v666
    %vm689 = vcmp.eq.s32.totalorder %v676, %v667
    %vm690 = vcmp.eq.s32.totalorder %v676, %v668
    %vm691 = vcmp.eq.s32.totalorder %v676, %v669
    %vm692 = vcmp.eq.s32.totalorder %v676, %v670
    %v693 = vsel %vm677, 1, 0
    %v694 = vsel %vm678, 1, 0
    %v695 = vsel %vm679, 1, 0
    %v696 = vsel %vm680, 1, 0
    %v697 = vsel %vm681, 1, 0
    %v698 = vsel %vm682, 1, 0
    %v699 = vsel %vm683, 1, 0
    %v700 = vsel %vm684, 1, 0
    %v701 = vsel %vm685, 1, 0
    %v702 = vsel %vm686, 1, 0
    %v703 = vsel %vm687, 1, 0
    %v704 = vsel %vm688, 1, 0
    %v705 = vsel %vm689, 1, 0
    %v706 = vsel %vm690, 1, 0
    %v707 = vsel %vm691, 1, 0
    %v708 = vsel %vm692, 1, 0
    %v709 = vcvt.s32.f32 %v693
    %v710 = vcvt.s32.f32 %v694
    %v711 = vcvt.s32.f32 %v695
    %v712 = vcvt.s32.f32 %v696
    %v713 = vcvt.s32.f32 %v697
    %v714 = vcvt.s32.f32 %v698
    %v715 = vcvt.s32.f32 %v699
    %v716 = vcvt.s32.f32 %v700
    %v717 = vcvt.s32.f32 %v701
    %v718 = vcvt.s32.f32 %v702
    %v719 = vcvt.s32.f32 %v703
    %v720 = vcvt.s32.f32 %v704
    %v721 = vcvt.s32.f32 %v705
    %v722 = vcvt.s32.f32 %v706
    %v723 = vcvt.s32.f32 %v707
    %v724 = vcvt.s32.f32 %v708
    %v725 = vld [vmem:[%s3] sm:$0xff]
    %v726 = vld [vmem:[%s3 + $0x8] sm:$0xff]
    %v727 = vld [vmem:[%s3 + $0x10] sm:$0xff]
    %v728 = vld [vmem:[%s3 + $0x18] sm:$0xff]
    %v729 = vld [vmem:[%s3 + $0x20] sm:$0xff]
    %v730 = vld [vmem:[%s3 + $0x28] sm:$0xff]
    %v731 = vld [vmem:[%s3 + $0x30] sm:$0xff]
    %v732 = vld [vmem:[%s3 + $0x38] sm:$0xff]
    %v733 = vld [vmem:[%s3 + $0x40] sm:$0xff]
    %v734 = vld [vmem:[%s3 + $0x48] sm:$0xff]
    %v735 = vld [vmem:[%s3 + $0x50] sm:$0xff]
    %v736 = vld [vmem:[%s3 + $0x58] sm:$0xff]
    %v737 = vld [vmem:[%s3 + $0x60] sm:$0xff]
    %v738 = vld [vmem:[%s3 + $0x68] sm:$0xff]
    %v739 = vld [vmem:[%s3 + $0x70] sm:$0xff]
    %v740 = vld [vmem:[%s3 + $0x78] sm:$0xff]
    %v741 = vld [vmem:[%s3 + $0x80] sm:$0xff]
    %v742 = vld [vmem:[%s3 + $0x88] sm:$0xff]
    %v743 = vld [vmem:[%s3 + $0x90] sm:$0xff]
    %v744 = vld [vmem:[%s3 + $0x98] sm:$0xff]
    %v745 = vld [vmem:[%s3 + $0xa0] sm:$0xff]
    %v746 = vld [vmem:[%s3 + $0xa8] sm:$0xff]
    %v747 = vld [vmem:[%s3 + $0xb0] sm:$0xff]
    %v748 = vld [vmem:[%s3 + $0xb8] sm:$0xff]
    %v749 = vld [vmem:[%s3 + $0xc0] sm:$0xff]
    %v750 = vld [vmem:[%s3 + $0xc8] sm:$0xff]
    %v751 = vld [vmem:[%s3 + $0xd0] sm:$0xff]
    %v752 = vld [vmem:[%s3 + $0xd8] sm:$0xff]
    %v753 = vld [vmem:[%s3 + $0xe0] sm:$0xff]
    %v754 = vld [vmem:[%s3 + $0xe8] sm:$0xff]
    %v755 = vld [vmem:[%s3 + $0xf0] sm:$0xff]
    %v756 = vld [vmem:[%s3 + $0xf8] sm:$0xff]
    %v757 = vld [vmem:[%s3 + $0x100] sm:$0xff]
    %v758 = vld [vmem:[%s3 + $0x108] sm:$0xff]
    %v759 = vld [vmem:[%s3 + $0x110] sm:$0xff]
    %v760 = vld [vmem:[%s3 + $0x118] sm:$0xff]
    %v761 = vld [vmem:[%s3 + $0x120] sm:$0xff]
    %v762 = vld [vmem:[%s3 + $0x128] sm:$0xff]
    %v763 = vld [vmem:[%s3 + $0x130] sm:$0xff]
    %v764 = vld [vmem:[%s3 + $0x138] sm:$0xff]
    %v765 = vld [vmem:[%s3 + $0x140] sm:$0xff]
    %v766 = vld [vmem:[%s3 + $0x148] sm:$0xff]
    %v767 = vld [vmem:[%s3 + $0x150] sm:$0xff]
    %v768 = vld [vmem:[%s3 + $0x158] sm:$0xff]
    %v769 = vld [vmem:[%s3 + $0x160] sm:$0xff]
    %v770 = vld [vmem:[%s3 + $0x168] sm:$0xff]
    %v771 = vld [vmem:[%s3 + $0x170] sm:$0xff]
    %v772 = vld [vmem:[%s3 + $0x178] sm:$0xff]
    %v773 = vld [vmem:[%s3 + $0x180] sm:$0xff]
    %v774 = vld [vmem:[%s3 + $0x188] sm:$0xff]
    %v775 = vld [vmem:[%s3 + $0x190] sm:$0xff]
    %v776 = vld [vmem:[%s3 + $0x198] sm:$0xff]
    %v777 = vld [vmem:[%s3 + $0x1a0] sm:$0xff]
    %v778 = vld [vmem:[%s3 + $0x1a8] sm:$0xff]
    %v779 = vld [vmem:[%s3 + $0x1b0] sm:$0xff]
    %v780 = vld [vmem:[%s3 + $0x1b8] sm:$0xff]
    %v781 = vld [vmem:[%s3 + $0x1c0] sm:$0xff]
    %v782 = vld [vmem:[%s3 + $0x1c8] sm:$0xff]
    %v783 = vld [vmem:[%s3 + $0x1d0] sm:$0xff]
    %v784 = vld [vmem:[%s3 + $0x1d8] sm:$0xff]
    %v785 = vld [vmem:[%s3 + $0x1e0] sm:$0xff]
    %v786 = vld [vmem:[%s3 + $0x1e8] sm:$0xff]
    %v787 = vld [vmem:[%s3 + $0x1f0] sm:$0xff]
    %v788 = vld [vmem:[%s3 + $0x1f8] sm:$0xff]
    %v789 = vld [vmem:[%s3 + $0x200] sm:$0xff]
    %v790 = vld [vmem:[%s3 + $0x208] sm:$0xff]
    %v791 = vld [vmem:[%s3 + $0x210] sm:$0xff]
    %v792 = vld [vmem:[%s3 + $0x218] sm:$0xff]
    %v793 = vld [vmem:[%s3 + $0x220] sm:$0xff]
    %v794 = vld [vmem:[%s3 + $0x228] sm:$0xff]
    %v795 = vld [vmem:[%s3 + $0x230] sm:$0xff]
    %v796 = vld [vmem:[%s3 + $0x238] sm:$0xff]
    %v797 = vld [vmem:[%s3 + $0x240] sm:$0xff]
    %v798 = vld [vmem:[%s3 + $0x248] sm:$0xff]
    %v799 = vld [vmem:[%s3 + $0x250] sm:$0xff]
    %v800 = vld [vmem:[%s3 + $0x258] sm:$0xff]
    %v801 = vld [vmem:[%s3 + $0x260] sm:$0xff]
    %v802 = vld [vmem:[%s3 + $0x268] sm:$0xff]
    %v803 = vld [vmem:[%s3 + $0x270] sm:$0xff]
    %v804 = vld [vmem:[%s3 + $0x278] sm:$0xff]
    %v805 = vld [vmem:[%s3 + $0x280] sm:$0xff]
    %v806 = vld [vmem:[%s3 + $0x288] sm:$0xff]
    %v807 = vld [vmem:[%s3 + $0x290] sm:$0xff]
    %v808 = vld [vmem:[%s3 + $0x298] sm:$0xff]
    %v809 = vld [vmem:[%s3 + $0x2a0] sm:$0xff]
    %v810 = vld [vmem:[%s3 + $0x2a8] sm:$0xff]
    %v811 = vld [vmem:[%s3 + $0x2b0] sm:$0xff]
    %v812 = vld [vmem:[%s3 + $0x2b8] sm:$0xff]
    %v813 = vld [vmem:[%s3 + $0x2c0] sm:$0xff]
    %v814 = vld [vmem:[%s3 + $0x2c8] sm:$0xff]
    %v815 = vld [vmem:[%s3 + $0x2d0] sm:$0xff]
    %v816 = vld [vmem:[%s3 + $0x2d8] sm:$0xff]
    %v817 = vld [vmem:[%s3 + $0x2e0] sm:$0xff]
    %v818 = vld [vmem:[%s3 + $0x2e8] sm:$0xff]
    %v819 = vld [vmem:[%s3 + $0x2f0] sm:$0xff]
    %v820 = vld [vmem:[%s3 + $0x2f8] sm:$0xff]
    %v821 = vld [vmem:[%s3 + $0x300] sm:$0xff]
    %v822 = vld [vmem:[%s3 + $0x308] sm:$0xff]
    %v823 = vld [vmem:[%s3 + $0x310] sm:$0xff]
    %v824 = vld [vmem:[%s3 + $0x318] sm:$0xff]
    %v825 = vld [vmem:[%s3 + $0x320] sm:$0xff]
    %v826 = vld [vmem:[%s3 + $0x328] sm:$0xff]
    %v827 = vld [vmem:[%s3 + $0x330] sm:$0xff]
    %v828 = vld [vmem:[%s3 + $0x338] sm:$0xff]
    %v829 = vld [vmem:[%s3 + $0x340] sm:$0xff]
    %v830 = vld [vmem:[%s3 + $0x348] sm:$0xff]
    %v831 = vld [vmem:[%s3 + $0x350] sm:$0xff]
    %v832 = vld [vmem:[%s3 + $0x358] sm:$0xff]
    %v833 = vld [vmem:[%s3 + $0x360] sm:$0xff]
    %v834 = vld [vmem:[%s3 + $0x368] sm:$0xff]
    %v835 = vld [vmem:[%s3 + $0x370] sm:$0xff]
    %v836 = vld [vmem:[%s3 + $0x378] sm:$0xff]
    %v837 = vld [vmem:[%s3 + $0x380] sm:$0xff]
    %v838 = vld [vmem:[%s3 + $0x388] sm:$0xff]
    %v839 = vld [vmem:[%s3 + $0x390] sm:$0xff]
    %v840 = vld [vmem:[%s3 + $0x398] sm:$0xff]
    %v841 = vld [vmem:[%s3 + $0x3a0] sm:$0xff]
    %v842 = vld [vmem:[%s3 + $0x3a8] sm:$0xff]
    %v843 = vld [vmem:[%s3 + $0x3b0] sm:$0xff]
    %v844 = vld [vmem:[%s3 + $0x3b8] sm:$0xff]
    %v845 = vld [vmem:[%s3 + $0x3c0] sm:$0xff]
    %v846 = vld [vmem:[%s3 + $0x3c8] sm:$0xff]
    %v847 = vld [vmem:[%s3 + $0x3d0] sm:$0xff]
    %v848 = vld [vmem:[%s3 + $0x3d8] sm:$0xff]
    %v849 = vld [vmem:[%s3 + $0x3e0] sm:$0xff]
    %vm850 = vcmask 850944
    %v852 = vsel %vm850, %v716, 0
    %v855 = vsel %vm850, %v724, 0
    %857 = vmatpush.msra.mxu0 %v740
    %858 = vmatpush.msra.mxu0 %v739
    %859 = vmatpush.msra.mxu0 %v738
    %860 = vmatpush.msra.mxu0 %v737
    %861 = vmatpush.msra.mxu0 %v736
    %862 = vmatpush.msra.mxu0 %v735
    %863 = vmatpush.msra.mxu0 %v734
    %864 = vmatpush.msra.mxu0 %v733
    %865 = vmatpush.msra.mxu0 %v732
    %866 = vmatpush.msra.mxu0 %v731
    %867 = vmatpush.msra.mxu0 %v730
    %868 = vmatpush.msra.mxu0 %v729
    %869 = vmatpush.msra.mxu0 %v728
    %870 = vmatpush.msra.mxu0 %v727
    %871 = vmatpush.msra.mxu0 %v726
    %872 = vmatpush.msra.mxu0 %v725
    %873 = vmatmul.f32.gmra.mxu0 %v709
    %v874 = vpop.f32.mrf.mxu0
    %v875 = vadd.f32 0.0, %v874
    %876 = vmatmul.f32.gmra.mxu0 %v717
    %v877 = vpop.f32.mrf.mxu0
    %v878 = vadd.f32 0.0, %v877
    %879 = vdwg.mxu0
    %880 = vmatpush.msra.mxu0 %v756
    %881 = vmatpush.msra.mxu0 %v755
    %882 = vmatpush.msra.mxu0 %v754
    %883 = vmatpush.msra.mxu0 %v753
    %884 = vmatpush.msra.mxu0 %v752
    %885 = vmatpush.msra.mxu0 %v751
    %886 = vmatpush.msra.mxu0 %v750
    %887 = vmatpush.msra.mxu0 %v749
    %888 = vmatpush.msra.mxu0 %v748
    %889 = vmatpush.msra.mxu0 %v747
    %890 = vmatpush.msra.mxu0 %v746
    %891 = vmatpush.msra.mxu0 %v745
    %892 = vmatpush.msra.mxu0 %v744
    %893 = vmatpush.msra.mxu0 %v743
    %894 = vmatpush.msra.mxu0 %v742
    %895 = vmatpush.msra.mxu0 %v741
    %896 = vmatmul.f32.gmra.mxu0 %v710
    %v897 = vpop.f32.mrf.mxu0
    %v898 = vadd.f32 %v875, %v897
    %899 = vmatmul.f32.gmra.mxu0 %v718
    %v900 = vpop.f32.mrf.mxu0
    %v901 = vadd.f32 %v878, %v900
    %902 = vdwg.mxu0
    %903 = vmatpush.msra.mxu0 %v772
    %904 = vmatpush.msra.mxu0 %v771
    %905 = vmatpush.msra.mxu0 %v770
    %906 = vmatpush.msra.mxu0 %v769
    %907 = vmatpush.msra.mxu0 %v768
    %908 = vmatpush.msra.mxu0 %v767
    %909 = vmatpush.msra.mxu0 %v766
    %910 = vmatpush.msra.mxu0 %v765
    %911 = vmatpush.msra.mxu0 %v764
    %912 = vmatpush.msra.mxu0 %v763
    %913 = vmatpush.msra.mxu0 %v762
    %914 = vmatpush.msra.mxu0 %v761
    %915 = vmatpush.msra.mxu0 %v760
    %916 = vmatpush.msra.mxu0 %v759
    %917 = vmatpush.msra.mxu0 %v758
    %918 = vmatpush.msra.mxu0 %v757
    %919 = vmatmul.f32.gmra.mxu0 %v711
    %v920 = vpop.f32.mrf.mxu0
    %v921 = vadd.f32 %v898, %v920
    %922 = vmatmul.f32.gmra.mxu0 %v719
    %v923 = vpop.f32.mrf.mxu0
    %v924 = vadd.f32 %v901, %v923
    %925 = vdwg.mxu0
    %926 = vmatpush.msra.mxu0 %v788
    %927 = vmatpush.msra.mxu0 %v787
    %928 = vmatpush.msra.mxu0 %v786
    %929 = vmatpush.msra.mxu0 %v785
    %930 = vmatpush.msra.mxu0 %v784
    %931 = vmatpush.msra.mxu0 %v783
    %932 = vmatpush.msra.mxu0 %v782
    %933 = vmatpush.msra.mxu0 %v781
    %934 = vmatpush.msra.mxu0 %v780
    %935 = vmatpush.msra.mxu0 %v779
    %936 = vmatpush.msra.mxu0 %v778
    %937 = vmatpush.msra.mxu0 %v777
    %938 = vmatpush.msra.mxu0 %v776
    %939 = vmatpush.msra.mxu0 %v775
    %940 = vmatpush.msra.mxu0 %v774
    %941 = vmatpush.msra.mxu0 %v773
    %942 = vmatmul.f32.gmra.mxu0 %v712
    %v943 = vpop.f32.mrf.mxu0
    %v944 = vadd.f32 %v921, %v943
    %945 = vmatmul.f32.gmra.mxu0 %v720
    %v946 = vpop.f32.mrf.mxu0
    %v947 = vadd.f32 %v924, %v946
    %948 = vdwg.mxu0
    %949 = vmatpush.msra.mxu0 %v804
    %950 = vmatpush.msra.mxu0 %v803
    %951 = vmatpush.msra.mxu0 %v802
    %952 = vmatpush.msra.mxu0 %v801
    %953 = vmatpush.msra.mxu0 %v800
    %954 = vmatpush.msra.mxu0 %v799
    %955 = vmatpush.msra.mxu0 %v798
    %956 = vmatpush.msra.mxu0 %v797
    %957 = vmatpush.msra.mxu0 %v796
    %958 = vmatpush.msra.mxu0 %v795
    %959 = vmatpush.msra.mxu0 %v794
    %960 = vmatpush.msra.mxu0 %v793
    %961 = vmatpush.msra.mxu0 %v792
    %962 = vmatpush.msra.mxu0 %v791
    %963 = vmatpush.msra.mxu0 %v790
    %964 = vmatpush.msra.mxu0 %v789
    %965 = vmatmul.f32.gmra.mxu0 %v713
    %v966 = vpop.f32.mrf.mxu0
    %v967 = vadd.f32 %v944, %v966
    %968 = vmatmul.f32.gmra.mxu0 %v721
    %v969 = vpop.f32.mrf.mxu0
    %v970 = vadd.f32 %v947, %v969
    %971 = vdwg.mxu0
    %972 = vmatpush.msra.mxu0 %v820
    %973 = vmatpush.msra.mxu0 %v819
    %974 = vmatpush.msra.mxu0 %v818
    %975 = vmatpush.msra.mxu0 %v817
    %976 = vmatpush.msra.mxu0 %v816
    %977 = vmatpush.msra.mxu0 %v815
    %978 = vmatpush.msra.mxu0 %v814
    %979 = vmatpush.msra.mxu0 %v813
    %980 = vmatpush.msra.mxu0 %v812
    %981 = vmatpush.msra.mxu0 %v811
    %982 = vmatpush.msra.mxu0 %v810
    %983 = vmatpush.msra.mxu0 %v809
    %984 = vmatpush.msra.mxu0 %v808
    %985 = vmatpush.msra.mxu0 %v807
    %986 = vmatpush.msra.mxu0 %v806
    %987 = vmatpush.msra.mxu0 %v805
    %988 = vmatmul.f32.gmra.mxu0 %v714
    %v989 = vpop.f32.mrf.mxu0
    %v990 = vadd.f32 %v967, %v989
    %991 = vmatmul.f32.gmra.mxu0 %v722
    %v992 = vpop.f32.mrf.mxu0
    %v993 = vadd.f32 %v970, %v992
    %994 = vdwg.mxu0
    %995 = vmatpush.msra.mxu0 %v836
    %996 = vmatpush.msra.mxu0 %v835
    %997 = vmatpush.msra.mxu0 %v834
    %998 = vmatpush.msra.mxu0 %v833
    %999 = vmatpush.msra.mxu0 %v832
    %1000 = vmatpush.msra.mxu0 %v831
    %1001 = vmatpush.msra.mxu0 %v830
    %1002 = vmatpush.msra.mxu0 %v829
    %1003 = vmatpush.msra.mxu0 %v828
    %1004 = vmatpush.msra.mxu0 %v827
    %1005 = vmatpush.msra.mxu0 %v826
    %1006 = vmatpush.msra.mxu0 %v825
    %1007 = vmatpush.msra.mxu0 %v824
    %1008 = vmatpush.msra.mxu0 %v823
    %1009 = vmatpush.msra.mxu0 %v822
    %1010 = vmatpush.msra.mxu0 %v821
    %1011 = vmatmul.f32.gmra.mxu0 %v715
    %v1012 = vpop.f32.mrf.mxu0
    %v1013 = vadd.f32 %v990, %v1012
    %1014 = vmatmul.f32.gmra.mxu0 %v723
    %v1015 = vpop.f32.mrf.mxu0
    %v1016 = vadd.f32 %v993, %v1015
    %1017 = vdwg.mxu0
    %1018 = vmatpush.msra.mxu0 0.0
    %1019 = vmatpush.msra.mxu0 0.0
    %1020 = vmatpush.msra.mxu0 0.0
    %1021 = vmatpush.msra.mxu0 %v849
    %1022 = vmatpush.msra.mxu0 %v848
    %1023 = vmatpush.msra.mxu0 %v847
    %1024 = vmatpush.msra.mxu0 %v846
    %1025 = vmatpush.msra.mxu0 %v845
    %1026 = vmatpush.msra.mxu0 %v844
    %1027 = vmatpush.msra.mxu0 %v843
    %1028 = vmatpush.msra.mxu0 %v842
    %1029 = vmatpush.msra.mxu0 %v841
    %1030 = vmatpush.msra.mxu0 %v840
    %1031 = vmatpush.msra.mxu0 %v839
    %1032 = vmatpush.msra.mxu0 %v838
    %1033 = vmatpush.msra.mxu0 %v837
    %1034 = vmatmul.f32.gmra.mxu0 %v852
    %v1035 = vpop.f32.mrf.mxu0
    %v1036 = vadd.f32 %v1013, %v1035
    %1037 = vmatmul.f32.gmra.mxu0 %v855
    %v1038 = vpop.f32.mrf.mxu0
    %v1039 = vadd.f32 %v1016, %v1038
    %1040 = vdwg.mxu0
    %v1041 = vld [vmem:[%s5] sm:$0xff]
    %v1042 = vld [vmem:[%s5 + $0x8] sm:$0xff]
    %v1043 = vld [vmem:[%s5 + $0x10] sm:$0xff]
    %v1044 = vld [vmem:[%s5 + $0x18] sm:$0xff]
    %v1045 = vld [vmem:[%s7] sm:$0x1]
    %v1047 = vperm.slane %v1045, 0
    %vm1049 = vcmask 261120
    %v1051 = vsel %vm1049, %v1036, 0
    %v1054 = vsel %vm1049, %v1039, 0
    %1056 = vmatpush.msra.mxu0 0.0
    %1057 = vmatpush.msra.mxu0 0.0
    %1058 = vmatpush.msra.mxu0 0.0
    %1059 = vmatpush.msra.mxu0 0.0
    %1060 = vmatpush.msra.mxu0 0.0
    %1061 = vmatpush.msra.mxu0 0.0
    %1062 = vmatpush.msra.mxu0 0.0
    %1063 = vmatpush.msra.mxu0 0.0
    %1064 = vmatpush.msra.mxu0 0.0
    %1065 = vmatpush.msra.mxu0 0.0
    %1066 = vmatpush.msra.mxu0 0.0
    %1067 = vmatpush.msra.mxu0 0.0
    %1068 = vmatpush.msra.mxu0 %v1044
    %1069 = vmatpush.msra.mxu0 %v1043
    %1070 = vmatpush.msra.mxu0 %v1042
    %1071 = vmatpush.msra.mxu0 %v1041
    %1072 = vmatmul.f32.gmra.mxu0 %v1051
    %v1073 = vpop.f32.mrf.mxu0
    %v1074 = vadd.f32 %v1047, %v1073
    %1075 = vmatmul.f32.gmra.mxu0 %v1054
    %v1076 = vpop.f32.mrf.mxu0
    %v1077 = vadd.f32 %v1047, %v1076
    %1078 = vdwg.mxu0
    %v1079 = vld [vmem:[%s9] sm:$0xff]
    %v1080 = vld [vmem:[%s9 + $0x8] sm:$0xff]
    %v1081 = vld [vmem:[%s9 + $0x10] sm:$0xff]
    %v1082 = vld [vmem:[%s9 + $0x18] sm:$0xff]
    %v1083 = vld [vmem:[%s11] sm:$0x1]
    %1085 = vrot.lane.b32.xlu0 %v1074, 96
    %v1086 = vpop.permute.xlu0 %1085
    %vm1087 = vcmask 64512
    %v1088 = vsel %vm1087, %v1074, 0
    %v1090 = vsel %vm1087, %v1086, 0
    %1092 = vmatpush.xpose.msra.mxu0 0.0
    %1093 = vmatpush.xpose.msra.mxu0 0.0
    %1094 = vmatpush.xpose.msra.mxu0 0.0
    %1095 = vmatpush.xpose.msra.mxu0 0.0
    %1096 = vmatpush.xpose.msra.mxu0 0.0
    %1097 = vmatpush.xpose.msra.mxu0 0.0
    %1098 = vmatpush.xpose.msra.mxu0 0.0
    %1099 = vmatpush.xpose.msra.mxu0 0.0
    %1100 = vmatpush.xpose.msra.mxu0 0.0
    %1101 = vmatpush.xpose.msra.mxu0 0.0
    %1102 = vmatpush.xpose.msra.mxu0 0.0
    %1103 = vmatpush.xpose.msra.mxu0 0.0
    %1104 = vmatpush.xpose.msra.mxu0 0.0
    %1105 = vmatpush.xpose.msra.mxu0 0.0
    %1106 = vmatpush.xpose.msra.mxu0 0.0
    %1107 = vmatpush.xpose.msra.mxu0 %v1090
    %1108 = vmatmul.f32.gmra.mxu0 %v1088
    %v1109 = vpop.f32.mrf.mxu0
    %v1110 = vadd.f32 0.0, %v1109
    %1111 = vdwg.mxu0
    %1113 = vrot.lane.b32.xlu0 %v1077, 96
    %v1114 = vpop.permute.xlu0 %1113
    %v1115 = vsel %vm1087, %v1077, 0
    %v1117 = vsel %vm1087, %v1114, 0
    %1119 = vmatpush.xpose.msra.mxu0 0.0
    %1120 = vmatpush.xpose.msra.mxu0 0.0
    %1121 = vmatpush.xpose.msra.mxu0 0.0
    %1122 = vmatpush.xpose.msra.mxu0 0.0
    %1123 = vmatpush.xpose.msra.mxu0 0.0
    %1124 = vmatpush.xpose.msra.mxu0 0.0
    %1125 = vmatpush.xpose.msra.mxu0 0.0
    %1126 = vmatpush.xpose.msra.mxu0 0.0
    %1127 = vmatpush.xpose.msra.mxu0 0.0
    %1128 = vmatpush.xpose.msra.mxu0 0.0
    %1129 = vmatpush.xpose.msra.mxu0 0.0
    %1130 = vmatpush.xpose.msra.mxu0 0.0
    %1131 = vmatpush.xpose.msra.mxu0 0.0
    %1132 = vmatpush.xpose.msra.mxu0 0.0
    %1133 = vmatpush.xpose.msra.mxu0 0.0
    %1134 = vmatpush.xpose.msra.mxu0 %v1117
    %1135 = vmatmul.f32.gmra.mxu0 %v1115
    %v1136 = vpop.f32.mrf.mxu0
    %v1137 = vadd.f32 0.0, %v1136
    %1138 = vdwg.mxu0
    %v1139 = vsel %vm1087, %v1110, -inf
    %1140 = vmax.xlane.f32.xlu0 %v1139
    %v1141 = vpop.xlane.xlu0 %1140
    %v1142 = vsel %vm1087, %v1137, -inf
    %1143 = vmax.xlane.f32.xlu0 %v1142
    %v1144 = vpop.xlane.xlu0 %1143
    %v1145 = vsub.f32 %v1110, %v1141
    %v1146 = vsub.f32 %v1137, %v1144
    %v1147 = vmul.f32 %v1145, 1.442695
    %v1148 = vpow.pop %v1147
    %v1149 = vmul.f32 %v1146, 1.442695
    %v1150 = vpow.pop %v1149
    %v1151 = vsel %vm1087, %v1148, 0.0
    %1152 = vadd.xlane.f32.xlu0 %v1151
    %v1153 = vpop.xlane.xlu0 %1152
    %v1154 = vsel %vm1087, %v1150, 0.0
    %1155 = vadd.xlane.f32.xlu0 %v1154
    %v1156 = vpop.xlane.xlu0 %1155
    %v1157 = vrcp.pop %v1153
    %v1158 = vrcp.pop %v1156
    %v1159 = vmul.f32 %v1148, %v1157
    %v1160 = vmul.f32 %v1150, %v1158
    %1161 = vrot.lane.b32.xlu0 %v1074, 64
    %v1162 = vpop.permute.xlu0 %1161
    %v1165 = vsel %vm1087, %v1159, 0
    %1167 = vmatpush.msra.mxu0 0.0
    %1168 = vmatpush.msra.mxu0 0.0
    %1169 = vmatpush.msra.mxu0 0.0
    %1170 = vmatpush.msra.mxu0 0.0
    %1171 = vmatpush.msra.mxu0 0.0
    %1172 = vmatpush.msra.mxu0 0.0
    %1173 = vmatpush.msra.mxu0 0.0
    %1174 = vmatpush.msra.mxu0 0.0
    %1175 = vmatpush.msra.mxu0 0.0
    %1176 = vmatpush.msra.mxu0 0.0
    %1177 = vmatpush.msra.mxu0 0.0
    %1178 = vmatpush.msra.mxu0 0.0
    %1179 = vmatpush.msra.mxu0 0.0
    %1180 = vmatpush.msra.mxu0 0.0
    %1181 = vmatpush.msra.mxu0 0.0
    %1182 = vmatpush.msra.mxu0 %v1162
    %1183 = vmatmul.f32.gmra.mxu0 %v1165
    %v1184 = vpop.f32.mrf.mxu0
    %v1185 = vadd.f32 0.0, %v1184
    %1186 = vdwg.mxu0
    %1187 = vrot.lane.b32.xlu0 %v1077, 64
    %v1188 = vpop.permute.xlu0 %1187
    %v1191 = vsel %vm1087, %v1160, 0
    %1193 = vmatpush.msra.mxu0 0.0
    %1194 = vmatpush.msra.mxu0 0.0
    %1195 = vmatpush.msra.mxu0 0.0
    %1196 = vmatpush.msra.mxu0 0.0
    %1197 = vmatpush.msra.mxu0 0.0
    %1198 = vmatpush.msra.mxu0 0.0
    %1199 = vmatpush.msra.mxu0 0.0
    %1200 = vmatpush.msra.mxu0 0.0
    %1201 = vmatpush.msra.mxu0 0.0
    %1202 = vmatpush.msra.mxu0 0.0
    %1203 = vmatpush.msra.mxu0 0.0
    %1204 = vmatpush.msra.mxu0 0.0
    %1205 = vmatpush.msra.mxu0 0.0
    %1206 = vmatpush.msra.mxu0 0.0
    %1207 = vmatpush.msra.mxu0 0.0
    %1208 = vmatpush.msra.mxu0 %v1188
    %1209 = vmatmul.f32.gmra.mxu0 %v1191
    %v1210 = vpop.f32.mrf.mxu0
    %v1211 = vadd.f32 0.0, %v1210
    %1212 = vdwg.mxu0
    %1213 = vrot.lane.b32.xlu0 %v1074, 120
    %v1214 = vpop.permute.xlu0 %1213
    %1215 = vrot.lane.b32.xlu0 %v1074, 88
    %v1216 = vpop.permute.xlu0 %1215
    %v1217 = vsel %vm1087, %v1214, 0
    %v1219 = vsel %vm1087, %v1216, 0
    %1221 = vmatpush.xpose.msra.mxu0 0.0
    %1222 = vmatpush.xpose.msra.mxu0 0.0
    %1223 = vmatpush.xpose.msra.mxu0 0.0
    %1224 = vmatpush.xpose.msra.mxu0 0.0
    %1225 = vmatpush.xpose.msra.mxu0 0.0
    %1226 = vmatpush.xpose.msra.mxu0 0.0
    %1227 = vmatpush.xpose.msra.mxu0 0.0
    %1228 = vmatpush.xpose.msra.mxu0 0.0
    %1229 = vmatpush.xpose.msra.mxu0 0.0
    %1230 = vmatpush.xpose.msra.mxu0 0.0
    %1231 = vmatpush.xpose.msra.mxu0 0.0
    %1232 = vmatpush.xpose.msra.mxu0 0.0
    %1233 = vmatpush.xpose.msra.mxu0 0.0
    %1234 = vmatpush.xpose.msra.mxu0 0.0
    %1235 = vmatpush.xpose.msra.mxu0 0.0
    %1236 = vmatpush.xpose.msra.mxu0 %v1219
    %1237 = vmatmul.f32.gmra.mxu0 %v1217
    %v1238 = vpop.f32.mrf.mxu0
    %v1239 = vadd.f32 0.0, %v1238
    %1240 = vdwg.mxu0
    %1241 = vrot.lane.b32.xlu0 %v1077, 120
    %v1242 = vpop.permute.xlu0 %1241
    %1243 = vrot.lane.b32.xlu0 %v1077, 88
    %v1244 = vpop.permute.xlu0 %1243
    %v1245 = vsel %vm1087, %v1242, 0
    %v1247 = vsel %vm1087, %v1244, 0
    %1249 = vmatpush.xpose.msra.mxu0 0.0
    %1250 = vmatpush.xpose.msra.mxu0 0.0
    %1251 = vmatpush.xpose.msra.mxu0 0.0
    %1252 = vmatpush.xpose.msra.mxu0 0.0
    %1253 = vmatpush.xpose.msra.mxu0 0.0
    %1254 = vmatpush.xpose.msra.mxu0 0.0
    %1255 = vmatpush.xpose.msra.mxu0 0.0
    %1256 = vmatpush.xpose.msra.mxu0 0.0
    %1257 = vmatpush.xpose.msra.mxu0 0.0
    %1258 = vmatpush.xpose.msra.mxu0 0.0
    %1259 = vmatpush.xpose.msra.mxu0 0.0
    %1260 = vmatpush.xpose.msra.mxu0 0.0
    %1261 = vmatpush.xpose.msra.mxu0 0.0
    %1262 = vmatpush.xpose.msra.mxu0 0.0
    %1263 = vmatpush.xpose.msra.mxu0 0.0
    %1264 = vmatpush.xpose.msra.mxu0 %v1247
    %1265 = vmatmul.f32.gmra.mxu0 %v1245
    %v1266 = vpop.f32.mrf.mxu0
    %v1267 = vadd.f32 0.0, %v1266
    %1268 = vdwg.mxu0
    %v1269 = vsel %vm1087, %v1239, -inf
    %1270 = vmax.xlane.f32.xlu0 %v1269
    %v1271 = vpop.xlane.xlu0 %1270
    %v1272 = vsel %vm1087, %v1267, -inf
    %1273 = vmax.xlane.f32.xlu0 %v1272
    %v1274 = vpop.xlane.xlu0 %1273
    %v1275 = vsub.f32 %v1239, %v1271
    %v1276 = vsub.f32 %v1267, %v1274
    %v1277 = vmul.f32 %v1275, 1.442695
    %v1278 = vpow.pop %v1277
    %v1279 = vmul.f32 %v1276, 1.442695
    %v1280 = vpow.pop %v1279
    %v1281 = vsel %vm1087, %v1278, 0.0
    %1282 = vadd.xlane.f32.xlu0 %v1281
    %v1283 = vpop.xlane.xlu0 %1282
    %v1284 = vsel %vm1087, %v1280, 0.0
    %1285 = vadd.xlane.f32.xlu0 %v1284
    %v1286 = vpop.xlane.xlu0 %1285
    %v1287 = vrcp.pop %v1283
    %v1288 = vrcp.pop %v1286
    %v1289 = vmul.f32 %v1278, %v1287
    %v1290 = vmul.f32 %v1280, %v1288
    %1291 = vrot.lane.b32.xlu0 %v1074, 56
    %v1292 = vpop.permute.xlu0 %1291
    %v1295 = vsel %vm1087, %v1289, 0
    %1297 = vmatpush.msra.mxu0 0.0
    %1298 = vmatpush.msra.mxu0 0.0
    %1299 = vmatpush.msra.mxu0 0.0
    %1300 = vmatpush.msra.mxu0 0.0
    %1301 = vmatpush.msra.mxu0 0.0
    %1302 = vmatpush.msra.mxu0 0.0
    %1303 = vmatpush.msra.mxu0 0.0
    %1304 = vmatpush.msra.mxu0 0.0
    %1305 = vmatpush.msra.mxu0 0.0
    %1306 = vmatpush.msra.mxu0 0.0
    %1307 = vmatpush.msra.mxu0 0.0
    %1308 = vmatpush.msra.mxu0 0.0
    %1309 = vmatpush.msra.mxu0 0.0
    %1310 = vmatpush.msra.mxu0 0.0
    %1311 = vmatpush.msra.mxu0 0.0
    %1312 = vmatpush.msra.mxu0 %v1292
    %1313 = vmatmul.f32.gmra.mxu0 %v1295
    %v1314 = vpop.f32.mrf.mxu0
    %v1315 = vadd.f32 0.0, %v1314
    %1316 = vdwg.mxu0
    %1317 = vrot.lane.b32.xlu0 %v1077, 56
    %v1318 = vpop.permute.xlu0 %1317
    %v1321 = vsel %vm1087, %v1290, 0
    %1323 = vmatpush.msra.mxu0 0.0
    %1324 = vmatpush.msra.mxu0 0.0
    %1325 = vmatpush.msra.mxu0 0.0
    %1326 = vmatpush.msra.mxu0 0.0
    %1327 = vmatpush.msra.mxu0 0.0
    %1328 = vmatpush.msra.mxu0 0.0
    %1329 = vmatpush.msra.mxu0 0.0
    %1330 = vmatpush.msra.mxu0 0.0
    %1331 = vmatpush.msra.mxu0 0.0
    %1332 = vmatpush.msra.mxu0 0.0
    %1333 = vmatpush.msra.mxu0 0.0
    %1334 = vmatpush.msra.mxu0 0.0
    %1335 = vmatpush.msra.mxu0 0.0
    %1336 = vmatpush.msra.mxu0 0.0
    %1337 = vmatpush.msra.mxu0 0.0
    %1338 = vmatpush.msra.mxu0 %v1318
    %1339 = vmatmul.f32.gmra.mxu0 %v1321
    %v1340 = vpop.f32.mrf.mxu0
    %v1341 = vadd.f32 0.0, %v1340
    %1342 = vdwg.mxu0
    %1343 = vrot.lane.b32.xlu0 %v1074, 112
    %v1344 = vpop.permute.xlu0 %1343
    %1345 = vrot.lane.b32.xlu0 %v1074, 80
    %v1346 = vpop.permute.xlu0 %1345
    %v1347 = vsel %vm1087, %v1344, 0
    %v1349 = vsel %vm1087, %v1346, 0
    %1351 = vmatpush.xpose.msra.mxu0 0.0
    %1352 = vmatpush.xpose.msra.mxu0 0.0
    %1353 = vmatpush.xpose.msra.mxu0 0.0
    %1354 = vmatpush.xpose.msra.mxu0 0.0
    %1355 = vmatpush.xpose.msra.mxu0 0.0
    %1356 = vmatpush.xpose.msra.mxu0 0.0
    %1357 = vmatpush.xpose.msra.mxu0 0.0
    %1358 = vmatpush.xpose.msra.mxu0 0.0
    %1359 = vmatpush.xpose.msra.mxu0 0.0
    %1360 = vmatpush.xpose.msra.mxu0 0.0
    %1361 = vmatpush.xpose.msra.mxu0 0.0
    %1362 = vmatpush.xpose.msra.mxu0 0.0
    %1363 = vmatpush.xpose.msra.mxu0 0.0
    %1364 = vmatpush.xpose.msra.mxu0 0.0
    %1365 = vmatpush.xpose.msra.mxu0 0.0
    %1366 = vmatpush.xpose.msra.mxu0 %v1349
    %1367 = vmatmul.f32.gmra.mxu0 %v1347
    %v1368 = vpop.f32.mrf.mxu0
    %v1369 = vadd.f32 0.0, %v1368
    %1370 = vdwg.mxu0
    %1371 = vrot.lane.b32.xlu0 %v1077, 112
    %v1372 = vpop.permute.xlu0 %1371
    %1373 = vrot.lane.b32.xlu0 %v1077, 80
    %v1374 = vpop.permute.xlu0 %1373
    %v1375 = vsel %vm1087, %v1372, 0
    %v1377 = vsel %vm1087, %v1374, 0
    %1379 = vmatpush.xpose.msra.mxu0 0.0
    %1380 = vmatpush.xpose.msra.mxu0 0.0
    %1381 = vmatpush.xpose.msra.mxu0 0.0
    %1382 = vmatpush.xpose.msra.mxu0 0.0
    %1383 = vmatpush.xpose.msra.mxu0 0.0
    %1384 = vmatpush.xpose.msra.mxu0 0.0
    %1385 = vmatpush.xpose.msra.mxu0 0.0
    %1386 = vmatpush.xpose.msra.mxu0 0.0
    %1387 = vmatpush.xpose.msra.mxu0 0.0
    %1388 = vmatpush.xpose.msra.mxu0 0.0
    %1389 = vmatpush.xpose.msra.mxu0 0.0
    %1390 = vmatpush.xpose.msra.mxu0 0.0
    %1391 = vmatpush.xpose.msra.mxu0 0.0
    %1392 = vmatpush.xpose.msra.mxu0 0.0
    %1393 = vmatpush.xpose.msra.mxu0 0.0
    %1394 = vmatpush.xpose.msra.mxu0 %v1377
    %1395 = vmatmul.f32.gmra.mxu0 %v1375
    %v1396 = vpop.f32.mrf.mxu0
    %v1397 = vadd.f32 0.0, %v1396
    %1398 = vdwg.mxu0
    %v1399 = vsel %vm1087, %v1369, -inf
    %1400 = vmax.xlane.f32.xlu0 %v1399
    %v1401 = vpop.xlane.xlu0 %1400
    %v1402 = vsel %vm1087, %v1397, -inf
    %1403 = vmax.xlane.f32.xlu0 %v1402
    %v1404 = vpop.xlane.xlu0 %1403
    %v1405 = vsub.f32 %v1369, %v1401
    %v1406 = vsub.f32 %v1397, %v1404
    %v1407 = vmul.f32 %v1405, 1.442695
    %v1408 = vpow.pop %v1407
    %v1409 = vmul.f32 %v1406, 1.442695
    %v1410 = vpow.pop %v1409
    %v1411 = vsel %vm1087, %v1408, 0.0
    %1412 = vadd.xlane.f32.xlu0 %v1411
    %v1413 = vpop.xlane.xlu0 %1412
    %v1414 = vsel %vm1087, %v1410, 0.0
    %1415 = vadd.xlane.f32.xlu0 %v1414
    %v1416 = vpop.xlane.xlu0 %1415
    %v1417 = vrcp.pop %v1413
    %v1418 = vrcp.pop %v1416
    %v1419 = vmul.f32 %v1408, %v1417
    %v1420 = vmul.f32 %v1410, %v1418
    %1421 = vrot.lane.b32.xlu0 %v1074, 48
    %v1422 = vpop.permute.xlu0 %1421
    %v1425 = vsel %vm1087, %v1419, 0
    %1427 = vmatpush.msra.mxu0 0.0
    %1428 = vmatpush.msra.mxu0 0.0
    %1429 = vmatpush.msra.mxu0 0.0
    %1430 = vmatpush.msra.mxu0 0.0
    %1431 = vmatpush.msra.mxu0 0.0
    %1432 = vmatpush.msra.mxu0 0.0
    %1433 = vmatpush.msra.mxu0 0.0
    %1434 = vmatpush.msra.mxu0 0.0
    %1435 = vmatpush.msra.mxu0 0.0
    %1436 = vmatpush.msra.mxu0 0.0
    %1437 = vmatpush.msra.mxu0 0.0
    %1438 = vmatpush.msra.mxu0 0.0
    %1439 = vmatpush.msra.mxu0 0.0
    %1440 = vmatpush.msra.mxu0 0.0
    %1441 = vmatpush.msra.mxu0 0.0
    %1442 = vmatpush.msra.mxu0 %v1422
    %1443 = vmatmul.f32.gmra.mxu0 %v1425
    %v1444 = vpop.f32.mrf.mxu0
    %v1445 = vadd.f32 0.0, %v1444
    %1446 = vdwg.mxu0
    %1447 = vrot.lane.b32.xlu0 %v1077, 48
    %v1448 = vpop.permute.xlu0 %1447
    %v1451 = vsel %vm1087, %v1420, 0
    %1453 = vmatpush.msra.mxu0 0.0
    %1454 = vmatpush.msra.mxu0 0.0
    %1455 = vmatpush.msra.mxu0 0.0
    %1456 = vmatpush.msra.mxu0 0.0
    %1457 = vmatpush.msra.mxu0 0.0
    %1458 = vmatpush.msra.mxu0 0.0
    %1459 = vmatpush.msra.mxu0 0.0
    %1460 = vmatpush.msra.mxu0 0.0
    %1461 = vmatpush.msra.mxu0 0.0
    %1462 = vmatpush.msra.mxu0 0.0
    %1463 = vmatpush.msra.mxu0 0.0
    %1464 = vmatpush.msra.mxu0 0.0
    %1465 = vmatpush.msra.mxu0 0.0
    %1466 = vmatpush.msra.mxu0 0.0
    %1467 = vmatpush.msra.mxu0 0.0
    %1468 = vmatpush.msra.mxu0 %v1448
    %1469 = vmatmul.f32.gmra.mxu0 %v1451
    %v1470 = vpop.f32.mrf.mxu0
    %v1471 = vadd.f32 0.0, %v1470
    %1472 = vdwg.mxu0
    %1473 = vrot.lane.b32.xlu0 %v1074, 104
    %v1474 = vpop.permute.xlu0 %1473
    %1475 = vrot.lane.b32.xlu0 %v1074, 72
    %v1476 = vpop.permute.xlu0 %1475
    %v1477 = vsel %vm1087, %v1474, 0
    %v1479 = vsel %vm1087, %v1476, 0
    %1481 = vmatpush.xpose.msra.mxu0 0.0
    %1482 = vmatpush.xpose.msra.mxu0 0.0
    %1483 = vmatpush.xpose.msra.mxu0 0.0
    %1484 = vmatpush.xpose.msra.mxu0 0.0
    %1485 = vmatpush.xpose.msra.mxu0 0.0
    %1486 = vmatpush.xpose.msra.mxu0 0.0
    %1487 = vmatpush.xpose.msra.mxu0 0.0
    %1488 = vmatpush.xpose.msra.mxu0 0.0
    %1489 = vmatpush.xpose.msra.mxu0 0.0
    %1490 = vmatpush.xpose.msra.mxu0 0.0
    %1491 = vmatpush.xpose.msra.mxu0 0.0
    %1492 = vmatpush.xpose.msra.mxu0 0.0
    %1493 = vmatpush.xpose.msra.mxu0 0.0
    %1494 = vmatpush.xpose.msra.mxu0 0.0
    %1495 = vmatpush.xpose.msra.mxu0 0.0
    %1496 = vmatpush.xpose.msra.mxu0 %v1479
    %1497 = vmatmul.f32.gmra.mxu0 %v1477
    %v1498 = vpop.f32.mrf.mxu0
    %v1499 = vadd.f32 0.0, %v1498
    %1500 = vdwg.mxu0
    %1501 = vrot.lane.b32.xlu0 %v1077, 104
    %v1502 = vpop.permute.xlu0 %1501
    %1503 = vrot.lane.b32.xlu0 %v1077, 72
    %v1504 = vpop.permute.xlu0 %1503
    %v1505 = vsel %vm1087, %v1502, 0
    %v1507 = vsel %vm1087, %v1504, 0
    %1509 = vmatpush.xpose.msra.mxu0 0.0
    %1510 = vmatpush.xpose.msra.mxu0 0.0
    %1511 = vmatpush.xpose.msra.mxu0 0.0
    %1512 = vmatpush.xpose.msra.mxu0 0.0
    %1513 = vmatpush.xpose.msra.mxu0 0.0
    %1514 = vmatpush.xpose.msra.mxu0 0.0
    %1515 = vmatpush.xpose.msra.mxu0 0.0
    %1516 = vmatpush.xpose.msra.mxu0 0.0
    %1517 = vmatpush.xpose.msra.mxu0 0.0
    %1518 = vmatpush.xpose.msra.mxu0 0.0
    %1519 = vmatpush.xpose.msra.mxu0 0.0
    %1520 = vmatpush.xpose.msra.mxu0 0.0
    %1521 = vmatpush.xpose.msra.mxu0 0.0
    %1522 = vmatpush.xpose.msra.mxu0 0.0
    %1523 = vmatpush.xpose.msra.mxu0 0.0
    %1524 = vmatpush.xpose.msra.mxu0 %v1507
    %1525 = vmatmul.f32.gmra.mxu0 %v1505
    %v1526 = vpop.f32.mrf.mxu0
    %v1527 = vadd.f32 0.0, %v1526
    %1528 = vdwg.mxu0
    %v1529 = vsel %vm1087, %v1499, -inf
    %1530 = vmax.xlane.f32.xlu0 %v1529
    %v1531 = vpop.xlane.xlu0 %1530
    %v1532 = vsel %vm1087, %v1527, -inf
    %1533 = vmax.xlane.f32.xlu0 %v1532
    %v1534 = vpop.xlane.xlu0 %1533
    %v1535 = vsub.f32 %v1499, %v1531
    %v1536 = vsub.f32 %v1527, %v1534
    %v1537 = vmul.f32 %v1535, 1.442695
    %v1538 = vpow.pop %v1537
    %v1539 = vmul.f32 %v1536, 1.442695
    %v1540 = vpow.pop %v1539
    %v1541 = vsel %vm1087, %v1538, 0.0
    %1542 = vadd.xlane.f32.xlu0 %v1541
    %v1543 = vpop.xlane.xlu0 %1542
    %v1544 = vsel %vm1087, %v1540, 0.0
    %1545 = vadd.xlane.f32.xlu0 %v1544
    %v1546 = vpop.xlane.xlu0 %1545
    %v1547 = vrcp.pop %v1543
    %v1548 = vrcp.pop %v1546
    %v1549 = vmul.f32 %v1538, %v1547
    %v1550 = vmul.f32 %v1540, %v1548
    %1551 = vrot.lane.b32.xlu0 %v1074, 40
    %v1552 = vpop.permute.xlu0 %1551
    %v1555 = vsel %vm1087, %v1549, 0
    %1557 = vmatpush.msra.mxu0 0.0
    %1558 = vmatpush.msra.mxu0 0.0
    %1559 = vmatpush.msra.mxu0 0.0
    %1560 = vmatpush.msra.mxu0 0.0
    %1561 = vmatpush.msra.mxu0 0.0
    %1562 = vmatpush.msra.mxu0 0.0
    %1563 = vmatpush.msra.mxu0 0.0
    %1564 = vmatpush.msra.mxu0 0.0
    %1565 = vmatpush.msra.mxu0 0.0
    %1566 = vmatpush.msra.mxu0 0.0
    %1567 = vmatpush.msra.mxu0 0.0
    %1568 = vmatpush.msra.mxu0 0.0
    %1569 = vmatpush.msra.mxu0 0.0
    %1570 = vmatpush.msra.mxu0 0.0
    %1571 = vmatpush.msra.mxu0 0.0
    %1572 = vmatpush.msra.mxu0 %v1552
    %1573 = vmatmul.f32.gmra.mxu0 %v1555
    %v1574 = vpop.f32.mrf.mxu0
    %v1575 = vadd.f32 0.0, %v1574
    %1576 = vdwg.mxu0
    %1577 = vrot.lane.b32.xlu0 %v1077, 40
    %v1578 = vpop.permute.xlu0 %1577
    %v1581 = vsel %vm1087, %v1550, 0
    %1583 = vmatpush.msra.mxu0 0.0
    %1584 = vmatpush.msra.mxu0 0.0
    %1585 = vmatpush.msra.mxu0 0.0
    %1586 = vmatpush.msra.mxu0 0.0
    %1587 = vmatpush.msra.mxu0 0.0
    %1588 = vmatpush.msra.mxu0 0.0
    %1589 = vmatpush.msra.mxu0 0.0
    %1590 = vmatpush.msra.mxu0 0.0
    %1591 = vmatpush.msra.mxu0 0.0
    %1592 = vmatpush.msra.mxu0 0.0
    %1593 = vmatpush.msra.mxu0 0.0
    %1594 = vmatpush.msra.mxu0 0.0
    %1595 = vmatpush.msra.mxu0 0.0
    %1596 = vmatpush.msra.mxu0 0.0
    %1597 = vmatpush.msra.mxu0 0.0
    %1598 = vmatpush.msra.mxu0 %v1578
    %1599 = vmatmul.f32.gmra.mxu0 %v1581
    %v1600 = vpop.f32.mrf.mxu0
    %v1601 = vadd.f32 0.0, %v1600
    %1602 = vdwg.mxu0
    %1605 = vrot.lane.b32.xlu0 %v1315, 8
    %v1606 = vpop.permute.xlu0 %1605
    %1607 = vrot.lane.b32.xlu0 %v1341, 8
    %v1608 = vpop.permute.xlu0 %1607
    %1613 = vrot.lane.b32.xlu0 %v1445, 16
    %v1614 = vpop.permute.xlu0 %1613
    %1615 = vrot.lane.b32.xlu0 %v1471, 16
    %v1616 = vpop.permute.xlu0 %1615
    %1621 = vrot.lane.b32.xlu0 %v1575, 24
    %v1622 = vpop.permute.xlu0 %1621
    %1623 = vrot.lane.b32.xlu0 %v1601, 24
    %v1624 = vpop.permute.xlu0 %1623
    %v1627 = vsel %vm1087, %v1185, %v1606
    %v1628 = vsel %vm1087, %v1211, %v1608
    %vm1629 = vcmask 130048
    %v1630 = vsel %vm1629, %v1627, %v1614
    %v1631 = vsel %vm1629, %v1628, %v1616
    %vm1632 = vcmask 195584
    %v1633 = vsel %vm1632, %v1630, %v1622
    %v1634 = vsel %vm1632, %v1631, %v1624
    %v1636 = vperm.slane %v1083, 0
    %v1639 = vsel %vm1049, %v1633, 0
    %v1642 = vsel %vm1049, %v1634, 0
    %1644 = vmatpush.msra.mxu0 0.0
    %1645 = vmatpush.msra.mxu0 0.0
    %1646 = vmatpush.msra.mxu0 0.0
    %1647 = vmatpush.msra.mxu0 0.0
    %1648 = vmatpush.msra.mxu0 0.0
    %1649 = vmatpush.msra.mxu0 0.0
    %1650 = vmatpush.msra.mxu0 0.0
    %1651 = vmatpush.msra.mxu0 0.0
    %1652 = vmatpush.msra.mxu0 0.0
    %1653 = vmatpush.msra.mxu0 0.0
    %1654 = vmatpush.msra.mxu0 0.0
    %1655 = vmatpush.msra.mxu0 0.0
    %1656 = vmatpush.msra.mxu0 %v1082
    %1657 = vmatpush.msra.mxu0 %v1081
    %1658 = vmatpush.msra.mxu0 %v1080
    %1659 = vmatpush.msra.mxu0 %v1079
    %1660 = vmatmul.f32.gmra.mxu0 %v1639
    %v1661 = vpop.f32.mrf.mxu0
    %v1662 = vadd.f32 %v1636, %v1661
    %1663 = vmatmul.f32.gmra.mxu0 %v1642
    %v1664 = vpop.f32.mrf.mxu0
    %v1665 = vadd.f32 %v1636, %v1664
    %1666 = vdwg.mxu0
    %v1667 = vadd.f32 %v1036, %v1662
    %v1668 = vadd.f32 %v1039, %v1665
    %v1669 = vld [vmem:[%s13] sm:$0x1]
    %v1670 = vld [vmem:[%s15] sm:$0x1]
    %v1671 = vsel %vm1049, %v1667, 0.0
    %1672 = vadd.xlane.f32.xlu0 %v1671
    %v1673 = vpop.xlane.xlu0 %1672
    %v1674 = vsel %vm1049, %v1668, 0.0
    %1675 = vadd.xlane.f32.xlu0 %v1674
    %v1676 = vpop.xlane.xlu0 %1675
    %v1677 = vrcp.pop 32.0
    %v1678 = vmul.f32 32.0, %v1677
    %v1679 = vsub.f32 1.0, %v1678
    %v1680 = vmul.f32 %v1677, %v1679
    %v1681 = vadd.f32 %v1677, %v1680
    %vm1682 = vweird.f32 %v1677
    %v1683 = vsel %vm1682, %v1677, %v1681
    %v1684 = vmul.f32 %v1673, %v1683
    %v1685 = vmul.f32 %v1676, %v1683
    %v1686 = vsub.f32 %v1667, %v1684
    %v1687 = vsub.f32 %v1668, %v1685
    %v1688 = vmul.f32 %v1686, %v1686
    %v1689 = vmul.f32 %v1687, %v1687
    %v1690 = vsel %vm1049, %v1688, 0.0
    %1691 = vadd.xlane.f32.xlu0 %v1690
    %v1692 = vpop.xlane.xlu0 %1691
    %v1693 = vsel %vm1049, %v1689, 0.0
    %1694 = vadd.xlane.f32.xlu0 %v1693
    %v1695 = vpop.xlane.xlu0 %1694
    %v1696 = vmul.f32 %v1692, %v1683
    %v1697 = vmul.f32 %v1695, %v1683
    %v1698 = vadd.f32 %v1696, 1e-05
    %v1699 = vadd.f32 %v1697, 1e-05
    %v1700 = vrsqrt.pop %v1698
    %v1701 = vmul.f32 %v1700, %v1698
    %v1702 = vmul.f32 %v1701, %v1700
    %v1703 = vmul.f32 0.5, %v1702
    %v1704 = vsub.f32 1.5, %v1703
    %v1705 = vmul.f32 %v1700, %v1704
    %vm1706 = vweird.f32 %v1698
    %vm1707 = vweird.f32 %v1700
    %vm1708 = vmor %vm1706, %vm1707
    %v1709 = vsel %vm1708, %v1700, %v1705
    %v1710 = vrsqrt.pop %v1699
    %v1711 = vmul.f32 %v1710, %v1699
    %v1712 = vmul.f32 %v1711, %v1710
    %v1713 = vmul.f32 0.5, %v1712
    %v1714 = vsub.f32 1.5, %v1713
    %v1715 = vmul.f32 %v1710, %v1714
    %vm1716 = vweird.f32 %v1699
    %vm1717 = vweird.f32 %v1710
    %vm1718 = vmor %vm1716, %vm1717
    %v1719 = vsel %vm1718, %v1710, %v1715
    %v1720 = vmul.f32 %v1686, %v1709
    %v1721 = vmul.f32 %v1687, %v1719
    %v1723 = vperm.slane %v1669, 0
    %v1725 = vmul.f32 %v1720, %v1723
    %v1726 = vmul.f32 %v1721, %v1723
    %v1728 = vperm.slane %v1670, 0
    %v1730 = vadd.f32 %v1725, %v1728
    %v1731 = vadd.f32 %v1726, %v1728
    %v1732 = vld [vmem:[%s17] sm:$0xff]
    %v1733 = vld [vmem:[%s17 + $0x8] sm:$0xff]
    %v1734 = vld [vmem:[%s17 + $0x10] sm:$0xff]
    %v1735 = vld [vmem:[%s17 + $0x18] sm:$0xff]
    %v1736 = vld [vmem:[%s19] sm:$0x1]
    %v1738 = vperm.slane %v1736, 0
    %v1741 = vsel %vm1049, %v1730, 0
    %v1744 = vsel %vm1049, %v1731, 0
    %1746 = vmatpush.msra.mxu0 0.0
    %1747 = vmatpush.msra.mxu0 0.0
    %1748 = vmatpush.msra.mxu0 0.0
    %1749 = vmatpush.msra.mxu0 0.0
    %1750 = vmatpush.msra.mxu0 0.0
    %1751 = vmatpush.msra.mxu0 0.0
    %1752 = vmatpush.msra.mxu0 0.0
    %1753 = vmatpush.msra.mxu0 0.0
    %1754 = vmatpush.msra.mxu0 0.0
    %1755 = vmatpush.msra.mxu0 0.0
    %1756 = vmatpush.msra.mxu0 0.0
    %1757 = vmatpush.msra.mxu0 0.0
    %1758 = vmatpush.msra.mxu0 %v1735
    %1759 = vmatpush.msra.mxu0 %v1734
    %1760 = vmatpush.msra.mxu0 %v1733
    %1761 = vmatpush.msra.mxu0 %v1732
    %1762 = vmatmul.f32.gmra.mxu0 %v1741
    %v1763 = vpop.f32.mrf.mxu0
    %v1764 = vadd.f32 %v1738, %v1763
    %1765 = vmatmul.f32.gmra.mxu0 %v1744
    %v1766 = vpop.f32.mrf.mxu0
    %v1767 = vadd.f32 %v1738, %v1766
    %1768 = vdwg.mxu0
    %v1769 = vmax.f32 %v1764, 0.0
    %v1770 = vmax.f32 %v1767, 0.0
    %v1771 = vld [vmem:[%s21] sm:$0xff]
    %v1772 = vld [vmem:[%s21 + $0x8] sm:$0xff]
    %v1773 = vld [vmem:[%s21 + $0x10] sm:$0xff]
    %v1774 = vld [vmem:[%s21 + $0x18] sm:$0xff]
    %v1775 = vld [vmem:[%s21 + $0x20] sm:$0xff]
    %v1776 = vld [vmem:[%s21 + $0x28] sm:$0xff]
    %v1777 = vld [vmem:[%s21 + $0x30] sm:$0xff]
    %v1778 = vld [vmem:[%s21 + $0x38] sm:$0xff]
    %v1779 = vld [vmem:[%s23] sm:$0x1]
    %v1781 = vperm.slane %v1779, 0
    %vm1783 = vcmask 523264
    %v1785 = vsel %vm1783, %v1769, 0
    %v1788 = vsel %vm1783, %v1770, 0
    %1790 = vmatpush.msra.mxu0 0.0
    %1791 = vmatpush.msra.mxu0 0.0
    %1792 = vmatpush.msra.mxu0 0.0
    %1793 = vmatpush.msra.mxu0 0.0
    %1794 = vmatpush.msra.mxu0 0.0
    %1795 = vmatpush.msra.mxu0 0.0
    %1796 = vmatpush.msra.mxu0 0.0
    %1797 = vmatpush.msra.mxu0 0.0
    %1798 = vmatpush.msra.mxu0 %v1778
    %1799 = vmatpush.msra.mxu0 %v1777
    %1800 = vmatpush.msra.mxu0 %v1776
    %1801 = vmatpush.msra.mxu0 %v1775
    %1802 = vmatpush.msra.mxu0 %v1774
    %1803 = vmatpush.msra.mxu0 %v1773
    %1804 = vmatpush.msra.mxu0 %v1772
    %1805 = vmatpush.msra.mxu0 %v1771
    %1806 = vmatmul.f32.gmra.mxu0 %v1785
    %v1807 = vpop.f32.mrf.mxu0
    %v1808 = vadd.f32 %v1781, %v1807
    %1809 = vmatmul.f32.gmra.mxu0 %v1788
    %v1810 = vpop.f32.mrf.mxu0
    %v1811 = vadd.f32 %v1781, %v1810
    %1812 = vdwg.mxu0
    %v1813 = vadd.f32 %v1730, %v1808
    %v1814 = vadd.f32 %v1731, %v1811
    %v1815 = vld [vmem:[%s25] sm:$0x1]
    %v1816 = vld [vmem:[%s27] sm:$0x1]
    %v1817 = vsel %vm1049, %v1813, 0.0
    %1818 = vadd.xlane.f32.xlu0 %v1817
    %v1819 = vpop.xlane.xlu0 %1818
    %v1820 = vsel %vm1049, %v1814, 0.0
    %1821 = vadd.xlane.f32.xlu0 %v1820
    %v1822 = vpop.xlane.xlu0 %1821
    %v1823 = vmul.f32 %v1819, %v1683
    %v1824 = vmul.f32 %v1822, %v1683
    %v1825 = vsub.f32 %v1813, %v1823
    %v1826 = vsub.f32 %v1814, %v1824
    %v1827 = vmul.f32 %v1825, %v1825
    %v1828 = vmul.f32 %v1826, %v1826
    %v1829 = vsel %vm1049, %v1827, 0.0
    %1830 = vadd.xlane.f32.xlu0 %v1829
    %v1831 = vpop.xlane.xlu0 %1830
    %v1832 = vsel %vm1049, %v1828, 0.0
    %1833 = vadd.xlane.f32.xlu0 %v1832
    %v1834 = vpop.xlane.xlu0 %1833
    %v1835 = vmul.f32 %v1831, %v1683
    %v1836 = vmul.f32 %v1834, %v1683
    %v1837 = vadd.f32 %v1835, 1e-05
    %v1838 = vadd.f32 %v1836, 1e-05
    %v1839 = vrsqrt.pop %v1837
    %v1840 = vmul.f32 %v1839, %v1837
    %v1841 = vmul.f32 %v1840, %v1839
    %v1842 = vmul.f32 0.5, %v1841
    %v1843 = vsub.f32 1.5, %v1842
    %v1844 = vmul.f32 %v1839, %v1843
    %vm1845 = vweird.f32 %v1837
    %vm1846 = vweird.f32 %v1839
    %vm1847 = vmor %vm1845, %vm1846
    %v1848 = vsel %vm1847, %v1839, %v1844
    %v1849 = vrsqrt.pop %v1838
    %v1850 = vmul.f32 %v1849, %v1838
    %v1851 = vmul.f32 %v1850, %v1849
    %v1852 = vmul.f32 0.5, %v1851
    %v1853 = vsub.f32 1.5, %v1852
    %v1854 = vmul.f32 %v1849, %v1853
    %vm1855 = vweird.f32 %v1838
    %vm1856 = vweird.f32 %v1849
    %vm1857 = vmor %vm1855, %vm1856
    %v1858 = vsel %vm1857, %v1849, %v1854
    %v1859 = vmul.f32 %v1825, %v1848
    %v1860 = vmul.f32 %v1826, %v1858
    %v1862 = vperm.slane %v1815, 0
    %v1864 = vmul.f32 %v1859, %v1862
    %v1865 = vmul.f32 %v1860, %v1862
    %v1867 = vperm.slane %v1816, 0
    %v1869 = vadd.f32 %v1864, %v1867
    %v1870 = vadd.f32 %v1865, %v1867
    %v1871 = vld [vmem:[%s29] sm:$0xff]
    %v1872 = vld [vmem:[%s29 + $0x8] sm:$0xff]
    %v1873 = vld [vmem:[%s29 + $0x10] sm:$0xff]
    %v1874 = vld [vmem:[%s29 + $0x18] sm:$0xff]
    %v1875 = vld [vmem:[%s31] sm:$0x1]
    %v1877 = vperm.slane %v1875, 0
    %v1880 = vsel %vm1049, %v1869, 0
    %v1883 = vsel %vm1049, %v1870, 0
    %1885 = vmatpush.msra.mxu0 0.0
    %1886 = vmatpush.msra.mxu0 0.0
    %1887 = vmatpush.msra.mxu0 0.0
    %1888 = vmatpush.msra.mxu0 0.0
    %1889 = vmatpush.msra.mxu0 0.0
    %1890 = vmatpush.msra.mxu0 0.0
    %1891 = vmatpush.msra.mxu0 0.0
    %1892 = vmatpush.msra.mxu0 0.0
    %1893 = vmatpush.msra.mxu0 0.0
    %1894 = vmatpush.msra.mxu0 0.0
    %1895 = vmatpush.msra.mxu0 0.0
    %1896 = vmatpush.msra.mxu0 0.0
    %1897 = vmatpush.msra.mxu0 %v1874
    %1898 = vmatpush.msra.mxu0 %v1873
    %1899 = vmatpush.msra.mxu0 %v1872
    %1900 = vmatpush.msra.mxu0 %v1871
    %1901 = vmatmul.f32.gmra.mxu0 %v1880
    %v1902 = vpop.f32.mrf.mxu0
    %v1903 = vadd.f32 %v1877, %v1902
    %1904 = vmatmul.f32.gmra.mxu0 %v1883
    %v1905 = vpop.f32.mrf.mxu0
    %v1906 = vadd.f32 %v1877, %v1905
    %1907 = vdwg.mxu0
    %v1908 = vld [vmem:[%s33] sm:$0xff]
    %v1909 = vld [vmem:[%s33 + $0x8] sm:$0xff]
    %v1910 = vld [vmem:[%s33 + $0x10] sm:$0xff]
    %v1911 = vld [vmem:[%s33 + $0x18] sm:$0xff]
    %v1912 = vld [vmem:[%s35] sm:$0x1]
    %1914 = vrot.lane.b32.xlu0 %v1903, 96
    %v1915 = vpop.permute.xlu0 %1914
    %v1916 = vsel %vm1087, %v1903, 0
    %v1918 = vsel %vm1087, %v1915, 0
    %1920 = vmatpush.xpose.msra.mxu0 0.0
    %1921 = vmatpush.xpose.msra.mxu0 0.0
    %1922 = vmatpush.xpose.msra.mxu0 0.0
    %1923 = vmatpush.xpose.msra.mxu0 0.0
    %1924 = vmatpush.xpose.msra.mxu0 0.0
    %1925 = vmatpush.xpose.msra.mxu0 0.0
    %1926 = vmatpush.xpose.msra.mxu0 0.0
    %1927 = vmatpush.xpose.msra.mxu0 0.0
    %1928 = vmatpush.xpose.msra.mxu0 0.0
    %1929 = vmatpush.xpose.msra.mxu0 0.0
    %1930 = vmatpush.xpose.msra.mxu0 0.0
    %1931 = vmatpush.xpose.msra.mxu0 0.0
    %1932 = vmatpush.xpose.msra.mxu0 0.0
    %1933 = vmatpush.xpose.msra.mxu0 0.0
    %1934 = vmatpush.xpose.msra.mxu0 0.0
    %1935 = vmatpush.xpose.msra.mxu0 %v1918
    %1936 = vmatmul.f32.gmra.mxu0 %v1916
    %v1937 = vpop.f32.mrf.mxu0
    %v1938 = vadd.f32 0.0, %v1937
    %1939 = vdwg.mxu0
    %1941 = vrot.lane.b32.xlu0 %v1906, 96
    %v1942 = vpop.permute.xlu0 %1941
    %v1943 = vsel %vm1087, %v1906, 0
    %v1945 = vsel %vm1087, %v1942, 0
    %1947 = vmatpush.xpose.msra.mxu0 0.0
    %1948 = vmatpush.xpose.msra.mxu0 0.0
    %1949 = vmatpush.xpose.msra.mxu0 0.0
    %1950 = vmatpush.xpose.msra.mxu0 0.0
    %1951 = vmatpush.xpose.msra.mxu0 0.0
    %1952 = vmatpush.xpose.msra.mxu0 0.0
    %1953 = vmatpush.xpose.msra.mxu0 0.0
    %1954 = vmatpush.xpose.msra.mxu0 0.0
    %1955 = vmatpush.xpose.msra.mxu0 0.0
    %1956 = vmatpush.xpose.msra.mxu0 0.0
    %1957 = vmatpush.xpose.msra.mxu0 0.0
    %1958 = vmatpush.xpose.msra.mxu0 0.0
    %1959 = vmatpush.xpose.msra.mxu0 0.0
    %1960 = vmatpush.xpose.msra.mxu0 0.0
    %1961 = vmatpush.xpose.msra.mxu0 0.0
    %1962 = vmatpush.xpose.msra.mxu0 %v1945
    %1963 = vmatmul.f32.gmra.mxu0 %v1943
    %v1964 = vpop.f32.mrf.mxu0
    %v1965 = vadd.f32 0.0, %v1964
    %1966 = vdwg.mxu0
    %v1967 = vsel %vm1087, %v1938, -inf
    %1968 = vmax.xlane.f32.xlu0 %v1967
    %v1969 = vpop.xlane.xlu0 %1968
    %v1970 = vsel %vm1087, %v1965, -inf
    %1971 = vmax.xlane.f32.xlu0 %v1970
    %v1972 = vpop.xlane.xlu0 %1971
    %v1973 = vsub.f32 %v1938, %v1969
    %v1974 = vsub.f32 %v1965, %v1972
    %v1975 = vmul.f32 %v1973, 1.442695
    %v1976 = vpow.pop %v1975
    %v1977 = vmul.f32 %v1974, 1.442695
    %v1978 = vpow.pop %v1977
    %v1979 = vsel %vm1087, %v1976, 0.0
    %1980 = vadd.xlane.f32.xlu0 %v1979
    %v1981 = vpop.xlane.xlu0 %1980
    %v1982 = vsel %vm1087, %v1978, 0.0
    %1983 = vadd.xlane.f32.xlu0 %v1982
    %v1984 = vpop.xlane.xlu0 %1983
    %v1985 = vrcp.pop %v1981
    %v1986 = vrcp.pop %v1984
    %v1987 = vmul.f32 %v1976, %v1985
    %v1988 = vmul.f32 %v1978, %v1986
    %1989 = vrot.lane.b32.xlu0 %v1903, 64
    %v1990 = vpop.permute.xlu0 %1989
    %v1993 = vsel %vm1087, %v1987, 0
    %1995 = vmatpush.msra.mxu0 0.0
    %1996 = vmatpush.msra.mxu0 0.0
    %1997 = vmatpush.msra.mxu0 0.0
    %1998 = vmatpush.msra.mxu0 0.0
    %1999 = vmatpush.msra.mxu0 0.0
    %2000 = vmatpush.msra.mxu0 0.0
    %2001 = vmatpush.msra.mxu0 0.0
    %2002 = vmatpush.msra.mxu0 0.0
    %2003 = vmatpush.msra.mxu0 0.0
    %2004 = vmatpush.msra.mxu0 0.0
    %2005 = vmatpush.msra.mxu0 0.0
    %2006 = vmatpush.msra.mxu0 0.0
    %2007 = vmatpush.msra.mxu0 0.0
    %2008 = vmatpush.msra.mxu0 0.0
    %2009 = vmatpush.msra.mxu0 0.0
    %2010 = vmatpush.msra.mxu0 %v1990
    %2011 = vmatmul.f32.gmra.mxu0 %v1993
    %v2012 = vpop.f32.mrf.mxu0
    %v2013 = vadd.f32 0.0, %v2012
    %2014 = vdwg.mxu0
    %2015 = vrot.lane.b32.xlu0 %v1906, 64
    %v2016 = vpop.permute.xlu0 %2015
    %v2019 = vsel %vm1087, %v1988, 0
    %2021 = vmatpush.msra.mxu0 0.0
    %2022 = vmatpush.msra.mxu0 0.0
    %2023 = vmatpush.msra.mxu0 0.0
    %2024 = vmatpush.msra.mxu0 0.0
    %2025 = vmatpush.msra.mxu0 0.0
    %2026 = vmatpush.msra.mxu0 0.0
    %2027 = vmatpush.msra.mxu0 0.0
    %2028 = vmatpush.msra.mxu0 0.0
    %2029 = vmatpush.msra.mxu0 0.0
    %2030 = vmatpush.msra.mxu0 0.0
    %2031 = vmatpush.msra.mxu0 0.0
    %2032 = vmatpush.msra.mxu0 0.0
    %2033 = vmatpush.msra.mxu0 0.0
    %2034 = vmatpush.msra.mxu0 0.0
    %2035 = vmatpush.msra.mxu0 0.0
    %2036 = vmatpush.msra.mxu0 %v2016
    %2037 = vmatmul.f32.gmra.mxu0 %v2019
    %v2038 = vpop.f32.mrf.mxu0
    %v2039 = vadd.f32 0.0, %v2038
    %2040 = vdwg.mxu0
    %2041 = vrot.lane.b32.xlu0 %v1903, 120
    %v2042 = vpop.permute.xlu0 %2041
    %2043 = vrot.lane.b32.xlu0 %v1903, 88
    %v2044 = vpop.permute.xlu0 %2043
    %v2045 = vsel %vm1087, %v2042, 0
    %v2047 = vsel %vm1087, %v2044, 0
    %2049 = vmatpush.xpose.msra.mxu0 0.0
    %2050 = vmatpush.xpose.msra.mxu0 0.0
    %2051 = vmatpush.xpose.msra.mxu0 0.0
    %2052 = vmatpush.xpose.msra.mxu0 0.0
    %2053 = vmatpush.xpose.msra.mxu0 0.0
    %2054 = vmatpush.xpose.msra.mxu0 0.0
    %2055 = vmatpush.xpose.msra.mxu0 0.0
    %2056 = vmatpush.xpose.msra.mxu0 0.0
    %2057 = vmatpush.xpose.msra.mxu0 0.0
    %2058 = vmatpush.xpose.msra.mxu0 0.0
    %2059 = vmatpush.xpose.msra.mxu0 0.0
    %2060 = vmatpush.xpose.msra.mxu0 0.0
    %2061 = vmatpush.xpose.msra.mxu0 0.0
    %2062 = vmatpush.xpose.msra.mxu0 0.0
    %2063 = vmatpush.xpose.msra.mxu0 0.0
    %2064 = vmatpush.xpose.msra.mxu0 %v2047
    %2065 = vmatmul.f32.gmra.mxu0 %v2045
    %v2066 = vpop.f32.mrf.mxu0
    %v2067 = vadd.f32 0.0, %v2066
    %2068 = vdwg.mxu0
    %2069 = vrot.lane.b32.xlu0 %v1906, 120
    %v2070 = vpop.permute.xlu0 %2069
    %2071 = vrot.lane.b32.xlu0 %v1906, 88
    %v2072 = vpop.permute.xlu0 %2071
    %v2073 = vsel %vm1087, %v2070, 0
    %v2075 = vsel %vm1087, %v2072, 0
    %2077 = vmatpush.xpose.msra.mxu0 0.0
    %2078 = vmatpush.xpose.msra.mxu0 0.0
    %2079 = vmatpush.xpose.msra.mxu0 0.0
    %2080 = vmatpush.xpose.msra.mxu0 0.0
    %2081 = vmatpush.xpose.msra.mxu0 0.0
    %2082 = vmatpush.xpose.msra.mxu0 0.0
    %2083 = vmatpush.xpose.msra.mxu0 0.0
    %2084 = vmatpush.xpose.msra.mxu0 0.0
    %2085 = vmatpush.xpose.msra.mxu0 0.0
    %2086 = vmatpush.xpose.msra.mxu0 0.0
    %2087 = vmatpush.xpose.msra.mxu0 0.0
    %2088 = vmatpush.xpose.msra.mxu0 0.0
    %2089 = vmatpush.xpose.msra.mxu0 0.0
    %2090 = vmatpush.xpose.msra.mxu0 0.0
    %2091 = vmatpush.xpose.msra.mxu0 0.0
    %2092 = vmatpush.xpose.msra.mxu0 %v2075
    %2093 = vmatmul.f32.gmra.mxu0 %v2073
    %v2094 = vpop.f32.mrf.mxu0
    %v2095 = vadd.f32 0.0, %v2094
    %2096 = vdwg.mxu0
    %v2097 = vsel %vm1087, %v2067, -inf
    %2098 = vmax.xlane.f32.xlu0 %v2097
    %v2099 = vpop.xlane.xlu0 %2098
    %v2100 = vsel %vm1087, %v2095, -inf
    %2101 = vmax.xlane.f32.xlu0 %v2100
    %v2102 = vpop.xlane.xlu0 %2101
    %v2103 = vsub.f32 %v2067, %v2099
    %v2104 = vsub.f32 %v2095, %v2102
    %v2105 = vmul.f32 %v2103, 1.442695
    %v2106 = vpow.pop %v2105
    %v2107 = vmul.f32 %v2104, 1.442695
    %v2108 = vpow.pop %v2107
    %v2109 = vsel %vm1087, %v2106, 0.0
    %2110 = vadd.xlane.f32.xlu0 %v2109
    %v2111 = vpop.xlane.xlu0 %2110
    %v2112 = vsel %vm1087, %v2108, 0.0
    %2113 = vadd.xlane.f32.xlu0 %v2112
    %v2114 = vpop.xlane.xlu0 %2113
    %v2115 = vrcp.pop %v2111
    %v2116 = vrcp.pop %v2114
    %v2117 = vmul.f32 %v2106, %v2115
    %v2118 = vmul.f32 %v2108, %v2116
    %2119 = vrot.lane.b32.xlu0 %v1903, 56
    %v2120 = vpop.permute.xlu0 %2119
    %v2123 = vsel %vm1087, %v2117, 0
    %2125 = vmatpush.msra.mxu0 0.0
    %2126 = vmatpush.msra.mxu0 0.0
    %2127 = vmatpush.msra.mxu0 0.0
    %2128 = vmatpush.msra.mxu0 0.0
    %2129 = vmatpush.msra.mxu0 0.0
    %2130 = vmatpush.msra.mxu0 0.0
    %2131 = vmatpush.msra.mxu0 0.0
    %2132 = vmatpush.msra.mxu0 0.0
    %2133 = vmatpush.msra.mxu0 0.0
    %2134 = vmatpush.msra.mxu0 0.0
    %2135 = vmatpush.msra.mxu0 0.0
    %2136 = vmatpush.msra.mxu0 0.0
    %2137 = vmatpush.msra.mxu0 0.0
    %2138 = vmatpush.msra.mxu0 0.0
    %2139 = vmatpush.msra.mxu0 0.0
    %2140 = vmatpush.msra.mxu0 %v2120
    %2141 = vmatmul.f32.gmra.mxu0 %v2123
    %v2142 = vpop.f32.mrf.mxu0
    %v2143 = vadd.f32 0.0, %v2142
    %2144 = vdwg.mxu0
    %2145 = vrot.lane.b32.xlu0 %v1906, 56
    %v2146 = vpop.permute.xlu0 %2145
    %v2149 = vsel %vm1087, %v2118, 0
    %2151 = vmatpush.msra.mxu0 0.0
    %2152 = vmatpush.msra.mxu0 0.0
    %2153 = vmatpush.msra.mxu0 0.0
    %2154 = vmatpush.msra.mxu0 0.0
    %2155 = vmatpush.msra.mxu0 0.0
    %2156 = vmatpush.msra.mxu0 0.0
    %2157 = vmatpush.msra.mxu0 0.0
    %2158 = vmatpush.msra.mxu0 0.0
    %2159 = vmatpush.msra.mxu0 0.0
    %2160 = vmatpush.msra.mxu0 0.0
    %2161 = vmatpush.msra.mxu0 0.0
    %2162 = vmatpush.msra.mxu0 0.0
    %2163 = vmatpush.msra.mxu0 0.0
    %2164 = vmatpush.msra.mxu0 0.0
    %2165 = vmatpush.msra.mxu0 0.0
    %2166 = vmatpush.msra.mxu0 %v2146
    %2167 = vmatmul.f32.gmra.mxu0 %v2149
    %v2168 = vpop.f32.mrf.mxu0
    %v2169 = vadd.f32 0.0, %v2168
    %2170 = vdwg.mxu0
    %2171 = vrot.lane.b32.xlu0 %v1903, 112
    %v2172 = vpop.permute.xlu0 %2171
    %2173 = vrot.lane.b32.xlu0 %v1903, 80
    %v2174 = vpop.permute.xlu0 %2173
    %v2175 = vsel %vm1087, %v2172, 0
    %v2177 = vsel %vm1087, %v2174, 0
    %2179 = vmatpush.xpose.msra.mxu0 0.0
    %2180 = vmatpush.xpose.msra.mxu0 0.0
    %2181 = vmatpush.xpose.msra.mxu0 0.0
    %2182 = vmatpush.xpose.msra.mxu0 0.0
    %2183 = vmatpush.xpose.msra.mxu0 0.0
    %2184 = vmatpush.xpose.msra.mxu0 0.0
    %2185 = vmatpush.xpose.msra.mxu0 0.0
    %2186 = vmatpush.xpose.msra.mxu0 0.0
    %2187 = vmatpush.xpose.msra.mxu0 0.0
    %2188 = vmatpush.xpose.msra.mxu0 0.0
    %2189 = vmatpush.xpose.msra.mxu0 0.0
    %2190 = vmatpush.xpose.msra.mxu0 0.0
    %2191 = vmatpush.xpose.msra.mxu0 0.0
    %2192 = vmatpush.xpose.msra.mxu0 0.0
    %2193 = vmatpush.xpose.msra.mxu0 0.0
    %2194 = vmatpush.xpose.msra.mxu0 %v2177
    %2195 = vmatmul.f32.gmra.mxu0 %v2175
    %v2196 = vpop.f32.mrf.mxu0
    %v2197 = vadd.f32 0.0, %v2196
    %2198 = vdwg.mxu0
    %2199 = vrot.lane.b32.xlu0 %v1906, 112
    %v2200 = vpop.permute.xlu0 %2199
    %2201 = vrot.lane.b32.xlu0 %v1906, 80
    %v2202 = vpop.permute.xlu0 %2201
    %v2203 = vsel %vm1087, %v2200, 0
    %v2205 = vsel %vm1087, %v2202, 0
    %2207 = vmatpush.xpose.msra.mxu0 0.0
    %2208 = vmatpush.xpose.msra.mxu0 0.0
    %2209 = vmatpush.xpose.msra.mxu0 0.0
    %2210 = vmatpush.xpose.msra.mxu0 0.0
    %2211 = vmatpush.xpose.msra.mxu0 0.0
    %2212 = vmatpush.xpose.msra.mxu0 0.0
    %2213 = vmatpush.xpose.msra.mxu0 0.0
    %2214 = vmatpush.xpose.msra.mxu0 0.0
    %2215 = vmatpush.xpose.msra.mxu0 0.0
    %2216 = vmatpush.xpose.msra.mxu0 0.0
    %2217 = vmatpush.xpose.msra.mxu0 0.0
    %2218 = vmatpush.xpose.msra.mxu0 0.0
    %2219 = vmatpush.xpose.msra.mxu0 0.0
    %2220 = vmatpush.xpose.msra.mxu0 0.0
    %2221 = vmatpush.xpose.msra.mxu0 0.0
    %2222 = vmatpush.xpose.msra.mxu0 %v2205
    %2223 = vmatmul.f32.gmra.mxu0 %v2203
    %v2224 = vpop.f32.mrf.mxu0
    %v2225 = vadd.f32 0.0, %v2224
    %2226 = vdwg.mxu0
    %v2227 = vsel %vm1087, %v2197, -inf
    %2228 = vmax.xlane.f32.xlu0 %v2227
    %v2229 = vpop.xlane.xlu0 %2228
    %v2230 = vsel %vm1087, %v2225, -inf
    %2231 = vmax.xlane.f32.xlu0 %v2230
    %v2232 = vpop.xlane.xlu0 %2231
    %v2233 = vsub.f32 %v2197, %v2229
    %v2234 = vsub.f32 %v2225, %v2232
    %v2235 = vmul.f32 %v2233, 1.442695
    %v2236 = vpow.pop %v2235
    %v2237 = vmul.f32 %v2234, 1.442695
    %v2238 = vpow.pop %v2237
    %v2239 = vsel %vm1087, %v2236, 0.0
    %2240 = vadd.xlane.f32.xlu0 %v2239
    %v2241 = vpop.xlane.xlu0 %2240
    %v2242 = vsel %vm1087, %v2238, 0.0
    %2243 = vadd.xlane.f32.xlu0 %v2242
    %v2244 = vpop.xlane.xlu0 %2243
    %v2245 = vrcp.pop %v2241
    %v2246 = vrcp.pop %v2244
    %v2247 = vmul.f32 %v2236, %v2245
    %v2248 = vmul.f32 %v2238, %v2246
    %2249 = vrot.lane.b32.xlu0 %v1903, 48
    %v2250 = vpop.permute.xlu0 %2249
    %v2253 = vsel %vm1087, %v2247, 0
    %2255 = vmatpush.msra.mxu0 0.0
    %2256 = vmatpush.msra.mxu0 0.0
    %2257 = vmatpush.msra.mxu0 0.0
    %2258 = vmatpush.msra.mxu0 0.0
    %2259 = vmatpush.msra.mxu0 0.0
    %2260 = vmatpush.msra.mxu0 0.0
    %2261 = vmatpush.msra.mxu0 0.0
    %2262 = vmatpush.msra.mxu0 0.0
    %2263 = vmatpush.msra.mxu0 0.0
    %2264 = vmatpush.msra.mxu0 0.0
    %2265 = vmatpush.msra.mxu0 0.0
    %2266 = vmatpush.msra.mxu0 0.0
    %2267 = vmatpush.msra.mxu0 0.0
    %2268 = vmatpush.msra.mxu0 0.0
    %2269 = vmatpush.msra.mxu0 0.0
    %2270 = vmatpush.msra.mxu0 %v2250
    %2271 = vmatmul.f32.gmra.mxu0 %v2253
    %v2272 = vpop.f32.mrf.mxu0
    %v2273 = vadd.f32 0.0, %v2272
    %2274 = vdwg.mxu0
    %2275 = vrot.lane.b32.xlu0 %v1906, 48
    %v2276 = vpop.permute.xlu0 %2275
    %v2279 = vsel %vm1087, %v2248, 0
    %2281 = vmatpush.msra.mxu0 0.0
    %2282 = vmatpush.msra.mxu0 0.0
    %2283 = vmatpush.msra.mxu0 0.0
    %2284 = vmatpush.msra.mxu0 0.0
    %2285 = vmatpush.msra.mxu0 0.0
    %2286 = vmatpush.msra.mxu0 0.0
    %2287 = vmatpush.msra.mxu0 0.0
    %2288 = vmatpush.msra.mxu0 0.0
    %2289 = vmatpush.msra.mxu0 0.0
    %2290 = vmatpush.msra.mxu0 0.0
    %2291 = vmatpush.msra.mxu0 0.0
    %2292 = vmatpush.msra.mxu0 0.0
    %2293 = vmatpush.msra.mxu0 0.0
    %2294 = vmatpush.msra.mxu0 0.0
    %2295 = vmatpush.msra.mxu0 0.0
    %2296 = vmatpush.msra.mxu0 %v2276
    %2297 = vmatmul.f32.gmra.mxu0 %v2279
    %v2298 = vpop.f32.mrf.mxu0
    %v2299 = vadd.f32 0.0, %v2298
    %2300 = vdwg.mxu0
    %2301 = vrot.lane.b32.xlu0 %v1903, 104
    %v2302 = vpop.permute.xlu0 %2301
    %2303 = vrot.lane.b32.xlu0 %v1903, 72
    %v2304 = vpop.permute.xlu0 %2303
    %v2305 = vsel %vm1087, %v2302, 0
    %v2307 = vsel %vm1087, %v2304, 0
    %2309 = vmatpush.xpose.msra.mxu0 0.0
    %2310 = vmatpush.xpose.msra.mxu0 0.0
    %2311 = vmatpush.xpose.msra.mxu0 0.0
    %2312 = vmatpush.xpose.msra.mxu0 0.0
    %2313 = vmatpush.xpose.msra.mxu0 0.0
    %2314 = vmatpush.xpose.msra.mxu0 0.0
    %2315 = vmatpush.xpose.msra.mxu0 0.0
    %2316 = vmatpush.xpose.msra.mxu0 0.0
    %2317 = vmatpush.xpose.msra.mxu0 0.0
    %2318 = vmatpush.xpose.msra.mxu0 0.0
    %2319 = vmatpush.xpose.msra.mxu0 0.0
    %2320 = vmatpush.xpose.msra.mxu0 0.0
    %2321 = vmatpush.xpose.msra.mxu0 0.0
    %2322 = vmatpush.xpose.msra.mxu0 0.0
    %2323 = vmatpush.xpose.msra.mxu0 0.0
    %2324 = vmatpush.xpose.msra.mxu0 %v2307
    %2325 = vmatmul.f32.gmra.mxu0 %v2305
    %v2326 = vpop.f32.mrf.mxu0
    %v2327 = vadd.f32 0.0, %v2326
    %2328 = vdwg.mxu0
    %2329 = vrot.lane.b32.xlu0 %v1906, 104
    %v2330 = vpop.permute.xlu0 %2329
    %2331 = vrot.lane.b32.xlu0 %v1906, 72
    %v2332 = vpop.permute.xlu0 %2331
    %v2333 = vsel %vm1087, %v2330, 0
    %v2335 = vsel %vm1087, %v2332, 0
    %2337 = vmatpush.xpose.msra.mxu0 0.0
    %2338 = vmatpush.xpose.msra.mxu0 0.0
    %2339 = vmatpush.xpose.msra.mxu0 0.0
    %2340 = vmatpush.xpose.msra.mxu0 0.0
    %2341 = vmatpush.xpose.msra.mxu0 0.0
    %2342 = vmatpush.xpose.msra.mxu0 0.0
    %2343 = vmatpush.xpose.msra.mxu0 0.0
    %2344 = vmatpush.xpose.msra.mxu0 0.0
    %2345 = vmatpush.xpose.msra.mxu0 0.0
    %2346 = vmatpush.xpose.msra.mxu0 0.0
    %2347 = vmatpush.xpose.msra.mxu0 0.0
    %2348 = vmatpush.xpose.msra.mxu0 0.0
    %2349 = vmatpush.xpose.msra.mxu0 0.0
    %2350 = vmatpush.xpose.msra.mxu0 0.0
    %2351 = vmatpush.xpose.msra.mxu0 0.0
    %2352 = vmatpush.xpose.msra.mxu0 %v2335
    %2353 = vmatmul.f32.gmra.mxu0 %v2333
    %v2354 = vpop.f32.mrf.mxu0
    %v2355 = vadd.f32 0.0, %v2354
    %2356 = vdwg.mxu0
    %v2357 = vsel %vm1087, %v2327, -inf
    %2358 = vmax.xlane.f32.xlu0 %v2357
    %v2359 = vpop.xlane.xlu0 %2358
    %v2360 = vsel %vm1087, %v2355, -inf
    %2361 = vmax.xlane.f32.xlu0 %v2360
    %v2362 = vpop.xlane.xlu0 %2361
    %v2363 = vsub.f32 %v2327, %v2359
    %v2364 = vsub.f32 %v2355, %v2362
    %v2365 = vmul.f32 %v2363, 1.442695
    %v2366 = vpow.pop %v2365
    %v2367 = vmul.f32 %v2364, 1.442695
    %v2368 = vpow.pop %v2367
    %v2369 = vsel %vm1087, %v2366, 0.0
    %2370 = vadd.xlane.f32.xlu0 %v2369
    %v2371 = vpop.xlane.xlu0 %2370
    %v2372 = vsel %vm1087, %v2368, 0.0
    %2373 = vadd.xlane.f32.xlu0 %v2372
    %v2374 = vpop.xlane.xlu0 %2373
    %v2375 = vrcp.pop %v2371
    %v2376 = vrcp.pop %v2374
    %v2377 = vmul.f32 %v2366, %v2375
    %v2378 = vmul.f32 %v2368, %v2376
    %2379 = vrot.lane.b32.xlu0 %v1903, 40
    %v2380 = vpop.permute.xlu0 %2379
    %v2383 = vsel %vm1087, %v2377, 0
    %2385 = vmatpush.msra.mxu0 0.0
    %2386 = vmatpush.msra.mxu0 0.0
    %2387 = vmatpush.msra.mxu0 0.0
    %2388 = vmatpush.msra.mxu0 0.0
    %2389 = vmatpush.msra.mxu0 0.0
    %2390 = vmatpush.msra.mxu0 0.0
    %2391 = vmatpush.msra.mxu0 0.0
    %2392 = vmatpush.msra.mxu0 0.0
    %2393 = vmatpush.msra.mxu0 0.0
    %2394 = vmatpush.msra.mxu0 0.0
    %2395 = vmatpush.msra.mxu0 0.0
    %2396 = vmatpush.msra.mxu0 0.0
    %2397 = vmatpush.msra.mxu0 0.0
    %2398 = vmatpush.msra.mxu0 0.0
    %2399 = vmatpush.msra.mxu0 0.0
    %2400 = vmatpush.msra.mxu0 %v2380
    %2401 = vmatmul.f32.gmra.mxu0 %v2383
    %v2402 = vpop.f32.mrf.mxu0
    %v2403 = vadd.f32 0.0, %v2402
    %2404 = vdwg.mxu0
    %2405 = vrot.lane.b32.xlu0 %v1906, 40
    %v2406 = vpop.permute.xlu0 %2405
    %v2409 = vsel %vm1087, %v2378, 0
    %2411 = vmatpush.msra.mxu0 0.0
    %2412 = vmatpush.msra.mxu0 0.0
    %2413 = vmatpush.msra.mxu0 0.0
    %2414 = vmatpush.msra.mxu0 0.0
    %2415 = vmatpush.msra.mxu0 0.0
    %2416 = vmatpush.msra.mxu0 0.0
    %2417 = vmatpush.msra.mxu0 0.0
    %2418 = vmatpush.msra.mxu0 0.0
    %2419 = vmatpush.msra.mxu0 0.0
    %2420 = vmatpush.msra.mxu0 0.0
    %2421 = vmatpush.msra.mxu0 0.0
    %2422 = vmatpush.msra.mxu0 0.0
    %2423 = vmatpush.msra.mxu0 0.0
    %2424 = vmatpush.msra.mxu0 0.0
    %2425 = vmatpush.msra.mxu0 0.0
    %2426 = vmatpush.msra.mxu0 %v2406
    %2427 = vmatmul.f32.gmra.mxu0 %v2409
    %v2428 = vpop.f32.mrf.mxu0
    %v2429 = vadd.f32 0.0, %v2428
    %2430 = vdwg.mxu0
    %2433 = vrot.lane.b32.xlu0 %v2143, 8
    %v2434 = vpop.permute.xlu0 %2433
    %2435 = vrot.lane.b32.xlu0 %v2169, 8
    %v2436 = vpop.permute.xlu0 %2435
    %2441 = vrot.lane.b32.xlu0 %v2273, 16
    %v2442 = vpop.permute.xlu0 %2441
    %2443 = vrot.lane.b32.xlu0 %v2299, 16
    %v2444 = vpop.permute.xlu0 %2443
    %2449 = vrot.lane.b32.xlu0 %v2403, 24
    %v2450 = vpop.permute.xlu0 %2449
    %2451 = vrot.lane.b32.xlu0 %v2429, 24
    %v2452 = vpop.permute.xlu0 %2451
    %v2455 = vsel %vm1087, %v2013, %v2434
    %v2456 = vsel %vm1087, %v2039, %v2436
    %v2457 = vsel %vm1629, %v2455, %v2442
    %v2458 = vsel %vm1629, %v2456, %v2444
    %v2459 = vsel %vm1632, %v2457, %v2450
    %v2460 = vsel %vm1632, %v2458, %v2452
    %v2462 = vperm.slane %v1912, 0
    %v2465 = vsel %vm1049, %v2459, 0
    %v2468 = vsel %vm1049, %v2460, 0
    %2470 = vmatpush.msra.mxu0 0.0
    %2471 = vmatpush.msra.mxu0 0.0
    %2472 = vmatpush.msra.mxu0 0.0
    %2473 = vmatpush.msra.mxu0 0.0
    %2474 = vmatpush.msra.mxu0 0.0
    %2475 = vmatpush.msra.mxu0 0.0
    %2476 = vmatpush.msra.mxu0 0.0
    %2477 = vmatpush.msra.mxu0 0.0
    %2478 = vmatpush.msra.mxu0 0.0
    %2479 = vmatpush.msra.mxu0 0.0
    %2480 = vmatpush.msra.mxu0 0.0
    %2481 = vmatpush.msra.mxu0 0.0
    %2482 = vmatpush.msra.mxu0 %v1911
    %2483 = vmatpush.msra.mxu0 %v1910
    %2484 = vmatpush.msra.mxu0 %v1909
    %2485 = vmatpush.msra.mxu0 %v1908
    %2486 = vmatmul.f32.gmra.mxu0 %v2465
    %v2487 = vpop.f32.mrf.mxu0
    %v2488 = vadd.f32 %v2462, %v2487
    %2489 = vmatmul.f32.gmra.mxu0 %v2468
    %v2490 = vpop.f32.mrf.mxu0
    %v2491 = vadd.f32 %v2462, %v2490
    %2492 = vdwg.mxu0
    %v2493 = vadd.f32 %v1869, %v2488
    %v2494 = vadd.f32 %v1870, %v2491
    %v2495 = vld [vmem:[%s37] sm:$0x1]
    %v2496 = vld [vmem:[%s39] sm:$0x1]
    %v2497 = vsel %vm1049, %v2493, 0.0
    %2498 = vadd.xlane.f32.xlu0 %v2497
    %v2499 = vpop.xlane.xlu0 %2498
    %v2500 = vsel %vm1049, %v2494, 0.0
    %2501 = vadd.xlane.f32.xlu0 %v2500
    %v2502 = vpop.xlane.xlu0 %2501
    %v2503 = vmul.f32 %v2499, %v1683
    %v2504 = vmul.f32 %v2502, %v1683
    %v2505 = vsub.f32 %v2493, %v2503
    %v2506 = vsub.f32 %v2494, %v2504
    %v2507 = vmul.f32 %v2505, %v2505
    %v2508 = vmul.f32 %v2506, %v2506
    %v2509 = vsel %vm1049, %v2507, 0.0
    %2510 = vadd.xlane.f32.xlu0 %v2509
    %v2511 = vpop.xlane.xlu0 %2510
    %v2512 = vsel %vm1049, %v2508, 0.0
    %2513 = vadd.xlane.f32.xlu0 %v2512
    %v2514 = vpop.xlane.xlu0 %2513
    %v2515 = vmul.f32 %v2511, %v1683
    %v2516 = vmul.f32 %v2514, %v1683
    %v2517 = vadd.f32 %v2515, 1e-05
    %v2518 = vadd.f32 %v2516, 1e-05
    %v2519 = vrsqrt.pop %v2517
    %v2520 = vmul.f32 %v2519, %v2517
    %v2521 = vmul.f32 %v2520, %v2519
    %v2522 = vmul.f32 0.5, %v2521
    %v2523 = vsub.f32 1.5, %v2522
    %v2524 = vmul.f32 %v2519, %v2523
    %vm2525 = vweird.f32 %v2517
    %vm2526 = vweird.f32 %v2519
    %vm2527 = vmor %vm2525, %vm2526
    %v2528 = vsel %vm2527, %v2519, %v2524
    %v2529 = vrsqrt.pop %v2518
    %v2530 = vmul.f32 %v2529, %v2518
    %v2531 = vmul.f32 %v2530, %v2529
    %v2532 = vmul.f32 0.5, %v2531
    %v2533 = vsub.f32 1.5, %v2532
    %v2534 = vmul.f32 %v2529, %v2533
    %vm2535 = vweird.f32 %v2518
    %vm2536 = vweird.f32 %v2529
    %vm2537 = vmor %vm2535, %vm2536
    %v2538 = vsel %vm2537, %v2529, %v2534
    %v2539 = vmul.f32 %v2505, %v2528
    %v2540 = vmul.f32 %v2506, %v2538
    %v2542 = vperm.slane %v2495, 0
    %v2544 = vmul.f32 %v2539, %v2542
    %v2545 = vmul.f32 %v2540, %v2542
    %v2547 = vperm.slane %v2496, 0
    %v2549 = vadd.f32 %v2544, %v2547
    %v2550 = vadd.f32 %v2545, %v2547
    %v2551 = vld [vmem:[%s41] sm:$0xff]
    %v2552 = vld [vmem:[%s41 + $0x8] sm:$0xff]
    %v2553 = vld [vmem:[%s41 + $0x10] sm:$0xff]
    %v2554 = vld [vmem:[%s41 + $0x18] sm:$0xff]
    %v2555 = vld [vmem:[%s43] sm:$0x1]
    %v2557 = vperm.slane %v2555, 0
    %v2560 = vsel %vm1049, %v2549, 0
    %v2563 = vsel %vm1049, %v2550, 0
    %2565 = vmatpush.msra.mxu0 0.0
    %2566 = vmatpush.msra.mxu0 0.0
    %2567 = vmatpush.msra.mxu0 0.0
    %2568 = vmatpush.msra.mxu0 0.0
    %2569 = vmatpush.msra.mxu0 0.0
    %2570 = vmatpush.msra.mxu0 0.0
    %2571 = vmatpush.msra.mxu0 0.0
    %2572 = vmatpush.msra.mxu0 0.0
    %2573 = vmatpush.msra.mxu0 0.0
    %2574 = vmatpush.msra.mxu0 0.0
    %2575 = vmatpush.msra.mxu0 0.0
    %2576 = vmatpush.msra.mxu0 0.0
    %2577 = vmatpush.msra.mxu0 %v2554
    %2578 = vmatpush.msra.mxu0 %v2553
    %2579 = vmatpush.msra.mxu0 %v2552
    %2580 = vmatpush.msra.mxu0 %v2551
    %2581 = vmatmul.f32.gmra.mxu0 %v2560
    %v2582 = vpop.f32.mrf.mxu0
    %v2583 = vadd.f32 %v2557, %v2582
    %2584 = vmatmul.f32.gmra.mxu0 %v2563
    %v2585 = vpop.f32.mrf.mxu0
    %v2586 = vadd.f32 %v2557, %v2585
    %2587 = vdwg.mxu0
    %v2588 = vmax.f32 %v2583, 0.0
    %v2589 = vmax.f32 %v2586, 0.0
    %v2590 = vld [vmem:[%s45] sm:$0xff]
    %v2591 = vld [vmem:[%s45 + $0x8] sm:$0xff]
    %v2592 = vld [vmem:[%s45 + $0x10] sm:$0xff]
    %v2593 = vld [vmem:[%s45 + $0x18] sm:$0xff]
    %v2594 = vld [vmem:[%s45 + $0x20] sm:$0xff]
    %v2595 = vld [vmem:[%s45 + $0x28] sm:$0xff]
    %v2596 = vld [vmem:[%s45 + $0x30] sm:$0xff]
    %v2597 = vld [vmem:[%s45 + $0x38] sm:$0xff]
    %v2598 = vld [vmem:[%s47] sm:$0x1]
    %v2600 = vperm.slane %v2598, 0
    %v2603 = vsel %vm1783, %v2588, 0
    %v2606 = vsel %vm1783, %v2589, 0
    %2608 = vmatpush.msra.mxu0 0.0
    %2609 = vmatpush.msra.mxu0 0.0
    %2610 = vmatpush.msra.mxu0 0.0
    %2611 = vmatpush.msra.mxu0 0.0
    %2612 = vmatpush.msra.mxu0 0.0
    %2613 = vmatpush.msra.mxu0 0.0
    %2614 = vmatpush.msra.mxu0 0.0
    %2615 = vmatpush.msra.mxu0 0.0
    %2616 = vmatpush.msra.mxu0 %v2597
    %2617 = vmatpush.msra.mxu0 %v2596
    %2618 = vmatpush.msra.mxu0 %v2595
    %2619 = vmatpush.msra.mxu0 %v2594
    %2620 = vmatpush.msra.mxu0 %v2593
    %2621 = vmatpush.msra.mxu0 %v2592
    %2622 = vmatpush.msra.mxu0 %v2591
    %2623 = vmatpush.msra.mxu0 %v2590
    %2624 = vmatmul.f32.gmra.mxu0 %v2603
    %v2625 = vpop.f32.mrf.mxu0
    %v2626 = vadd.f32 %v2600, %v2625
    %2627 = vmatmul.f32.gmra.mxu0 %v2606
    %v2628 = vpop.f32.mrf.mxu0
    %v2629 = vadd.f32 %v2600, %v2628
    %2630 = vdwg.mxu0
    %v2631 = vadd.f32 %v2549, %v2626
    %v2632 = vadd.f32 %v2550, %v2629
    %v2633 = vld [vmem:[%s49] sm:$0x1]
    %v2634 = vld [vmem:[%s51] sm:$0x1]
    %v2635 = vsel %vm1049, %v2631, 0.0
    %2636 = vadd.xlane.f32.xlu0 %v2635
    %v2637 = vpop.xlane.xlu0 %2636
    %v2638 = vsel %vm1049, %v2632, 0.0
    %2639 = vadd.xlane.f32.xlu0 %v2638
    %v2640 = vpop.xlane.xlu0 %2639
    %v2641 = vmul.f32 %v2637, %v1683
    %v2642 = vmul.f32 %v2640, %v1683
    %v2643 = vsub.f32 %v2631, %v2641
    %v2644 = vsub.f32 %v2632, %v2642
    %v2645 = vmul.f32 %v2643, %v2643
    %v2646 = vmul.f32 %v2644, %v2644
    %v2647 = vsel %vm1049, %v2645, 0.0
    %2648 = vadd.xlane.f32.xlu0 %v2647
    %v2649 = vpop.xlane.xlu0 %2648
    %v2650 = vsel %vm1049, %v2646, 0.0
    %2651 = vadd.xlane.f32.xlu0 %v2650
    %v2652 = vpop.xlane.xlu0 %2651
    %v2653 = vmul.f32 %v2649, %v1683
    %v2654 = vmul.f32 %v2652, %v1683
    %v2655 = vadd.f32 %v2653, 1e-05
    %v2656 = vadd.f32 %v2654, 1e-05
    %v2657 = vrsqrt.pop %v2655
    %v2658 = vmul.f32 %v2657, %v2655
    %v2659 = vmul.f32 %v2658, %v2657
    %v2660 = vmul.f32 0.5, %v2659
    %v2661 = vsub.f32 1.5, %v2660
    %v2662 = vmul.f32 %v2657, %v2661
    %vm2663 = vweird.f32 %v2655
    %vm2664 = vweird.f32 %v2657
    %vm2665 = vmor %vm2663, %vm2664
    %v2666 = vsel %vm2665, %v2657, %v2662
    %v2667 = vrsqrt.pop %v2656
    %v2668 = vmul.f32 %v2667, %v2656
    %v2669 = vmul.f32 %v2668, %v2667
    %v2670 = vmul.f32 0.5, %v2669
    %v2671 = vsub.f32 1.5, %v2670
    %v2672 = vmul.f32 %v2667, %v2671
    %vm2673 = vweird.f32 %v2656
    %vm2674 = vweird.f32 %v2667
    %vm2675 = vmor %vm2673, %vm2674
    %v2676 = vsel %vm2675, %v2667, %v2672
    %v2677 = vmul.f32 %v2643, %v2666
    %v2678 = vmul.f32 %v2644, %v2676
    %v2680 = vperm.slane %v2633, 0
    %v2682 = vmul.f32 %v2677, %v2680
    %v2683 = vmul.f32 %v2678, %v2680
    %v2685 = vperm.slane %v2634, 0
    %v2687 = vadd.f32 %v2682, %v2685
    %v2688 = vadd.f32 %v2683, %v2685
    %v2689 = vld [vmem:[%s53] sm:$0x1]
    %v2690 = vld [vmem:[%s55] sm:$0x1]
    %v2691 = vsel %vm1049, %v2687, 0.0
    %2692 = vadd.xlane.f32.xlu0 %v2691
    %v2693 = vpop.xlane.xlu0 %2692
    %v2694 = vsel %vm1049, %v2688, 0.0
    %2695 = vadd.xlane.f32.xlu0 %v2694
    %v2696 = vpop.xlane.xlu0 %2695
    %v2697 = vmul.f32 %v2693, %v1683
    %v2698 = vmul.f32 %v2696, %v1683
    %v2699 = vsub.f32 %v2687, %v2697
    %v2700 = vsub.f32 %v2688, %v2698
    %v2701 = vmul.f32 %v2699, %v2699
    %v2702 = vmul.f32 %v2700, %v2700
    %v2703 = vsel %vm1049, %v2701, 0.0
    %2704 = vadd.xlane.f32.xlu0 %v2703
    %v2705 = vpop.xlane.xlu0 %2704
    %v2706 = vsel %vm1049, %v2702, 0.0
    %2707 = vadd.xlane.f32.xlu0 %v2706
    %v2708 = vpop.xlane.xlu0 %2707
    %v2709 = vmul.f32 %v2705, %v1683
    %v2710 = vmul.f32 %v2708, %v1683
    %v2711 = vadd.f32 %v2709, 1e-05
    %v2712 = vadd.f32 %v2710, 1e-05
    %v2713 = vrsqrt.pop %v2711
    %v2714 = vmul.f32 %v2713, %v2711
    %v2715 = vmul.f32 %v2714, %v2713
    %v2716 = vmul.f32 0.5, %v2715
    %v2717 = vsub.f32 1.5, %v2716
    %v2718 = vmul.f32 %v2713, %v2717
    %vm2719 = vweird.f32 %v2711
    %vm2720 = vweird.f32 %v2713
    %vm2721 = vmor %vm2719, %vm2720
    %v2722 = vsel %vm2721, %v2713, %v2718
    %v2723 = vrsqrt.pop %v2712
    %v2724 = vmul.f32 %v2723, %v2712
    %v2725 = vmul.f32 %v2724, %v2723
    %v2726 = vmul.f32 0.5, %v2725
    %v2727 = vsub.f32 1.5, %v2726
    %v2728 = vmul.f32 %v2723, %v2727
    %vm2729 = vweird.f32 %v2712
    %vm2730 = vweird.f32 %v2723
    %vm2731 = vmor %vm2729, %vm2730
    %v2732 = vsel %vm2731, %v2723, %v2728
    %v2733 = vmul.f32 %v2699, %v2722
    %v2734 = vmul.f32 %v2700, %v2732
    %v2736 = vperm.slane %v2689, 0
    %v2738 = vmul.f32 %v2733, %v2736
    %v2739 = vmul.f32 %v2734, %v2736
    %v2741 = vperm.slane %v2690, 0
    %v2743 = vadd.f32 %v2738, %v2741
    %v2744 = vadd.f32 %v2739, %v2741
    %v2745 = vld [vmem:[%s57] sm:$0xff]
    %v2746 = vld [vmem:[%s57 + $0x8] sm:$0xff]
    %v2747 = vld [vmem:[%s57 + $0x10] sm:$0xff]
    %v2748 = vld [vmem:[%s57 + $0x18] sm:$0xff]
    %v2749 = vld [vmem:[%s59] sm:$0x1]
    %v2751 = vperm.slane %v2749, 0
    %2753 = vmatpush.msra.mxu0 0.0
    %2754 = vmatpush.msra.mxu0 0.0
    %2755 = vmatpush.msra.mxu0 0.0
    %2756 = vmatpush.msra.mxu0 0.0
    %2757 = vmatpush.msra.mxu0 0.0
    %2758 = vmatpush.msra.mxu0 0.0
    %2759 = vmatpush.msra.mxu0 0.0
    %2760 = vmatpush.msra.mxu0 0.0
    %2761 = vmatpush.msra.mxu0 0.0
    %2762 = vmatpush.msra.mxu0 0.0
    %2763 = vmatpush.msra.mxu0 0.0
    %2764 = vmatpush.msra.mxu0 0.0
    %2765 = vmatpush.msra.mxu0 %v2748
    %2766 = vmatpush.msra.mxu0 %v2747
    %2767 = vmatpush.msra.mxu0 %v2746
    %2768 = vmatpush.msra.mxu0 %v2745
    %2769 = vmatmul.f32.gmra.mxu0 %v1051
    %v2770 = vpop.f32.mrf.mxu0
    %v2771 = vadd.f32 %v2751, %v2770
    %2772 = vmatmul.f32.gmra.mxu0 %v1054
    %v2773 = vpop.f32.mrf.mxu0
    %v2774 = vadd.f32 %v2751, %v2773
    %2775 = vdwg.mxu0
    %v2776 = vld [vmem:[%s61] sm:$0xff]
    %v2777 = vld [vmem:[%s61 + $0x8] sm:$0xff]
    %v2778 = vld [vmem:[%s61 + $0x10] sm:$0xff]
    %v2779 = vld [vmem:[%s61 + $0x18] sm:$0xff]
    %v2780 = vld [vmem:[%s63] sm:$0x1]
    %2782 = vrot.lane.b32.xlu0 %v2771, 96
    %v2783 = vpop.permute.xlu0 %2782
    %v2784 = vsel %vm1087, %v2771, 0
    %v2786 = vsel %vm1087, %v2783, 0
    %2788 = vmatpush.xpose.msra.mxu0 0.0
    %2789 = vmatpush.xpose.msra.mxu0 0.0
    %2790 = vmatpush.xpose.msra.mxu0 0.0
    %2791 = vmatpush.xpose.msra.mxu0 0.0
    %2792 = vmatpush.xpose.msra.mxu0 0.0
    %2793 = vmatpush.xpose.msra.mxu0 0.0
    %2794 = vmatpush.xpose.msra.mxu0 0.0
    %2795 = vmatpush.xpose.msra.mxu0 0.0
    %2796 = vmatpush.xpose.msra.mxu0 0.0
    %2797 = vmatpush.xpose.msra.mxu0 0.0
    %2798 = vmatpush.xpose.msra.mxu0 0.0
    %2799 = vmatpush.xpose.msra.mxu0 0.0
    %2800 = vmatpush.xpose.msra.mxu0 0.0
    %2801 = vmatpush.xpose.msra.mxu0 0.0
    %2802 = vmatpush.xpose.msra.mxu0 0.0
    %2803 = vmatpush.xpose.msra.mxu0 %v2786
    %2804 = vmatmul.f32.gmra.mxu0 %v2784
    %v2805 = vpop.f32.mrf.mxu0
    %v2806 = vadd.f32 0.0, %v2805
    %2807 = vdwg.mxu0
    %2809 = vrot.lane.b32.xlu0 %v2774, 96
    %v2810 = vpop.permute.xlu0 %2809
    %v2811 = vsel %vm1087, %v2774, 0
    %v2813 = vsel %vm1087, %v2810, 0
    %2815 = vmatpush.xpose.msra.mxu0 0.0
    %2816 = vmatpush.xpose.msra.mxu0 0.0
    %2817 = vmatpush.xpose.msra.mxu0 0.0
    %2818 = vmatpush.xpose.msra.mxu0 0.0
    %2819 = vmatpush.xpose.msra.mxu0 0.0
    %2820 = vmatpush.xpose.msra.mxu0 0.0
    %2821 = vmatpush.xpose.msra.mxu0 0.0
    %2822 = vmatpush.xpose.msra.mxu0 0.0
    %2823 = vmatpush.xpose.msra.mxu0 0.0
    %2824 = vmatpush.xpose.msra.mxu0 0.0
    %2825 = vmatpush.xpose.msra.mxu0 0.0
    %2826 = vmatpush.xpose.msra.mxu0 0.0
    %2827 = vmatpush.xpose.msra.mxu0 0.0
    %2828 = vmatpush.xpose.msra.mxu0 0.0
    %2829 = vmatpush.xpose.msra.mxu0 0.0
    %2830 = vmatpush.xpose.msra.mxu0 %v2813
    %2831 = vmatmul.f32.gmra.mxu0 %v2811
    %v2832 = vpop.f32.mrf.mxu0
    %v2833 = vadd.f32 0.0, %v2832
    %2834 = vdwg.mxu0
    %v2835 = vsel %vm1087, %v2806, -inf
    %2836 = vmax.xlane.f32.xlu0 %v2835
    %v2837 = vpop.xlane.xlu0 %2836
    %v2838 = vsel %vm1087, %v2833, -inf
    %2839 = vmax.xlane.f32.xlu0 %v2838
    %v2840 = vpop.xlane.xlu0 %2839
    %v2841 = vsub.f32 %v2806, %v2837
    %v2842 = vsub.f32 %v2833, %v2840
    %v2843 = vmul.f32 %v2841, 1.442695
    %v2844 = vpow.pop %v2843
    %v2845 = vmul.f32 %v2842, 1.442695
    %v2846 = vpow.pop %v2845
    %v2847 = vsel %vm1087, %v2844, 0.0
    %2848 = vadd.xlane.f32.xlu0 %v2847
    %v2849 = vpop.xlane.xlu0 %2848
    %v2850 = vsel %vm1087, %v2846, 0.0
    %2851 = vadd.xlane.f32.xlu0 %v2850
    %v2852 = vpop.xlane.xlu0 %2851
    %v2853 = vrcp.pop %v2849
    %v2854 = vrcp.pop %v2852
    %v2855 = vmul.f32 %v2844, %v2853
    %v2856 = vmul.f32 %v2846, %v2854
    %2857 = vrot.lane.b32.xlu0 %v2771, 64
    %v2858 = vpop.permute.xlu0 %2857
    %v2861 = vsel %vm1087, %v2855, 0
    %2863 = vmatpush.msra.mxu0 0.0
    %2864 = vmatpush.msra.mxu0 0.0
    %2865 = vmatpush.msra.mxu0 0.0
    %2866 = vmatpush.msra.mxu0 0.0
    %2867 = vmatpush.msra.mxu0 0.0
    %2868 = vmatpush.msra.mxu0 0.0
    %2869 = vmatpush.msra.mxu0 0.0
    %2870 = vmatpush.msra.mxu0 0.0
    %2871 = vmatpush.msra.mxu0 0.0
    %2872 = vmatpush.msra.mxu0 0.0
    %2873 = vmatpush.msra.mxu0 0.0
    %2874 = vmatpush.msra.mxu0 0.0
    %2875 = vmatpush.msra.mxu0 0.0
    %2876 = vmatpush.msra.mxu0 0.0
    %2877 = vmatpush.msra.mxu0 0.0
    %2878 = vmatpush.msra.mxu0 %v2858
    %2879 = vmatmul.f32.gmra.mxu0 %v2861
    %v2880 = vpop.f32.mrf.mxu0
    %v2881 = vadd.f32 0.0, %v2880
    %2882 = vdwg.mxu0
    %2883 = vrot.lane.b32.xlu0 %v2774, 64
    %v2884 = vpop.permute.xlu0 %2883
    %v2887 = vsel %vm1087, %v2856, 0
    %2889 = vmatpush.msra.mxu0 0.0
    %2890 = vmatpush.msra.mxu0 0.0
    %2891 = vmatpush.msra.mxu0 0.0
    %2892 = vmatpush.msra.mxu0 0.0
    %2893 = vmatpush.msra.mxu0 0.0
    %2894 = vmatpush.msra.mxu0 0.0
    %2895 = vmatpush.msra.mxu0 0.0
    %2896 = vmatpush.msra.mxu0 0.0
    %2897 = vmatpush.msra.mxu0 0.0
    %2898 = vmatpush.msra.mxu0 0.0
    %2899 = vmatpush.msra.mxu0 0.0
    %2900 = vmatpush.msra.mxu0 0.0
    %2901 = vmatpush.msra.mxu0 0.0
    %2902 = vmatpush.msra.mxu0 0.0
    %2903 = vmatpush.msra.mxu0 0.0
    %2904 = vmatpush.msra.mxu0 %v2884
    %2905 = vmatmul.f32.gmra.mxu0 %v2887
    %v2906 = vpop.f32.mrf.mxu0
    %v2907 = vadd.f32 0.0, %v2906
    %2908 = vdwg.mxu0
    %2909 = vrot.lane.b32.xlu0 %v2771, 120
    %v2910 = vpop.permute.xlu0 %2909
    %2911 = vrot.lane.b32.xlu0 %v2771, 88
    %v2912 = vpop.permute.xlu0 %2911
    %v2913 = vsel %vm1087, %v2910, 0
    %v2915 = vsel %vm1087, %v2912, 0
    %2917 = vmatpush.xpose.msra.mxu0 0.0
    %2918 = vmatpush.xpose.msra.mxu0 0.0
    %2919 = vmatpush.xpose.msra.mxu0 0.0
    %2920 = vmatpush.xpose.msra.mxu0 0.0
    %2921 = vmatpush.xpose.msra.mxu0 0.0
    %2922 = vmatpush.xpose.msra.mxu0 0.0
    %2923 = vmatpush.xpose.msra.mxu0 0.0
    %2924 = vmatpush.xpose.msra.mxu0 0.0
    %2925 = vmatpush.xpose.msra.mxu0 0.0
    %2926 = vmatpush.xpose.msra.mxu0 0.0
    %2927 = vmatpush.xpose.msra.mxu0 0.0
    %2928 = vmatpush.xpose.msra.mxu0 0.0
    %2929 = vmatpush.xpose.msra.mxu0 0.0
    %2930 = vmatpush.xpose.msra.mxu0 0.0
    %2931 = vmatpush.xpose.msra.mxu0 0.0
    %2932 = vmatpush.xpose.msra.mxu0 %v2915
    %2933 = vmatmul.f32.gmra.mxu0 %v2913
    %v2934 = vpop.f32.mrf.mxu0
    %v2935 = vadd.f32 0.0, %v2934
    %2936 = vdwg.mxu0
    %2937 = vrot.lane.b32.xlu0 %v2774, 120
    %v2938 = vpop.permute.xlu0 %2937
    %2939 = vrot.lane.b32.xlu0 %v2774, 88
    %v2940 = vpop.permute.xlu0 %2939
    %v2941 = vsel %vm1087, %v2938, 0
    %v2943 = vsel %vm1087, %v2940, 0
    %2945 = vmatpush.xpose.msra.mxu0 0.0
    %2946 = vmatpush.xpose.msra.mxu0 0.0
    %2947 = vmatpush.xpose.msra.mxu0 0.0
    %2948 = vmatpush.xpose.msra.mxu0 0.0
    %2949 = vmatpush.xpose.msra.mxu0 0.0
    %2950 = vmatpush.xpose.msra.mxu0 0.0
    %2951 = vmatpush.xpose.msra.mxu0 0.0
    %2952 = vmatpush.xpose.msra.mxu0 0.0
    %2953 = vmatpush.xpose.msra.mxu0 0.0
    %2954 = vmatpush.xpose.msra.mxu0 0.0
    %2955 = vmatpush.xpose.msra.mxu0 0.0
    %2956 = vmatpush.xpose.msra.mxu0 0.0
    %2957 = vmatpush.xpose.msra.mxu0 0.0
    %2958 = vmatpush.xpose.msra.mxu0 0.0
    %2959 = vmatpush.xpose.msra.mxu0 0.0
    %2960 = vmatpush.xpose.msra.mxu0 %v2943
    %2961 = vmatmul.f32.gmra.mxu0 %v2941
    %v2962 = vpop.f32.mrf.mxu0
    %v2963 = vadd.f32 0.0, %v2962
    %2964 = vdwg.mxu0
    %v2965 = vsel %vm1087, %v2935, -inf
    %2966 = vmax.xlane.f32.xlu0 %v2965
    %v2967 = vpop.xlane.xlu0 %2966
    %v2968 = vsel %vm1087, %v2963, -inf
    %2969 = vmax.xlane.f32.xlu0 %v2968
    %v2970 = vpop.xlane.xlu0 %2969
    %v2971 = vsub.f32 %v2935, %v2967
    %v2972 = vsub.f32 %v2963, %v2970
    %v2973 = vmul.f32 %v2971, 1.442695
    %v2974 = vpow.pop %v2973
    %v2975 = vmul.f32 %v2972, 1.442695
    %v2976 = vpow.pop %v2975
    %v2977 = vsel %vm1087, %v2974, 0.0
    %2978 = vadd.xlane.f32.xlu0 %v2977
    %v2979 = vpop.xlane.xlu0 %2978
    %v2980 = vsel %vm1087, %v2976, 0.0
    %2981 = vadd.xlane.f32.xlu0 %v2980
    %v2982 = vpop.xlane.xlu0 %2981
    %v2983 = vrcp.pop %v2979
    %v2984 = vrcp.pop %v2982
    %v2985 = vmul.f32 %v2974, %v2983
    %v2986 = vmul.f32 %v2976, %v2984
    %2987 = vrot.lane.b32.xlu0 %v2771, 56
    %v2988 = vpop.permute.xlu0 %2987
    %v2991 = vsel %vm1087, %v2985, 0
    %2993 = vmatpush.msra.mxu0 0.0
    %2994 = vmatpush.msra.mxu0 0.0
    %2995 = vmatpush.msra.mxu0 0.0
    %2996 = vmatpush.msra.mxu0 0.0
    %2997 = vmatpush.msra.mxu0 0.0
    %2998 = vmatpush.msra.mxu0 0.0
    %2999 = vmatpush.msra.mxu0 0.0
    %3000 = vmatpush.msra.mxu0 0.0
    %3001 = vmatpush.msra.mxu0 0.0
    %3002 = vmatpush.msra.mxu0 0.0
    %3003 = vmatpush.msra.mxu0 0.0
    %3004 = vmatpush.msra.mxu0 0.0
    %3005 = vmatpush.msra.mxu0 0.0
    %3006 = vmatpush.msra.mxu0 0.0
    %3007 = vmatpush.msra.mxu0 0.0
    %3008 = vmatpush.msra.mxu0 %v2988
    %3009 = vmatmul.f32.gmra.mxu0 %v2991
    %v3010 = vpop.f32.mrf.mxu0
    %v3011 = vadd.f32 0.0, %v3010
    %3012 = vdwg.mxu0
    %3013 = vrot.lane.b32.xlu0 %v2774, 56
    %v3014 = vpop.permute.xlu0 %3013
    %v3017 = vsel %vm1087, %v2986, 0
    %3019 = vmatpush.msra.mxu0 0.0
    %3020 = vmatpush.msra.mxu0 0.0
    %3021 = vmatpush.msra.mxu0 0.0
    %3022 = vmatpush.msra.mxu0 0.0
    %3023 = vmatpush.msra.mxu0 0.0
    %3024 = vmatpush.msra.mxu0 0.0
    %3025 = vmatpush.msra.mxu0 0.0
    %3026 = vmatpush.msra.mxu0 0.0
    %3027 = vmatpush.msra.mxu0 0.0
    %3028 = vmatpush.msra.mxu0 0.0
    %3029 = vmatpush.msra.mxu0 0.0
    %3030 = vmatpush.msra.mxu0 0.0
    %3031 = vmatpush.msra.mxu0 0.0
    %3032 = vmatpush.msra.mxu0 0.0
    %3033 = vmatpush.msra.mxu0 0.0
    %3034 = vmatpush.msra.mxu0 %v3014
    %3035 = vmatmul.f32.gmra.mxu0 %v3017
    %v3036 = vpop.f32.mrf.mxu0
    %v3037 = vadd.f32 0.0, %v3036
    %3038 = vdwg.mxu0
    %3039 = vrot.lane.b32.xlu0 %v2771, 112
    %v3040 = vpop.permute.xlu0 %3039
    %3041 = vrot.lane.b32.xlu0 %v2771, 80
    %v3042 = vpop.permute.xlu0 %3041
    %v3043 = vsel %vm1087, %v3040, 0
    %v3045 = vsel %vm1087, %v3042, 0
    %3047 = vmatpush.xpose.msra.mxu0 0.0
    %3048 = vmatpush.xpose.msra.mxu0 0.0
    %3049 = vmatpush.xpose.msra.mxu0 0.0
    %3050 = vmatpush.xpose.msra.mxu0 0.0
    %3051 = vmatpush.xpose.msra.mxu0 0.0
    %3052 = vmatpush.xpose.msra.mxu0 0.0
    %3053 = vmatpush.xpose.msra.mxu0 0.0
    %3054 = vmatpush.xpose.msra.mxu0 0.0
    %3055 = vmatpush.xpose.msra.mxu0 0.0
    %3056 = vmatpush.xpose.msra.mxu0 0.0
    %3057 = vmatpush.xpose.msra.mxu0 0.0
    %3058 = vmatpush.xpose.msra.mxu0 0.0
    %3059 = vmatpush.xpose.msra.mxu0 0.0
    %3060 = vmatpush.xpose.msra.mxu0 0.0
    %3061 = vmatpush.xpose.msra.mxu0 0.0
    %3062 = vmatpush.xpose.msra.mxu0 %v3045
    %3063 = vmatmul.f32.gmra.mxu0 %v3043
    %v3064 = vpop.f32.mrf.mxu0
    %v3065 = vadd.f32 0.0, %v3064
    %3066 = vdwg.mxu0
    %3067 = vrot.lane.b32.xlu0 %v2774, 112
    %v3068 = vpop.permute.xlu0 %3067
    %3069 = vrot.lane.b32.xlu0 %v2774, 80
    %v3070 = vpop.permute.xlu0 %3069
    %v3071 = vsel %vm1087, %v3068, 0
    %v3073 = vsel %vm1087, %v3070, 0
    %3075 = vmatpush.xpose.msra.mxu0 0.0
    %3076 = vmatpush.xpose.msra.mxu0 0.0
    %3077 = vmatpush.xpose.msra.mxu0 0.0
    %3078 = vmatpush.xpose.msra.mxu0 0.0
    %3079 = vmatpush.xpose.msra.mxu0 0.0
    %3080 = vmatpush.xpose.msra.mxu0 0.0
    %3081 = vmatpush.xpose.msra.mxu0 0.0
    %3082 = vmatpush.xpose.msra.mxu0 0.0
    %3083 = vmatpush.xpose.msra.mxu0 0.0
    %3084 = vmatpush.xpose.msra.mxu0 0.0
    %3085 = vmatpush.xpose.msra.mxu0 0.0
    %3086 = vmatpush.xpose.msra.mxu0 0.0
    %3087 = vmatpush.xpose.msra.mxu0 0.0
    %3088 = vmatpush.xpose.msra.mxu0 0.0
    %3089 = vmatpush.xpose.msra.mxu0 0.0
    %3090 = vmatpush.xpose.msra.mxu0 %v3073
    %3091 = vmatmul.f32.gmra.mxu0 %v3071
    %v3092 = vpop.f32.mrf.mxu0
    %v3093 = vadd.f32 0.0, %v3092
    %3094 = vdwg.mxu0
    %v3095 = vsel %vm1087, %v3065, -inf
    %3096 = vmax.xlane.f32.xlu0 %v3095
    %v3097 = vpop.xlane.xlu0 %3096
    %v3098 = vsel %vm1087, %v3093, -inf
    %3099 = vmax.xlane.f32.xlu0 %v3098
    %v3100 = vpop.xlane.xlu0 %3099
    %v3101 = vsub.f32 %v3065, %v3097
    %v3102 = vsub.f32 %v3093, %v3100
    %v3103 = vmul.f32 %v3101, 1.442695
    %v3104 = vpow.pop %v3103
    %v3105 = vmul.f32 %v3102, 1.442695
    %v3106 = vpow.pop %v3105
    %v3107 = vsel %vm1087, %v3104, 0.0
    %3108 = vadd.xlane.f32.xlu0 %v3107
    %v3109 = vpop.xlane.xlu0 %3108
    %v3110 = vsel %vm1087, %v3106, 0.0
    %3111 = vadd.xlane.f32.xlu0 %v3110
    %v3112 = vpop.xlane.xlu0 %3111
    %v3113 = vrcp.pop %v3109
    %v3114 = vrcp.pop %v3112
    %v3115 = vmul.f32 %v3104, %v3113
    %v3116 = vmul.f32 %v3106, %v3114
    %3117 = vrot.lane.b32.xlu0 %v2771, 48
    %v3118 = vpop.permute.xlu0 %3117
    %v3121 = vsel %vm1087, %v3115, 0
    %3123 = vmatpush.msra.mxu0 0.0
    %3124 = vmatpush.msra.mxu0 0.0
    %3125 = vmatpush.msra.mxu0 0.0
    %3126 = vmatpush.msra.mxu0 0.0
    %3127 = vmatpush.msra.mxu0 0.0
    %3128 = vmatpush.msra.mxu0 0.0
    %3129 = vmatpush.msra.mxu0 0.0
    %3130 = vmatpush.msra.mxu0 0.0
    %3131 = vmatpush.msra.mxu0 0.0
    %3132 = vmatpush.msra.mxu0 0.0
    %3133 = vmatpush.msra.mxu0 0.0
    %3134 = vmatpush.msra.mxu0 0.0
    %3135 = vmatpush.msra.mxu0 0.0
    %3136 = vmatpush.msra.mxu0 0.0
    %3137 = vmatpush.msra.mxu0 0.0
    %3138 = vmatpush.msra.mxu0 %v3118
    %3139 = vmatmul.f32.gmra.mxu0 %v3121
    %v3140 = vpop.f32.mrf.mxu0
    %v3141 = vadd.f32 0.0, %v3140
    %3142 = vdwg.mxu0
    %3143 = vrot.lane.b32.xlu0 %v2774, 48
    %v3144 = vpop.permute.xlu0 %3143
    %v3147 = vsel %vm1087, %v3116, 0
    %3149 = vmatpush.msra.mxu0 0.0
    %3150 = vmatpush.msra.mxu0 0.0
    %3151 = vmatpush.msra.mxu0 0.0
    %3152 = vmatpush.msra.mxu0 0.0
    %3153 = vmatpush.msra.mxu0 0.0
    %3154 = vmatpush.msra.mxu0 0.0
    %3155 = vmatpush.msra.mxu0 0.0
    %3156 = vmatpush.msra.mxu0 0.0
    %3157 = vmatpush.msra.mxu0 0.0
    %3158 = vmatpush.msra.mxu0 0.0
    %3159 = vmatpush.msra.mxu0 0.0
    %3160 = vmatpush.msra.mxu0 0.0
    %3161 = vmatpush.msra.mxu0 0.0
    %3162 = vmatpush.msra.mxu0 0.0
    %3163 = vmatpush.msra.mxu0 0.0
    %3164 = vmatpush.msra.mxu0 %v3144
    %3165 = vmatmul.f32.gmra.mxu0 %v3147
    %v3166 = vpop.f32.mrf.mxu0
    %v3167 = vadd.f32 0.0, %v3166
    %3168 = vdwg.mxu0
    %3169 = vrot.lane.b32.xlu0 %v2771, 104
    %v3170 = vpop.permute.xlu0 %3169
    %3171 = vrot.lane.b32.xlu0 %v2771, 72
    %v3172 = vpop.permute.xlu0 %3171
    %v3173 = vsel %vm1087, %v3170, 0
    %v3175 = vsel %vm1087, %v3172, 0
    %3177 = vmatpush.xpose.msra.mxu0 0.0
    %3178 = vmatpush.xpose.msra.mxu0 0.0
    %3179 = vmatpush.xpose.msra.mxu0 0.0
    %3180 = vmatpush.xpose.msra.mxu0 0.0
    %3181 = vmatpush.xpose.msra.mxu0 0.0
    %3182 = vmatpush.xpose.msra.mxu0 0.0
    %3183 = vmatpush.xpose.msra.mxu0 0.0
    %3184 = vmatpush.xpose.msra.mxu0 0.0
    %3185 = vmatpush.xpose.msra.mxu0 0.0
    %3186 = vmatpush.xpose.msra.mxu0 0.0
    %3187 = vmatpush.xpose.msra.mxu0 0.0
    %3188 = vmatpush.xpose.msra.mxu0 0.0
    %3189 = vmatpush.xpose.msra.mxu0 0.0
    %3190 = vmatpush.xpose.msra.mxu0 0.0
    %3191 = vmatpush.xpose.msra.mxu0 0.0
    %3192 = vmatpush.xpose.msra.mxu0 %v3175
    %3193 = vmatmul.f32.gmra.mxu0 %v3173
    %v3194 = vpop.f32.mrf.mxu0
    %v3195 = vadd.f32 0.0, %v3194
    %3196 = vdwg.mxu0
    %3197 = vrot.lane.b32.xlu0 %v2774, 104
    %v3198 = vpop.permute.xlu0 %3197
    %3199 = vrot.lane.b32.xlu0 %v2774, 72
    %v3200 = vpop.permute.xlu0 %3199
    %v3201 = vsel %vm1087, %v3198, 0
    %v3203 = vsel %vm1087, %v3200, 0
    %3205 = vmatpush.xpose.msra.mxu0 0.0
    %3206 = vmatpush.xpose.msra.mxu0 0.0
    %3207 = vmatpush.xpose.msra.mxu0 0.0
    %3208 = vmatpush.xpose.msra.mxu0 0.0
    %3209 = vmatpush.xpose.msra.mxu0 0.0
    %3210 = vmatpush.xpose.msra.mxu0 0.0
    %3211 = vmatpush.xpose.msra.mxu0 0.0
    %3212 = vmatpush.xpose.msra.mxu0 0.0
    %3213 = vmatpush.xpose.msra.mxu0 0.0
    %3214 = vmatpush.xpose.msra.mxu0 0.0
    %3215 = vmatpush.xpose.msra.mxu0 0.0
    %3216 = vmatpush.xpose.msra.mxu0 0.0
    %3217 = vmatpush.xpose.msra.mxu0 0.0
    %3218 = vmatpush.xpose.msra.mxu0 0.0
    %3219 = vmatpush.xpose.msra.mxu0 0.0
    %3220 = vmatpush.xpose.msra.mxu0 %v3203
    %3221 = vmatmul.f32.gmra.mxu0 %v3201
    %v3222 = vpop.f32.mrf.mxu0
    %v3223 = vadd.f32 0.0, %v3222
    %3224 = vdwg.mxu0
    %v3225 = vsel %vm1087, %v3195, -inf
    %3226 = vmax.xlane.f32.xlu0 %v3225
    %v3227 = vpop.xlane.xlu0 %3226
    %v3228 = vsel %vm1087, %v3223, -inf
    %3229 = vmax.xlane.f32.xlu0 %v3228
    %v3230 = vpop.xlane.xlu0 %3229
    %v3231 = vsub.f32 %v3195, %v3227
    %v3232 = vsub.f32 %v3223, %v3230
    %v3233 = vmul.f32 %v3231, 1.442695
    %v3234 = vpow.pop %v3233
    %v3235 = vmul.f32 %v3232, 1.442695
    %v3236 = vpow.pop %v3235
    %v3237 = vsel %vm1087, %v3234, 0.0
    %3238 = vadd.xlane.f32.xlu0 %v3237
    %v3239 = vpop.xlane.xlu0 %3238
    %v3240 = vsel %vm1087, %v3236, 0.0
    %3241 = vadd.xlane.f32.xlu0 %v3240
    %v3242 = vpop.xlane.xlu0 %3241
    %v3243 = vrcp.pop %v3239
    %v3244 = vrcp.pop %v3242
    %v3245 = vmul.f32 %v3234, %v3243
    %v3246 = vmul.f32 %v3236, %v3244
    %3247 = vrot.lane.b32.xlu0 %v2771, 40
    %v3248 = vpop.permute.xlu0 %3247
    %v3251 = vsel %vm1087, %v3245, 0
    %3253 = vmatpush.msra.mxu0 0.0
    %3254 = vmatpush.msra.mxu0 0.0
    %3255 = vmatpush.msra.mxu0 0.0
    %3256 = vmatpush.msra.mxu0 0.0
    %3257 = vmatpush.msra.mxu0 0.0
    %3258 = vmatpush.msra.mxu0 0.0
    %3259 = vmatpush.msra.mxu0 0.0
    %3260 = vmatpush.msra.mxu0 0.0
    %3261 = vmatpush.msra.mxu0 0.0
    %3262 = vmatpush.msra.mxu0 0.0
    %3263 = vmatpush.msra.mxu0 0.0
    %3264 = vmatpush.msra.mxu0 0.0
    %3265 = vmatpush.msra.mxu0 0.0
    %3266 = vmatpush.msra.mxu0 0.0
    %3267 = vmatpush.msra.mxu0 0.0
    %3268 = vmatpush.msra.mxu0 %v3248
    %3269 = vmatmul.f32.gmra.mxu0 %v3251
    %v3270 = vpop.f32.mrf.mxu0
    %v3271 = vadd.f32 0.0, %v3270
    %3272 = vdwg.mxu0
    %3273 = vrot.lane.b32.xlu0 %v2774, 40
    %v3274 = vpop.permute.xlu0 %3273
    %v3277 = vsel %vm1087, %v3246, 0
    %3279 = vmatpush.msra.mxu0 0.0
    %3280 = vmatpush.msra.mxu0 0.0
    %3281 = vmatpush.msra.mxu0 0.0
    %3282 = vmatpush.msra.mxu0 0.0
    %3283 = vmatpush.msra.mxu0 0.0
    %3284 = vmatpush.msra.mxu0 0.0
    %3285 = vmatpush.msra.mxu0 0.0
    %3286 = vmatpush.msra.mxu0 0.0
    %3287 = vmatpush.msra.mxu0 0.0
    %3288 = vmatpush.msra.mxu0 0.0
    %3289 = vmatpush.msra.mxu0 0.0
    %3290 = vmatpush.msra.mxu0 0.0
    %3291 = vmatpush.msra.mxu0 0.0
    %3292 = vmatpush.msra.mxu0 0.0
    %3293 = vmatpush.msra.mxu0 0.0
    %3294 = vmatpush.msra.mxu0 %v3274
    %3295 = vmatmul.f32.gmra.mxu0 %v3277
    %v3296 = vpop.f32.mrf.mxu0
    %v3297 = vadd.f32 0.0, %v3296
    %3298 = vdwg.mxu0
    %3301 = vrot.lane.b32.xlu0 %v3011, 8
    %v3302 = vpop.permute.xlu0 %3301
    %3303 = vrot.lane.b32.xlu0 %v3037, 8
    %v3304 = vpop.permute.xlu0 %3303
    %3309 = vrot.lane.b32.xlu0 %v3141, 16
    %v3310 = vpop.permute.xlu0 %3309
    %3311 = vrot.lane.b32.xlu0 %v3167, 16
    %v3312 = vpop.permute.xlu0 %3311
    %3317 = vrot.lane.b32.xlu0 %v3271, 24
    %v3318 = vpop.permute.xlu0 %3317
    %3319 = vrot.lane.b32.xlu0 %v3297, 24
    %v3320 = vpop.permute.xlu0 %3319
    %v3323 = vsel %vm1087, %v2881, %v3302
    %v3324 = vsel %vm1087, %v2907, %v3304
    %v3325 = vsel %vm1629, %v3323, %v3310
    %v3326 = vsel %vm1629, %v3324, %v3312
    %v3327 = vsel %vm1632, %v3325, %v3318
    %v3328 = vsel %vm1632, %v3326, %v3320
    %v3330 = vperm.slane %v2780, 0
    %v3333 = vsel %vm1049, %v3327, 0
    %v3336 = vsel %vm1049, %v3328, 0
    %3338 = vmatpush.msra.mxu0 0.0
    %3339 = vmatpush.msra.mxu0 0.0
    %3340 = vmatpush.msra.mxu0 0.0
    %3341 = vmatpush.msra.mxu0 0.0
    %3342 = vmatpush.msra.mxu0 0.0
    %3343 = vmatpush.msra.mxu0 0.0
    %3344 = vmatpush.msra.mxu0 0.0
    %3345 = vmatpush.msra.mxu0 0.0
    %3346 = vmatpush.msra.mxu0 0.0
    %3347 = vmatpush.msra.mxu0 0.0
    %3348 = vmatpush.msra.mxu0 0.0
    %3349 = vmatpush.msra.mxu0 0.0
    %3350 = vmatpush.msra.mxu0 %v2779
    %3351 = vmatpush.msra.mxu0 %v2778
    %3352 = vmatpush.msra.mxu0 %v2777
    %3353 = vmatpush.msra.mxu0 %v2776
    %3354 = vmatmul.f32.gmra.mxu0 %v3333
    %v3355 = vpop.f32.mrf.mxu0
    %v3356 = vadd.f32 %v3330, %v3355
    %3357 = vmatmul.f32.gmra.mxu0 %v3336
    %v3358 = vpop.f32.mrf.mxu0
    %v3359 = vadd.f32 %v3330, %v3358
    %3360 = vdwg.mxu0
    %v3361 = vadd.f32 %v1036, %v3356
    %v3362 = vadd.f32 %v1039, %v3359
    %v3363 = vld [vmem:[#allocation2] sm:$0x1]
    %v3364 = vld [vmem:[#allocation5] sm:$0x1]
    %v3365 = vsel %vm1049, %v3361, 0.0
    %3366 = vadd.xlane.f32.xlu0 %v3365
    %v3367 = vpop.xlane.xlu0 %3366
    %v3368 = vsel %vm1049, %v3362, 0.0
    %3369 = vadd.xlane.f32.xlu0 %v3368
    %v3370 = vpop.xlane.xlu0 %3369
    %v3371 = vmul.f32 %v3367, %v1683
    %v3372 = vmul.f32 %v3370, %v1683
    %v3373 = vsub.f32 %v3361, %v3371
    %v3374 = vsub.f32 %v3362, %v3372
    %v3375 = vmul.f32 %v3373, %v3373
    %v3376 = vmul.f32 %v3374, %v3374
    %v3377 = vsel %vm1049, %v3375, 0.0
    %3378 = vadd.xlane.f32.xlu0 %v3377
    %v3379 = vpop.xlane.xlu0 %3378
    %v3380 = vsel %vm1049, %v3376, 0.0
    %3381 = vadd.xlane.f32.xlu0 %v3380
    %v3382 = vpop.xlane.xlu0 %3381
    %v3383 = vmul.f32 %v3379, %v1683
    %v3384 = vmul.f32 %v3382, %v1683
    %v3385 = vadd.f32 %v3383, 1e-05
    %v3386 = vadd.f32 %v3384, 1e-05
    %v3387 = vrsqrt.pop %v3385
    %v3388 = vmul.f32 %v3387, %v3385
    %v3389 = vmul.f32 %v3388, %v3387
    %v3390 = vmul.f32 0.5, %v3389
    %v3391 = vsub.f32 1.5, %v3390
    %v3392 = vmul.f32 %v3387, %v3391
    %vm3393 = vweird.f32 %v3385
    %vm3394 = vweird.f32 %v3387
    %vm3395 = vmor %vm3393, %vm3394
    %v3396 = vsel %vm3395, %v3387, %v3392
    %v3397 = vrsqrt.pop %v3386
    %v3398 = vmul.f32 %v3397, %v3386
    %v3399 = vmul.f32 %v3398, %v3397
    %v3400 = vmul.f32 0.5, %v3399
    %v3401 = vsub.f32 1.5, %v3400
    %v3402 = vmul.f32 %v3397, %v3401
    %vm3403 = vweird.f32 %v3386
    %vm3404 = vweird.f32 %v3397
    %vm3405 = vmor %vm3403, %vm3404
    %v3406 = vsel %vm3405, %v3397, %v3402
    %v3407 = vmul.f32 %v3373, %v3396
    %v3408 = vmul.f32 %v3374, %v3406
    %v3410 = vperm.slane %v3363, 0
    %v3412 = vmul.f32 %v3407, %v3410
    %v3413 = vmul.f32 %v3408, %v3410
    %v3415 = vperm.slane %v3364, 0
    %v3417 = vadd.f32 %v3412, %v3415
    %v3418 = vadd.f32 %v3413, %v3415
    %v3419 = vld [vmem:[%s69] sm:$0xff]
    %v3420 = vld [vmem:[%s69 + $0x8] sm:$0xff]
    %v3421 = vld [vmem:[%s69 + $0x10] sm:$0xff]
    %v3422 = vld [vmem:[%s69 + $0x18] sm:$0xff]
    %v3423 = vld [vmem:[#allocation7] sm:$0x1]
    %v3425 = vperm.slane %v3423, 0
    %v3428 = vsel %vm1049, %v3417, 0
    %v3431 = vsel %vm1049, %v3418, 0
    %3433 = vmatpush.msra.mxu0 0.0
    %3434 = vmatpush.msra.mxu0 0.0
    %3435 = vmatpush.msra.mxu0 0.0
    %3436 = vmatpush.msra.mxu0 0.0
    %3437 = vmatpush.msra.mxu0 0.0
    %3438 = vmatpush.msra.mxu0 0.0
    %3439 = vmatpush.msra.mxu0 0.0
    %3440 = vmatpush.msra.mxu0 0.0
    %3441 = vmatpush.msra.mxu0 0.0
    %3442 = vmatpush.msra.mxu0 0.0
    %3443 = vmatpush.msra.mxu0 0.0
    %3444 = vmatpush.msra.mxu0 0.0
    %3445 = vmatpush.msra.mxu0 %v3422
    %3446 = vmatpush.msra.mxu0 %v3421
    %3447 = vmatpush.msra.mxu0 %v3420
    %3448 = vmatpush.msra.mxu0 %v3419
    %3449 = vmatmul.f32.gmra.mxu0 %v3428
    %v3450 = vpop.f32.mrf.mxu0
    %v3451 = vadd.f32 %v3425, %v3450
    %3452 = vmatmul.f32.gmra.mxu0 %v3431
    %v3453 = vpop.f32.mrf.mxu0
    %v3454 = vadd.f32 %v3425, %v3453
    %3455 = vdwg.mxu0
    %v3456 = vld [vmem:[%s73] sm:$0xff]
    %v3457 = vld [vmem:[%s73 + $0x8] sm:$0xff]
    %v3458 = vld [vmem:[%s73 + $0x10] sm:$0xff]
    %v3459 = vld [vmem:[%s73 + $0x18] sm:$0xff]
    %v3460 = vld [vmem:[#allocation8] sm:$0x1]
    %v3462 = vperm.slane %v3460, 0
    %v3465 = vsel %vm1049, %v2743, 0
    %v3468 = vsel %vm1049, %v2744, 0
    %3470 = vmatpush.msra.mxu0 0.0
    %3471 = vmatpush.msra.mxu0 0.0
    %3472 = vmatpush.msra.mxu0 0.0
    %3473 = vmatpush.msra.mxu0 0.0
    %3474 = vmatpush.msra.mxu0 0.0
    %3475 = vmatpush.msra.mxu0 0.0
    %3476 = vmatpush.msra.mxu0 0.0
    %3477 = vmatpush.msra.mxu0 0.0
    %3478 = vmatpush.msra.mxu0 0.0
    %3479 = vmatpush.msra.mxu0 0.0
    %3480 = vmatpush.msra.mxu0 0.0
    %3481 = vmatpush.msra.mxu0 0.0
    %3482 = vmatpush.msra.mxu0 %v3459
    %3483 = vmatpush.msra.mxu0 %v3458
    %3484 = vmatpush.msra.mxu0 %v3457
    %3485 = vmatpush.msra.mxu0 %v3456
    %3486 = vmatmul.f32.gmra.mxu0 %v3465
    %v3487 = vpop.f32.mrf.mxu0
    %v3488 = vadd.f32 %v3462, %v3487
    %3489 = vmatmul.f32.gmra.mxu0 %v3468
    %v3490 = vpop.f32.mrf.mxu0
    %v3491 = vadd.f32 %v3462, %v3490
    %3492 = vdwg.mxu0
    %v3493 = vld [vmem:[%s77] sm:$0xff]
    %v3494 = vld [vmem:[%s77 + $0x8] sm:$0xff]
    %v3495 = vld [vmem:[%s77 + $0x10] sm:$0xff]
    %v3496 = vld [vmem:[%s77 + $0x18] sm:$0xff]
    %v3497 = vld [vmem:[#allocation10] sm:$0x1]
    %v3499 = vsel %vm1087, %v3451, 0
    %v3502 = vsel %vm1087, %v3488, 0
    %3504 = vmatpush.xpose.msra.mxu0 0.0
    %3505 = vmatpush.xpose.msra.mxu0 0.0
    %3506 = vmatpush.xpose.msra.mxu0 0.0
    %3507 = vmatpush.xpose.msra.mxu0 0.0
    %3508 = vmatpush.xpose.msra.mxu0 0.0
    %3509 = vmatpush.xpose.msra.mxu0 0.0
    %3510 = vmatpush.xpose.msra.mxu0 0.0
    %3511 = vmatpush.xpose.msra.mxu0 0.0
    %3512 = vmatpush.xpose.msra.mxu0 0.0
    %3513 = vmatpush.xpose.msra.mxu0 0.0
    %3514 = vmatpush.xpose.msra.mxu0 0.0
    %3515 = vmatpush.xpose.msra.mxu0 0.0
    %3516 = vmatpush.xpose.msra.mxu0 0.0
    %3517 = vmatpush.xpose.msra.mxu0 0.0
    %3518 = vmatpush.xpose.msra.mxu0 0.0
    %3519 = vmatpush.xpose.msra.mxu0 %v3502
    %3520 = vmatmul.f32.gmra.mxu0 %v3499
    %v3521 = vpop.f32.mrf.mxu0
    %v3522 = vadd.f32 0.0, %v3521
    %3523 = vdwg.mxu0
    %v3525 = vsel %vm1087, %v3454, 0
    %v3528 = vsel %vm1087, %v3491, 0
    %3530 = vmatpush.xpose.msra.mxu0 0.0
    %3531 = vmatpush.xpose.msra.mxu0 0.0
    %3532 = vmatpush.xpose.msra.mxu0 0.0
    %3533 = vmatpush.xpose.msra.mxu0 0.0
    %3534 = vmatpush.xpose.msra.mxu0 0.0
    %3535 = vmatpush.xpose.msra.mxu0 0.0
    %3536 = vmatpush.xpose.msra.mxu0 0.0
    %3537 = vmatpush.xpose.msra.mxu0 0.0
    %3538 = vmatpush.xpose.msra.mxu0 0.0
    %3539 = vmatpush.xpose.msra.mxu0 0.0
    %3540 = vmatpush.xpose.msra.mxu0 0.0
    %3541 = vmatpush.xpose.msra.mxu0 0.0
    %3542 = vmatpush.xpose.msra.mxu0 0.0
    %3543 = vmatpush.xpose.msra.mxu0 0.0
    %3544 = vmatpush.xpose.msra.mxu0 0.0
    %3545 = vmatpush.xpose.msra.mxu0 %v3528
    %3546 = vmatmul.f32.gmra.mxu0 %v3525
    %v3547 = vpop.f32.mrf.mxu0
    %v3548 = vadd.f32 0.0, %v3547
    %3549 = vdwg.mxu0
    %v3550 = vsel %vm1087, %v3522, -inf
    %3551 = vmax.xlane.f32.xlu0 %v3550
    %v3552 = vpop.xlane.xlu0 %3551
    %v3553 = vsel %vm1087, %v3548, -inf
    %3554 = vmax.xlane.f32.xlu0 %v3553
    %v3555 = vpop.xlane.xlu0 %3554
    %v3556 = vsub.f32 %v3522, %v3552
    %v3557 = vsub.f32 %v3548, %v3555
    %v3558 = vmul.f32 %v3556, 1.442695
    %v3559 = vpow.pop %v3558
    %v3560 = vmul.f32 %v3557, 1.442695
    %v3561 = vpow.pop %v3560
    %v3562 = vsel %vm1087, %v3559, 0.0
    %3563 = vadd.xlane.f32.xlu0 %v3562
    %v3564 = vpop.xlane.xlu0 %3563
    %v3565 = vsel %vm1087, %v3561, 0.0
    %3566 = vadd.xlane.f32.xlu0 %v3565
    %v3567 = vpop.xlane.xlu0 %3566
    %v3568 = vrcp.pop %v3564
    %v3569 = vrcp.pop %v3567
    %v3570 = vmul.f32 %v3559, %v3568
    %v3571 = vmul.f32 %v3561, %v3569
    %3572 = vrot.lane.b32.xlu0 %v3488, 96
    %v3573 = vpop.permute.xlu0 %3572
    %v3576 = vsel %vm1087, %v3570, 0
    %3578 = vmatpush.msra.mxu0 0.0
    %3579 = vmatpush.msra.mxu0 0.0
    %3580 = vmatpush.msra.mxu0 0.0
    %3581 = vmatpush.msra.mxu0 0.0
    %3582 = vmatpush.msra.mxu0 0.0
    %3583 = vmatpush.msra.mxu0 0.0
    %3584 = vmatpush.msra.mxu0 0.0
    %3585 = vmatpush.msra.mxu0 0.0
    %3586 = vmatpush.msra.mxu0 0.0
    %3587 = vmatpush.msra.mxu0 0.0
    %3588 = vmatpush.msra.mxu0 0.0
    %3589 = vmatpush.msra.mxu0 0.0
    %3590 = vmatpush.msra.mxu0 0.0
    %3591 = vmatpush.msra.mxu0 0.0
    %3592 = vmatpush.msra.mxu0 0.0
    %3593 = vmatpush.msra.mxu0 %v3573
    %3594 = vmatmul.f32.gmra.mxu0 %v3576
    %v3595 = vpop.f32.mrf.mxu0
    %v3596 = vadd.f32 0.0, %v3595
    %3597 = vdwg.mxu0
    %3598 = vrot.lane.b32.xlu0 %v3491, 96
    %v3599 = vpop.permute.xlu0 %3598
    %v3602 = vsel %vm1087, %v3571, 0
    %3604 = vmatpush.msra.mxu0 0.0
    %3605 = vmatpush.msra.mxu0 0.0
    %3606 = vmatpush.msra.mxu0 0.0
    %3607 = vmatpush.msra.mxu0 0.0
    %3608 = vmatpush.msra.mxu0 0.0
    %3609 = vmatpush.msra.mxu0 0.0
    %3610 = vmatpush.msra.mxu0 0.0
    %3611 = vmatpush.msra.mxu0 0.0
    %3612 = vmatpush.msra.mxu0 0.0
    %3613 = vmatpush.msra.mxu0 0.0
    %3614 = vmatpush.msra.mxu0 0.0
    %3615 = vmatpush.msra.mxu0 0.0
    %3616 = vmatpush.msra.mxu0 0.0
    %3617 = vmatpush.msra.mxu0 0.0
    %3618 = vmatpush.msra.mxu0 0.0
    %3619 = vmatpush.msra.mxu0 %v3599
    %3620 = vmatmul.f32.gmra.mxu0 %v3602
    %v3621 = vpop.f32.mrf.mxu0
    %v3622 = vadd.f32 0.0, %v3621
    %3623 = vdwg.mxu0
    %3624 = vrot.lane.b32.xlu0 %v3451, 120
    %v3625 = vpop.permute.xlu0 %3624
    %3626 = vrot.lane.b32.xlu0 %v3488, 120
    %v3627 = vpop.permute.xlu0 %3626
    %v3628 = vsel %vm1087, %v3625, 0
    %v3630 = vsel %vm1087, %v3627, 0
    %3632 = vmatpush.xpose.msra.mxu0 0.0
    %3633 = vmatpush.xpose.msra.mxu0 0.0
    %3634 = vmatpush.xpose.msra.mxu0 0.0
    %3635 = vmatpush.xpose.msra.mxu0 0.0
    %3636 = vmatpush.xpose.msra.mxu0 0.0
    %3637 = vmatpush.xpose.msra.mxu0 0.0
    %3638 = vmatpush.xpose.msra.mxu0 0.0
    %3639 = vmatpush.xpose.msra.mxu0 0.0
    %3640 = vmatpush.xpose.msra.mxu0 0.0
    %3641 = vmatpush.xpose.msra.mxu0 0.0
    %3642 = vmatpush.xpose.msra.mxu0 0.0
    %3643 = vmatpush.xpose.msra.mxu0 0.0
    %3644 = vmatpush.xpose.msra.mxu0 0.0
    %3645 = vmatpush.xpose.msra.mxu0 0.0
    %3646 = vmatpush.xpose.msra.mxu0 0.0
    %3647 = vmatpush.xpose.msra.mxu0 %v3630
    %3648 = vmatmul.f32.gmra.mxu0 %v3628
    %v3649 = vpop.f32.mrf.mxu0
    %v3650 = vadd.f32 0.0, %v3649
    %3651 = vdwg.mxu0
    %3652 = vrot.lane.b32.xlu0 %v3454, 120
    %v3653 = vpop.permute.xlu0 %3652
    %3654 = vrot.lane.b32.xlu0 %v3491, 120
    %v3655 = vpop.permute.xlu0 %3654
    %v3656 = vsel %vm1087, %v3653, 0
    %v3658 = vsel %vm1087, %v3655, 0
    %3660 = vmatpush.xpose.msra.mxu0 0.0
    %3661 = vmatpush.xpose.msra.mxu0 0.0
    %3662 = vmatpush.xpose.msra.mxu0 0.0
    %3663 = vmatpush.xpose.msra.mxu0 0.0
    %3664 = vmatpush.xpose.msra.mxu0 0.0
    %3665 = vmatpush.xpose.msra.mxu0 0.0
    %3666 = vmatpush.xpose.msra.mxu0 0.0
    %3667 = vmatpush.xpose.msra.mxu0 0.0
    %3668 = vmatpush.xpose.msra.mxu0 0.0
    %3669 = vmatpush.xpose.msra.mxu0 0.0
    %3670 = vmatpush.xpose.msra.mxu0 0.0
    %3671 = vmatpush.xpose.msra.mxu0 0.0
    %3672 = vmatpush.xpose.msra.mxu0 0.0
    %3673 = vmatpush.xpose.msra.mxu0 0.0
    %3674 = vmatpush.xpose.msra.mxu0 0.0
    %3675 = vmatpush.xpose.msra.mxu0 %v3658
    %3676 = vmatmul.f32.gmra.mxu0 %v3656
    %v3677 = vpop.f32.mrf.mxu0
    %v3678 = vadd.f32 0.0, %v3677
    %3679 = vdwg.mxu0
    %v3680 = vsel %vm1087, %v3650, -inf
    %3681 = vmax.xlane.f32.xlu0 %v3680
    %v3682 = vpop.xlane.xlu0 %3681
    %v3683 = vsel %vm1087, %v3678, -inf
    %3684 = vmax.xlane.f32.xlu0 %v3683
    %v3685 = vpop.xlane.xlu0 %3684
    %v3686 = vsub.f32 %v3650, %v3682
    %v3687 = vsub.f32 %v3678, %v3685
    %v3688 = vmul.f32 %v3686, 1.442695
    %v3689 = vpow.pop %v3688
    %v3690 = vmul.f32 %v3687, 1.442695
    %v3691 = vpow.pop %v3690
    %v3692 = vsel %vm1087, %v3689, 0.0
    %3693 = vadd.xlane.f32.xlu0 %v3692
    %v3694 = vpop.xlane.xlu0 %3693
    %v3695 = vsel %vm1087, %v3691, 0.0
    %3696 = vadd.xlane.f32.xlu0 %v3695
    %v3697 = vpop.xlane.xlu0 %3696
    %v3698 = vrcp.pop %v3694
    %v3699 = vrcp.pop %v3697
    %v3700 = vmul.f32 %v3689, %v3698
    %v3701 = vmul.f32 %v3691, %v3699
    %3702 = vrot.lane.b32.xlu0 %v3488, 88
    %v3703 = vpop.permute.xlu0 %3702
    %v3706 = vsel %vm1087, %v3700, 0
    %3708 = vmatpush.msra.mxu0 0.0
    %3709 = vmatpush.msra.mxu0 0.0
    %3710 = vmatpush.msra.mxu0 0.0
    %3711 = vmatpush.msra.mxu0 0.0
    %3712 = vmatpush.msra.mxu0 0.0
    %3713 = vmatpush.msra.mxu0 0.0
    %3714 = vmatpush.msra.mxu0 0.0
    %3715 = vmatpush.msra.mxu0 0.0
    %3716 = vmatpush.msra.mxu0 0.0
    %3717 = vmatpush.msra.mxu0 0.0
    %3718 = vmatpush.msra.mxu0 0.0
    %3719 = vmatpush.msra.mxu0 0.0
    %3720 = vmatpush.msra.mxu0 0.0
    %3721 = vmatpush.msra.mxu0 0.0
    %3722 = vmatpush.msra.mxu0 0.0
    %3723 = vmatpush.msra.mxu0 %v3703
    %3724 = vmatmul.f32.gmra.mxu0 %v3706
    %v3725 = vpop.f32.mrf.mxu0
    %v3726 = vadd.f32 0.0, %v3725
    %3727 = vdwg.mxu0
    %3728 = vrot.lane.b32.xlu0 %v3491, 88
    %v3729 = vpop.permute.xlu0 %3728
    %v3732 = vsel %vm1087, %v3701, 0
    %3734 = vmatpush.msra.mxu0 0.0
    %3735 = vmatpush.msra.mxu0 0.0
    %3736 = vmatpush.msra.mxu0 0.0
    %3737 = vmatpush.msra.mxu0 0.0
    %3738 = vmatpush.msra.mxu0 0.0
    %3739 = vmatpush.msra.mxu0 0.0
    %3740 = vmatpush.msra.mxu0 0.0
    %3741 = vmatpush.msra.mxu0 0.0
    %3742 = vmatpush.msra.mxu0 0.0
    %3743 = vmatpush.msra.mxu0 0.0
    %3744 = vmatpush.msra.mxu0 0.0
    %3745 = vmatpush.msra.mxu0 0.0
    %3746 = vmatpush.msra.mxu0 0.0
    %3747 = vmatpush.msra.mxu0 0.0
    %3748 = vmatpush.msra.mxu0 0.0
    %3749 = vmatpush.msra.mxu0 %v3729
    %3750 = vmatmul.f32.gmra.mxu0 %v3732
    %v3751 = vpop.f32.mrf.mxu0
    %v3752 = vadd.f32 0.0, %v3751
    %3753 = vdwg.mxu0
    %3754 = vrot.lane.b32.xlu0 %v3451, 112
    %v3755 = vpop.permute.xlu0 %3754
    %3756 = vrot.lane.b32.xlu0 %v3488, 112
    %v3757 = vpop.permute.xlu0 %3756
    %v3758 = vsel %vm1087, %v3755, 0
    %v3760 = vsel %vm1087, %v3757, 0
    %3762 = vmatpush.xpose.msra.mxu0 0.0
    %3763 = vmatpush.xpose.msra.mxu0 0.0
    %3764 = vmatpush.xpose.msra.mxu0 0.0
    %3765 = vmatpush.xpose.msra.mxu0 0.0
    %3766 = vmatpush.xpose.msra.mxu0 0.0
    %3767 = vmatpush.xpose.msra.mxu0 0.0
    %3768 = vmatpush.xpose.msra.mxu0 0.0
    %3769 = vmatpush.xpose.msra.mxu0 0.0
    %3770 = vmatpush.xpose.msra.mxu0 0.0
    %3771 = vmatpush.xpose.msra.mxu0 0.0
    %3772 = vmatpush.xpose.msra.mxu0 0.0
    %3773 = vmatpush.xpose.msra.mxu0 0.0
    %3774 = vmatpush.xpose.msra.mxu0 0.0
    %3775 = vmatpush.xpose.msra.mxu0 0.0
    %3776 = vmatpush.xpose.msra.mxu0 0.0
    %3777 = vmatpush.xpose.msra.mxu0 %v3760
    %3778 = vmatmul.f32.gmra.mxu0 %v3758
    %v3779 = vpop.f32.mrf.mxu0
    %v3780 = vadd.f32 0.0, %v3779
    %3781 = vdwg.mxu0
    %3782 = vrot.lane.b32.xlu0 %v3454, 112
    %v3783 = vpop.permute.xlu0 %3782
    %3784 = vrot.lane.b32.xlu0 %v3491, 112
    %v3785 = vpop.permute.xlu0 %3784
    %v3786 = vsel %vm1087, %v3783, 0
    %v3788 = vsel %vm1087, %v3785, 0
    %3790 = vmatpush.xpose.msra.mxu0 0.0
    %3791 = vmatpush.xpose.msra.mxu0 0.0
    %3792 = vmatpush.xpose.msra.mxu0 0.0
    %3793 = vmatpush.xpose.msra.mxu0 0.0
    %3794 = vmatpush.xpose.msra.mxu0 0.0
    %3795 = vmatpush.xpose.msra.mxu0 0.0
    %3796 = vmatpush.xpose.msra.mxu0 0.0
    %3797 = vmatpush.xpose.msra.mxu0 0.0
    %3798 = vmatpush.xpose.msra.mxu0 0.0
    %3799 = vmatpush.xpose.msra.mxu0 0.0
    %3800 = vmatpush.xpose.msra.mxu0 0.0
    %3801 = vmatpush.xpose.msra.mxu0 0.0
    %3802 = vmatpush.xpose.msra.mxu0 0.0
    %3803 = vmatpush.xpose.msra.mxu0 0.0
    %3804 = vmatpush.xpose.msra.mxu0 0.0
    %3805 = vmatpush.xpose.msra.mxu0 %v3788
    %3806 = vmatmul.f32.gmra.mxu0 %v3786
    %v3807 = vpop.f32.mrf.mxu0
    %v3808 = vadd.f32 0.0, %v3807
    %3809 = vdwg.mxu0
    %v3810 = vsel %vm1087, %v3780, -inf
    %3811 = vmax.xlane.f32.xlu0 %v3810
    %v3812 = vpop.xlane.xlu0 %3811
    %v3813 = vsel %vm1087, %v3808, -inf
    %3814 = vmax.xlane.f32.xlu0 %v3813
    %v3815 = vpop.xlane.xlu0 %3814
    %v3816 = vsub.f32 %v3780, %v3812
    %v3817 = vsub.f32 %v3808, %v3815
    %v3818 = vmul.f32 %v3816, 1.442695
    %v3819 = vpow.pop %v3818
    %v3820 = vmul.f32 %v3817, 1.442695
    %v3821 = vpow.pop %v3820
    %v3822 = vsel %vm1087, %v3819, 0.0
    %3823 = vadd.xlane.f32.xlu0 %v3822
    %v3824 = vpop.xlane.xlu0 %3823
    %v3825 = vsel %vm1087, %v3821, 0.0
    %3826 = vadd.xlane.f32.xlu0 %v3825
    %v3827 = vpop.xlane.xlu0 %3826
    %v3828 = vrcp.pop %v3824
    %v3829 = vrcp.pop %v3827
    %v3830 = vmul.f32 %v3819, %v3828
    %v3831 = vmul.f32 %v3821, %v3829
    %3832 = vrot.lane.b32.xlu0 %v3488, 80
    %v3833 = vpop.permute.xlu0 %3832
    %v3836 = vsel %vm1087, %v3830, 0
    %3838 = vmatpush.msra.mxu0 0.0
    %3839 = vmatpush.msra.mxu0 0.0
    %3840 = vmatpush.msra.mxu0 0.0
    %3841 = vmatpush.msra.mxu0 0.0
    %3842 = vmatpush.msra.mxu0 0.0
    %3843 = vmatpush.msra.mxu0 0.0
    %3844 = vmatpush.msra.mxu0 0.0
    %3845 = vmatpush.msra.mxu0 0.0
    %3846 = vmatpush.msra.mxu0 0.0
    %3847 = vmatpush.msra.mxu0 0.0
    %3848 = vmatpush.msra.mxu0 0.0
    %3849 = vmatpush.msra.mxu0 0.0
    %3850 = vmatpush.msra.mxu0 0.0
    %3851 = vmatpush.msra.mxu0 0.0
    %3852 = vmatpush.msra.mxu0 0.0
    %3853 = vmatpush.msra.mxu0 %v3833
    %3854 = vmatmul.f32.gmra.mxu0 %v3836
    %v3855 = vpop.f32.mrf.mxu0
    %v3856 = vadd.f32 0.0, %v3855
    %3857 = vdwg.mxu0
    %3858 = vrot.lane.b32.xlu0 %v3491, 80
    %v3859 = vpop.permute.xlu0 %3858
    %v3862 = vsel %vm1087, %v3831, 0
    %3864 = vmatpush.msra.mxu0 0.0
    %3865 = vmatpush.msra.mxu0 0.0
    %3866 = vmatpush.msra.mxu0 0.0
    %3867 = vmatpush.msra.mxu0 0.0
    %3868 = vmatpush.msra.mxu0 0.0
    %3869 = vmatpush.msra.mxu0 0.0
    %3870 = vmatpush.msra.mxu0 0.0
    %3871 = vmatpush.msra.mxu0 0.0
    %3872 = vmatpush.msra.mxu0 0.0
    %3873 = vmatpush.msra.mxu0 0.0
    %3874 = vmatpush.msra.mxu0 0.0
    %3875 = vmatpush.msra.mxu0 0.0
    %3876 = vmatpush.msra.mxu0 0.0
    %3877 = vmatpush.msra.mxu0 0.0
    %3878 = vmatpush.msra.mxu0 0.0
    %3879 = vmatpush.msra.mxu0 %v3859
    %3880 = vmatmul.f32.gmra.mxu0 %v3862
    %v3881 = vpop.f32.mrf.mxu0
    %v3882 = vadd.f32 0.0, %v3881
    %3883 = vdwg.mxu0
    %3884 = vrot.lane.b32.xlu0 %v3451, 104
    %v3885 = vpop.permute.xlu0 %3884
    %3886 = vrot.lane.b32.xlu0 %v3488, 104
    %v3887 = vpop.permute.xlu0 %3886
    %v3888 = vsel %vm1087, %v3885, 0
    %v3890 = vsel %vm1087, %v3887, 0
    %3892 = vmatpush.xpose.msra.mxu0 0.0
    %3893 = vmatpush.xpose.msra.mxu0 0.0
    %3894 = vmatpush.xpose.msra.mxu0 0.0
    %3895 = vmatpush.xpose.msra.mxu0 0.0
    %3896 = vmatpush.xpose.msra.mxu0 0.0
    %3897 = vmatpush.xpose.msra.mxu0 0.0
    %3898 = vmatpush.xpose.msra.mxu0 0.0
    %3899 = vmatpush.xpose.msra.mxu0 0.0
    %3900 = vmatpush.xpose.msra.mxu0 0.0
    %3901 = vmatpush.xpose.msra.mxu0 0.0
    %3902 = vmatpush.xpose.msra.mxu0 0.0
    %3903 = vmatpush.xpose.msra.mxu0 0.0
    %3904 = vmatpush.xpose.msra.mxu0 0.0
    %3905 = vmatpush.xpose.msra.mxu0 0.0
    %3906 = vmatpush.xpose.msra.mxu0 0.0
    %3907 = vmatpush.xpose.msra.mxu0 %v3890
    %3908 = vmatmul.f32.gmra.mxu0 %v3888
    %v3909 = vpop.f32.mrf.mxu0
    %v3910 = vadd.f32 0.0, %v3909
    %3911 = vdwg.mxu0
    %3912 = vrot.lane.b32.xlu0 %v3454, 104
    %v3913 = vpop.permute.xlu0 %3912
    %3914 = vrot.lane.b32.xlu0 %v3491, 104
    %v3915 = vpop.permute.xlu0 %3914
    %v3916 = vsel %vm1087, %v3913, 0
    %v3918 = vsel %vm1087, %v3915, 0
    %3920 = vmatpush.xpose.msra.mxu0 0.0
    %3921 = vmatpush.xpose.msra.mxu0 0.0
    %3922 = vmatpush.xpose.msra.mxu0 0.0
    %3923 = vmatpush.xpose.msra.mxu0 0.0
    %3924 = vmatpush.xpose.msra.mxu0 0.0
    %3925 = vmatpush.xpose.msra.mxu0 0.0
    %3926 = vmatpush.xpose.msra.mxu0 0.0
    %3927 = vmatpush.xpose.msra.mxu0 0.0
    %3928 = vmatpush.xpose.msra.mxu0 0.0
    %3929 = vmatpush.xpose.msra.mxu0 0.0
    %3930 = vmatpush.xpose.msra.mxu0 0.0
    %3931 = vmatpush.xpose.msra.mxu0 0.0
    %3932 = vmatpush.xpose.msra.mxu0 0.0
    %3933 = vmatpush.xpose.msra.mxu0 0.0
    %3934 = vmatpush.xpose.msra.mxu0 0.0
    %3935 = vmatpush.xpose.msra.mxu0 %v3918
    %3936 = vmatmul.f32.gmra.mxu0 %v3916
    %v3937 = vpop.f32.mrf.mxu0
    %v3938 = vadd.f32 0.0, %v3937
    %3939 = vdwg.mxu0
    %v3940 = vsel %vm1087, %v3910, -inf
    %3941 = vmax.xlane.f32.xlu0 %v3940
    %v3942 = vpop.xlane.xlu0 %3941
    %v3943 = vsel %vm1087, %v3938, -inf
    %3944 = vmax.xlane.f32.xlu0 %v3943
    %v3945 = vpop.xlane.xlu0 %3944
    %v3946 = vsub.f32 %v3910, %v3942
    %v3947 = vsub.f32 %v3938, %v3945
    %v3948 = vmul.f32 %v3946, 1.442695
    %v3949 = vpow.pop %v3948
    %v3950 = vmul.f32 %v3947, 1.442695
    %v3951 = vpow.pop %v3950
    %v3952 = vsel %vm1087, %v3949, 0.0
    %3953 = vadd.xlane.f32.xlu0 %v3952
    %v3954 = vpop.xlane.xlu0 %3953
    %v3955 = vsel %vm1087, %v3951, 0.0
    %3956 = vadd.xlane.f32.xlu0 %v3955
    %v3957 = vpop.xlane.xlu0 %3956
    %v3958 = vrcp.pop %v3954
    %v3959 = vrcp.pop %v3957
    %v3960 = vmul.f32 %v3949, %v3958
    %v3961 = vmul.f32 %v3951, %v3959
    %3962 = vrot.lane.b32.xlu0 %v3488, 72
    %v3963 = vpop.permute.xlu0 %3962
    %v3966 = vsel %vm1087, %v3960, 0
    %3968 = vmatpush.msra.mxu0 0.0
    %3969 = vmatpush.msra.mxu0 0.0
    %3970 = vmatpush.msra.mxu0 0.0
    %3971 = vmatpush.msra.mxu0 0.0
    %3972 = vmatpush.msra.mxu0 0.0
    %3973 = vmatpush.msra.mxu0 0.0
    %3974 = vmatpush.msra.mxu0 0.0
    %3975 = vmatpush.msra.mxu0 0.0
    %3976 = vmatpush.msra.mxu0 0.0
    %3977 = vmatpush.msra.mxu0 0.0
    %3978 = vmatpush.msra.mxu0 0.0
    %3979 = vmatpush.msra.mxu0 0.0
    %3980 = vmatpush.msra.mxu0 0.0
    %3981 = vmatpush.msra.mxu0 0.0
    %3982 = vmatpush.msra.mxu0 0.0
    %3983 = vmatpush.msra.mxu0 %v3963
    %3984 = vmatmul.f32.gmra.mxu0 %v3966
    %v3985 = vpop.f32.mrf.mxu0
    %v3986 = vadd.f32 0.0, %v3985
    %3987 = vdwg.mxu0
    %3988 = vrot.lane.b32.xlu0 %v3491, 72
    %v3989 = vpop.permute.xlu0 %3988
    %v3992 = vsel %vm1087, %v3961, 0
    %3994 = vmatpush.msra.mxu0 0.0
    %3995 = vmatpush.msra.mxu0 0.0
    %3996 = vmatpush.msra.mxu0 0.0
    %3997 = vmatpush.msra.mxu0 0.0
    %3998 = vmatpush.msra.mxu0 0.0
    %3999 = vmatpush.msra.mxu0 0.0
    %4000 = vmatpush.msra.mxu0 0.0
    %4001 = vmatpush.msra.mxu0 0.0
    %4002 = vmatpush.msra.mxu0 0.0
    %4003 = vmatpush.msra.mxu0 0.0
    %4004 = vmatpush.msra.mxu0 0.0
    %4005 = vmatpush.msra.mxu0 0.0
    %4006 = vmatpush.msra.mxu0 0.0
    %4007 = vmatpush.msra.mxu0 0.0
    %4008 = vmatpush.msra.mxu0 0.0
    %4009 = vmatpush.msra.mxu0 %v3989
    %4010 = vmatmul.f32.gmra.mxu0 %v3992
    %v4011 = vpop.f32.mrf.mxu0
    %v4012 = vadd.f32 0.0, %v4011
    %4013 = vdwg.mxu0
    %4016 = vrot.lane.b32.xlu0 %v3726, 8
    %v4017 = vpop.permute.xlu0 %4016
    %4018 = vrot.lane.b32.xlu0 %v3752, 8
    %v4019 = vpop.permute.xlu0 %4018
    %4024 = vrot.lane.b32.xlu0 %v3856, 16
    %v4025 = vpop.permute.xlu0 %4024
    %4026 = vrot.lane.b32.xlu0 %v3882, 16
    %v4027 = vpop.permute.xlu0 %4026
    %4032 = vrot.lane.b32.xlu0 %v3986, 24
    %v4033 = vpop.permute.xlu0 %4032
    %4034 = vrot.lane.b32.xlu0 %v4012, 24
    %v4035 = vpop.permute.xlu0 %4034
    %v4038 = vsel %vm1087, %v3596, %v4017
    %v4039 = vsel %vm1087, %v3622, %v4019
    %v4040 = vsel %vm1629, %v4038, %v4025
    %v4041 = vsel %vm1629, %v4039, %v4027
    %v4042 = vsel %vm1632, %v4040, %v4033
    %v4043 = vsel %vm1632, %v4041, %v4035
    %v4045 = vperm.slane %v3497, 0
    %v4048 = vsel %vm1049, %v4042, 0
    %v4051 = vsel %vm1049, %v4043, 0
    %4053 = vmatpush.msra.mxu0 0.0
    %4054 = vmatpush.msra.mxu0 0.0
    %4055 = vmatpush.msra.mxu0 0.0
    %4056 = vmatpush.msra.mxu0 0.0
    %4057 = vmatpush.msra.mxu0 0.0
    %4058 = vmatpush.msra.mxu0 0.0
    %4059 = vmatpush.msra.mxu0 0.0
    %4060 = vmatpush.msra.mxu0 0.0
    %4061 = vmatpush.msra.mxu0 0.0
    %4062 = vmatpush.msra.mxu0 0.0
    %4063 = vmatpush.msra.mxu0 0.0
    %4064 = vmatpush.msra.mxu0 0.0
    %4065 = vmatpush.msra.mxu0 %v3496
    %4066 = vmatpush.msra.mxu0 %v3495
    %4067 = vmatpush.msra.mxu0 %v3494
    %4068 = vmatpush.msra.mxu0 %v3493
    %4069 = vmatmul.f32.gmra.mxu0 %v4048
    %v4070 = vpop.f32.mrf.mxu0
    %v4071 = vadd.f32 %v4045, %v4070
    %4072 = vmatmul.f32.gmra.mxu0 %v4051
    %v4073 = vpop.f32.mrf.mxu0
    %v4074 = vadd.f32 %v4045, %v4073
    %4075 = vdwg.mxu0
    %v4076 = vadd.f32 %v3417, %v4071
    %v4077 = vadd.f32 %v3418, %v4074
    %v4078 = vld [vmem:[#allocation11] sm:$0x1]
    %v4079 = vld [vmem:[#allocation13] sm:$0x1]
    %v4080 = vsel %vm1049, %v4076, 0.0
    %4081 = vadd.xlane.f32.xlu0 %v4080
    %v4082 = vpop.xlane.xlu0 %4081
    %v4083 = vsel %vm1049, %v4077, 0.0
    %4084 = vadd.xlane.f32.xlu0 %v4083
    %v4085 = vpop.xlane.xlu0 %4084
    %v4086 = vmul.f32 %v4082, %v1683
    %v4087 = vmul.f32 %v4085, %v1683
    %v4088 = vsub.f32 %v4076, %v4086
    %v4089 = vsub.f32 %v4077, %v4087
    %v4090 = vmul.f32 %v4088, %v4088
    %v4091 = vmul.f32 %v4089, %v4089
    %v4092 = vsel %vm1049, %v4090, 0.0
    %4093 = vadd.xlane.f32.xlu0 %v4092
    %v4094 = vpop.xlane.xlu0 %4093
    %v4095 = vsel %vm1049, %v4091, 0.0
    %4096 = vadd.xlane.f32.xlu0 %v4095
    %v4097 = vpop.xlane.xlu0 %4096
    %v4098 = vmul.f32 %v4094, %v1683
    %v4099 = vmul.f32 %v4097, %v1683
    %v4100 = vadd.f32 %v4098, 1e-05
    %v4101 = vadd.f32 %v4099, 1e-05
    %v4102 = vrsqrt.pop %v4100
    %v4103 = vmul.f32 %v4102, %v4100
    %v4104 = vmul.f32 %v4103, %v4102
    %v4105 = vmul.f32 0.5, %v4104
    %v4106 = vsub.f32 1.5, %v4105
    %v4107 = vmul.f32 %v4102, %v4106
    %vm4108 = vweird.f32 %v4100
    %vm4109 = vweird.f32 %v4102
    %vm4110 = vmor %vm4108, %vm4109
    %v4111 = vsel %vm4110, %v4102, %v4107
    %v4112 = vrsqrt.pop %v4101
    %v4113 = vmul.f32 %v4112, %v4101
    %v4114 = vmul.f32 %v4113, %v4112
    %v4115 = vmul.f32 0.5, %v4114
    %v4116 = vsub.f32 1.5, %v4115
    %v4117 = vmul.f32 %v4112, %v4116
    %vm4118 = vweird.f32 %v4101
    %vm4119 = vweird.f32 %v4112
    %vm4120 = vmor %vm4118, %vm4119
    %v4121 = vsel %vm4120, %v4112, %v4117
    %v4122 = vmul.f32 %v4088, %v4111
    %v4123 = vmul.f32 %v4089, %v4121
    %v4125 = vperm.slane %v4078, 0
    %v4127 = vmul.f32 %v4122, %v4125
    %v4128 = vmul.f32 %v4123, %v4125
    %v4130 = vperm.slane %v4079, 0
    %v4132 = vadd.f32 %v4127, %v4130
    %v4133 = vadd.f32 %v4128, %v4130
    %v4134 = vld [vmem:[%s85] sm:$0xff]
    %v4135 = vld [vmem:[%s85 + $0x8] sm:$0xff]
    %v4136 = vld [vmem:[%s85 + $0x10] sm:$0xff]
    %v4137 = vld [vmem:[%s85 + $0x18] sm:$0xff]
    %v4138 = vld [vmem:[#allocation14] sm:$0x1]
    %v4140 = vperm.slane %v4138, 0
    %v4143 = vsel %vm1049, %v4132, 0
    %v4146 = vsel %vm1049, %v4133, 0
    %4148 = vmatpush.msra.mxu0 0.0
    %4149 = vmatpush.msra.mxu0 0.0
    %4150 = vmatpush.msra.mxu0 0.0
    %4151 = vmatpush.msra.mxu0 0.0
    %4152 = vmatpush.msra.mxu0 0.0
    %4153 = vmatpush.msra.mxu0 0.0
    %4154 = vmatpush.msra.mxu0 0.0
    %4155 = vmatpush.msra.mxu0 0.0
    %4156 = vmatpush.msra.mxu0 0.0
    %4157 = vmatpush.msra.mxu0 0.0
    %4158 = vmatpush.msra.mxu0 0.0
    %4159 = vmatpush.msra.mxu0 0.0
    %4160 = vmatpush.msra.mxu0 %v4137
    %4161 = vmatpush.msra.mxu0 %v4136
    %4162 = vmatpush.msra.mxu0 %v4135
    %4163 = vmatpush.msra.mxu0 %v4134
    %4164 = vmatmul.f32.gmra.mxu0 %v4143
    %v4165 = vpop.f32.mrf.mxu0
    %v4166 = vadd.f32 %v4140, %v4165
    %4167 = vmatmul.f32.gmra.mxu0 %v4146
    %v4168 = vpop.f32.mrf.mxu0
    %v4169 = vadd.f32 %v4140, %v4168
    %4170 = vdwg.mxu0
    %v4171 = vmax.f32 %v4166, 0.0
    %v4172 = vmax.f32 %v4169, 0.0
    %v4173 = vld [vmem:[%s89] sm:$0xff]
    %v4174 = vld [vmem:[%s89 + $0x8] sm:$0xff]
    %v4175 = vld [vmem:[%s89 + $0x10] sm:$0xff]
    %v4176 = vld [vmem:[%s89 + $0x18] sm:$0xff]
    %v4177 = vld [vmem:[%s89 + $0x20] sm:$0xff]
    %v4178 = vld [vmem:[%s89 + $0x28] sm:$0xff]
    %v4179 = vld [vmem:[%s89 + $0x30] sm:$0xff]
    %v4180 = vld [vmem:[%s89 + $0x38] sm:$0xff]
    %v4181 = vld [vmem:[#allocation16] sm:$0x1]
    %v4183 = vperm.slane %v4181, 0
    %v4186 = vsel %vm1783, %v4171, 0
    %v4189 = vsel %vm1783, %v4172, 0
    %4191 = vmatpush.msra.mxu0 0.0
    %4192 = vmatpush.msra.mxu0 0.0
    %4193 = vmatpush.msra.mxu0 0.0
    %4194 = vmatpush.msra.mxu0 0.0
    %4195 = vmatpush.msra.mxu0 0.0
    %4196 = vmatpush.msra.mxu0 0.0
    %4197 = vmatpush.msra.mxu0 0.0
    %4198 = vmatpush.msra.mxu0 0.0
    %4199 = vmatpush.msra.mxu0 %v4180
    %4200 = vmatpush.msra.mxu0 %v4179
    %4201 = vmatpush.msra.mxu0 %v4178
    %4202 = vmatpush.msra.mxu0 %v4177
    %4203 = vmatpush.msra.mxu0 %v4176
    %4204 = vmatpush.msra.mxu0 %v4175
    %4205 = vmatpush.msra.mxu0 %v4174
    %4206 = vmatpush.msra.mxu0 %v4173
    %4207 = vmatmul.f32.gmra.mxu0 %v4186
    %v4208 = vpop.f32.mrf.mxu0
    %v4209 = vadd.f32 %v4183, %v4208
    %4210 = vmatmul.f32.gmra.mxu0 %v4189
    %v4211 = vpop.f32.mrf.mxu0
    %v4212 = vadd.f32 %v4183, %v4211
    %4213 = vdwg.mxu0
    %v4214 = vadd.f32 %v4132, %v4209
    %v4215 = vadd.f32 %v4133, %v4212
    %v4216 = vld [vmem:[#allocation17] sm:$0x1]
    %v4217 = vld [vmem:[#allocation19] sm:$0x1]
    %v4218 = vsel %vm1049, %v4214, 0.0
    %4219 = vadd.xlane.f32.xlu0 %v4218
    %v4220 = vpop.xlane.xlu0 %4219
    %v4221 = vsel %vm1049, %v4215, 0.0
    %4222 = vadd.xlane.f32.xlu0 %v4221
    %v4223 = vpop.xlane.xlu0 %4222
    %v4224 = vmul.f32 %v4220, %v1683
    %v4225 = vmul.f32 %v4223, %v1683
    %v4226 = vsub.f32 %v4214, %v4224
    %v4227 = vsub.f32 %v4215, %v4225
    %v4228 = vmul.f32 %v4226, %v4226
    %v4229 = vmul.f32 %v4227, %v4227
    %v4230 = vsel %vm1049, %v4228, 0.0
    %4231 = vadd.xlane.f32.xlu0 %v4230
    %v4232 = vpop.xlane.xlu0 %4231
    %v4233 = vsel %vm1049, %v4229, 0.0
    %4234 = vadd.xlane.f32.xlu0 %v4233
    %v4235 = vpop.xlane.xlu0 %4234
    %v4236 = vmul.f32 %v4232, %v1683
    %v4237 = vmul.f32 %v4235, %v1683
    %v4238 = vadd.f32 %v4236, 1e-05
    %v4239 = vadd.f32 %v4237, 1e-05
    %v4240 = vrsqrt.pop %v4238
    %v4241 = vmul.f32 %v4240, %v4238
    %v4242 = vmul.f32 %v4241, %v4240
    %v4243 = vmul.f32 0.5, %v4242
    %v4244 = vsub.f32 1.5, %v4243
    %v4245 = vmul.f32 %v4240, %v4244
    %vm4246 = vweird.f32 %v4238
    %vm4247 = vweird.f32 %v4240
    %vm4248 = vmor %vm4246, %vm4247
    %v4249 = vsel %vm4248, %v4240, %v4245
    %v4250 = vrsqrt.pop %v4239
    %v4251 = vmul.f32 %v4250, %v4239
    %v4252 = vmul.f32 %v4251, %v4250
    %v4253 = vmul.f32 0.5, %v4252
    %v4254 = vsub.f32 1.5, %v4253
    %v4255 = vmul.f32 %v4250, %v4254
    %vm4256 = vweird.f32 %v4239
    %vm4257 = vweird.f32 %v4250
    %vm4258 = vmor %vm4256, %vm4257
    %v4259 = vsel %vm4258, %v4250, %v4255
    %v4260 = vmul.f32 %v4226, %v4249
    %v4261 = vmul.f32 %v4227, %v4259
    %v4263 = vperm.slane %v4216, 0
    %v4265 = vmul.f32 %v4260, %v4263
    %v4266 = vmul.f32 %v4261, %v4263
    %v4268 = vperm.slane %v4217, 0
    %v4270 = vadd.f32 %v4265, %v4268
    %v4271 = vadd.f32 %v4266, %v4268
    %v4272 = vld [vmem:[%s97] sm:$0xff]
    %v4273 = vld [vmem:[%s97 + $0x8] sm:$0xff]
    %v4274 = vld [vmem:[%s97 + $0x10] sm:$0xff]
    %v4275 = vld [vmem:[%s97 + $0x18] sm:$0xff]
    %v4276 = vld [vmem:[#allocation20] sm:$0x1]
    %v4278 = vperm.slane %v4276, 0
    %v4281 = vsel %vm1049, %v4270, 0
    %v4284 = vsel %vm1049, %v4271, 0
    %4286 = vmatpush.msra.mxu0 0.0
    %4287 = vmatpush.msra.mxu0 0.0
    %4288 = vmatpush.msra.mxu0 0.0
    %4289 = vmatpush.msra.mxu0 0.0
    %4290 = vmatpush.msra.mxu0 0.0
    %4291 = vmatpush.msra.mxu0 0.0
    %4292 = vmatpush.msra.mxu0 0.0
    %4293 = vmatpush.msra.mxu0 0.0
    %4294 = vmatpush.msra.mxu0 0.0
    %4295 = vmatpush.msra.mxu0 0.0
    %4296 = vmatpush.msra.mxu0 0.0
    %4297 = vmatpush.msra.mxu0 0.0
    %4298 = vmatpush.msra.mxu0 %v4275
    %4299 = vmatpush.msra.mxu0 %v4274
    %4300 = vmatpush.msra.mxu0 %v4273
    %4301 = vmatpush.msra.mxu0 %v4272
    %4302 = vmatmul.f32.gmra.mxu0 %v4281
    %v4303 = vpop.f32.mrf.mxu0
    %v4304 = vadd.f32 %v4278, %v4303
    %4305 = vmatmul.f32.gmra.mxu0 %v4284
    %v4306 = vpop.f32.mrf.mxu0
    %v4307 = vadd.f32 %v4278, %v4306
    %4308 = vdwg.mxu0
    %v4309 = vld [vmem:[%s101] sm:$0xff]
    %v4310 = vld [vmem:[%s101 + $0x8] sm:$0xff]
    %v4311 = vld [vmem:[%s101 + $0x10] sm:$0xff]
    %v4312 = vld [vmem:[%s101 + $0x18] sm:$0xff]
    %v4313 = vld [vmem:[#allocation22] sm:$0x1]
    %4315 = vrot.lane.b32.xlu0 %v4304, 96
    %v4316 = vpop.permute.xlu0 %4315
    %v4317 = vsel %vm1087, %v4304, 0
    %v4319 = vsel %vm1087, %v4316, 0
    %4321 = vmatpush.xpose.msra.mxu0 0.0
    %4322 = vmatpush.xpose.msra.mxu0 0.0
    %4323 = vmatpush.xpose.msra.mxu0 0.0
    %4324 = vmatpush.xpose.msra.mxu0 0.0
    %4325 = vmatpush.xpose.msra.mxu0 0.0
    %4326 = vmatpush.xpose.msra.mxu0 0.0
    %4327 = vmatpush.xpose.msra.mxu0 0.0
    %4328 = vmatpush.xpose.msra.mxu0 0.0
    %4329 = vmatpush.xpose.msra.mxu0 0.0
    %4330 = vmatpush.xpose.msra.mxu0 0.0
    %4331 = vmatpush.xpose.msra.mxu0 0.0
    %4332 = vmatpush.xpose.msra.mxu0 0.0
    %4333 = vmatpush.xpose.msra.mxu0 0.0
    %4334 = vmatpush.xpose.msra.mxu0 0.0
    %4335 = vmatpush.xpose.msra.mxu0 0.0
    %4336 = vmatpush.xpose.msra.mxu0 %v4319
    %4337 = vmatmul.f32.gmra.mxu0 %v4317
    %v4338 = vpop.f32.mrf.mxu0
    %v4339 = vadd.f32 0.0, %v4338
    %4340 = vdwg.mxu0
    %4342 = vrot.lane.b32.xlu0 %v4307, 96
    %v4343 = vpop.permute.xlu0 %4342
    %v4344 = vsel %vm1087, %v4307, 0
    %v4346 = vsel %vm1087, %v4343, 0
    %4348 = vmatpush.xpose.msra.mxu0 0.0
    %4349 = vmatpush.xpose.msra.mxu0 0.0
    %4350 = vmatpush.xpose.msra.mxu0 0.0
    %4351 = vmatpush.xpose.msra.mxu0 0.0
    %4352 = vmatpush.xpose.msra.mxu0 0.0
    %4353 = vmatpush.xpose.msra.mxu0 0.0
    %4354 = vmatpush.xpose.msra.mxu0 0.0
    %4355 = vmatpush.xpose.msra.mxu0 0.0
    %4356 = vmatpush.xpose.msra.mxu0 0.0
    %4357 = vmatpush.xpose.msra.mxu0 0.0
    %4358 = vmatpush.xpose.msra.mxu0 0.0
    %4359 = vmatpush.xpose.msra.mxu0 0.0
    %4360 = vmatpush.xpose.msra.mxu0 0.0
    %4361 = vmatpush.xpose.msra.mxu0 0.0
    %4362 = vmatpush.xpose.msra.mxu0 0.0
    %4363 = vmatpush.xpose.msra.mxu0 %v4346
    %4364 = vmatmul.f32.gmra.mxu0 %v4344
    %v4365 = vpop.f32.mrf.mxu0
    %v4366 = vadd.f32 0.0, %v4365
    %4367 = vdwg.mxu0
    %v4368 = vsel %vm1087, %v4339, -inf
    %4369 = vmax.xlane.f32.xlu0 %v4368
    %v4370 = vpop.xlane.xlu0 %4369
    %v4371 = vsel %vm1087, %v4366, -inf
    %4372 = vmax.xlane.f32.xlu0 %v4371
    %v4373 = vpop.xlane.xlu0 %4372
    %v4374 = vsub.f32 %v4339, %v4370
    %v4375 = vsub.f32 %v4366, %v4373
    %v4376 = vmul.f32 %v4374, 1.442695
    %v4377 = vpow.pop %v4376
    %v4378 = vmul.f32 %v4375, 1.442695
    %v4379 = vpow.pop %v4378
    %v4380 = vsel %vm1087, %v4377, 0.0
    %4381 = vadd.xlane.f32.xlu0 %v4380
    %v4382 = vpop.xlane.xlu0 %4381
    %v4383 = vsel %vm1087, %v4379, 0.0
    %4384 = vadd.xlane.f32.xlu0 %v4383
    %v4385 = vpop.xlane.xlu0 %4384
    %v4386 = vrcp.pop %v4382
    %v4387 = vrcp.pop %v4385
    %v4388 = vmul.f32 %v4377, %v4386
    %v4389 = vmul.f32 %v4379, %v4387
    %4390 = vrot.lane.b32.xlu0 %v4304, 64
    %v4391 = vpop.permute.xlu0 %4390
    %v4394 = vsel %vm1087, %v4388, 0
    %4396 = vmatpush.msra.mxu0 0.0
    %4397 = vmatpush.msra.mxu0 0.0
    %4398 = vmatpush.msra.mxu0 0.0
    %4399 = vmatpush.msra.mxu0 0.0
    %4400 = vmatpush.msra.mxu0 0.0
    %4401 = vmatpush.msra.mxu0 0.0
    %4402 = vmatpush.msra.mxu0 0.0
    %4403 = vmatpush.msra.mxu0 0.0
    %4404 = vmatpush.msra.mxu0 0.0
    %4405 = vmatpush.msra.mxu0 0.0
    %4406 = vmatpush.msra.mxu0 0.0
    %4407 = vmatpush.msra.mxu0 0.0
    %4408 = vmatpush.msra.mxu0 0.0
    %4409 = vmatpush.msra.mxu0 0.0
    %4410 = vmatpush.msra.mxu0 0.0
    %4411 = vmatpush.msra.mxu0 %v4391
    %4412 = vmatmul.f32.gmra.mxu0 %v4394
    %v4413 = vpop.f32.mrf.mxu0
    %v4414 = vadd.f32 0.0, %v4413
    %4415 = vdwg.mxu0
    %4416 = vrot.lane.b32.xlu0 %v4307, 64
    %v4417 = vpop.permute.xlu0 %4416
    %v4420 = vsel %vm1087, %v4389, 0
    %4422 = vmatpush.msra.mxu0 0.0
    %4423 = vmatpush.msra.mxu0 0.0
    %4424 = vmatpush.msra.mxu0 0.0
    %4425 = vmatpush.msra.mxu0 0.0
    %4426 = vmatpush.msra.mxu0 0.0
    %4427 = vmatpush.msra.mxu0 0.0
    %4428 = vmatpush.msra.mxu0 0.0
    %4429 = vmatpush.msra.mxu0 0.0
    %4430 = vmatpush.msra.mxu0 0.0
    %4431 = vmatpush.msra.mxu0 0.0
    %4432 = vmatpush.msra.mxu0 0.0
    %4433 = vmatpush.msra.mxu0 0.0
    %4434 = vmatpush.msra.mxu0 0.0
    %4435 = vmatpush.msra.mxu0 0.0
    %4436 = vmatpush.msra.mxu0 0.0
    %4437 = vmatpush.msra.mxu0 %v4417
    %4438 = vmatmul.f32.gmra.mxu0 %v4420
    %v4439 = vpop.f32.mrf.mxu0
    %v4440 = vadd.f32 0.0, %v4439
    %4441 = vdwg.mxu0
    %4442 = vrot.lane.b32.xlu0 %v4304, 120
    %v4443 = vpop.permute.xlu0 %4442
    %4444 = vrot.lane.b32.xlu0 %v4304, 88
    %v4445 = vpop.permute.xlu0 %4444
    %v4446 = vsel %vm1087, %v4443, 0
    %v4448 = vsel %vm1087, %v4445, 0
    %4450 = vmatpush.xpose.msra.mxu0 0.0
    %4451 = vmatpush.xpose.msra.mxu0 0.0
    %4452 = vmatpush.xpose.msra.mxu0 0.0
    %4453 = vmatpush.xpose.msra.mxu0 0.0
    %4454 = vmatpush.xpose.msra.mxu0 0.0
    %4455 = vmatpush.xpose.msra.mxu0 0.0
    %4456 = vmatpush.xpose.msra.mxu0 0.0
    %4457 = vmatpush.xpose.msra.mxu0 0.0
    %4458 = vmatpush.xpose.msra.mxu0 0.0
    %4459 = vmatpush.xpose.msra.mxu0 0.0
    %4460 = vmatpush.xpose.msra.mxu0 0.0
    %4461 = vmatpush.xpose.msra.mxu0 0.0
    %4462 = vmatpush.xpose.msra.mxu0 0.0
    %4463 = vmatpush.xpose.msra.mxu0 0.0
    %4464 = vmatpush.xpose.msra.mxu0 0.0
    %4465 = vmatpush.xpose.msra.mxu0 %v4448
    %4466 = vmatmul.f32.gmra.mxu0 %v4446
    %v4467 = vpop.f32.mrf.mxu0
    %v4468 = vadd.f32 0.0, %v4467
    %4469 = vdwg.mxu0
    %4470 = vrot.lane.b32.xlu0 %v4307, 120
    %v4471 = vpop.permute.xlu0 %4470
    %4472 = vrot.lane.b32.xlu0 %v4307, 88
    %v4473 = vpop.permute.xlu0 %4472
    %v4474 = vsel %vm1087, %v4471, 0
    %v4476 = vsel %vm1087, %v4473, 0
    %4478 = vmatpush.xpose.msra.mxu0 0.0
    %4479 = vmatpush.xpose.msra.mxu0 0.0
    %4480 = vmatpush.xpose.msra.mxu0 0.0
    %4481 = vmatpush.xpose.msra.mxu0 0.0
    %4482 = vmatpush.xpose.msra.mxu0 0.0
    %4483 = vmatpush.xpose.msra.mxu0 0.0
    %4484 = vmatpush.xpose.msra.mxu0 0.0
    %4485 = vmatpush.xpose.msra.mxu0 0.0
    %4486 = vmatpush.xpose.msra.mxu0 0.0
    %4487 = vmatpush.xpose.msra.mxu0 0.0
    %4488 = vmatpush.xpose.msra.mxu0 0.0
    %4489 = vmatpush.xpose.msra.mxu0 0.0
    %4490 = vmatpush.xpose.msra.mxu0 0.0
    %4491 = vmatpush.xpose.msra.mxu0 0.0
    %4492 = vmatpush.xpose.msra.mxu0 0.0
    %4493 = vmatpush.xpose.msra.mxu0 %v4476
    %4494 = vmatmul.f32.gmra.mxu0 %v4474
    %v4495 = vpop.f32.mrf.mxu0
    %v4496 = vadd.f32 0.0, %v4495
    %4497 = vdwg.mxu0
    %v4498 = vsel %vm1087, %v4468, -inf
    %4499 = vmax.xlane.f32.xlu0 %v4498
    %v4500 = vpop.xlane.xlu0 %4499
    %v4501 = vsel %vm1087, %v4496, -inf
    %4502 = vmax.xlane.f32.xlu0 %v4501
    %v4503 = vpop.xlane.xlu0 %4502
    %v4504 = vsub.f32 %v4468, %v4500
    %v4505 = vsub.f32 %v4496, %v4503
    %v4506 = vmul.f32 %v4504, 1.442695
    %v4507 = vpow.pop %v4506
    %v4508 = vmul.f32 %v4505, 1.442695
    %v4509 = vpow.pop %v4508
    %v4510 = vsel %vm1087, %v4507, 0.0
    %4511 = vadd.xlane.f32.xlu0 %v4510
    %v4512 = vpop.xlane.xlu0 %4511
    %v4513 = vsel %vm1087, %v4509, 0.0
    %4514 = vadd.xlane.f32.xlu0 %v4513
    %v4515 = vpop.xlane.xlu0 %4514
    %v4516 = vrcp.pop %v4512
    %v4517 = vrcp.pop %v4515
    %v4518 = vmul.f32 %v4507, %v4516
    %v4519 = vmul.f32 %v4509, %v4517
    %4520 = vrot.lane.b32.xlu0 %v4304, 56
    %v4521 = vpop.permute.xlu0 %4520
    %v4524 = vsel %vm1087, %v4518, 0
    %4526 = vmatpush.msra.mxu0 0.0
    %4527 = vmatpush.msra.mxu0 0.0
    %4528 = vmatpush.msra.mxu0 0.0
    %4529 = vmatpush.msra.mxu0 0.0
    %4530 = vmatpush.msra.mxu0 0.0
    %4531 = vmatpush.msra.mxu0 0.0
    %4532 = vmatpush.msra.mxu0 0.0
    %4533 = vmatpush.msra.mxu0 0.0
    %4534 = vmatpush.msra.mxu0 0.0
    %4535 = vmatpush.msra.mxu0 0.0
    %4536 = vmatpush.msra.mxu0 0.0
    %4537 = vmatpush.msra.mxu0 0.0
    %4538 = vmatpush.msra.mxu0 0.0
    %4539 = vmatpush.msra.mxu0 0.0
    %4540 = vmatpush.msra.mxu0 0.0
    %4541 = vmatpush.msra.mxu0 %v4521
    %4542 = vmatmul.f32.gmra.mxu0 %v4524
    %v4543 = vpop.f32.mrf.mxu0
    %v4544 = vadd.f32 0.0, %v4543
    %4545 = vdwg.mxu0
    %4546 = vrot.lane.b32.xlu0 %v4307, 56
    %v4547 = vpop.permute.xlu0 %4546
    %v4550 = vsel %vm1087, %v4519, 0
    %4552 = vmatpush.msra.mxu0 0.0
    %4553 = vmatpush.msra.mxu0 0.0
    %4554 = vmatpush.msra.mxu0 0.0
    %4555 = vmatpush.msra.mxu0 0.0
    %4556 = vmatpush.msra.mxu0 0.0
    %4557 = vmatpush.msra.mxu0 0.0
    %4558 = vmatpush.msra.mxu0 0.0
    %4559 = vmatpush.msra.mxu0 0.0
    %4560 = vmatpush.msra.mxu0 0.0
    %4561 = vmatpush.msra.mxu0 0.0
    %4562 = vmatpush.msra.mxu0 0.0
    %4563 = vmatpush.msra.mxu0 0.0
    %4564 = vmatpush.msra.mxu0 0.0
    %4565 = vmatpush.msra.mxu0 0.0
    %4566 = vmatpush.msra.mxu0 0.0
    %4567 = vmatpush.msra.mxu0 %v4547
    %4568 = vmatmul.f32.gmra.mxu0 %v4550
    %v4569 = vpop.f32.mrf.mxu0
    %v4570 = vadd.f32 0.0, %v4569
    %4571 = vdwg.mxu0
    %4572 = vrot.lane.b32.xlu0 %v4304, 112
    %v4573 = vpop.permute.xlu0 %4572
    %4574 = vrot.lane.b32.xlu0 %v4304, 80
    %v4575 = vpop.permute.xlu0 %4574
    %v4576 = vsel %vm1087, %v4573, 0
    %v4578 = vsel %vm1087, %v4575, 0
    %4580 = vmatpush.xpose.msra.mxu0 0.0
    %4581 = vmatpush.xpose.msra.mxu0 0.0
    %4582 = vmatpush.xpose.msra.mxu0 0.0
    %4583 = vmatpush.xpose.msra.mxu0 0.0
    %4584 = vmatpush.xpose.msra.mxu0 0.0
    %4585 = vmatpush.xpose.msra.mxu0 0.0
    %4586 = vmatpush.xpose.msra.mxu0 0.0
    %4587 = vmatpush.xpose.msra.mxu0 0.0
    %4588 = vmatpush.xpose.msra.mxu0 0.0
    %4589 = vmatpush.xpose.msra.mxu0 0.0
    %4590 = vmatpush.xpose.msra.mxu0 0.0
    %4591 = vmatpush.xpose.msra.mxu0 0.0
    %4592 = vmatpush.xpose.msra.mxu0 0.0
    %4593 = vmatpush.xpose.msra.mxu0 0.0
    %4594 = vmatpush.xpose.msra.mxu0 0.0
    %4595 = vmatpush.xpose.msra.mxu0 %v4578
    %4596 = vmatmul.f32.gmra.mxu0 %v4576
    %v4597 = vpop.f32.mrf.mxu0
    %v4598 = vadd.f32 0.0, %v4597
    %4599 = vdwg.mxu0
    %4600 = vrot.lane.b32.xlu0 %v4307, 112
    %v4601 = vpop.permute.xlu0 %4600
    %4602 = vrot.lane.b32.xlu0 %v4307, 80
    %v4603 = vpop.permute.xlu0 %4602
    %v4604 = vsel %vm1087, %v4601, 0
    %v4606 = vsel %vm1087, %v4603, 0
    %4608 = vmatpush.xpose.msra.mxu0 0.0
    %4609 = vmatpush.xpose.msra.mxu0 0.0
    %4610 = vmatpush.xpose.msra.mxu0 0.0
    %4611 = vmatpush.xpose.msra.mxu0 0.0
    %4612 = vmatpush.xpose.msra.mxu0 0.0
    %4613 = vmatpush.xpose.msra.mxu0 0.0
    %4614 = vmatpush.xpose.msra.mxu0 0.0
    %4615 = vmatpush.xpose.msra.mxu0 0.0
    %4616 = vmatpush.xpose.msra.mxu0 0.0
    %4617 = vmatpush.xpose.msra.mxu0 0.0
    %4618 = vmatpush.xpose.msra.mxu0 0.0
    %4619 = vmatpush.xpose.msra.mxu0 0.0
    %4620 = vmatpush.xpose.msra.mxu0 0.0
    %4621 = vmatpush.xpose.msra.mxu0 0.0
    %4622 = vmatpush.xpose.msra.mxu0 0.0
    %4623 = vmatpush.xpose.msra.mxu0 %v4606
    %4624 = vmatmul.f32.gmra.mxu0 %v4604
    %v4625 = vpop.f32.mrf.mxu0
    %v4626 = vadd.f32 0.0, %v4625
    %4627 = vdwg.mxu0
    %v4628 = vsel %vm1087, %v4598, -inf
    %4629 = vmax.xlane.f32.xlu0 %v4628
    %v4630 = vpop.xlane.xlu0 %4629
    %v4631 = vsel %vm1087, %v4626, -inf
    %4632 = vmax.xlane.f32.xlu0 %v4631
    %v4633 = vpop.xlane.xlu0 %4632
    %v4634 = vsub.f32 %v4598, %v4630
    %v4635 = vsub.f32 %v4626, %v4633
    %v4636 = vmul.f32 %v4634, 1.442695
    %v4637 = vpow.pop %v4636
    %v4638 = vmul.f32 %v4635, 1.442695
    %v4639 = vpow.pop %v4638
    %v4640 = vsel %vm1087, %v4637, 0.0
    %4641 = vadd.xlane.f32.xlu0 %v4640
    %v4642 = vpop.xlane.xlu0 %4641
    %v4643 = vsel %vm1087, %v4639, 0.0
    %4644 = vadd.xlane.f32.xlu0 %v4643
    %v4645 = vpop.xlane.xlu0 %4644
    %v4646 = vrcp.pop %v4642
    %v4647 = vrcp.pop %v4645
    %v4648 = vmul.f32 %v4637, %v4646
    %v4649 = vmul.f32 %v4639, %v4647
    %4650 = vrot.lane.b32.xlu0 %v4304, 48
    %v4651 = vpop.permute.xlu0 %4650
    %v4654 = vsel %vm1087, %v4648, 0
    %4656 = vmatpush.msra.mxu0 0.0
    %4657 = vmatpush.msra.mxu0 0.0
    %4658 = vmatpush.msra.mxu0 0.0
    %4659 = vmatpush.msra.mxu0 0.0
    %4660 = vmatpush.msra.mxu0 0.0
    %4661 = vmatpush.msra.mxu0 0.0
    %4662 = vmatpush.msra.mxu0 0.0
    %4663 = vmatpush.msra.mxu0 0.0
    %4664 = vmatpush.msra.mxu0 0.0
    %4665 = vmatpush.msra.mxu0 0.0
    %4666 = vmatpush.msra.mxu0 0.0
    %4667 = vmatpush.msra.mxu0 0.0
    %4668 = vmatpush.msra.mxu0 0.0
    %4669 = vmatpush.msra.mxu0 0.0
    %4670 = vmatpush.msra.mxu0 0.0
    %4671 = vmatpush.msra.mxu0 %v4651
    %4672 = vmatmul.f32.gmra.mxu0 %v4654
    %v4673 = vpop.f32.mrf.mxu0
    %v4674 = vadd.f32 0.0, %v4673
    %4675 = vdwg.mxu0
    %4676 = vrot.lane.b32.xlu0 %v4307, 48
    %v4677 = vpop.permute.xlu0 %4676
    %v4680 = vsel %vm1087, %v4649, 0
    %4682 = vmatpush.msra.mxu0 0.0
    %4683 = vmatpush.msra.mxu0 0.0
    %4684 = vmatpush.msra.mxu0 0.0
    %4685 = vmatpush.msra.mxu0 0.0
    %4686 = vmatpush.msra.mxu0 0.0
    %4687 = vmatpush.msra.mxu0 0.0
    %4688 = vmatpush.msra.mxu0 0.0
    %4689 = vmatpush.msra.mxu0 0.0
    %4690 = vmatpush.msra.mxu0 0.0
    %4691 = vmatpush.msra.mxu0 0.0
    %4692 = vmatpush.msra.mxu0 0.0
    %4693 = vmatpush.msra.mxu0 0.0
    %4694 = vmatpush.msra.mxu0 0.0
    %4695 = vmatpush.msra.mxu0 0.0
    %4696 = vmatpush.msra.mxu0 0.0
    %4697 = vmatpush.msra.mxu0 %v4677
    %4698 = vmatmul.f32.gmra.mxu0 %v4680
    %v4699 = vpop.f32.mrf.mxu0
    %v4700 = vadd.f32 0.0, %v4699
    %4701 = vdwg.mxu0
    %4702 = vrot.lane.b32.xlu0 %v4304, 104
    %v4703 = vpop.permute.xlu0 %4702
    %4704 = vrot.lane.b32.xlu0 %v4304, 72
    %v4705 = vpop.permute.xlu0 %4704
    %v4706 = vsel %vm1087, %v4703, 0
    %v4708 = vsel %vm1087, %v4705, 0
    %4710 = vmatpush.xpose.msra.mxu0 0.0
    %4711 = vmatpush.xpose.msra.mxu0 0.0
    %4712 = vmatpush.xpose.msra.mxu0 0.0
    %4713 = vmatpush.xpose.msra.mxu0 0.0
    %4714 = vmatpush.xpose.msra.mxu0 0.0
    %4715 = vmatpush.xpose.msra.mxu0 0.0
    %4716 = vmatpush.xpose.msra.mxu0 0.0
    %4717 = vmatpush.xpose.msra.mxu0 0.0
    %4718 = vmatpush.xpose.msra.mxu0 0.0
    %4719 = vmatpush.xpose.msra.mxu0 0.0
    %4720 = vmatpush.xpose.msra.mxu0 0.0
    %4721 = vmatpush.xpose.msra.mxu0 0.0
    %4722 = vmatpush.xpose.msra.mxu0 0.0
    %4723 = vmatpush.xpose.msra.mxu0 0.0
    %4724 = vmatpush.xpose.msra.mxu0 0.0
    %4725 = vmatpush.xpose.msra.mxu0 %v4708
    %4726 = vmatmul.f32.gmra.mxu0 %v4706
    %v4727 = vpop.f32.mrf.mxu0
    %v4728 = vadd.f32 0.0, %v4727
    %4729 = vdwg.mxu0
    %4730 = vrot.lane.b32.xlu0 %v4307, 104
    %v4731 = vpop.permute.xlu0 %4730
    %4732 = vrot.lane.b32.xlu0 %v4307, 72
    %v4733 = vpop.permute.xlu0 %4732
    %v4734 = vsel %vm1087, %v4731, 0
    %v4736 = vsel %vm1087, %v4733, 0
    %4738 = vmatpush.xpose.msra.mxu0 0.0
    %4739 = vmatpush.xpose.msra.mxu0 0.0
    %4740 = vmatpush.xpose.msra.mxu0 0.0
    %4741 = vmatpush.xpose.msra.mxu0 0.0
    %4742 = vmatpush.xpose.msra.mxu0 0.0
    %4743 = vmatpush.xpose.msra.mxu0 0.0
    %4744 = vmatpush.xpose.msra.mxu0 0.0
    %4745 = vmatpush.xpose.msra.mxu0 0.0
    %4746 = vmatpush.xpose.msra.mxu0 0.0
    %4747 = vmatpush.xpose.msra.mxu0 0.0
    %4748 = vmatpush.xpose.msra.mxu0 0.0
    %4749 = vmatpush.xpose.msra.mxu0 0.0
    %4750 = vmatpush.xpose.msra.mxu0 0.0
    %4751 = vmatpush.xpose.msra.mxu0 0.0
    %4752 = vmatpush.xpose.msra.mxu0 0.0
    %4753 = vmatpush.xpose.msra.mxu0 %v4736
    %4754 = vmatmul.f32.gmra.mxu0 %v4734
    %v4755 = vpop.f32.mrf.mxu0
    %v4756 = vadd.f32 0.0, %v4755
    %4757 = vdwg.mxu0
    %v4758 = vsel %vm1087, %v4728, -inf
    %4759 = vmax.xlane.f32.xlu0 %v4758
    %v4760 = vpop.xlane.xlu0 %4759
    %v4761 = vsel %vm1087, %v4756, -inf
    %4762 = vmax.xlane.f32.xlu0 %v4761
    %v4763 = vpop.xlane.xlu0 %4762
    %v4764 = vsub.f32 %v4728, %v4760
    %v4765 = vsub.f32 %v4756, %v4763
    %v4766 = vmul.f32 %v4764, 1.442695
    %v4767 = vpow.pop %v4766
    %v4768 = vmul.f32 %v4765, 1.442695
    %v4769 = vpow.pop %v4768
    %v4770 = vsel %vm1087, %v4767, 0.0
    %4771 = vadd.xlane.f32.xlu0 %v4770
    %v4772 = vpop.xlane.xlu0 %4771
    %v4773 = vsel %vm1087, %v4769, 0.0
    %4774 = vadd.xlane.f32.xlu0 %v4773
    %v4775 = vpop.xlane.xlu0 %4774
    %v4776 = vrcp.pop %v4772
    %v4777 = vrcp.pop %v4775
    %v4778 = vmul.f32 %v4767, %v4776
    %v4779 = vmul.f32 %v4769, %v4777
    %4780 = vrot.lane.b32.xlu0 %v4304, 40
    %v4781 = vpop.permute.xlu0 %4780
    %v4784 = vsel %vm1087, %v4778, 0
    %4786 = vmatpush.msra.mxu0 0.0
    %4787 = vmatpush.msra.mxu0 0.0
    %4788 = vmatpush.msra.mxu0 0.0
    %4789 = vmatpush.msra.mxu0 0.0
    %4790 = vmatpush.msra.mxu0 0.0
    %4791 = vmatpush.msra.mxu0 0.0
    %4792 = vmatpush.msra.mxu0 0.0
    %4793 = vmatpush.msra.mxu0 0.0
    %4794 = vmatpush.msra.mxu0 0.0
    %4795 = vmatpush.msra.mxu0 0.0
    %4796 = vmatpush.msra.mxu0 0.0
    %4797 = vmatpush.msra.mxu0 0.0
    %4798 = vmatpush.msra.mxu0 0.0
    %4799 = vmatpush.msra.mxu0 0.0
    %4800 = vmatpush.msra.mxu0 0.0
    %4801 = vmatpush.msra.mxu0 %v4781
    %4802 = vmatmul.f32.gmra.mxu0 %v4784
    %v4803 = vpop.f32.mrf.mxu0
    %v4804 = vadd.f32 0.0, %v4803
    %4805 = vdwg.mxu0
    %4806 = vrot.lane.b32.xlu0 %v4307, 40
    %v4807 = vpop.permute.xlu0 %4806
    %v4810 = vsel %vm1087, %v4779, 0
    %4812 = vmatpush.msra.mxu0 0.0
    %4813 = vmatpush.msra.mxu0 0.0
    %4814 = vmatpush.msra.mxu0 0.0
    %4815 = vmatpush.msra.mxu0 0.0
    %4816 = vmatpush.msra.mxu0 0.0
    %4817 = vmatpush.msra.mxu0 0.0
    %4818 = vmatpush.msra.mxu0 0.0
    %4819 = vmatpush.msra.mxu0 0.0
    %4820 = vmatpush.msra.mxu0 0.0
    %4821 = vmatpush.msra.mxu0 0.0
    %4822 = vmatpush.msra.mxu0 0.0
    %4823 = vmatpush.msra.mxu0 0.0
    %4824 = vmatpush.msra.mxu0 0.0
    %4825 = vmatpush.msra.mxu0 0.0
    %4826 = vmatpush.msra.mxu0 0.0
    %4827 = vmatpush.msra.mxu0 %v4807
    %4828 = vmatmul.f32.gmra.mxu0 %v4810
    %v4829 = vpop.f32.mrf.mxu0
    %v4830 = vadd.f32 0.0, %v4829
    %4831 = vdwg.mxu0
    %4834 = vrot.lane.b32.xlu0 %v4544, 8
    %v4835 = vpop.permute.xlu0 %4834
    %4836 = vrot.lane.b32.xlu0 %v4570, 8
    %v4837 = vpop.permute.xlu0 %4836
    %4842 = vrot.lane.b32.xlu0 %v4674, 16
    %v4843 = vpop.permute.xlu0 %4842
    %4844 = vrot.lane.b32.xlu0 %v4700, 16
    %v4845 = vpop.permute.xlu0 %4844
    %4850 = vrot.lane.b32.xlu0 %v4804, 24
    %v4851 = vpop.permute.xlu0 %4850
    %4852 = vrot.lane.b32.xlu0 %v4830, 24
    %v4853 = vpop.permute.xlu0 %4852
    %v4856 = vsel %vm1087, %v4414, %v4835
    %v4857 = vsel %vm1087, %v4440, %v4837
    %v4858 = vsel %vm1629, %v4856, %v4843
    %v4859 = vsel %vm1629, %v4857, %v4845
    %v4860 = vsel %vm1632, %v4858, %v4851
    %v4861 = vsel %vm1632, %v4859, %v4853
    %v4863 = vperm.slane %v4313, 0
    %v4866 = vsel %vm1049, %v4860, 0
    %v4869 = vsel %vm1049, %v4861, 0
    %4871 = vmatpush.msra.mxu0 0.0
    %4872 = vmatpush.msra.mxu0 0.0
    %4873 = vmatpush.msra.mxu0 0.0
    %4874 = vmatpush.msra.mxu0 0.0
    %4875 = vmatpush.msra.mxu0 0.0
    %4876 = vmatpush.msra.mxu0 0.0
    %4877 = vmatpush.msra.mxu0 0.0
    %4878 = vmatpush.msra.mxu0 0.0
    %4879 = vmatpush.msra.mxu0 0.0
    %4880 = vmatpush.msra.mxu0 0.0
    %4881 = vmatpush.msra.mxu0 0.0
    %4882 = vmatpush.msra.mxu0 0.0
    %4883 = vmatpush.msra.mxu0 %v4312
    %4884 = vmatpush.msra.mxu0 %v4311
    %4885 = vmatpush.msra.mxu0 %v4310
    %4886 = vmatpush.msra.mxu0 %v4309
    %4887 = vmatmul.f32.gmra.mxu0 %v4866
    %v4888 = vpop.f32.mrf.mxu0
    %v4889 = vadd.f32 %v4863, %v4888
    %4890 = vmatmul.f32.gmra.mxu0 %v4869
    %v4891 = vpop.f32.mrf.mxu0
    %v4892 = vadd.f32 %v4863, %v4891
    %4893 = vdwg.mxu0
    %v4894 = vadd.f32 %v4270, %v4889
    %v4895 = vadd.f32 %v4271, %v4892
    %v4896 = vld [vmem:[#allocation23] sm:$0x1]
    %v4897 = vld [vmem:[#allocation25] sm:$0x1]
    %v4898 = vsel %vm1049, %v4894, 0.0
    %4899 = vadd.xlane.f32.xlu0 %v4898
    %v4900 = vpop.xlane.xlu0 %4899
    %v4901 = vsel %vm1049, %v4895, 0.0
    %4902 = vadd.xlane.f32.xlu0 %v4901
    %v4903 = vpop.xlane.xlu0 %4902
    %v4904 = vmul.f32 %v4900, %v1683
    %v4905 = vmul.f32 %v4903, %v1683
    %v4906 = vsub.f32 %v4894, %v4904
    %v4907 = vsub.f32 %v4895, %v4905
    %v4908 = vmul.f32 %v4906, %v4906
    %v4909 = vmul.f32 %v4907, %v4907
    %v4910 = vsel %vm1049, %v4908, 0.0
    %4911 = vadd.xlane.f32.xlu0 %v4910
    %v4912 = vpop.xlane.xlu0 %4911
    %v4913 = vsel %vm1049, %v4909, 0.0
    %4914 = vadd.xlane.f32.xlu0 %v4913
    %v4915 = vpop.xlane.xlu0 %4914
    %v4916 = vmul.f32 %v4912, %v1683
    %v4917 = vmul.f32 %v4915, %v1683
    %v4918 = vadd.f32 %v4916, 1e-05
    %v4919 = vadd.f32 %v4917, 1e-05
    %v4920 = vrsqrt.pop %v4918
    %v4921 = vmul.f32 %v4920, %v4918
    %v4922 = vmul.f32 %v4921, %v4920
    %v4923 = vmul.f32 0.5, %v4922
    %v4924 = vsub.f32 1.5, %v4923
    %v4925 = vmul.f32 %v4920, %v4924
    %vm4926 = vweird.f32 %v4918
    %vm4927 = vweird.f32 %v4920
    %vm4928 = vmor %vm4926, %vm4927
    %v4929 = vsel %vm4928, %v4920, %v4925
    %v4930 = vrsqrt.pop %v4919
    %v4931 = vmul.f32 %v4930, %v4919
    %v4932 = vmul.f32 %v4931, %v4930
    %v4933 = vmul.f32 0.5, %v4932
    %v4934 = vsub.f32 1.5, %v4933
    %v4935 = vmul.f32 %v4930, %v4934
    %vm4936 = vweird.f32 %v4919
    %vm4937 = vweird.f32 %v4930
    %vm4938 = vmor %vm4936, %vm4937
    %v4939 = vsel %vm4938, %v4930, %v4935
    %v4940 = vmul.f32 %v4906, %v4929
    %v4941 = vmul.f32 %v4907, %v4939
    %v4943 = vperm.slane %v4896, 0
    %v4945 = vmul.f32 %v4940, %v4943
    %v4946 = vmul.f32 %v4941, %v4943
    %v4948 = vperm.slane %v4897, 0
    %v4950 = vadd.f32 %v4945, %v4948
    %v4951 = vadd.f32 %v4946, %v4948
    %v4952 = vld [vmem:[%s109] sm:$0xff]
    %v4953 = vld [vmem:[%s109 + $0x8] sm:$0xff]
    %v4954 = vld [vmem:[%s109 + $0x10] sm:$0xff]
    %v4955 = vld [vmem:[%s109 + $0x18] sm:$0xff]
    %v4956 = vld [vmem:[#allocation26] sm:$0x1]
    %v4958 = vperm.slane %v4956, 0
    %v4961 = vsel %vm1049, %v4950, 0
    %v4964 = vsel %vm1049, %v4951, 0
    %4966 = vmatpush.msra.mxu0 0.0
    %4967 = vmatpush.msra.mxu0 0.0
    %4968 = vmatpush.msra.mxu0 0.0
    %4969 = vmatpush.msra.mxu0 0.0
    %4970 = vmatpush.msra.mxu0 0.0
    %4971 = vmatpush.msra.mxu0 0.0
    %4972 = vmatpush.msra.mxu0 0.0
    %4973 = vmatpush.msra.mxu0 0.0
    %4974 = vmatpush.msra.mxu0 0.0
    %4975 = vmatpush.msra.mxu0 0.0
    %4976 = vmatpush.msra.mxu0 0.0
    %4977 = vmatpush.msra.mxu0 0.0
    %4978 = vmatpush.msra.mxu0 %v4955
    %4979 = vmatpush.msra.mxu0 %v4954
    %4980 = vmatpush.msra.mxu0 %v4953
    %4981 = vmatpush.msra.mxu0 %v4952
    %4982 = vmatmul.f32.gmra.mxu0 %v4961
    %v4983 = vpop.f32.mrf.mxu0
    %v4984 = vadd.f32 %v4958, %v4983
    %4985 = vmatmul.f32.gmra.mxu0 %v4964
    %v4986 = vpop.f32.mrf.mxu0
    %v4987 = vadd.f32 %v4958, %v4986
    %4988 = vdwg.mxu0
    %v4989 = vld [vmem:[%s113] sm:$0xff]
    %v4990 = vld [vmem:[%s113 + $0x8] sm:$0xff]
    %v4991 = vld [vmem:[%s113 + $0x10] sm:$0xff]
    %v4992 = vld [vmem:[%s113 + $0x18] sm:$0xff]
    %v4993 = vld [vmem:[#allocation28] sm:$0x1]
    %v4995 = vperm.slane %v4993, 0
    %4997 = vmatpush.msra.mxu0 0.0
    %4998 = vmatpush.msra.mxu0 0.0
    %4999 = vmatpush.msra.mxu0 0.0
    %5000 = vmatpush.msra.mxu0 0.0
    %5001 = vmatpush.msra.mxu0 0.0
    %5002 = vmatpush.msra.mxu0 0.0
    %5003 = vmatpush.msra.mxu0 0.0
    %5004 = vmatpush.msra.mxu0 0.0
    %5005 = vmatpush.msra.mxu0 0.0
    %5006 = vmatpush.msra.mxu0 0.0
    %5007 = vmatpush.msra.mxu0 0.0
    %5008 = vmatpush.msra.mxu0 0.0
    %5009 = vmatpush.msra.mxu0 %v4992
    %5010 = vmatpush.msra.mxu0 %v4991
    %5011 = vmatpush.msra.mxu0 %v4990
    %5012 = vmatpush.msra.mxu0 %v4989
    %5013 = vmatmul.f32.gmra.mxu0 %v3465
    %v5014 = vpop.f32.mrf.mxu0
    %v5015 = vadd.f32 %v4995, %v5014
    %5016 = vmatmul.f32.gmra.mxu0 %v3468
    %v5017 = vpop.f32.mrf.mxu0
    %v5018 = vadd.f32 %v4995, %v5017
    %5019 = vdwg.mxu0
    %v5020 = vld [vmem:[%s117] sm:$0xff]
    %v5021 = vld [vmem:[%s117 + $0x8] sm:$0xff]
    %v5022 = vld [vmem:[%s117 + $0x10] sm:$0xff]
    %v5023 = vld [vmem:[%s117 + $0x18] sm:$0xff]
    %v5024 = vld [vmem:[#allocation29] sm:$0x1]
    %v5026 = vsel %vm1087, %v4984, 0
    %v5029 = vsel %vm1087, %v5015, 0
    %5031 = vmatpush.xpose.msra.mxu0 0.0
    %5032 = vmatpush.xpose.msra.mxu0 0.0
    %5033 = vmatpush.xpose.msra.mxu0 0.0
    %5034 = vmatpush.xpose.msra.mxu0 0.0
    %5035 = vmatpush.xpose.msra.mxu0 0.0
    %5036 = vmatpush.xpose.msra.mxu0 0.0
    %5037 = vmatpush.xpose.msra.mxu0 0.0
    %5038 = vmatpush.xpose.msra.mxu0 0.0
    %5039 = vmatpush.xpose.msra.mxu0 0.0
    %5040 = vmatpush.xpose.msra.mxu0 0.0
    %5041 = vmatpush.xpose.msra.mxu0 0.0
    %5042 = vmatpush.xpose.msra.mxu0 0.0
    %5043 = vmatpush.xpose.msra.mxu0 0.0
    %5044 = vmatpush.xpose.msra.mxu0 0.0
    %5045 = vmatpush.xpose.msra.mxu0 0.0
    %5046 = vmatpush.xpose.msra.mxu0 %v5029
    %5047 = vmatmul.f32.gmra.mxu0 %v5026
    %v5048 = vpop.f32.mrf.mxu0
    %v5049 = vadd.f32 0.0, %v5048
    %5050 = vdwg.mxu0
    %v5052 = vsel %vm1087, %v4987, 0
    %v5055 = vsel %vm1087, %v5018, 0
    %5057 = vmatpush.xpose.msra.mxu0 0.0
    %5058 = vmatpush.xpose.msra.mxu0 0.0
    %5059 = vmatpush.xpose.msra.mxu0 0.0
    %5060 = vmatpush.xpose.msra.mxu0 0.0
    %5061 = vmatpush.xpose.msra.mxu0 0.0
    %5062 = vmatpush.xpose.msra.mxu0 0.0
    %5063 = vmatpush.xpose.msra.mxu0 0.0
    %5064 = vmatpush.xpose.msra.mxu0 0.0
    %5065 = vmatpush.xpose.msra.mxu0 0.0
    %5066 = vmatpush.xpose.msra.mxu0 0.0
    %5067 = vmatpush.xpose.msra.mxu0 0.0
    %5068 = vmatpush.xpose.msra.mxu0 0.0
    %5069 = vmatpush.xpose.msra.mxu0 0.0
    %5070 = vmatpush.xpose.msra.mxu0 0.0
    %5071 = vmatpush.xpose.msra.mxu0 0.0
    %5072 = vmatpush.xpose.msra.mxu0 %v5055
    %5073 = vmatmul.f32.gmra.mxu0 %v5052
    %v5074 = vpop.f32.mrf.mxu0
    %v5075 = vadd.f32 0.0, %v5074
    %5076 = vdwg.mxu0
    %v5077 = vsel %vm1087, %v5049, -inf
    %5078 = vmax.xlane.f32.xlu0 %v5077
    %v5079 = vpop.xlane.xlu0 %5078
    %v5080 = vsel %vm1087, %v5075, -inf
    %5081 = vmax.xlane.f32.xlu0 %v5080
    %v5082 = vpop.xlane.xlu0 %5081
    %v5083 = vsub.f32 %v5049, %v5079
    %v5084 = vsub.f32 %v5075, %v5082
    %v5085 = vmul.f32 %v5083, 1.442695
    %v5086 = vpow.pop %v5085
    %v5087 = vmul.f32 %v5084, 1.442695
    %v5088 = vpow.pop %v5087
    %v5089 = vsel %vm1087, %v5086, 0.0
    %5090 = vadd.xlane.f32.xlu0 %v5089
    %v5091 = vpop.xlane.xlu0 %5090
    %v5092 = vsel %vm1087, %v5088, 0.0
    %5093 = vadd.xlane.f32.xlu0 %v5092
    %v5094 = vpop.xlane.xlu0 %5093
    %v5095 = vrcp.pop %v5091
    %v5096 = vrcp.pop %v5094
    %v5097 = vmul.f32 %v5086, %v5095
    %v5098 = vmul.f32 %v5088, %v5096
    %5099 = vrot.lane.b32.xlu0 %v5015, 96
    %v5100 = vpop.permute.xlu0 %5099
    %v5103 = vsel %vm1087, %v5097, 0
    %5105 = vmatpush.msra.mxu0 0.0
    %5106 = vmatpush.msra.mxu0 0.0
    %5107 = vmatpush.msra.mxu0 0.0
    %5108 = vmatpush.msra.mxu0 0.0
    %5109 = vmatpush.msra.mxu0 0.0
    %5110 = vmatpush.msra.mxu0 0.0
    %5111 = vmatpush.msra.mxu0 0.0
    %5112 = vmatpush.msra.mxu0 0.0
    %5113 = vmatpush.msra.mxu0 0.0
    %5114 = vmatpush.msra.mxu0 0.0
    %5115 = vmatpush.msra.mxu0 0.0
    %5116 = vmatpush.msra.mxu0 0.0
    %5117 = vmatpush.msra.mxu0 0.0
    %5118 = vmatpush.msra.mxu0 0.0
    %5119 = vmatpush.msra.mxu0 0.0
    %5120 = vmatpush.msra.mxu0 %v5100
    %5121 = vmatmul.f32.gmra.mxu0 %v5103
    %v5122 = vpop.f32.mrf.mxu0
    %v5123 = vadd.f32 0.0, %v5122
    %5124 = vdwg.mxu0
    %5125 = vrot.lane.b32.xlu0 %v5018, 96
    %v5126 = vpop.permute.xlu0 %5125
    %v5129 = vsel %vm1087, %v5098, 0
    %5131 = vmatpush.msra.mxu0 0.0
    %5132 = vmatpush.msra.mxu0 0.0
    %5133 = vmatpush.msra.mxu0 0.0
    %5134 = vmatpush.msra.mxu0 0.0
    %5135 = vmatpush.msra.mxu0 0.0
    %5136 = vmatpush.msra.mxu0 0.0
    %5137 = vmatpush.msra.mxu0 0.0
    %5138 = vmatpush.msra.mxu0 0.0
    %5139 = vmatpush.msra.mxu0 0.0
    %5140 = vmatpush.msra.mxu0 0.0
    %5141 = vmatpush.msra.mxu0 0.0
    %5142 = vmatpush.msra.mxu0 0.0
    %5143 = vmatpush.msra.mxu0 0.0
    %5144 = vmatpush.msra.mxu0 0.0
    %5145 = vmatpush.msra.mxu0 0.0
    %5146 = vmatpush.msra.mxu0 %v5126
    %5147 = vmatmul.f32.gmra.mxu0 %v5129
    %v5148 = vpop.f32.mrf.mxu0
    %v5149 = vadd.f32 0.0, %v5148
    %5150 = vdwg.mxu0
    %5151 = vrot.lane.b32.xlu0 %v4984, 120
    %v5152 = vpop.permute.xlu0 %5151
    %5153 = vrot.lane.b32.xlu0 %v5015, 120
    %v5154 = vpop.permute.xlu0 %5153
    %v5155 = vsel %vm1087, %v5152, 0
    %v5157 = vsel %vm1087, %v5154, 0
    %5159 = vmatpush.xpose.msra.mxu0 0.0
    %5160 = vmatpush.xpose.msra.mxu0 0.0
    %5161 = vmatpush.xpose.msra.mxu0 0.0
    %5162 = vmatpush.xpose.msra.mxu0 0.0
    %5163 = vmatpush.xpose.msra.mxu0 0.0
    %5164 = vmatpush.xpose.msra.mxu0 0.0
    %5165 = vmatpush.xpose.msra.mxu0 0.0
    %5166 = vmatpush.xpose.msra.mxu0 0.0
    %5167 = vmatpush.xpose.msra.mxu0 0.0
    %5168 = vmatpush.xpose.msra.mxu0 0.0
    %5169 = vmatpush.xpose.msra.mxu0 0.0
    %5170 = vmatpush.xpose.msra.mxu0 0.0
    %5171 = vmatpush.xpose.msra.mxu0 0.0
    %5172 = vmatpush.xpose.msra.mxu0 0.0
    %5173 = vmatpush.xpose.msra.mxu0 0.0
    %5174 = vmatpush.xpose.msra.mxu0 %v5157
    %5175 = vmatmul.f32.gmra.mxu0 %v5155
    %v5176 = vpop.f32.mrf.mxu0
    %v5177 = vadd.f32 0.0, %v5176
    %5178 = vdwg.mxu0
    %5179 = vrot.lane.b32.xlu0 %v4987, 120
    %v5180 = vpop.permute.xlu0 %5179
    %5181 = vrot.lane.b32.xlu0 %v5018, 120
    %v5182 = vpop.permute.xlu0 %5181
    %v5183 = vsel %vm1087, %v5180, 0
    %v5185 = vsel %vm1087, %v5182, 0
    %5187 = vmatpush.xpose.msra.mxu0 0.0
    %5188 = vmatpush.xpose.msra.mxu0 0.0
    %5189 = vmatpush.xpose.msra.mxu0 0.0
    %5190 = vmatpush.xpose.msra.mxu0 0.0
    %5191 = vmatpush.xpose.msra.mxu0 0.0
    %5192 = vmatpush.xpose.msra.mxu0 0.0
    %5193 = vmatpush.xpose.msra.mxu0 0.0
    %5194 = vmatpush.xpose.msra.mxu0 0.0
    %5195 = vmatpush.xpose.msra.mxu0 0.0
    %5196 = vmatpush.xpose.msra.mxu0 0.0
    %5197 = vmatpush.xpose.msra.mxu0 0.0
    %5198 = vmatpush.xpose.msra.mxu0 0.0
    %5199 = vmatpush.xpose.msra.mxu0 0.0
    %5200 = vmatpush.xpose.msra.mxu0 0.0
    %5201 = vmatpush.xpose.msra.mxu0 0.0
    %5202 = vmatpush.xpose.msra.mxu0 %v5185
    %5203 = vmatmul.f32.gmra.mxu0 %v5183
    %v5204 = vpop.f32.mrf.mxu0
    %v5205 = vadd.f32 0.0, %v5204
    %5206 = vdwg.mxu0
    %v5207 = vsel %vm1087, %v5177, -inf
    %5208 = vmax.xlane.f32.xlu0 %v5207
    %v5209 = vpop.xlane.xlu0 %5208
    %v5210 = vsel %vm1087, %v5205, -inf
    %5211 = vmax.xlane.f32.xlu0 %v5210
    %v5212 = vpop.xlane.xlu0 %5211
    %v5213 = vsub.f32 %v5177, %v5209
    %v5214 = vsub.f32 %v5205, %v5212
    %v5215 = vmul.f32 %v5213, 1.442695
    %v5216 = vpow.pop %v5215
    %v5217 = vmul.f32 %v5214, 1.442695
    %v5218 = vpow.pop %v5217
    %v5219 = vsel %vm1087, %v5216, 0.0
    %5220 = vadd.xlane.f32.xlu0 %v5219
    %v5221 = vpop.xlane.xlu0 %5220
    %v5222 = vsel %vm1087, %v5218, 0.0
    %5223 = vadd.xlane.f32.xlu0 %v5222
    %v5224 = vpop.xlane.xlu0 %5223
    %v5225 = vrcp.pop %v5221
    %v5226 = vrcp.pop %v5224
    %v5227 = vmul.f32 %v5216, %v5225
    %v5228 = vmul.f32 %v5218, %v5226
    %5229 = vrot.lane.b32.xlu0 %v5015, 88
    %v5230 = vpop.permute.xlu0 %5229
    %v5233 = vsel %vm1087, %v5227, 0
    %5235 = vmatpush.msra.mxu0 0.0
    %5236 = vmatpush.msra.mxu0 0.0
    %5237 = vmatpush.msra.mxu0 0.0
    %5238 = vmatpush.msra.mxu0 0.0
    %5239 = vmatpush.msra.mxu0 0.0
    %5240 = vmatpush.msra.mxu0 0.0
    %5241 = vmatpush.msra.mxu0 0.0
    %5242 = vmatpush.msra.mxu0 0.0
    %5243 = vmatpush.msra.mxu0 0.0
    %5244 = vmatpush.msra.mxu0 0.0
    %5245 = vmatpush.msra.mxu0 0.0
    %5246 = vmatpush.msra.mxu0 0.0
    %5247 = vmatpush.msra.mxu0 0.0
    %5248 = vmatpush.msra.mxu0 0.0
    %5249 = vmatpush.msra.mxu0 0.0
    %5250 = vmatpush.msra.mxu0 %v5230
    %5251 = vmatmul.f32.gmra.mxu0 %v5233
    %v5252 = vpop.f32.mrf.mxu0
    %v5253 = vadd.f32 0.0, %v5252
    %5254 = vdwg.mxu0
    %5255 = vrot.lane.b32.xlu0 %v5018, 88
    %v5256 = vpop.permute.xlu0 %5255
    %v5259 = vsel %vm1087, %v5228, 0
    %5261 = vmatpush.msra.mxu0 0.0
    %5262 = vmatpush.msra.mxu0 0.0
    %5263 = vmatpush.msra.mxu0 0.0
    %5264 = vmatpush.msra.mxu0 0.0
    %5265 = vmatpush.msra.mxu0 0.0
    %5266 = vmatpush.msra.mxu0 0.0
    %5267 = vmatpush.msra.mxu0 0.0
    %5268 = vmatpush.msra.mxu0 0.0
    %5269 = vmatpush.msra.mxu0 0.0
    %5270 = vmatpush.msra.mxu0 0.0
    %5271 = vmatpush.msra.mxu0 0.0
    %5272 = vmatpush.msra.mxu0 0.0
    %5273 = vmatpush.msra.mxu0 0.0
    %5274 = vmatpush.msra.mxu0 0.0
    %5275 = vmatpush.msra.mxu0 0.0
    %5276 = vmatpush.msra.mxu0 %v5256
    %5277 = vmatmul.f32.gmra.mxu0 %v5259
    %v5278 = vpop.f32.mrf.mxu0
    %v5279 = vadd.f32 0.0, %v5278
    %5280 = vdwg.mxu0
    %5281 = vrot.lane.b32.xlu0 %v4984, 112
    %v5282 = vpop.permute.xlu0 %5281
    %5283 = vrot.lane.b32.xlu0 %v5015, 112
    %v5284 = vpop.permute.xlu0 %5283
    %v5285 = vsel %vm1087, %v5282, 0
    %v5287 = vsel %vm1087, %v5284, 0
    %5289 = vmatpush.xpose.msra.mxu0 0.0
    %5290 = vmatpush.xpose.msra.mxu0 0.0
    %5291 = vmatpush.xpose.msra.mxu0 0.0
    %5292 = vmatpush.xpose.msra.mxu0 0.0
    %5293 = vmatpush.xpose.msra.mxu0 0.0
    %5294 = vmatpush.xpose.msra.mxu0 0.0
    %5295 = vmatpush.xpose.msra.mxu0 0.0
    %5296 = vmatpush.xpose.msra.mxu0 0.0
    %5297 = vmatpush.xpose.msra.mxu0 0.0
    %5298 = vmatpush.xpose.msra.mxu0 0.0
    %5299 = vmatpush.xpose.msra.mxu0 0.0
    %5300 = vmatpush.xpose.msra.mxu0 0.0
    %5301 = vmatpush.xpose.msra.mxu0 0.0
    %5302 = vmatpush.xpose.msra.mxu0 0.0
    %5303 = vmatpush.xpose.msra.mxu0 0.0
    %5304 = vmatpush.xpose.msra.mxu0 %v5287
    %5305 = vmatmul.f32.gmra.mxu0 %v5285
    %v5306 = vpop.f32.mrf.mxu0
    %v5307 = vadd.f32 0.0, %v5306
    %5308 = vdwg.mxu0
    %5309 = vrot.lane.b32.xlu0 %v4987, 112
    %v5310 = vpop.permute.xlu0 %5309
    %5311 = vrot.lane.b32.xlu0 %v5018, 112
    %v5312 = vpop.permute.xlu0 %5311
    %v5313 = vsel %vm1087, %v5310, 0
    %v5315 = vsel %vm1087, %v5312, 0
    %5317 = vmatpush.xpose.msra.mxu0 0.0
    %5318 = vmatpush.xpose.msra.mxu0 0.0
    %5319 = vmatpush.xpose.msra.mxu0 0.0
    %5320 = vmatpush.xpose.msra.mxu0 0.0
    %5321 = vmatpush.xpose.msra.mxu0 0.0
    %5322 = vmatpush.xpose.msra.mxu0 0.0
    %5323 = vmatpush.xpose.msra.mxu0 0.0
    %5324 = vmatpush.xpose.msra.mxu0 0.0
    %5325 = vmatpush.xpose.msra.mxu0 0.0
    %5326 = vmatpush.xpose.msra.mxu0 0.0
    %5327 = vmatpush.xpose.msra.mxu0 0.0
    %5328 = vmatpush.xpose.msra.mxu0 0.0
    %5329 = vmatpush.xpose.msra.mxu0 0.0
    %5330 = vmatpush.xpose.msra.mxu0 0.0
    %5331 = vmatpush.xpose.msra.mxu0 0.0
    %5332 = vmatpush.xpose.msra.mxu0 %v5315
    %5333 = vmatmul.f32.gmra.mxu0 %v5313
    %v5334 = vpop.f32.mrf.mxu0
    %v5335 = vadd.f32 0.0, %v5334
    %5336 = vdwg.mxu0
    %v5337 = vsel %vm1087, %v5307, -inf
    %5338 = vmax.xlane.f32.xlu0 %v5337
    %v5339 = vpop.xlane.xlu0 %5338
    %v5340 = vsel %vm1087, %v5335, -inf
    %5341 = vmax.xlane.f32.xlu0 %v5340
    %v5342 = vpop.xlane.xlu0 %5341
    %v5343 = vsub.f32 %v5307, %v5339
    %v5344 = vsub.f32 %v5335, %v5342
    %v5345 = vmul.f32 %v5343, 1.442695
    %v5346 = vpow.pop %v5345
    %v5347 = vmul.f32 %v5344, 1.442695
    %v5348 = vpow.pop %v5347
    %v5349 = vsel %vm1087, %v5346, 0.0
    %5350 = vadd.xlane.f32.xlu0 %v5349
    %v5351 = vpop.xlane.xlu0 %5350
    %v5352 = vsel %vm1087, %v5348, 0.0
    %5353 = vadd.xlane.f32.xlu0 %v5352
    %v5354 = vpop.xlane.xlu0 %5353
    %v5355 = vrcp.pop %v5351
    %v5356 = vrcp.pop %v5354
    %v5357 = vmul.f32 %v5346, %v5355
    %v5358 = vmul.f32 %v5348, %v5356
    %5359 = vrot.lane.b32.xlu0 %v5015, 80
    %v5360 = vpop.permute.xlu0 %5359
    %v5363 = vsel %vm1087, %v5357, 0
    %5365 = vmatpush.msra.mxu0 0.0
    %5366 = vmatpush.msra.mxu0 0.0
    %5367 = vmatpush.msra.mxu0 0.0
    %5368 = vmatpush.msra.mxu0 0.0
    %5369 = vmatpush.msra.mxu0 0.0
    %5370 = vmatpush.msra.mxu0 0.0
    %5371 = vmatpush.msra.mxu0 0.0
    %5372 = vmatpush.msra.mxu0 0.0
    %5373 = vmatpush.msra.mxu0 0.0
    %5374 = vmatpush.msra.mxu0 0.0
    %5375 = vmatpush.msra.mxu0 0.0
    %5376 = vmatpush.msra.mxu0 0.0
    %5377 = vmatpush.msra.mxu0 0.0
    %5378 = vmatpush.msra.mxu0 0.0
    %5379 = vmatpush.msra.mxu0 0.0
    %5380 = vmatpush.msra.mxu0 %v5360
    %5381 = vmatmul.f32.gmra.mxu0 %v5363
    %v5382 = vpop.f32.mrf.mxu0
    %v5383 = vadd.f32 0.0, %v5382
    %5384 = vdwg.mxu0
    %5385 = vrot.lane.b32.xlu0 %v5018, 80
    %v5386 = vpop.permute.xlu0 %5385
    %v5389 = vsel %vm1087, %v5358, 0
    %5391 = vmatpush.msra.mxu0 0.0
    %5392 = vmatpush.msra.mxu0 0.0
    %5393 = vmatpush.msra.mxu0 0.0
    %5394 = vmatpush.msra.mxu0 0.0
    %5395 = vmatpush.msra.mxu0 0.0
    %5396 = vmatpush.msra.mxu0 0.0
    %5397 = vmatpush.msra.mxu0 0.0
    %5398 = vmatpush.msra.mxu0 0.0
    %5399 = vmatpush.msra.mxu0 0.0
    %5400 = vmatpush.msra.mxu0 0.0
    %5401 = vmatpush.msra.mxu0 0.0
    %5402 = vmatpush.msra.mxu0 0.0
    %5403 = vmatpush.msra.mxu0 0.0
    %5404 = vmatpush.msra.mxu0 0.0
    %5405 = vmatpush.msra.mxu0 0.0
    %5406 = vmatpush.msra.mxu0 %v5386
    %5407 = vmatmul.f32.gmra.mxu0 %v5389
    %v5408 = vpop.f32.mrf.mxu0
    %v5409 = vadd.f32 0.0, %v5408
    %5410 = vdwg.mxu0
    %5411 = vrot.lane.b32.xlu0 %v4984, 104
    %v5412 = vpop.permute.xlu0 %5411
    %5413 = vrot.lane.b32.xlu0 %v5015, 104
    %v5414 = vpop.permute.xlu0 %5413
    %v5415 = vsel %vm1087, %v5412, 0
    %v5417 = vsel %vm1087, %v5414, 0
    %5419 = vmatpush.xpose.msra.mxu0 0.0
    %5420 = vmatpush.xpose.msra.mxu0 0.0
    %5421 = vmatpush.xpose.msra.mxu0 0.0
    %5422 = vmatpush.xpose.msra.mxu0 0.0
    %5423 = vmatpush.xpose.msra.mxu0 0.0
    %5424 = vmatpush.xpose.msra.mxu0 0.0
    %5425 = vmatpush.xpose.msra.mxu0 0.0
    %5426 = vmatpush.xpose.msra.mxu0 0.0
    %5427 = vmatpush.xpose.msra.mxu0 0.0
    %5428 = vmatpush.xpose.msra.mxu0 0.0
    %5429 = vmatpush.xpose.msra.mxu0 0.0
    %5430 = vmatpush.xpose.msra.mxu0 0.0
    %5431 = vmatpush.xpose.msra.mxu0 0.0
    %5432 = vmatpush.xpose.msra.mxu0 0.0
    %5433 = vmatpush.xpose.msra.mxu0 0.0
    %5434 = vmatpush.xpose.msra.mxu0 %v5417
    %5435 = vmatmul.f32.gmra.mxu0 %v5415
    %v5436 = vpop.f32.mrf.mxu0
    %v5437 = vadd.f32 0.0, %v5436
    %5438 = vdwg.mxu0
    %5439 = vrot.lane.b32.xlu0 %v4987, 104
    %v5440 = vpop.permute.xlu0 %5439
    %5441 = vrot.lane.b32.xlu0 %v5018, 104
    %v5442 = vpop.permute.xlu0 %5441
    %v5443 = vsel %vm1087, %v5440, 0
    %v5445 = vsel %vm1087, %v5442, 0
    %5447 = vmatpush.xpose.msra.mxu0 0.0
    %5448 = vmatpush.xpose.msra.mxu0 0.0
    %5449 = vmatpush.xpose.msra.mxu0 0.0
    %5450 = vmatpush.xpose.msra.mxu0 0.0
    %5451 = vmatpush.xpose.msra.mxu0 0.0
    %5452 = vmatpush.xpose.msra.mxu0 0.0
    %5453 = vmatpush.xpose.msra.mxu0 0.0
    %5454 = vmatpush.xpose.msra.mxu0 0.0
    %5455 = vmatpush.xpose.msra.mxu0 0.0
    %5456 = vmatpush.xpose.msra.mxu0 0.0
    %5457 = vmatpush.xpose.msra.mxu0 0.0
    %5458 = vmatpush.xpose.msra.mxu0 0.0
    %5459 = vmatpush.xpose.msra.mxu0 0.0
    %5460 = vmatpush.xpose.msra.mxu0 0.0
    %5461 = vmatpush.xpose.msra.mxu0 0.0
    %5462 = vmatpush.xpose.msra.mxu0 %v5445
    %5463 = vmatmul.f32.gmra.mxu0 %v5443
    %v5464 = vpop.f32.mrf.mxu0
    %v5465 = vadd.f32 0.0, %v5464
    %5466 = vdwg.mxu0
    %v5467 = vsel %vm1087, %v5437, -inf
    %5468 = vmax.xlane.f32.xlu0 %v5467
    %v5469 = vpop.xlane.xlu0 %5468
    %v5470 = vsel %vm1087, %v5465, -inf
    %5471 = vmax.xlane.f32.xlu0 %v5470
    %v5472 = vpop.xlane.xlu0 %5471
    %v5473 = vsub.f32 %v5437, %v5469
    %v5474 = vsub.f32 %v5465, %v5472
    %v5475 = vmul.f32 %v5473, 1.442695
    %v5476 = vpow.pop %v5475
    %v5477 = vmul.f32 %v5474, 1.442695
    %v5478 = vpow.pop %v5477
    %v5479 = vsel %vm1087, %v5476, 0.0
    %5480 = vadd.xlane.f32.xlu0 %v5479
    %v5481 = vpop.xlane.xlu0 %5480
    %v5482 = vsel %vm1087, %v5478, 0.0
    %5483 = vadd.xlane.f32.xlu0 %v5482
    %v5484 = vpop.xlane.xlu0 %5483
    %v5485 = vrcp.pop %v5481
    %v5486 = vrcp.pop %v5484
    %v5487 = vmul.f32 %v5476, %v5485
    %v5488 = vmul.f32 %v5478, %v5486
    %5489 = vrot.lane.b32.xlu0 %v5015, 72
    %v5490 = vpop.permute.xlu0 %5489
    %v5493 = vsel %vm1087, %v5487, 0
    %5495 = vmatpush.msra.mxu0 0.0
    %5496 = vmatpush.msra.mxu0 0.0
    %5497 = vmatpush.msra.mxu0 0.0
    %5498 = vmatpush.msra.mxu0 0.0
    %5499 = vmatpush.msra.mxu0 0.0
    %5500 = vmatpush.msra.mxu0 0.0
    %5501 = vmatpush.msra.mxu0 0.0
    %5502 = vmatpush.msra.mxu0 0.0
    %5503 = vmatpush.msra.mxu0 0.0
    %5504 = vmatpush.msra.mxu0 0.0
    %5505 = vmatpush.msra.mxu0 0.0
    %5506 = vmatpush.msra.mxu0 0.0
    %5507 = vmatpush.msra.mxu0 0.0
    %5508 = vmatpush.msra.mxu0 0.0
    %5509 = vmatpush.msra.mxu0 0.0
    %5510 = vmatpush.msra.mxu0 %v5490
    %5511 = vmatmul.f32.gmra.mxu0 %v5493
    %v5512 = vpop.f32.mrf.mxu0
    %v5513 = vadd.f32 0.0, %v5512
    %5514 = vdwg.mxu0
    %5515 = vrot.lane.b32.xlu0 %v5018, 72
    %v5516 = vpop.permute.xlu0 %5515
    %v5519 = vsel %vm1087, %v5488, 0
    %5521 = vmatpush.msra.mxu0 0.0
    %5522 = vmatpush.msra.mxu0 0.0
    %5523 = vmatpush.msra.mxu0 0.0
    %5524 = vmatpush.msra.mxu0 0.0
    %5525 = vmatpush.msra.mxu0 0.0
    %5526 = vmatpush.msra.mxu0 0.0
    %5527 = vmatpush.msra.mxu0 0.0
    %5528 = vmatpush.msra.mxu0 0.0
    %5529 = vmatpush.msra.mxu0 0.0
    %5530 = vmatpush.msra.mxu0 0.0
    %5531 = vmatpush.msra.mxu0 0.0
    %5532 = vmatpush.msra.mxu0 0.0
    %5533 = vmatpush.msra.mxu0 0.0
    %5534 = vmatpush.msra.mxu0 0.0
    %5535 = vmatpush.msra.mxu0 0.0
    %5536 = vmatpush.msra.mxu0 %v5516
    %5537 = vmatmul.f32.gmra.mxu0 %v5519
    %v5538 = vpop.f32.mrf.mxu0
    %v5539 = vadd.f32 0.0, %v5538
    %5540 = vdwg.mxu0
    %5543 = vrot.lane.b32.xlu0 %v5253, 8
    %v5544 = vpop.permute.xlu0 %5543
    %5545 = vrot.lane.b32.xlu0 %v5279, 8
    %v5546 = vpop.permute.xlu0 %5545
    %5551 = vrot.lane.b32.xlu0 %v5383, 16
    %v5552 = vpop.permute.xlu0 %5551
    %5553 = vrot.lane.b32.xlu0 %v5409, 16
    %v5554 = vpop.permute.xlu0 %5553
    %5559 = vrot.lane.b32.xlu0 %v5513, 24
    %v5560 = vpop.permute.xlu0 %5559
    %5561 = vrot.lane.b32.xlu0 %v5539, 24
    %v5562 = vpop.permute.xlu0 %5561
    %v5565 = vsel %vm1087, %v5123, %v5544
    %v5566 = vsel %vm1087, %v5149, %v5546
    %v5567 = vsel %vm1629, %v5565, %v5552
    %v5568 = vsel %vm1629, %v5566, %v5554
    %v5569 = vsel %vm1632, %v5567, %v5560
    %v5570 = vsel %vm1632, %v5568, %v5562
    %v5572 = vperm.slane %v5024, 0
    %v5575 = vsel %vm1049, %v5569, 0
    %v5578 = vsel %vm1049, %v5570, 0
    %5580 = vmatpush.msra.mxu0 0.0
    %5581 = vmatpush.msra.mxu0 0.0
    %5582 = vmatpush.msra.mxu0 0.0
    %5583 = vmatpush.msra.mxu0 0.0
    %5584 = vmatpush.msra.mxu0 0.0
    %5585 = vmatpush.msra.mxu0 0.0
    %5586 = vmatpush.msra.mxu0 0.0
    %5587 = vmatpush.msra.mxu0 0.0
    %5588 = vmatpush.msra.mxu0 0.0
    %5589 = vmatpush.msra.mxu0 0.0
    %5590 = vmatpush.msra.mxu0 0.0
    %5591 = vmatpush.msra.mxu0 0.0
    %5592 = vmatpush.msra.mxu0 %v5023
    %5593 = vmatpush.msra.mxu0 %v5022
    %5594 = vmatpush.msra.mxu0 %v5021
    %5595 = vmatpush.msra.mxu0 %v5020
    %5596 = vmatmul.f32.gmra.mxu0 %v5575
    %v5597 = vpop.f32.mrf.mxu0
    %v5598 = vadd.f32 %v5572, %v5597
    %5599 = vmatmul.f32.gmra.mxu0 %v5578
    %v5600 = vpop.f32.mrf.mxu0
    %v5601 = vadd.f32 %v5572, %v5600
    %5602 = vdwg.mxu0
    %v5603 = vadd.f32 %v4950, %v5598
    %v5604 = vadd.f32 %v4951, %v5601
    %v5605 = vld [vmem:[#allocation31] sm:$0x1]
    %v5606 = vld [vmem:[#allocation32] sm:$0x1]
    %v5607 = vsel %vm1049, %v5603, 0.0
    %5608 = vadd.xlane.f32.xlu0 %v5607
    %v5609 = vpop.xlane.xlu0 %5608
    %v5610 = vsel %vm1049, %v5604, 0.0
    %5611 = vadd.xlane.f32.xlu0 %v5610
    %v5612 = vpop.xlane.xlu0 %5611
    %v5613 = vmul.f32 %v5609, %v1683
    %v5614 = vmul.f32 %v5612, %v1683
    %v5615 = vsub.f32 %v5603, %v5613
    %v5616 = vsub.f32 %v5604, %v5614
    %v5617 = vmul.f32 %v5615, %v5615
    %v5618 = vmul.f32 %v5616, %v5616
    %v5619 = vsel %vm1049, %v5617, 0.0
    %5620 = vadd.xlane.f32.xlu0 %v5619
    %v5621 = vpop.xlane.xlu0 %5620
    %v5622 = vsel %vm1049, %v5618, 0.0
    %5623 = vadd.xlane.f32.xlu0 %v5622
    %v5624 = vpop.xlane.xlu0 %5623
    %v5625 = vmul.f32 %v5621, %v1683
    %v5626 = vmul.f32 %v5624, %v1683
    %v5627 = vadd.f32 %v5625, 1e-05
    %v5628 = vadd.f32 %v5626, 1e-05
    %v5629 = vrsqrt.pop %v5627
    %v5630 = vmul.f32 %v5629, %v5627
    %v5631 = vmul.f32 %v5630, %v5629
    %v5632 = vmul.f32 0.5, %v5631
    %v5633 = vsub.f32 1.5, %v5632
    %v5634 = vmul.f32 %v5629, %v5633
    %vm5635 = vweird.f32 %v5627
    %vm5636 = vweird.f32 %v5629
    %vm5637 = vmor %vm5635, %vm5636
    %v5638 = vsel %vm5637, %v5629, %v5634
    %v5639 = vrsqrt.pop %v5628
    %v5640 = vmul.f32 %v5639, %v5628
    %v5641 = vmul.f32 %v5640, %v5639
    %v5642 = vmul.f32 0.5, %v5641
    %v5643 = vsub.f32 1.5, %v5642
    %v5644 = vmul.f32 %v5639, %v5643
    %vm5645 = vweird.f32 %v5628
    %vm5646 = vweird.f32 %v5639
    %vm5647 = vmor %vm5645, %vm5646
    %v5648 = vsel %vm5647, %v5639, %v5644
    %v5649 = vmul.f32 %v5615, %v5638
    %v5650 = vmul.f32 %v5616, %v5648
    %v5652 = vperm.slane %v5605, 0
    %v5654 = vmul.f32 %v5649, %v5652
    %v5655 = vmul.f32 %v5650, %v5652
    %v5657 = vperm.slane %v5606, 0
    %v5659 = vadd.f32 %v5654, %v5657
    %v5660 = vadd.f32 %v5655, %v5657
    %v5661 = vld [vmem:[%s125] sm:$0xff]
    %v5662 = vld [vmem:[%s125 + $0x8] sm:$0xff]
    %v5663 = vld [vmem:[%s125 + $0x10] sm:$0xff]
    %v5664 = vld [vmem:[%s125 + $0x18] sm:$0xff]
    %v5665 = vld [vmem:[#allocation34] sm:$0x1]
    %v5667 = vperm.slane %v5665, 0
    %v5670 = vsel %vm1049, %v5659, 0
    %v5673 = vsel %vm1049, %v5660, 0
    %5675 = vmatpush.msra.mxu0 0.0
    %5676 = vmatpush.msra.mxu0 0.0
    %5677 = vmatpush.msra.mxu0 0.0
    %5678 = vmatpush.msra.mxu0 0.0
    %5679 = vmatpush.msra.mxu0 0.0
    %5680 = vmatpush.msra.mxu0 0.0
    %5681 = vmatpush.msra.mxu0 0.0
    %5682 = vmatpush.msra.mxu0 0.0
    %5683 = vmatpush.msra.mxu0 0.0
    %5684 = vmatpush.msra.mxu0 0.0
    %5685 = vmatpush.msra.mxu0 0.0
    %5686 = vmatpush.msra.mxu0 0.0
    %5687 = vmatpush.msra.mxu0 %v5664
    %5688 = vmatpush.msra.mxu0 %v5663
    %5689 = vmatpush.msra.mxu0 %v5662
    %5690 = vmatpush.msra.mxu0 %v5661
    %5691 = vmatmul.f32.gmra.mxu0 %v5670
    %v5692 = vpop.f32.mrf.mxu0
    %v5693 = vadd.f32 %v5667, %v5692
    %5694 = vmatmul.f32.gmra.mxu0 %v5673
    %v5695 = vpop.f32.mrf.mxu0
    %v5696 = vadd.f32 %v5667, %v5695
    %5697 = vdwg.mxu0
    %v5698 = vmax.f32 %v5693, 0.0
    %v5699 = vmax.f32 %v5696, 0.0
    %v5700 = vld [vmem:[%s129] sm:$0xff]
    %v5701 = vld [vmem:[%s129 + $0x8] sm:$0xff]
    %v5702 = vld [vmem:[%s129 + $0x10] sm:$0xff]
    %v5703 = vld [vmem:[%s129 + $0x18] sm:$0xff]
    %v5704 = vld [vmem:[%s129 + $0x20] sm:$0xff]
    %v5705 = vld [vmem:[%s129 + $0x28] sm:$0xff]
    %v5706 = vld [vmem:[%s129 + $0x30] sm:$0xff]
    %v5707 = vld [vmem:[%s129 + $0x38] sm:$0xff]
    %v5708 = vld [vmem:[#allocation35] sm:$0x1]
    %v5710 = vperm.slane %v5708, 0
    %v5713 = vsel %vm1783, %v5698, 0
    %v5716 = vsel %vm1783, %v5699, 0
    %5718 = vmatpush.msra.mxu0 0.0
    %5719 = vmatpush.msra.mxu0 0.0
    %5720 = vmatpush.msra.mxu0 0.0
    %5721 = vmatpush.msra.mxu0 0.0
    %5722 = vmatpush.msra.mxu0 0.0
    %5723 = vmatpush.msra.mxu0 0.0
    %5724 = vmatpush.msra.mxu0 0.0
    %5725 = vmatpush.msra.mxu0 0.0
    %5726 = vmatpush.msra.mxu0 %v5707
    %5727 = vmatpush.msra.mxu0 %v5706
    %5728 = vmatpush.msra.mxu0 %v5705
    %5729 = vmatpush.msra.mxu0 %v5704
    %5730 = vmatpush.msra.mxu0 %v5703
    %5731 = vmatpush.msra.mxu0 %v5702
    %5732 = vmatpush.msra.mxu0 %v5701
    %5733 = vmatpush.msra.mxu0 %v5700
    %5734 = vmatmul.f32.gmra.mxu0 %v5713
    %v5735 = vpop.f32.mrf.mxu0
    %v5736 = vadd.f32 %v5710, %v5735
    %5737 = vmatmul.f32.gmra.mxu0 %v5716
    %v5738 = vpop.f32.mrf.mxu0
    %v5739 = vadd.f32 %v5710, %v5738
    %5740 = vdwg.mxu0
    %v5741 = vadd.f32 %v5659, %v5736
    %v5742 = vadd.f32 %v5660, %v5739
    %v5743 = vld [vmem:[#allocation37] sm:$0x1]
    %v5744 = vld [vmem:[#allocation38] sm:$0x1]
    %v5745 = vsel %vm1049, %v5741, 0.0
    %5746 = vadd.xlane.f32.xlu0 %v5745
    %v5747 = vpop.xlane.xlu0 %5746
    %v5748 = vsel %vm1049, %v5742, 0.0
    %5749 = vadd.xlane.f32.xlu0 %v5748
    %v5750 = vpop.xlane.xlu0 %5749
    %v5751 = vmul.f32 %v5747, %v1683
    %v5752 = vmul.f32 %v5750, %v1683
    %v5753 = vsub.f32 %v5741, %v5751
    %v5754 = vsub.f32 %v5742, %v5752
    %v5755 = vmul.f32 %v5753, %v5753
    %v5756 = vmul.f32 %v5754, %v5754
    %v5757 = vsel %vm1049, %v5755, 0.0
    %5758 = vadd.xlane.f32.xlu0 %v5757
    %v5759 = vpop.xlane.xlu0 %5758
    %v5760 = vsel %vm1049, %v5756, 0.0
    %5761 = vadd.xlane.f32.xlu0 %v5760
    %v5762 = vpop.xlane.xlu0 %5761
    %v5763 = vmul.f32 %v5759, %v1683
    %v5764 = vmul.f32 %v5762, %v1683
    %v5765 = vadd.f32 %v5763, 1e-05
    %v5766 = vadd.f32 %v5764, 1e-05
    %v5767 = vrsqrt.pop %v5765
    %v5768 = vmul.f32 %v5767, %v5765
    %v5769 = vmul.f32 %v5768, %v5767
    %v5770 = vmul.f32 0.5, %v5769
    %v5771 = vsub.f32 1.5, %v5770
    %v5772 = vmul.f32 %v5767, %v5771
    %vm5773 = vweird.f32 %v5765
    %vm5774 = vweird.f32 %v5767
    %vm5775 = vmor %vm5773, %vm5774
    %v5776 = vsel %vm5775, %v5767, %v5772
    %v5777 = vrsqrt.pop %v5766
    %v5778 = vmul.f32 %v5777, %v5766
    %v5779 = vmul.f32 %v5778, %v5777
    %v5780 = vmul.f32 0.5, %v5779
    %v5781 = vsub.f32 1.5, %v5780
    %v5782 = vmul.f32 %v5777, %v5781
    %vm5783 = vweird.f32 %v5766
    %vm5784 = vweird.f32 %v5777
    %vm5785 = vmor %vm5783, %vm5784
    %v5786 = vsel %vm5785, %v5777, %v5782
    %v5787 = vmul.f32 %v5753, %v5776
    %v5788 = vmul.f32 %v5754, %v5786
    %v5790 = vperm.slane %v5743, 0
    %v5792 = vmul.f32 %v5787, %v5790
    %v5793 = vmul.f32 %v5788, %v5790
    %v5795 = vperm.slane %v5744, 0
    %v5797 = vadd.f32 %v5792, %v5795
    %v5798 = vadd.f32 %v5793, %v5795
    %v5799 = vld [vmem:[#allocation40] sm:$0x1]
    %v5800 = vld [vmem:[#allocation41] sm:$0x1]
    %v5801 = vsel %vm1049, %v5797, 0.0
    %5802 = vadd.xlane.f32.xlu0 %v5801
    %v5803 = vpop.xlane.xlu0 %5802
    %v5804 = vsel %vm1049, %v5798, 0.0
    %5805 = vadd.xlane.f32.xlu0 %v5804
    %v5806 = vpop.xlane.xlu0 %5805
    %v5807 = vmul.f32 %v5803, %v1683
    %v5808 = vmul.f32 %v5806, %v1683
    %v5809 = vsub.f32 %v5797, %v5807
    %v5810 = vsub.f32 %v5798, %v5808
    %v5811 = vmul.f32 %v5809, %v5809
    %v5812 = vmul.f32 %v5810, %v5810
    %v5813 = vsel %vm1049, %v5811, 0.0
    %5814 = vadd.xlane.f32.xlu0 %v5813
    %v5815 = vpop.xlane.xlu0 %5814
    %v5816 = vsel %vm1049, %v5812, 0.0
    %5817 = vadd.xlane.f32.xlu0 %v5816
    %v5818 = vpop.xlane.xlu0 %5817
    %v5819 = vmul.f32 %v5815, %v1683
    %v5820 = vmul.f32 %v5818, %v1683
    %v5821 = vadd.f32 %v5819, 1e-05
    %v5822 = vadd.f32 %v5820, 1e-05
    %v5823 = vrsqrt.pop %v5821
    %v5824 = vmul.f32 %v5823, %v5821
    %v5825 = vmul.f32 %v5824, %v5823
    %v5826 = vmul.f32 0.5, %v5825
    %v5827 = vsub.f32 1.5, %v5826
    %v5828 = vmul.f32 %v5823, %v5827
    %vm5829 = vweird.f32 %v5821
    %vm5830 = vweird.f32 %v5823
    %vm5831 = vmor %vm5829, %vm5830
    %v5832 = vsel %vm5831, %v5823, %v5828
    %v5833 = vrsqrt.pop %v5822
    %v5834 = vmul.f32 %v5833, %v5822
    %v5835 = vmul.f32 %v5834, %v5833
    %v5836 = vmul.f32 0.5, %v5835
    %v5837 = vsub.f32 1.5, %v5836
    %v5838 = vmul.f32 %v5833, %v5837
    %vm5839 = vweird.f32 %v5822
    %vm5840 = vweird.f32 %v5833
    %vm5841 = vmor %vm5839, %vm5840
    %v5842 = vsel %vm5841, %v5833, %v5838
    %v5843 = vmul.f32 %v5809, %v5832
    %v5844 = vmul.f32 %v5810, %v5842
    %v5846 = vperm.slane %v5799, 0
    %v5848 = vmul.f32 %v5843, %v5846
    %v5849 = vmul.f32 %v5844, %v5846
    %v5851 = vperm.slane %v5800, 0
    %v5853 = vadd.f32 %v5848, %v5851
    %v5854 = vadd.f32 %v5849, %v5851
    %v5855 = vsel %vm1049, %v5853, 0.0
    %v5856 = vrot.slane %v5855, 4
    %v5857 = vadd.f32 %v5855, %v5856
    %v5858 = vrot.slane %v5857, 2
    %v5859 = vadd.f32 %v5857, %v5858
    %v5860 = vrot.slane %v5859, 1
    %v5861 = vadd.f32 %v5859, %v5860
    %v5862 = vsel %vm1049, %v5854, 0.0
    %v5863 = vrot.slane %v5862, 4
    %v5864 = vadd.f32 %v5862, %v5863
    %v5865 = vrot.slane %v5864, 2
    %v5866 = vadd.f32 %v5864, %v5865
    %v5867 = vrot.slane %v5866, 1
    %v5868 = vadd.f32 %v5866, %v5867
    %v5869 = vrcp.pop 8.0
    %v5870 = vmul.f32 8.0, %v5869
    %v5871 = vsub.f32 1.0, %v5870
    %v5872 = vmul.f32 %v5869, %v5871
    %v5873 = vadd.f32 %v5869, %v5872
    %vm5874 = vweird.f32 %v5869
    %v5875 = vsel %vm5874, %v5869, %v5873
    %v5876 = vmul.f32 %v5861, %v5875
    %v5877 = vmul.f32 %v5868, %v5875
    %v5878 = vld [vmem:[%s141] sm:$0xff]
    %v5879 = vld [vmem:[%s141 + $0x8] sm:$0xff]
    %v5880 = vld [vmem:[%s141 + $0x10] sm:$0xff]
    %v5881 = vld [vmem:[%s141 + $0x18] sm:$0xff]
    %v5882 = vld [vmem:[#allocation43] sm:$0x1]
    %v5884 = vperm.slane %v5882, 0
    %vm5888 = vcmask 1041409
    %v5889 = vsel %vm5888, %v5877, %v5876
    %v5890 = vsel %vm1049, %v5889, 0
    %5892 = vmatpush.msra.mxu0 0.0
    %5893 = vmatpush.msra.mxu0 0.0
    %5894 = vmatpush.msra.mxu0 0.0
    %5895 = vmatpush.msra.mxu0 0.0
    %5896 = vmatpush.msra.mxu0 0.0
    %5897 = vmatpush.msra.mxu0 0.0
    %5898 = vmatpush.msra.mxu0 0.0
    %5899 = vmatpush.msra.mxu0 0.0
    %5900 = vmatpush.msra.mxu0 0.0
    %5901 = vmatpush.msra.mxu0 0.0
    %5902 = vmatpush.msra.mxu0 0.0
    %5903 = vmatpush.msra.mxu0 0.0
    %5904 = vmatpush.msra.mxu0 %v5881
    %5905 = vmatpush.msra.mxu0 %v5880
    %5906 = vmatpush.msra.mxu0 %v5879
    %5907 = vmatpush.msra.mxu0 %v5878
    %5908 = vmatmul.f32.gmra.mxu0 %v5890
    %v5909 = vpop.f32.mrf.mxu0
    %v5910 = vadd.f32 %v5884, %v5909
    %5911 = vdwg.mxu0
    %vm5912 = vcmask 9216
    %5913 = vst.msk [vmem:[#allocation44] sm:$0x3] %vm5912, %v5910
    // Predicated region
    $region398: #{course_recommendation_forward.1} parent=1 // pred_check
      _
    $region399: #{course_recommendation_forward.1} parent=1 // pred_check_branch
      %5915 = sbr.rel (0) target = $region401
    $region400: #{course_recommendation_forward.1} parent=1 // pred_region
      %5917 = vsyncadd [#allocation4], 0
      %s5919 = sshll.u32 [#allocation44], 4
      %s5920 = int_to_ptr.vmem [resolvable:$true] %s5919
      %s5921 = sshll.u32 %s145, 4
      %s5922 = int_to_ptr.hbm [resolvable:$true] %s5921
      %5924 = dma.vmem_to_hbm [thread:$0]  %s5920, 32, %s5922, [#allocation4]
    $region401: #{course_recommendation_forward.1} parent=1 // pred_fallthru
      _
    // Predicated region
    $region402: #{course_recommendation_forward.1} parent=1 // pred_check
      _
    $region403: #{course_recommendation_forward.1} parent=1 // pred_check_branch
      %5926 = sbr.rel (0) target = $region405
    $region404: #{course_recommendation_forward.1} parent=1 // pred_region
      %5928 = dma.done [#allocation4], 32
    $region405: #{course_recommendation_forward.1} parent=1 // pred_fallthru
      _
    %5929 = vsyncpa [#allocation3], 1
    %5930 = vsyncpa [#allocation6], 1
    %5931 = vsyncpa [#allocation9], 1
    %5932 = vsyncpa [#allocation12], 1
    %5933 = vsyncpa [#allocation15], 1
    %5934 = vsyncpa [#allocation18], 1
    %5935 = vsyncpa [#allocation21], 1
    %5936 = vsyncpa [#allocation24], 1
    %5937 = vsyncpa [#allocation27], 1
    %5938 = vsyncpa [#allocation30], 1
    %5939 = vsyncpa [#allocation33], 1
    %5940 = vsyncpa [#allocation36], 1
    %5941 = vsyncpa [#allocation39], 1
    %5942 = vsyncpa [#allocation42], 1
    %5943 = vsyncpa [#allocation4], 1

</llo_original>
